<compile_context>
chip_gen: v5e
topology: v5e:2x2
jax: 0.10.0
libtpu: 0.0.40
codegen_flags: <defaults>
</compile_context>

<pallas_src>
import numpy as np
import jax
import jax.numpy as jnp
from jax import lax
from jax.experimental import pallas as pl
from jax.experimental.pallas import tpu as pltpu


def _avgpool2x2(y, bt, h, w, c):
    """(bt, h, w, c) values -> (bt, h//2, w//2, c) f32 2x2 average pool (VPU only)."""
    h2, w2 = h // 2, w // 2
    yw = y.reshape(bt * h, w2, 2, c)
    pw = yw[:, :, 0, :].astype(jnp.float32) + yw[:, :, 1, :].astype(jnp.float32)
    ph = pw.reshape(bt, h2, 2, w2, c)
    return (ph[:, :, 0] + ph[:, :, 1]) * 0.25


def _store_padded(pad_ref, val):
    """Fill a (Bt, H+2, W+2, C) zero-halo scratch with `val` in its interior.

    Left/right zero columns are folded into the full-width interior slab store
    (no 1-wide masked column writes); top/bottom halo rows are contiguous
    full-width stores.  Re-done every grid step so it stays correct when the
    batch grid axis is sharded across TensorCores.
    """
    bt, hp, wp, c = pad_ref.shape
    h, w = hp - 2, wp - 2
    zrow = jnp.zeros((bt, 1, wp, c), pad_ref.dtype)
    pad_ref[:, 0:1, :, :] = zrow
    pad_ref[:, hp - 1:hp, :, :] = zrow
    zcol = jnp.zeros((bt, h, 1, c), pad_ref.dtype)
    pad_ref[:, 1:h + 1, :, :] = jnp.concatenate(
        [zcol, val.astype(pad_ref.dtype), zcol], axis=2)


def _conv3x3_im2col(pad_ref, w_ref, bt, h, w):
    """3x3 'same' conv from a bf16 zero-halo (Bt, H+2, W+2, C) scratch.

    Builds an im2col buffer (Bt*H*W, 9*C) and issues a single bf16 MXU matmul
    with f32 accumulation (K = 9*C fills the MXU far better than 9 per-tap
    K=C matmuls and moves the 9-term accumulation into the MXU accumulator).
    """
    c = pad_ref.shape[3]
    taps = []
    for dh in range(3):
        for dw in range(3):
            taps.append(pad_ref[:, dh:dh + h, dw:dw + w, :])
    patches = jnp.concatenate(taps, axis=-1).reshape(bt * h * w, 9 * c)
    return jnp.dot(patches, w_ref[...], preferred_element_type=jnp.float32)


def _res_dis_block_kernel(x_ref, w1_ref, b1_ref, w2_ref, b2_ref, wsc_ref, bsc_ref,
                          o_ref, xpad_ref, ypad_ref):
    bt, h, w, cin = x_ref.shape
    cout = o_ref.shape[3]
    oh, ow = h // 2, w // 2

    x = x_ref[...]                                                  # (Bt,H,W,Cin) bf16

    # ---- shortcut first (keeps x's live range short): AvgPool2 then Conv1x1 ----
    # Pooling before the 1x1 conv is equivalent (both linear) and 4x less MXU work;
    # the bias is added after pooling, which is also equivalent.
    xp = _avgpool2x2(x, bt, h, w, cin)                              # (Bt,OH,OW,Cin) f32
    sc = jnp.dot(xp.reshape(bt * oh * ow, cin).astype(jnp.bfloat16), wsc_ref[...],
                 preferred_element_type=jnp.float32) + bsc_ref[...]
    o_ref[...] = sc.reshape(bt, oh, ow, cout).astype(o_ref.dtype)   # stash shortcut

    # ---- residual: ReLU -> Conv3x3 -> ReLU -> Conv3x3 -> AvgPool2 ----
    _store_padded(xpad_ref, jnp.maximum(x, 0))                      # bf16 ReLU(x) + halo
    y1 = _conv3x3_im2col(xpad_ref, w1_ref, bt, h, w)                # (M,Cout) f32
    y1 = jnp.maximum(y1 + b1_ref[...], 0.0)
    _store_padded(ypad_ref, y1.reshape(bt, h, w, cout))             # bf16 ReLU(y1) + halo
    y2 = _conv3x3_im2col(ypad_ref, w2_ref, bt, h, w) + b2_ref[...]  # (M,Cout) f32
    res = _avgpool2x2(y2.reshape(bt, h, w, cout), bt, h, w, cout)   # (Bt,OH,OW,Cout) f32

    o_ref[...] = (o_ref[...] + res).astype(o_ref.dtype)


def res_dis_block(x_nchw, params, block_batch=None):
    """Pallas forward for ResDisBlock(down=True, in_channels != out_channels).

    x_nchw: (N, Cin, H, W) f32 -> (N, Cout, H//2, W//2) f32.
    params = (w1 HWIO(3,3,Cin,Cout), b1 (Cout,), w2 HWIO(3,3,Cout,Cout), b2 (Cout,),
              wsc (Cin,Cout), bsc (Cout,)).
    """
    w1, b1, w2, b2, wsc, bsc = params
    n, cin, h, w = x_nchw.shape
    cout = w1.shape[-1]
    assert h % 2 == 0 and w % 2 == 0, "AvgPool2d(2) needs even spatial dims"
    oh, ow = h // 2, w // 2

    # NHWC with channels on the 128-lane axis; bf16 input DMA (math/output stay f32).
    # TODO(synk): keep activations NHWC end-to-end across blocks to drop these two
    # HBM-level transposes (each is a full read+write of x / out).
    x = jnp.transpose(x_nchw, (0, 2, 3, 1)).astype(jnp.bfloat16)

    # MXU operands in bf16; 3x3 weights pre-reshaped to the im2col layout
    # (rows ordered dh, dw, cin), matching the kernel's tap concatenation order.
    w1b = jnp.asarray(w1, jnp.bfloat16).reshape(9 * cin, cout)
    w2b = jnp.asarray(w2, jnp.bfloat16).reshape(9 * cout, cout)
    wscb = jnp.asarray(wsc, jnp.bfloat16)
    b1r = jnp.asarray(b1, jnp.float32).reshape(1, cout)
    b2r = jnp.asarray(b2, jnp.float32).reshape(1, cout)
    bscr = jnp.asarray(bsc, jnp.float32).reshape(1, cout)

    # ---- per-generation VMEM budget ----
    try:
        vmem_cap = int(pltpu.get_tpu_info().vmem_capacity_bytes)
    except Exception:
        vmem_cap = 64 << 20                            # assume the smallest (v7x per-core)
    vmem_limit = min((vmem_cap * 3) // 4, 96 << 20)    # headroom below physical VMEM
    budget = vmem_limit // 2                           # per-step working-set target

    weight_bytes = 2 * 2 * (w1b.size + w2b.size + wscb.size) + 2 * 4 * 3 * cout
    bytes_per_img = (
        2 * 2 * h * w * cin                            # bf16 input block, double-buffered
        + 2 * 4 * oh * ow * cout                       # f32 output block, double-buffered
        + 2 * (h + 2) * (w + 2) * (cin + cout)         # bf16 zero-halo scratches
        + 2 * 9 * h * w * (cin + cout)                 # bf16 im2col patch buffers
        + 4 * 2 * h * w * cout                         # f32 conv outputs (y1, y2)
        + 4 * h * w * (cin + cout) // 2                # f32 pooling temps
    )
    avail = max(budget - weight_bytes, bytes_per_img)

    if block_batch is None:
        bt = max(1, min(n, avail // max(bytes_per_img, 1)))
    else:
        bt = max(1, min(block_batch, n))
    if n >= 2:
        bt = min(bt, n // 2)        # >= 2 grid steps so both v7x TensorCores get work
    bt = int(bt)
    while n % bt:
        bt -= 1

    def const_spec(shape):
        nd = len(shape)
        return pl.BlockSpec(shape, lambda i, _nd=nd: (0,) * _nd)

    out = pl.pallas_call(
        _res_dis_block_kernel,
        out_shape=jax.ShapeDtypeStruct((n, oh, ow, cout), jnp.float32),
        grid_spec=pltpu.PrefetchScalarGridSpec(
            num_scalar_prefetch=0,
            grid=(n // bt,),
            in_specs=[
                pl.BlockSpec((bt, h, w, cin), lambda i: (i, 0, 0, 0)),
                const_spec((9 * cin, cout)),      # w1 (im2col layout, bf16)
                const_spec((1, cout)),            # b1
                const_spec((9 * cout, cout)),     # w2 (im2col layout, bf16)
                const_spec((1, cout)),            # b2
                const_spec((cin, cout)),          # shortcut 1x1 weight (bf16)
                const_spec((1, cout)),            # shortcut bias
            ],
            out_specs=pl.BlockSpec((bt, oh, ow, cout), lambda i: (i, 0, 0, 0)),
            scratch_shapes=[
                pltpu.VMEM((bt, h + 2, w + 2, cin), jnp.bfloat16),   # zero-halo ReLU(x)
                pltpu.VMEM((bt, h + 2, w + 2, cout), jnp.bfloat16),  # zero-halo ReLU(conv1)
            ],
        ),
        compiler_params=pltpu.CompilerParams(
            dimension_semantics=("parallel",),    # batch images are independent (v7x: 2 TCs)
            vmem_limit_bytes=int(vmem_limit)),
    )(x, w1b, b1r, w2b, b2r, wscb, bscr)

    return jnp.transpose(out, (0, 3, 1, 2))       # back to NCHW


def reference_forward(x_nchw, params):
    """Pure-JAX f32 reference matching ResDisBlock(down=True, in!=out) semantics (NCHW)."""
    w1, b1, w2, b2, wsc, bsc = params
    dn = ("NCHW", "HWIO", "NCHW")
    hp = lax.Precision.HIGHEST
    # residual: ReLU -> Conv3x3 -> ReLU -> Conv3x3 -> AvgPool2
    y = jnp.maximum(x_nchw, 0.0)
    y = lax.conv_general_dilated(y, w1, (1, 1), ((1, 1), (1, 1)),
                                 dimension_numbers=dn, precision=hp)
    y = jnp.maximum(y + b1[None, :, None, None], 0.0)
    y = lax.conv_general_dilated(y, w2, (1, 1), ((1, 1), (1, 1)),
                                 dimension_numbers=dn, precision=hp)
    y = y + b2[None, :, None, None]
    nb, cc, hh, ww = y.shape
    res = y.reshape(nb, cc, hh // 2, 2, ww // 2, 2).mean(axis=(3, 5))
    # shortcut: Conv1x1 -> AvgPool2
    sc = lax.conv_general_dilated(x_nchw, wsc[None, None], (1, 1), ((0, 0), (0, 0)),
                                  dimension_numbers=dn, precision=hp)
    sc = sc + bsc[None, :, None, None]
    sc = sc.reshape(nb, cc, hh // 2, 2, ww // 2, 2).mean(axis=(3, 5))
    return res + sc


if __name__ == "__main__":
    key = jax.random.PRNGKey(0)
    n, cin, cout, h, w = 2, 4, 8, 16, 16
    k = jax.random.split(key, 7)

    x = jax.random.normal(k[0], (n, cin, h, w), jnp.float32)
    # deterministic synthetic parameters (conv weights in HWIO layout)
    w1 = 0.1 * jax.random.normal(k[1], (3, 3, cin, cout), jnp.float32)
    b1 = 0.1 * jax.random.normal(k[2], (cout,), jnp.float32)
    w2 = 0.1 * jax.random.normal(k[3], (3, 3, cout, cout), jnp.float32)
    b2 = 0.1 * jax.random.normal(k[4], (cout,), jnp.float32)
    wsc = 0.1 * jax.random.normal(k[5], (cin, cout), jnp.float32)
    bsc = 0.1 * jax.random.normal(k[6], (cout,), jnp.float32)
    params = (w1, b1, w2, b2, wsc, bsc)

    out = jax.block_until_ready(res_dis_block(x, params))
    ref = jax.block_until_ready(reference_forward(x, params))
    # bf16 input + bf16 MXU operands (f32 accumulation) -> loosened tolerance vs f32 ref.
    np.testing.assert_allclose(np.asarray(out), np.asarray(ref), rtol=2e-2, atol=3e-2)
    print("KERNEL_OK")
</pallas_src>

<mosaic_0001>
module attributes {stable_mosaic.version = 11 : i64} {
  func.func @_res_dis_block_kernel(%arg0: i32, %arg1: memref<1x16x16x4xbf16, #tpu.memory_space<vmem>>, %arg2: memref<36x8xbf16, #tpu.memory_space<vmem>>, %arg3: memref<1x8xf32, #tpu.memory_space<vmem>>, %arg4: memref<72x8xbf16, #tpu.memory_space<vmem>>, %arg5: memref<1x8xf32, #tpu.memory_space<vmem>>, %arg6: memref<4x8xbf16, #tpu.memory_space<vmem>>, %arg7: memref<1x8xf32, #tpu.memory_space<vmem>>, %arg8: memref<1x8x8x8xf32, #tpu.memory_space<vmem>>, %arg9: memref<1x18x18x4xbf16, #tpu.memory_space<vmem>>, %arg10: memref<1x18x18x8xbf16, #tpu.memory_space<vmem>>) attributes {dimension_semantics = [#tpu.dimension_semantics<parallel>], iteration_bounds = array<i64: 2>, scalar_prefetch = 0 : i64, scratch_operands = 2 : i64, tpu.core_type = #tpu.core_type<tc>, window_params = [{transform_indices = @transform_0, window_bounds = array<i64: 1, 16, 16, 4>}, {pipeline_mode = #tpu.pipeline_mode<synchronous>, transform_indices = @transform_1, window_bounds = array<i64: 36, 8>}, {pipeline_mode = #tpu.pipeline_mode<synchronous>, transform_indices = @transform_2, window_bounds = array<i64: 1, 8>}, {pipeline_mode = #tpu.pipeline_mode<synchronous>, transform_indices = @transform_3, window_bounds = array<i64: 72, 8>}, {pipeline_mode = #tpu.pipeline_mode<synchronous>, transform_indices = @transform_4, window_bounds = array<i64: 1, 8>}, {pipeline_mode = #tpu.pipeline_mode<synchronous>, transform_indices = @transform_5, window_bounds = array<i64: 4, 8>}, {pipeline_mode = #tpu.pipeline_mode<synchronous>, transform_indices = @transform_6, window_bounds = array<i64: 1, 8>}, {transform_indices = @transform_7, window_bounds = array<i64: 1, 8, 8, 8>}]} {
    %c0 = arith.constant 0 : index
    %c0_0 = arith.constant 0 : index
    %c0_1 = arith.constant 0 : index
    %c0_2 = arith.constant 0 : index
    %0 = vector.load %arg1[%c0, %c0_0, %c0_1, %c0_2] : memref<1x16x16x4xbf16, #tpu.memory_space<vmem>>, vector<1x16x16x4xbf16>
    %1 = vector.shape_cast %0 : vector<1x16x16x4xbf16> to vector<16x8x2x4xbf16>
    %2 = vector.extract_strided_slice %1 {offsets = [0, 0, 0, 0], sizes = [16, 8, 1, 4], strides = [1, 1, 1, 1]} : vector<16x8x2x4xbf16> to vector<16x8x1x4xbf16>
    %3 = vector.shape_cast %2 : vector<16x8x1x4xbf16> to vector<16x8x4xbf16>
    %4 = arith.extf %3 : vector<16x8x4xbf16> to vector<16x8x4xf32>
    %5 = vector.extract_strided_slice %1 {offsets = [0, 0, 1, 0], sizes = [16, 8, 1, 4], strides = [1, 1, 1, 1]} : vector<16x8x2x4xbf16> to vector<16x8x1x4xbf16>
    %6 = vector.shape_cast %5 : vector<16x8x1x4xbf16> to vector<16x8x4xbf16>
    %7 = arith.extf %6 : vector<16x8x4xbf16> to vector<16x8x4xf32>
    %8 = arith.addf %4, %7 : vector<16x8x4xf32>
    %9 = vector.shape_cast %8 : vector<16x8x4xf32> to vector<1x8x2x8x4xf32>
    %10 = vector.extract_strided_slice %9 {offsets = [0, 0, 0, 0, 0], sizes = [1, 8, 1, 8, 4], strides = [1, 1, 1, 1, 1]} : vector<1x8x2x8x4xf32> to vector<1x8x1x8x4xf32>
    %11 = vector.shape_cast %10 : vector<1x8x1x8x4xf32> to vector<1x8x8x4xf32>
    %12 = vector.extract_strided_slice %9 {offsets = [0, 0, 1, 0, 0], sizes = [1, 8, 1, 8, 4], strides = [1, 1, 1, 1, 1]} : vector<1x8x2x8x4xf32> to vector<1x8x1x8x4xf32>
    %13 = vector.shape_cast %12 : vector<1x8x1x8x4xf32> to vector<1x8x8x4xf32>
    %14 = arith.addf %11, %13 : vector<1x8x8x4xf32>
    %cst = arith.constant 2.500000e-01 : f32
    %15 = vector.broadcast %cst : f32 to vector<1x8x8x4xf32>
    %16 = arith.mulf %14, %15 : vector<1x8x8x4xf32>
    %17 = vector.shape_cast %16 : vector<1x8x8x4xf32> to vector<64x4xf32>
    %18 = arith.truncf %17 : vector<64x4xf32> to vector<64x4xbf16>
    %c0_3 = arith.constant 0 : index
    %c0_4 = arith.constant 0 : index
    %19 = vector.load %arg6[%c0_3, %c0_4] : memref<4x8xbf16, #tpu.memory_space<vmem>>, vector<4x8xbf16>
    %cst_5 = arith.constant dense<0.000000e+00> : vector<64x8xf32>
    %20 = tpu.matmul %18, %19, %cst_5 {dimension_numbers = #tpu.dot_dimension_numbers<[1], [0], [0], [1], [0, 0, 1, 1], [], []>} : vector<64x4xbf16>, vector<4x8xbf16>, vector<64x8xf32> -> vector<64x8xf32>
    %c0_6 = arith.constant 0 : index
    %c0_7 = arith.constant 0 : index
    %21 = vector.load %arg7[%c0_6, %c0_7] : memref<1x8xf32, #tpu.memory_space<vmem>>, vector<1x8xf32>
    %22 = vector.broadcast %21 : vector<1x8xf32> to vector<64x8xf32>
    %23 = arith.addf %20, %22 : vector<64x8xf32>
    %24 = vector.shape_cast %23 : vector<64x8xf32> to vector<1x8x8x8xf32>
    %c0_8 = arith.constant 0 : index
    %c0_9 = arith.constant 0 : index
    %c0_10 = arith.constant 0 : index
    %c0_11 = arith.constant 0 : index
    %25 = vector.load %arg8[%c0_8, %c0_9, %c0_10, %c0_11] : memref<1x8x8x8xf32, #tpu.memory_space<vmem>>, vector<1x8x8x8xf32>
    tpu.vector_store %arg8[%c0_8, %c0_9, %c0_10, %c0_11], %24 {strides = array<i32>} : memref<1x8x8x8xf32, #tpu.memory_space<vmem>>, vector<1x8x8x8xf32>,
    %cst_12 = arith.constant 0.000000e+00 : bf16
    %26 = vector.broadcast %cst_12 : bf16 to vector<1x16x16x4xbf16>
    %27 = arith.maximumf %0, %26 : vector<1x16x16x4xbf16>
    %cst_13 = arith.constant 0.000000e+00 : bf16
    %28 = vector.broadcast %cst_13 : bf16 to vector<1x1x18x4xbf16>
    %c0_14 = arith.constant 0 : index
    %c0_15 = arith.constant 0 : index
    %c0_16 = arith.constant 0 : index
    %c0_17 = arith.constant 0 : index
    %29 = vector.load %arg9[%c0_14, %c0_15, %c0_16, %c0_17] : memref<1x18x18x4xbf16, #tpu.memory_space<vmem>>, vector<1x1x18x4xbf16>
    tpu.vector_store %arg9[%c0_14, %c0_15, %c0_16, %c0_17], %28 {strides = array<i32>} : memref<1x18x18x4xbf16, #tpu.memory_space<vmem>>, vector<1x1x18x4xbf16>,
    %c0_18 = arith.constant 0 : index
    %c17 = arith.constant 17 : index
    %c0_19 = arith.constant 0 : index
    %c0_20 = arith.constant 0 : index
    %30 = vector.load %arg9[%c0_18, %c17, %c0_19, %c0_20] : memref<1x18x18x4xbf16, #tpu.memory_space<vmem>>, vector<1x1x18x4xbf16>
    tpu.vector_store %arg9[%c0_18, %c17, %c0_19, %c0_20], %28 {strides = array<i32>} : memref<1x18x18x4xbf16, #tpu.memory_space<vmem>>, vector<1x1x18x4xbf16>,
    %cst_21 = arith.constant 0.000000e+00 : bf16
    %31 = vector.broadcast %cst_21 : bf16 to vector<1x16x1x4xbf16>
    %32 = tpu.concatenate %31, %27, %31 in 2 : vector<1x16x1x4xbf16>, vector<1x16x16x4xbf16>, vector<1x16x1x4xbf16> -> vector<1x16x18x4xbf16>
    %c0_22 = arith.constant 0 : index
    %c1 = arith.constant 1 : index
    %c0_23 = arith.constant 0 : index
    %c0_24 = arith.constant 0 : index
    %33 = vector.load %arg9[%c0_22, %c1, %c0_23, %c0_24] : memref<1x18x18x4xbf16, #tpu.memory_space<vmem>>, vector<1x16x18x4xbf16>
    tpu.vector_store %arg9[%c0_22, %c1, %c0_23, %c0_24], %32 {strides = array<i32>} : memref<1x18x18x4xbf16, #tpu.memory_space<vmem>>, vector<1x16x18x4xbf16>,
    %c0_25 = arith.constant 0 : index
    %c0_26 = arith.constant 0 : index
    %c0_27 = arith.constant 0 : index
    %c0_28 = arith.constant 0 : index
    %34 = vector.load %arg9[%c0_25, %c0_26, %c0_27, %c0_28] : memref<1x18x18x4xbf16, #tpu.memory_space<vmem>>, vector<1x16x16x4xbf16>
    %c0_29 = arith.constant 0 : index
    %c0_30 = arith.constant 0 : index
    %c1_31 = arith.constant 1 : index
    %c0_32 = arith.constant 0 : index
    %35 = vector.load %arg9[%c0_29, %c0_30, %c1_31, %c0_32] : memref<1x18x18x4xbf16, #tpu.memory_space<vmem>>, vector<1x16x16x4xbf16>
    %c0_33 = arith.constant 0 : index
    %c0_34 = arith.constant 0 : index
    %c2 = arith.constant 2 : index
    %c0_35 = arith.constant 0 : index
    %36 = vector.load %arg9[%c0_33, %c0_34, %c2, %c0_35] : memref<1x18x18x4xbf16, #tpu.memory_space<vmem>>, vector<1x16x16x4xbf16>
    %c0_36 = arith.constant 0 : index
    %c1_37 = arith.constant 1 : index
    %c0_38 = arith.constant 0 : index
    %c0_39 = arith.constant 0 : index
    %37 = vector.load %arg9[%c0_36, %c1_37, %c0_38, %c0_39] : memref<1x18x18x4xbf16, #tpu.memory_space<vmem>>, vector<1x16x16x4xbf16>
    %c0_40 = arith.constant 0 : index
    %c1_41 = arith.constant 1 : index
    %c1_42 = arith.constant 1 : index
    %c0_43 = arith.constant 0 : index
    %38 = vector.load %arg9[%c0_40, %c1_41, %c1_42, %c0_43] : memref<1x18x18x4xbf16, #tpu.memory_space<vmem>>, vector<1x16x16x4xbf16>
    %c0_44 = arith.constant 0 : index
    %c1_45 = arith.constant 1 : index
    %c2_46 = arith.constant 2 : index
    %c0_47 = arith.constant 0 : index
    %39 = vector.load %arg9[%c0_44, %c1_45, %c2_46, %c0_47] : memref<1x18x18x4xbf16, #tpu.memory_space<vmem>>, vector<1x16x16x4xbf16>
    %c0_48 = arith.constant 0 : index
    %c2_49 = arith.constant 2 : index
    %c0_50 = arith.constant 0 : index
    %c0_51 = arith.constant 0 : index
    %40 = vector.load %arg9[%c0_48, %c2_49, %c0_50, %c0_51] : memref<1x18x18x4xbf16, #tpu.memory_space<vmem>>, vector<1x16x16x4xbf16>
    %c0_52 = arith.constant 0 : index
    %c2_53 = arith.constant 2 : index
    %c1_54 = arith.constant 1 : index
    %c0_55 = arith.constant 0 : index
    %41 = vector.load %arg9[%c0_52, %c2_53, %c1_54, %c0_55] : memref<1x18x18x4xbf16, #tpu.memory_space<vmem>>, vector<1x16x16x4xbf16>
    %c0_56 = arith.constant 0 : index
    %c2_57 = arith.constant 2 : index
    %c2_58 = arith.constant 2 : index
    %c0_59 = arith.constant 0 : index
    %42 = vector.load %arg9[%c0_56, %c2_57, %c2_58, %c0_59] : memref<1x18x18x4xbf16, #tpu.memory_space<vmem>>, vector<1x16x16x4xbf16>
    %43 = tpu.concatenate %34, %35, %36, %37, %38, %39, %40, %41, %42 in 3 : vector<1x16x16x4xbf16>, vector<1x16x16x4xbf16>, vector<1x16x16x4xbf16>, vector<1x16x16x4xbf16>, vector<1x16x16x4xbf16>, vector<1x16x16x4xbf16>, vector<1x16x16x4xbf16>, vector<1x16x16x4xbf16>, vector<1x16x16x4xbf16> -> vector<1x16x16x36xbf16>
    %44 = vector.shape_cast %43 : vector<1x16x16x36xbf16> to vector<256x36xbf16>
    %c0_60 = arith.constant 0 : index
    %c0_61 = arith.constant 0 : index
    %45 = vector.load %arg2[%c0_60, %c0_61] : memref<36x8xbf16, #tpu.memory_space<vmem>>, vector<36x8xbf16>
    %cst_62 = arith.constant dense<0.000000e+00> : vector<256x8xf32>
    %46 = tpu.matmul %44, %45, %cst_62 {dimension_numbers = #tpu.dot_dimension_numbers<[1], [0], [0], [1], [0, 0, 1, 1], [], []>} : vector<256x36xbf16>, vector<36x8xbf16>, vector<256x8xf32> -> vector<256x8xf32>
    %c0_63 = arith.constant 0 : index
    %c0_64 = arith.constant 0 : index
    %47 = vector.load %arg3[%c0_63, %c0_64] : memref<1x8xf32, #tpu.memory_space<vmem>>, vector<1x8xf32>
    %48 = vector.broadcast %47 : vector<1x8xf32> to vector<256x8xf32>
    %49 = arith.addf %46, %48 : vector<256x8xf32>
    %cst_65 = arith.constant 0.000000e+00 : f32
    %50 = vector.broadcast %cst_65 : f32 to vector<256x8xf32>
    %51 = arith.maximumf %49, %50 : vector<256x8xf32>
    %52 = vector.shape_cast %51 : vector<256x8xf32> to vector<1x16x16x8xf32>
    %cst_66 = arith.constant 0.000000e+00 : bf16
    %53 = vector.broadcast %cst_66 : bf16 to vector<1x1x18x8xbf16>
    %c0_67 = arith.constant 0 : index
    %c0_68 = arith.constant 0 : index
    %c0_69 = arith.constant 0 : index
    %c0_70 = arith.constant 0 : index
    %54 = vector.load %arg10[%c0_67, %c0_68, %c0_69, %c0_70] : memref<1x18x18x8xbf16, #tpu.memory_space<vmem>>, vector<1x1x18x8xbf16>
    tpu.vector_store %arg10[%c0_67, %c0_68, %c0_69, %c0_70], %53 {strides = array<i32>} : memref<1x18x18x8xbf16, #tpu.memory_space<vmem>>, vector<1x1x18x8xbf16>,
    %c0_71 = arith.constant 0 : index
    %c17_72 = arith.constant 17 : index
    %c0_73 = arith.constant 0 : index
    %c0_74 = arith.constant 0 : index
    %55 = vector.load %arg10[%c0_71, %c17_72, %c0_73, %c0_74] : memref<1x18x18x8xbf16, #tpu.memory_space<vmem>>, vector<1x1x18x8xbf16>
    tpu.vector_store %arg10[%c0_71, %c17_72, %c0_73, %c0_74], %53 {strides = array<i32>} : memref<1x18x18x8xbf16, #tpu.memory_space<vmem>>, vector<1x1x18x8xbf16>,
    %cst_75 = arith.constant 0.000000e+00 : bf16
    %56 = vector.broadcast %cst_75 : bf16 to vector<1x16x1x8xbf16>
    %57 = arith.truncf %52 : vector<1x16x16x8xf32> to vector<1x16x16x8xbf16>
    %58 = tpu.concatenate %56, %57, %56 in 2 : vector<1x16x1x8xbf16>, vector<1x16x16x8xbf16>, vector<1x16x1x8xbf16> -> vector<1x16x18x8xbf16>
    %c0_76 = arith.constant 0 : index
    %c1_77 = arith.constant 1 : index
    %c0_78 = arith.constant 0 : index
    %c0_79 = arith.constant 0 : index
    %59 = vector.load %arg10[%c0_76, %c1_77, %c0_78, %c0_79] : memref<1x18x18x8xbf16, #tpu.memory_space<vmem>>, vector<1x16x18x8xbf16>
    tpu.vector_store %arg10[%c0_76, %c1_77, %c0_78, %c0_79], %58 {strides = array<i32>} : memref<1x18x18x8xbf16, #tpu.memory_space<vmem>>, vector<1x16x18x8xbf16>,
    %c0_80 = arith.constant 0 : index
    %c0_81 = arith.constant 0 : index
    %c0_82 = arith.constant 0 : index
    %c0_83 = arith.constant 0 : index
    %60 = vector.load %arg10[%c0_80, %c0_81, %c0_82, %c0_83] : memref<1x18x18x8xbf16, #tpu.memory_space<vmem>>, vector<1x16x16x8xbf16>
    %c0_84 = arith.constant 0 : index
    %c0_85 = arith.constant 0 : index
    %c1_86 = arith.constant 1 : index
    %c0_87 = arith.constant 0 : index
    %61 = vector.load %arg10[%c0_84, %c0_85, %c1_86, %c0_87] : memref<1x18x18x8xbf16, #tpu.memory_space<vmem>>, vector<1x16x16x8xbf16>
    %c0_88 = arith.constant 0 : index
    %c0_89 = arith.constant 0 : index
    %c2_90 = arith.constant 2 : index
    %c0_91 = arith.constant 0 : index
    %62 = vector.load %arg10[%c0_88, %c0_89, %c2_90, %c0_91] : memref<1x18x18x8xbf16, #tpu.memory_space<vmem>>, vector<1x16x16x8xbf16>
    %c0_92 = arith.constant 0 : index
    %c1_93 = arith.constant 1 : index
    %c0_94 = arith.constant 0 : index
    %c0_95 = arith.constant 0 : index
    %63 = vector.load %arg10[%c0_92, %c1_93, %c0_94, %c0_95] : memref<1x18x18x8xbf16, #tpu.memory_space<vmem>>, vector<1x16x16x8xbf16>
    %c0_96 = arith.constant 0 : index
    %c1_97 = arith.constant 1 : index
    %c1_98 = arith.constant 1 : index
    %c0_99 = arith.constant 0 : index
    %64 = vector.load %arg10[%c0_96, %c1_97, %c1_98, %c0_99] : memref<1x18x18x8xbf16, #tpu.memory_space<vmem>>, vector<1x16x16x8xbf16>
    %c0_100 = arith.constant 0 : index
    %c1_101 = arith.constant 1 : index
    %c2_102 = arith.constant 2 : index
    %c0_103 = arith.constant 0 : index
    %65 = vector.load %arg10[%c0_100, %c1_101, %c2_102, %c0_103] : memref<1x18x18x8xbf16, #tpu.memory_space<vmem>>, vector<1x16x16x8xbf16>
    %c0_104 = arith.constant 0 : index
    %c2_105 = arith.constant 2 : index
    %c0_106 = arith.constant 0 : index
    %c0_107 = arith.constant 0 : index
    %66 = vector.load %arg10[%c0_104, %c2_105, %c0_106, %c0_107] : memref<1x18x18x8xbf16, #tpu.memory_space<vmem>>, vector<1x16x16x8xbf16>
    %c0_108 = arith.constant 0 : index
    %c2_109 = arith.constant 2 : index
    %c1_110 = arith.constant 1 : index
    %c0_111 = arith.constant 0 : index
    %67 = vector.load %arg10[%c0_108, %c2_109, %c1_110, %c0_111] : memref<1x18x18x8xbf16, #tpu.memory_space<vmem>>, vector<1x16x16x8xbf16>
    %c0_112 = arith.constant 0 : index
    %c2_113 = arith.constant 2 : index
    %c2_114 = arith.constant 2 : index
    %c0_115 = arith.constant 0 : index
    %68 = vector.load %arg10[%c0_112, %c2_113, %c2_114, %c0_115] : memref<1x18x18x8xbf16, #tpu.memory_space<vmem>>, vector<1x16x16x8xbf16>
    %69 = tpu.concatenate %60, %61, %62, %63, %64, %65, %66, %67, %68 in 3 : vector<1x16x16x8xbf16>, vector<1x16x16x8xbf16>, vector<1x16x16x8xbf16>, vector<1x16x16x8xbf16>, vector<1x16x16x8xbf16>, vector<1x16x16x8xbf16>, vector<1x16x16x8xbf16>, vector<1x16x16x8xbf16>, vector<1x16x16x8xbf16> -> vector<1x16x16x72xbf16>
    %70 = vector.shape_cast %69 : vector<1x16x16x72xbf16> to vector<256x72xbf16>
    %c0_116 = arith.constant 0 : index
    %c0_117 = arith.constant 0 : index
    %71 = vector.load %arg4[%c0_116, %c0_117] : memref<72x8xbf16, #tpu.memory_space<vmem>>, vector<72x8xbf16>
    %cst_118 = arith.constant dense<0.000000e+00> : vector<256x8xf32>
    %72 = tpu.matmul %70, %71, %cst_118 {dimension_numbers = #tpu.dot_dimension_numbers<[1], [0], [0], [1], [0, 0, 1, 1], [], []>} : vector<256x72xbf16>, vector<72x8xbf16>, vector<256x8xf32> -> vector<256x8xf32>
    %c0_119 = arith.constant 0 : index
    %c0_120 = arith.constant 0 : index
    %73 = vector.load %arg5[%c0_119, %c0_120] : memref<1x8xf32, #tpu.memory_space<vmem>>, vector<1x8xf32>
    %74 = vector.broadcast %73 : vector<1x8xf32> to vector<256x8xf32>
    %75 = arith.addf %72, %74 : vector<256x8xf32>
    %76 = vector.shape_cast %75 : vector<256x8xf32> to vector<1x16x16x8xf32>
    %77 = vector.shape_cast %76 : vector<1x16x16x8xf32> to vector<16x8x2x8xf32>
    %78 = vector.extract_strided_slice %77 {offsets = [0, 0, 0, 0], sizes = [16, 8, 1, 8], strides = [1, 1, 1, 1]} : vector<16x8x2x8xf32> to vector<16x8x1x8xf32>
    %79 = vector.shape_cast %78 : vector<16x8x1x8xf32> to vector<16x8x8xf32>
    %80 = vector.extract_strided_slice %77 {offsets = [0, 0, 1, 0], sizes = [16, 8, 1, 8], strides = [1, 1, 1, 1]} : vector<16x8x2x8xf32> to vector<16x8x1x8xf32>
    %81 = vector.shape_cast %80 : vector<16x8x1x8xf32> to vector<16x8x8xf32>
    %82 = arith.addf %79, %81 : vector<16x8x8xf32>
    %83 = vector.shape_cast %82 : vector<16x8x8xf32> to vector<1x8x2x8x8xf32>
    %84 = vector.extract_strided_slice %83 {offsets = [0, 0, 0, 0, 0], sizes = [1, 8, 1, 8, 8], strides = [1, 1, 1, 1, 1]} : vector<1x8x2x8x8xf32> to vector<1x8x1x8x8xf32>
    %85 = vector.shape_cast %84 : vector<1x8x1x8x8xf32> to vector<1x8x8x8xf32>
    %86 = vector.extract_strided_slice %83 {offsets = [0, 0, 1, 0, 0], sizes = [1, 8, 1, 8, 8], strides = [1, 1, 1, 1, 1]} : vector<1x8x2x8x8xf32> to vector<1x8x1x8x8xf32>
    %87 = vector.shape_cast %86 : vector<1x8x1x8x8xf32> to vector<1x8x8x8xf32>
    %88 = arith.addf %85, %87 : vector<1x8x8x8xf32>
    %cst_121 = arith.constant 2.500000e-01 : f32
    %89 = vector.broadcast %cst_121 : f32 to vector<1x8x8x8xf32>
    %90 = arith.mulf %88, %89 : vector<1x8x8x8xf32>
    %c0_122 = arith.constant 0 : index
    %c0_123 = arith.constant 0 : index
    %c0_124 = arith.constant 0 : index
    %c0_125 = arith.constant 0 : index
    %91 = vector.load %arg8[%c0_122, %c0_123, %c0_124, %c0_125] : memref<1x8x8x8xf32, #tpu.memory_space<vmem>>, vector<1x8x8x8xf32>
    %92 = arith.addf %91, %90 : vector<1x8x8x8xf32>
    %c0_126 = arith.constant 0 : index
    %c0_127 = arith.constant 0 : index
    %c0_128 = arith.constant 0 : index
    %c0_129 = arith.constant 0 : index
    %93 = vector.load %arg8[%c0_126, %c0_127, %c0_128, %c0_129] : memref<1x8x8x8xf32, #tpu.memory_space<vmem>>, vector<1x8x8x8xf32>
    tpu.vector_store %arg8[%c0_126, %c0_127, %c0_128, %c0_129], %92 {strides = array<i32>} : memref<1x8x8x8xf32, #tpu.memory_space<vmem>>, vector<1x8x8x8xf32>,
    return
  }
  func.func @transform_0(%arg0: i32) -> (i32, i32, i32, i32) {
    %c0_i32 = arith.constant 0 : i32
    %c0_i32_0 = arith.constant 0 : i32
    %c0_i32_1 = arith.constant 0 : i32
    %c0_i32_2 = arith.constant 0 : i32
    return %arg0, %c0_i32, %c0_i32_0, %c0_i32_1 : i32, i32, i32, i32
  }
  func.func @transform_1(%arg0: i32) -> (i32, i32) {
    %c0_i32 = arith.constant 0 : i32
    %c0_i32_0 = arith.constant 0 : i32
    %c0_i32_1 = arith.constant 0 : i32
    return %c0_i32, %c0_i32_0 : i32, i32
  }
  func.func @transform_2(%arg0: i32) -> (i32, i32) {
    %c0_i32 = arith.constant 0 : i32
    %c0_i32_0 = arith.constant 0 : i32
    %c0_i32_1 = arith.constant 0 : i32
    return %c0_i32, %c0_i32_0 : i32, i32
  }
  func.func @transform_3(%arg0: i32) -> (i32, i32) {
    %c0_i32 = arith.constant 0 : i32
    %c0_i32_0 = arith.constant 0 : i32
    %c0_i32_1 = arith.constant 0 : i32
    return %c0_i32, %c0_i32_0 : i32, i32
  }
  func.func @transform_4(%arg0: i32) -> (i32, i32) {
    %c0_i32 = arith.constant 0 : i32
    %c0_i32_0 = arith.constant 0 : i32
    %c0_i32_1 = arith.constant 0 : i32
    return %c0_i32, %c0_i32_0 : i32, i32
  }
  func.func @transform_5(%arg0: i32) -> (i32, i32) {
    %c0_i32 = arith.constant 0 : i32
    %c0_i32_0 = arith.constant 0 : i32
    %c0_i32_1 = arith.constant 0 : i32
    return %c0_i32, %c0_i32_0 : i32, i32
  }
  func.func @transform_6(%arg0: i32) -> (i32, i32) {
    %c0_i32 = arith.constant 0 : i32
    %c0_i32_0 = arith.constant 0 : i32
    %c0_i32_1 = arith.constant 0 : i32
    return %c0_i32, %c0_i32_0 : i32, i32
  }
  func.func @transform_7(%arg0: i32) -> (i32, i32, i32, i32) {
    %c0_i32 = arith.constant 0 : i32
    %c0_i32_0 = arith.constant 0 : i32
    %c0_i32_1 = arith.constant 0 : i32
    %c0_i32_2 = arith.constant 0 : i32
    return %arg0, %c0_i32, %c0_i32_0, %c0_i32_1 : i32, i32, i32, i32
  }
}

</mosaic_0001>

<llo_original>
// kernel: tpu_custom_call.1
$region0: #{tpu_custom_call.1}
  #allocation0 [shape = 'u32[]', space=smem, size = 0x4, offset = 0x4, fixed_abs, tag = 'smem constant byte address 0x4 - core index']
  #allocation1 [shape = 'u32[72,128]{1,0:T(1,128)}', space=vmem, size = 0x9000, scoped, tag = 'internal scratch']
  #allocation2 [shape = 'bf16[1,18,18,4]{3,2,1,0:T(8,128)(2,1)}', space=vmem, size = 0x1b000, scoped, tag = 'scratch operand']
  #allocation3 [shape = 'bf16[1,18,18,8]{3,2,1,0:T(8,128)(2,1)}', space=vmem, size = 0x1b000, scoped, tag = 'scratch operand']
  %s0 = inlined_call_operand.vmem [shape: bf16[2,16,16,4], index: 0, kind: input, shape index: {}]
  %s1 = inlined_call_operand.vmem [shape: bf16[36,8], index: 1, kind: input, shape index: {}]
  %s2 = inlined_call_operand.vmem [shape: f32[1,8], index: 2, kind: input, shape index: {}]
  %s3 = inlined_call_operand.vmem [shape: bf16[72,8], index: 3, kind: input, shape index: {}]
  %s4 = inlined_call_operand.vmem [shape: f32[1,8], index: 4, kind: input, shape index: {}]
  %s5 = inlined_call_operand.vmem [shape: bf16[4,8], index: 5, kind: input, shape index: {}]
  %s6 = inlined_call_operand.vmem [shape: f32[1,8], index: 6, kind: input, shape index: {}]
  %s7 = inlined_call_operand.hbm [shape: f32[2,8,8,8], index: 7, kind: output, shape index: {}]
  %s8 = sld [smem:[#allocation0]]
  $region61: #{tpu_custom_call.1} parent=0
    _
  %s10 = ssub.s32 1, %s8
  %s11 = scalar_select 0, %s10, %s8
  $region1: #{tpu_custom_call.1} parent=0
    #allocation4 [shape = 'u8[65536]{0}', space=vmem, size = 0x10000, scoped, tag = 'output window, operand 0']
    #allocation5 [shape = 's32[2]{0}', space=sflag, size = 0x8, scoped, tag = 'scoped memory for tpu_custom_call.1']
    %12 = vsyncpa [#allocation5], 0
    %s13 = scalar_lea.sflag [#allocation5], 1
    %14 = vsyncpa %s13, 0
    loop: start=0, step=1, limit=4
    $region2: #{tpu_custom_call.1} parent=1 // loop_pre_header
      _
    $region3: #{tpu_custom_call.1} parent=1 // loop_header
      %s16 = sphi 0, %s20
      %p17 = scmp.ge.s32.totalorder %s16, 4
      %s26 = sphi 0, %s28
      %s29 = sphi 0, %s26
      %s30 = sphi 0, %s29
      %s46 = sphi 0, %s30
      %s50 = sphi 0, %s50
      %s52 = sphi 0, %s50
      %s53 = sphi 0, %s52
      %s67 = sphi 0, %s53
      %s71 = sphi 0, %s71
      %s73 = sphi 0, %s71
      %s74 = sphi 0, %s73
      %s88 = sphi 0, %s74
      %s92 = sphi 0, %s92
      %s94 = sphi 0, %s92
      %s95 = sphi 0, %s94
      %s109 = sphi 0, %s95
      %s113 = sphi 0, %s113
      %s115 = sphi 0, %s113
      %s116 = sphi 0, %s115
      %s130 = sphi 0, %s116
      %s134 = sphi 0, %s134
      %s136 = sphi 0, %s134
      %s137 = sphi 0, %s136
      %s151 = sphi 0, %s137
      %s155 = sphi 0, %s155
      %s157 = sphi 0, %s155
      %s158 = sphi 0, %s157
      %s172 = sphi 0, %s158
      %s178 = sphi 0, %s180
      %s181 = sphi 0, %s178
      %s182 = sphi 0, %s181
      %s198 = sphi 0, %s182
    $region4: #{tpu_custom_call.1} parent=1 // loop_header_branch
      %19 = sbr.rel (%p17) target = $region8
    $region5: #{tpu_custom_call.1} parent=1 // loop_body
      %s21 = ssub.s32 %s16, 1
      %s22 = ssub.s32 %s16, 2
      %s23 = sadd.s32 %s16, 1
      %s24 = ssub.s32 %s16, %s23
      %p25 = scmp.eq.s32.totalorder %s24, 0
      %s27 = sadd.s32 %s26, 1
      %s28 = scalar_select %p25, %s26, %s27
      %p31 = pneg %p25
      %p32 = scmp.eq.s32.totalorder %s16, 1
      %p33 = por %p31, %p32
      %p34 = scmp.ne.s32.totalorder %s26, %s29
      %p35 = scmp.eq.s32.totalorder %s16, 0
      %p36 = por %p34, %p35
      %p37 = scmp.ne.s32.totalorder %s26, %s29
      %p38 = scmp.eq.s32.totalorder %s21, 1
      %p39 = por %p37, %p38
      %p40 = scmp.ne.s32.totalorder %s29, %s30
      %p41 = scmp.eq.s32.totalorder %s21, 0
      %p42 = por %p40, %p41
      %p43 = scmp.ne.s32.totalorder %s29, %s30
      %p44 = scmp.eq.s32.totalorder %s22, 1
      %p45 = por %p43, %p44
      %p47 = scmp.ne.s32.totalorder %s30, %s46
      %p48 = scmp.eq.s32.totalorder %s22, 0
      %p49 = por %p47, %p48
      %s51 = sadd.s32 %s50, 1
      %p54 = scmp.eq.s32.totalorder %s16, 1
      %p55 = scmp.ne.s32.totalorder %s50, %s52
      %p56 = scmp.eq.s32.totalorder %s16, 0
      %p57 = por %p55, %p56
      %p58 = scmp.ne.s32.totalorder %s50, %s52
      %p59 = scmp.eq.s32.totalorder %s21, 1
      %p60 = por %p58, %p59
      %p61 = scmp.ne.s32.totalorder %s52, %s53
      %p62 = scmp.eq.s32.totalorder %s21, 0
      %p63 = por %p61, %p62
      %p64 = scmp.ne.s32.totalorder %s52, %s53
      %p65 = scmp.eq.s32.totalorder %s22, 1
      %p66 = por %p64, %p65
      %p68 = scmp.ne.s32.totalorder %s53, %s67
      %p69 = scmp.eq.s32.totalorder %s22, 0
      %p70 = por %p68, %p69
      %s72 = sadd.s32 %s71, 1
      %p75 = scmp.eq.s32.totalorder %s16, 1
      %p76 = scmp.ne.s32.totalorder %s71, %s73
      %p77 = scmp.eq.s32.totalorder %s16, 0
      %p78 = por %p76, %p77
      %p79 = scmp.ne.s32.totalorder %s71, %s73
      %p80 = scmp.eq.s32.totalorder %s21, 1
      %p81 = por %p79, %p80
      %p82 = scmp.ne.s32.totalorder %s73, %s74
      %p83 = scmp.eq.s32.totalorder %s21, 0
      %p84 = por %p82, %p83
      %p85 = scmp.ne.s32.totalorder %s73, %s74
      %p86 = scmp.eq.s32.totalorder %s22, 1
      %p87 = por %p85, %p86
      %p89 = scmp.ne.s32.totalorder %s74, %s88
      %p90 = scmp.eq.s32.totalorder %s22, 0
      %p91 = por %p89, %p90
      %s93 = sadd.s32 %s92, 1
      %p96 = scmp.eq.s32.totalorder %s16, 1
      %p97 = scmp.ne.s32.totalorder %s92, %s94
      %p98 = scmp.eq.s32.totalorder %s16, 0
      %p99 = por %p97, %p98
      %p100 = scmp.ne.s32.totalorder %s92, %s94
      %p101 = scmp.eq.s32.totalorder %s21, 1
      %p102 = por %p100, %p101
      %p103 = scmp.ne.s32.totalorder %s94, %s95
      %p104 = scmp.eq.s32.totalorder %s21, 0
      %p105 = por %p103, %p104
      %p106 = scmp.ne.s32.totalorder %s94, %s95
      %p107 = scmp.eq.s32.totalorder %s22, 1
      %p108 = por %p106, %p107
      %p110 = scmp.ne.s32.totalorder %s95, %s109
      %p111 = scmp.eq.s32.totalorder %s22, 0
      %p112 = por %p110, %p111
      %s114 = sadd.s32 %s113, 1
      %p117 = scmp.eq.s32.totalorder %s16, 1
      %p118 = scmp.ne.s32.totalorder %s113, %s115
      %p119 = scmp.eq.s32.totalorder %s16, 0
      %p120 = por %p118, %p119
      %p121 = scmp.ne.s32.totalorder %s113, %s115
      %p122 = scmp.eq.s32.totalorder %s21, 1
      %p123 = por %p121, %p122
      %p124 = scmp.ne.s32.totalorder %s115, %s116
      %p125 = scmp.eq.s32.totalorder %s21, 0
      %p126 = por %p124, %p125
      %p127 = scmp.ne.s32.totalorder %s115, %s116
      %p128 = scmp.eq.s32.totalorder %s22, 1
      %p129 = por %p127, %p128
      %p131 = scmp.ne.s32.totalorder %s116, %s130
      %p132 = scmp.eq.s32.totalorder %s22, 0
      %p133 = por %p131, %p132
      %s135 = sadd.s32 %s134, 1
      %p138 = scmp.eq.s32.totalorder %s16, 1
      %p139 = scmp.ne.s32.totalorder %s134, %s136
      %p140 = scmp.eq.s32.totalorder %s16, 0
      %p141 = por %p139, %p140
      %p142 = scmp.ne.s32.totalorder %s134, %s136
      %p143 = scmp.eq.s32.totalorder %s21, 1
      %p144 = por %p142, %p143
      %p145 = scmp.ne.s32.totalorder %s136, %s137
      %p146 = scmp.eq.s32.totalorder %s21, 0
      %p147 = por %p145, %p146
      %p148 = scmp.ne.s32.totalorder %s136, %s137
      %p149 = scmp.eq.s32.totalorder %s22, 1
      %p150 = por %p148, %p149
      %p152 = scmp.ne.s32.totalorder %s137, %s151
      %p153 = scmp.eq.s32.totalorder %s22, 0
      %p154 = por %p152, %p153
      %s156 = sadd.s32 %s155, 1
      %p159 = scmp.eq.s32.totalorder %s16, 1
      %p160 = scmp.ne.s32.totalorder %s155, %s157
      %p161 = scmp.eq.s32.totalorder %s16, 0
      %p162 = por %p160, %p161
      %p163 = scmp.ne.s32.totalorder %s155, %s157
      %p164 = scmp.eq.s32.totalorder %s21, 1
      %p165 = por %p163, %p164
      %p166 = scmp.ne.s32.totalorder %s157, %s158
      %p167 = scmp.eq.s32.totalorder %s21, 0
      %p168 = por %p166, %p167
      %p169 = scmp.ne.s32.totalorder %s157, %s158
      %p170 = scmp.eq.s32.totalorder %s22, 1
      %p171 = por %p169, %p170
      %p173 = scmp.ne.s32.totalorder %s158, %s172
      %p174 = scmp.eq.s32.totalorder %s22, 0
      %p175 = por %p173, %p174
      %s176 = ssub.s32 %s16, %s23
      %p177 = scmp.eq.s32.totalorder %s176, 0
      %s179 = sadd.s32 %s178, 1
      %s180 = scalar_select %p177, %s178, %s179
      %p183 = pneg %p177
      %p184 = scmp.eq.s32.totalorder %s16, 1
      %p185 = por %p183, %p184
      %p186 = scmp.ne.s32.totalorder %s178, %s181
      %p187 = scmp.eq.s32.totalorder %s16, 0
      %p188 = por %p186, %p187
      %p189 = scmp.ne.s32.totalorder %s178, %s181
      %p190 = scmp.eq.s32.totalorder %s21, 1
      %p191 = por %p189, %p190
      %p192 = scmp.ne.s32.totalorder %s181, %s182
      %p193 = scmp.eq.s32.totalorder %s21, 0
      %p194 = por %p192, %p193
      %p195 = scmp.ne.s32.totalorder %s181, %s182
      %p196 = scmp.eq.s32.totalorder %s22, 1
      %p197 = por %p195, %p196
      %p199 = scmp.ne.s32.totalorder %s182, %s198
      %p200 = scmp.eq.s32.totalorder %s22, 0
      %p201 = por %p199, %p200
      %p202 = scmp.le.s32.totalorder 1, %s16
      %p203 = scmp.lt.s32.totalorder %s16, 3
      %p204 = pnand %p202, %p203
      %p205 = pneg %p204
      // Predicated region
      $region9: #{tpu_custom_call.1} parent=5 // pred_check
        _
      $region10: #{tpu_custom_call.1} parent=5 // pred_check_branch
        %207 = sbr.rel (%p204) target = $region12
      $region11: #{tpu_custom_call.1} parent=5 // pred_region
        %s208 = ssub.s32 %s16, 1
        // Predicated region
        $region13: #{tpu_custom_call.1} parent=11 // pred_check
          %p209 = pneg %p63
        $region14: #{tpu_custom_call.1} parent=11 // pred_check_branch
          %211 = sbr.rel (%p209) target = $region16
        $region15: #{tpu_custom_call.1} parent=11 // pred_region
          _
        $region16: #{tpu_custom_call.1} parent=11 // pred_fallthru
          _
        // Predicated region
        $region17: #{tpu_custom_call.1} parent=11 // pred_check
          %p212 = pneg %p84
        $region18: #{tpu_custom_call.1} parent=11 // pred_check_branch
          %214 = sbr.rel (%p212) target = $region20
        $region19: #{tpu_custom_call.1} parent=11 // pred_region
          _
        $region20: #{tpu_custom_call.1} parent=11 // pred_fallthru
          _
        // Predicated region
        $region21: #{tpu_custom_call.1} parent=11 // pred_check
          %p215 = pneg %p105
        $region22: #{tpu_custom_call.1} parent=11 // pred_check_branch
          %217 = sbr.rel (%p215) target = $region24
        $region23: #{tpu_custom_call.1} parent=11 // pred_region
          _
        $region24: #{tpu_custom_call.1} parent=11 // pred_fallthru
          _
        // Predicated region
        $region25: #{tpu_custom_call.1} parent=11 // pred_check
          %p218 = pneg %p126
        $region26: #{tpu_custom_call.1} parent=11 // pred_check_branch
          %220 = sbr.rel (%p218) target = $region28
        $region27: #{tpu_custom_call.1} parent=11 // pred_region
          _
        $region28: #{tpu_custom_call.1} parent=11 // pred_fallthru
          _
        // Predicated region
        $region29: #{tpu_custom_call.1} parent=11 // pred_check
          %p221 = pneg %p147
        $region30: #{tpu_custom_call.1} parent=11 // pred_check_branch
          %223 = sbr.rel (%p221) target = $region32
        $region31: #{tpu_custom_call.1} parent=11 // pred_region
          _
        $region32: #{tpu_custom_call.1} parent=11 // pred_fallthru
          _
        // Predicated region
        $region33: #{tpu_custom_call.1} parent=11 // pred_check
          %p224 = pneg %p168
        $region34: #{tpu_custom_call.1} parent=11 // pred_check_branch
          %226 = sbr.rel (%p224) target = $region36
        $region35: #{tpu_custom_call.1} parent=11 // pred_region
          _
        $region36: #{tpu_custom_call.1} parent=11 // pred_fallthru
          _
      $region12: #{tpu_custom_call.1} parent=5 // pred_fallthru
        _
      %p227 = scmp.lt.s32.totalorder %s16, 2
      // Predicated region
      $region37: #{tpu_custom_call.1} parent=5 // pred_check
        %p228 = pneg %p227
      $region38: #{tpu_custom_call.1} parent=5 // pred_check_branch
        %230 = sbr.rel (%p228) target = $region40
      $region39: #{tpu_custom_call.1} parent=5 // pred_region
        // Predicated region
        $region41: #{tpu_custom_call.1} parent=39 // pred_check
          %p231 = pneg %p36
        $region42: #{tpu_custom_call.1} parent=39 // pred_check_branch
          %233 = sbr.rel (%p231) target = $region44
        $region43: #{tpu_custom_call.1} parent=39 // pred_region
          %p234 = scmp.lt.s32.totalorder %s16, 1
          %s235 = scalar_select %p234, %s16, 1
          %s236 = smul.addr %s235, 32
          %s237 = smul.addr %s236, 4
          %s238 = scalar_lea.vmem %s0, %s237
        $region44: #{tpu_custom_call.1} parent=39 // pred_fallthru
          _
      $region40: #{tpu_custom_call.1} parent=5 // pred_fallthru
        _
      %p239 = scmp.le.s32.totalorder 1, %s16
      %p240 = scmp.lt.s32.totalorder %s16, 3
      %p241 = pnand %p239, %p240
      %p242 = pneg %p241
      // Predicated region
      $region45: #{tpu_custom_call.1} parent=5 // pred_check
        _
      $region46: #{tpu_custom_call.1} parent=5 // pred_check_branch
        %244 = sbr.rel (%p241) target = $region48
      $region47: #{tpu_custom_call.1} parent=5 // pred_region
        %s245 = ssub.s32 %s16, 1
        %p246 = scmp.lt.s32.totalorder %s21, 1
        %s247 = scalar_select %p246, %s21, 1
        %s248 = smul.addr %s247, 32
        %s249 = smul.addr %s248, 4
        %s250 = scalar_lea.vmem %s0, %s249
        %p251 = pneg %p42
        %p252 = pneg %p39
        %p253 = pneg %p63
        %p254 = pneg %p60
        %p255 = pneg %p84
        %p256 = pneg %p81
        %p257 = pneg %p105
        %p258 = pneg %p102
        %p259 = pneg %p126
        %p260 = pneg %p123
        %p261 = pneg %p147
        %p262 = pneg %p144
        %p263 = pneg %p168
        %p264 = pneg %p165
        %p265 = pneg %p194
        %p266 = pneg %p191
        %s267 = sand.u32 %s181, 1
        %s268 = scalar_lea.sflag [#allocation5], %s267
        %s269 = sand.u32 %s181, 1
        %s270 = smul.addr %s269, 64
        %s271 = scalar_lea.vmem [#allocation4], %s270
        %p272 = scmp.lt.s32.totalorder %s21, 1
        %s273 = scalar_select %p272, %s21, 1
        %s274 = smul.addr %s273, 32
        %s275 = smul.addr %s274, 4
        %s276 = scalar_lea.vmem %s0, %s275
        %v278 = vld [vmem:[%s276] sm:$0xf]
        %v279 = vld [vmem:[%s276 + $0x4] sm:$0xf]
        %v280 = vld [vmem:[%s276 + $0x8] sm:$0xf]
        %v281 = vld [vmem:[%s276 + $0xc] sm:$0xf]
        %v282 = vld [vmem:[%s276 + $0x10] sm:$0xf]
        %v283 = vld [vmem:[%s276 + $0x14] sm:$0xf]
        %v284 = vld [vmem:[%s276 + $0x18] sm:$0xf]
        %v285 = vld [vmem:[%s276 + $0x1c] sm:$0xf]
        %v286 = vld [vmem:[%s276 + $0x20] sm:$0xf]
        %v287 = vld [vmem:[%s276 + $0x24] sm:$0xf]
        %v288 = vld [vmem:[%s276 + $0x28] sm:$0xf]
        %v289 = vld [vmem:[%s276 + $0x2c] sm:$0xf]
        %v290 = vld [vmem:[%s276 + $0x30] sm:$0xf]
        %v291 = vld [vmem:[%s276 + $0x34] sm:$0xf]
        %v292 = vld [vmem:[%s276 + $0x38] sm:$0xf]
        %v293 = vld [vmem:[%s276 + $0x3c] sm:$0xf]
        %v294 = vld [vmem:[%s276 + $0x40] sm:$0xf]
        %v295 = vld [vmem:[%s276 + $0x44] sm:$0xf]
        %v296 = vld [vmem:[%s276 + $0x48] sm:$0xf]
        %v297 = vld [vmem:[%s276 + $0x4c] sm:$0xf]
        %v298 = vld [vmem:[%s276 + $0x50] sm:$0xf]
        %v299 = vld [vmem:[%s276 + $0x54] sm:$0xf]
        %v300 = vld [vmem:[%s276 + $0x58] sm:$0xf]
        %v301 = vld [vmem:[%s276 + $0x5c] sm:$0xf]
        %v302 = vld [vmem:[%s276 + $0x60] sm:$0xf]
        %v303 = vld [vmem:[%s276 + $0x64] sm:$0xf]
        %v304 = vld [vmem:[%s276 + $0x68] sm:$0xf]
        %v305 = vld [vmem:[%s276 + $0x6c] sm:$0xf]
        %v306 = vld [vmem:[%s276 + $0x70] sm:$0xf]
        %v307 = vld [vmem:[%s276 + $0x74] sm:$0xf]
        %v308 = vld [vmem:[%s276 + $0x78] sm:$0xf]
        %v309 = vld [vmem:[%s276 + $0x7c] sm:$0xf]
        %v342 = vrot.slane %v278, 3
        %v343 = vrot.slane %v279, 3
        %v344 = vrot.slane %v280, 3
        %v345 = vrot.slane %v281, 3
        %v346 = vrot.slane %v282, 3
        %v347 = vrot.slane %v283, 3
        %v348 = vrot.slane %v284, 3
        %v349 = vrot.slane %v285, 3
        %v350 = vrot.slane %v286, 3
        %v351 = vrot.slane %v287, 3
        %v352 = vrot.slane %v288, 3
        %v353 = vrot.slane %v289, 3
        %v354 = vrot.slane %v290, 3
        %v355 = vrot.slane %v291, 3
        %v356 = vrot.slane %v292, 3
        %v357 = vrot.slane %v293, 3
        %v358 = vrot.slane %v294, 3
        %v359 = vrot.slane %v295, 3
        %v360 = vrot.slane %v296, 3
        %v361 = vrot.slane %v297, 3
        %v362 = vrot.slane %v298, 3
        %v363 = vrot.slane %v299, 3
        %v364 = vrot.slane %v300, 3
        %v365 = vrot.slane %v301, 3
        %v366 = vrot.slane %v302, 3
        %v367 = vrot.slane %v303, 3
        %v368 = vrot.slane %v304, 3
        %v369 = vrot.slane %v305, 3
        %v370 = vrot.slane %v306, 3
        %v371 = vrot.slane %v307, 3
        %v372 = vrot.slane %v308, 3
        %v373 = vrot.slane %v309, 3
        %vm374 = vcmask 1040384
        %v377 = vsel %vm374, %v278, %v342
        %vm378 = vcmask 1041409
        %v379 = vsel %vm378, %v278, %v342
        %v381 = vrot.slane %v379, 1
        %vm382 = vcmask 1042434
        %v383 = vsel %vm382, %v278, %v342
        %v385 = vrot.slane %v383, 2
        %vm386 = vcmask 1043459
        %v387 = vsel %vm386, %v278, %v342
        %v389 = vrot.slane %v387, 3
        %v392 = vsel %vm374, %v279, %v343
        %v393 = vsel %vm378, %v279, %v343
        %v395 = vrot.slane %v393, 1
        %v396 = vsel %vm382, %v279, %v343
        %v398 = vrot.slane %v396, 2
        %v399 = vsel %vm386, %v279, %v343
        %v401 = vrot.slane %v399, 3
        %v404 = vsel %vm374, %v280, %v344
        %v405 = vsel %vm378, %v280, %v344
        %v407 = vrot.slane %v405, 1
        %v408 = vsel %vm382, %v280, %v344
        %v410 = vrot.slane %v408, 2
        %v411 = vsel %vm386, %v280, %v344
        %v413 = vrot.slane %v411, 3
        %v416 = vsel %vm374, %v281, %v345
        %v417 = vsel %vm378, %v281, %v345
        %v419 = vrot.slane %v417, 1
        %v420 = vsel %vm382, %v281, %v345
        %v422 = vrot.slane %v420, 2
        %v423 = vsel %vm386, %v281, %v345
        %v425 = vrot.slane %v423, 3
        %v428 = vsel %vm374, %v282, %v346
        %v429 = vsel %vm378, %v282, %v346
        %v431 = vrot.slane %v429, 1
        %v432 = vsel %vm382, %v282, %v346
        %v434 = vrot.slane %v432, 2
        %v435 = vsel %vm386, %v282, %v346
        %v437 = vrot.slane %v435, 3
        %v440 = vsel %vm374, %v283, %v347
        %v441 = vsel %vm378, %v283, %v347
        %v443 = vrot.slane %v441, 1
        %v444 = vsel %vm382, %v283, %v347
        %v446 = vrot.slane %v444, 2
        %v447 = vsel %vm386, %v283, %v347
        %v449 = vrot.slane %v447, 3
        %v452 = vsel %vm374, %v284, %v348
        %v453 = vsel %vm378, %v284, %v348
        %v455 = vrot.slane %v453, 1
        %v456 = vsel %vm382, %v284, %v348
        %v458 = vrot.slane %v456, 2
        %v459 = vsel %vm386, %v284, %v348
        %v461 = vrot.slane %v459, 3
        %v464 = vsel %vm374, %v285, %v349
        %v465 = vsel %vm378, %v285, %v349
        %v467 = vrot.slane %v465, 1
        %v468 = vsel %vm382, %v285, %v349
        %v470 = vrot.slane %v468, 2
        %v471 = vsel %vm386, %v285, %v349
        %v473 = vrot.slane %v471, 3
        %v476 = vsel %vm374, %v286, %v350
        %v477 = vsel %vm378, %v286, %v350
        %v479 = vrot.slane %v477, 1
        %v480 = vsel %vm382, %v286, %v350
        %v482 = vrot.slane %v480, 2
        %v483 = vsel %vm386, %v286, %v350
        %v485 = vrot.slane %v483, 3
        %v488 = vsel %vm374, %v287, %v351
        %v489 = vsel %vm378, %v287, %v351
        %v491 = vrot.slane %v489, 1
        %v492 = vsel %vm382, %v287, %v351
        %v494 = vrot.slane %v492, 2
        %v495 = vsel %vm386, %v287, %v351
        %v497 = vrot.slane %v495, 3
        %v500 = vsel %vm374, %v288, %v352
        %v501 = vsel %vm378, %v288, %v352
        %v503 = vrot.slane %v501, 1
        %v504 = vsel %vm382, %v288, %v352
        %v506 = vrot.slane %v504, 2
        %v507 = vsel %vm386, %v288, %v352
        %v509 = vrot.slane %v507, 3
        %v512 = vsel %vm374, %v289, %v353
        %v513 = vsel %vm378, %v289, %v353
        %v515 = vrot.slane %v513, 1
        %v516 = vsel %vm382, %v289, %v353
        %v518 = vrot.slane %v516, 2
        %v519 = vsel %vm386, %v289, %v353
        %v521 = vrot.slane %v519, 3
        %v524 = vsel %vm374, %v290, %v354
        %v525 = vsel %vm378, %v290, %v354
        %v527 = vrot.slane %v525, 1
        %v528 = vsel %vm382, %v290, %v354
        %v530 = vrot.slane %v528, 2
        %v531 = vsel %vm386, %v290, %v354
        %v533 = vrot.slane %v531, 3
        %v536 = vsel %vm374, %v291, %v355
        %v537 = vsel %vm378, %v291, %v355
        %v539 = vrot.slane %v537, 1
        %v540 = vsel %vm382, %v291, %v355
        %v542 = vrot.slane %v540, 2
        %v543 = vsel %vm386, %v291, %v355
        %v545 = vrot.slane %v543, 3
        %v548 = vsel %vm374, %v292, %v356
        %v549 = vsel %vm378, %v292, %v356
        %v551 = vrot.slane %v549, 1
        %v552 = vsel %vm382, %v292, %v356
        %v554 = vrot.slane %v552, 2
        %v555 = vsel %vm386, %v292, %v356
        %v557 = vrot.slane %v555, 3
        %v560 = vsel %vm374, %v293, %v357
        %v561 = vsel %vm378, %v293, %v357
        %v563 = vrot.slane %v561, 1
        %v564 = vsel %vm382, %v293, %v357
        %v566 = vrot.slane %v564, 2
        %v567 = vsel %vm386, %v293, %v357
        %v569 = vrot.slane %v567, 3
        %v572 = vsel %vm374, %v294, %v358
        %v573 = vsel %vm378, %v294, %v358
        %v575 = vrot.slane %v573, 1
        %v576 = vsel %vm382, %v294, %v358
        %v578 = vrot.slane %v576, 2
        %v579 = vsel %vm386, %v294, %v358
        %v581 = vrot.slane %v579, 3
        %v584 = vsel %vm374, %v295, %v359
        %v585 = vsel %vm378, %v295, %v359
        %v587 = vrot.slane %v585, 1
        %v588 = vsel %vm382, %v295, %v359
        %v590 = vrot.slane %v588, 2
        %v591 = vsel %vm386, %v295, %v359
        %v593 = vrot.slane %v591, 3
        %v596 = vsel %vm374, %v296, %v360
        %v597 = vsel %vm378, %v296, %v360
        %v599 = vrot.slane %v597, 1
        %v600 = vsel %vm382, %v296, %v360
        %v602 = vrot.slane %v600, 2
        %v603 = vsel %vm386, %v296, %v360
        %v605 = vrot.slane %v603, 3
        %v608 = vsel %vm374, %v297, %v361
        %v609 = vsel %vm378, %v297, %v361
        %v611 = vrot.slane %v609, 1
        %v612 = vsel %vm382, %v297, %v361
        %v614 = vrot.slane %v612, 2
        %v615 = vsel %vm386, %v297, %v361
        %v617 = vrot.slane %v615, 3
        %v620 = vsel %vm374, %v298, %v362
        %v621 = vsel %vm378, %v298, %v362
        %v623 = vrot.slane %v621, 1
        %v624 = vsel %vm382, %v298, %v362
        %v626 = vrot.slane %v624, 2
        %v627 = vsel %vm386, %v298, %v362
        %v629 = vrot.slane %v627, 3
        %v632 = vsel %vm374, %v299, %v363
        %v633 = vsel %vm378, %v299, %v363
        %v635 = vrot.slane %v633, 1
        %v636 = vsel %vm382, %v299, %v363
        %v638 = vrot.slane %v636, 2
        %v639 = vsel %vm386, %v299, %v363
        %v641 = vrot.slane %v639, 3
        %v644 = vsel %vm374, %v300, %v364
        %v645 = vsel %vm378, %v300, %v364
        %v647 = vrot.slane %v645, 1
        %v648 = vsel %vm382, %v300, %v364
        %v650 = vrot.slane %v648, 2
        %v651 = vsel %vm386, %v300, %v364
        %v653 = vrot.slane %v651, 3
        %v656 = vsel %vm374, %v301, %v365
        %v657 = vsel %vm378, %v301, %v365
        %v659 = vrot.slane %v657, 1
        %v660 = vsel %vm382, %v301, %v365
        %v662 = vrot.slane %v660, 2
        %v663 = vsel %vm386, %v301, %v365
        %v665 = vrot.slane %v663, 3
        %v668 = vsel %vm374, %v302, %v366
        %v669 = vsel %vm378, %v302, %v366
        %v671 = vrot.slane %v669, 1
        %v672 = vsel %vm382, %v302, %v366
        %v674 = vrot.slane %v672, 2
        %v675 = vsel %vm386, %v302, %v366
        %v677 = vrot.slane %v675, 3
        %v680 = vsel %vm374, %v303, %v367
        %v681 = vsel %vm378, %v303, %v367
        %v683 = vrot.slane %v681, 1
        %v684 = vsel %vm382, %v303, %v367
        %v686 = vrot.slane %v684, 2
        %v687 = vsel %vm386, %v303, %v367
        %v689 = vrot.slane %v687, 3
        %v692 = vsel %vm374, %v304, %v368
        %v693 = vsel %vm378, %v304, %v368
        %v695 = vrot.slane %v693, 1
        %v696 = vsel %vm382, %v304, %v368
        %v698 = vrot.slane %v696, 2
        %v699 = vsel %vm386, %v304, %v368
        %v701 = vrot.slane %v699, 3
        %v704 = vsel %vm374, %v305, %v369
        %v705 = vsel %vm378, %v305, %v369
        %v707 = vrot.slane %v705, 1
        %v708 = vsel %vm382, %v305, %v369
        %v710 = vrot.slane %v708, 2
        %v711 = vsel %vm386, %v305, %v369
        %v713 = vrot.slane %v711, 3
        %v716 = vsel %vm374, %v306, %v370
        %v717 = vsel %vm378, %v306, %v370
        %v719 = vrot.slane %v717, 1
        %v720 = vsel %vm382, %v306, %v370
        %v722 = vrot.slane %v720, 2
        %v723 = vsel %vm386, %v306, %v370
        %v725 = vrot.slane %v723, 3
        %v728 = vsel %vm374, %v307, %v371
        %v729 = vsel %vm378, %v307, %v371
        %v731 = vrot.slane %v729, 1
        %v732 = vsel %vm382, %v307, %v371
        %v734 = vrot.slane %v732, 2
        %v735 = vsel %vm386, %v307, %v371
        %v737 = vrot.slane %v735, 3
        %v740 = vsel %vm374, %v308, %v372
        %v741 = vsel %vm378, %v308, %v372
        %v743 = vrot.slane %v741, 1
        %v744 = vsel %vm382, %v308, %v372
        %v746 = vrot.slane %v744, 2
        %v747 = vsel %vm386, %v308, %v372
        %v749 = vrot.slane %v747, 3
        %v752 = vsel %vm374, %v309, %v373
        %v753 = vsel %vm378, %v309, %v373
        %v755 = vrot.slane %v753, 1
        %v756 = vsel %vm382, %v309, %v373
        %v758 = vrot.slane %v756, 2
        %v759 = vsel %vm386, %v309, %v373
        %v761 = vrot.slane %v759, 3
        %v890 = vunpack.c.l.bf16 %v377
        %v891 = vunpack.c.l.bf16 %v381
        %v892 = vunpack.c.l.bf16 %v385
        %v893 = vunpack.c.l.bf16 %v389
        %v894 = vunpack.c.l.bf16 %v392
        %v895 = vunpack.c.l.bf16 %v395
        %v896 = vunpack.c.l.bf16 %v398
        %v897 = vunpack.c.l.bf16 %v401
        %v898 = vunpack.c.l.bf16 %v404
        %v899 = vunpack.c.l.bf16 %v407
        %v900 = vunpack.c.l.bf16 %v410
        %v901 = vunpack.c.l.bf16 %v413
        %v902 = vunpack.c.l.bf16 %v416
        %v903 = vunpack.c.l.bf16 %v419
        %v904 = vunpack.c.l.bf16 %v422
        %v905 = vunpack.c.l.bf16 %v425
        %v906 = vunpack.c.l.bf16 %v428
        %v907 = vunpack.c.l.bf16 %v431
        %v908 = vunpack.c.l.bf16 %v434
        %v909 = vunpack.c.l.bf16 %v437
        %v910 = vunpack.c.l.bf16 %v440
        %v911 = vunpack.c.l.bf16 %v443
        %v912 = vunpack.c.l.bf16 %v446
        %v913 = vunpack.c.l.bf16 %v449
        %v914 = vunpack.c.l.bf16 %v452
        %v915 = vunpack.c.l.bf16 %v455
        %v916 = vunpack.c.l.bf16 %v458
        %v917 = vunpack.c.l.bf16 %v461
        %v918 = vunpack.c.l.bf16 %v464
        %v919 = vunpack.c.l.bf16 %v467
        %v920 = vunpack.c.l.bf16 %v470
        %v921 = vunpack.c.l.bf16 %v473
        %v922 = vunpack.c.l.bf16 %v476
        %v923 = vunpack.c.l.bf16 %v479
        %v924 = vunpack.c.l.bf16 %v482
        %v925 = vunpack.c.l.bf16 %v485
        %v926 = vunpack.c.l.bf16 %v488
        %v927 = vunpack.c.l.bf16 %v491
        %v928 = vunpack.c.l.bf16 %v494
        %v929 = vunpack.c.l.bf16 %v497
        %v930 = vunpack.c.l.bf16 %v500
        %v931 = vunpack.c.l.bf16 %v503
        %v932 = vunpack.c.l.bf16 %v506
        %v933 = vunpack.c.l.bf16 %v509
        %v934 = vunpack.c.l.bf16 %v512
        %v935 = vunpack.c.l.bf16 %v515
        %v936 = vunpack.c.l.bf16 %v518
        %v937 = vunpack.c.l.bf16 %v521
        %v938 = vunpack.c.l.bf16 %v524
        %v939 = vunpack.c.l.bf16 %v527
        %v940 = vunpack.c.l.bf16 %v530
        %v941 = vunpack.c.l.bf16 %v533
        %v942 = vunpack.c.l.bf16 %v536
        %v943 = vunpack.c.l.bf16 %v539
        %v944 = vunpack.c.l.bf16 %v542
        %v945 = vunpack.c.l.bf16 %v545
        %v946 = vunpack.c.l.bf16 %v548
        %v947 = vunpack.c.l.bf16 %v551
        %v948 = vunpack.c.l.bf16 %v554
        %v949 = vunpack.c.l.bf16 %v557
        %v950 = vunpack.c.l.bf16 %v560
        %v951 = vunpack.c.l.bf16 %v563
        %v952 = vunpack.c.l.bf16 %v566
        %v953 = vunpack.c.l.bf16 %v569
        %v954 = vunpack.c.l.bf16 %v572
        %v955 = vunpack.c.l.bf16 %v575
        %v956 = vunpack.c.l.bf16 %v578
        %v957 = vunpack.c.l.bf16 %v581
        %v958 = vunpack.c.l.bf16 %v584
        %v959 = vunpack.c.l.bf16 %v587
        %v960 = vunpack.c.l.bf16 %v590
        %v961 = vunpack.c.l.bf16 %v593
        %v962 = vunpack.c.l.bf16 %v596
        %v963 = vunpack.c.l.bf16 %v599
        %v964 = vunpack.c.l.bf16 %v602
        %v965 = vunpack.c.l.bf16 %v605
        %v966 = vunpack.c.l.bf16 %v608
        %v967 = vunpack.c.l.bf16 %v611
        %v968 = vunpack.c.l.bf16 %v614
        %v969 = vunpack.c.l.bf16 %v617
        %v970 = vunpack.c.l.bf16 %v620
        %v971 = vunpack.c.l.bf16 %v623
        %v972 = vunpack.c.l.bf16 %v626
        %v973 = vunpack.c.l.bf16 %v629
        %v974 = vunpack.c.l.bf16 %v632
        %v975 = vunpack.c.l.bf16 %v635
        %v976 = vunpack.c.l.bf16 %v638
        %v977 = vunpack.c.l.bf16 %v641
        %v978 = vunpack.c.l.bf16 %v644
        %v979 = vunpack.c.l.bf16 %v647
        %v980 = vunpack.c.l.bf16 %v650
        %v981 = vunpack.c.l.bf16 %v653
        %v982 = vunpack.c.l.bf16 %v656
        %v983 = vunpack.c.l.bf16 %v659
        %v984 = vunpack.c.l.bf16 %v662
        %v985 = vunpack.c.l.bf16 %v665
        %v986 = vunpack.c.l.bf16 %v668
        %v987 = vunpack.c.l.bf16 %v671
        %v988 = vunpack.c.l.bf16 %v674
        %v989 = vunpack.c.l.bf16 %v677
        %v990 = vunpack.c.l.bf16 %v680
        %v991 = vunpack.c.l.bf16 %v683
        %v992 = vunpack.c.l.bf16 %v686
        %v993 = vunpack.c.l.bf16 %v689
        %v994 = vunpack.c.l.bf16 %v692
        %v995 = vunpack.c.l.bf16 %v695
        %v996 = vunpack.c.l.bf16 %v698
        %v997 = vunpack.c.l.bf16 %v701
        %v998 = vunpack.c.l.bf16 %v704
        %v999 = vunpack.c.l.bf16 %v707
        %v1000 = vunpack.c.l.bf16 %v710
        %v1001 = vunpack.c.l.bf16 %v713
        %v1002 = vunpack.c.l.bf16 %v716
        %v1003 = vunpack.c.l.bf16 %v719
        %v1004 = vunpack.c.l.bf16 %v722
        %v1005 = vunpack.c.l.bf16 %v725
        %v1006 = vunpack.c.l.bf16 %v728
        %v1007 = vunpack.c.l.bf16 %v731
        %v1008 = vunpack.c.l.bf16 %v734
        %v1009 = vunpack.c.l.bf16 %v737
        %v1010 = vunpack.c.l.bf16 %v740
        %v1011 = vunpack.c.l.bf16 %v743
        %v1012 = vunpack.c.l.bf16 %v746
        %v1013 = vunpack.c.l.bf16 %v749
        %v1014 = vunpack.c.l.bf16 %v752
        %v1015 = vunpack.c.l.bf16 %v755
        %v1016 = vunpack.c.l.bf16 %v758
        %v1017 = vunpack.c.l.bf16 %v761
        %v1146 = vrot.slane %v890, 7
        %v1147 = vrot.slane %v1146, 2
        %v1148 = vrot.slane %v891, 7
        %v1149 = vrot.slane %v1148, 2
        %v1150 = vrot.slane %v892, 7
        %v1151 = vrot.slane %v1150, 2
        %v1152 = vrot.slane %v893, 7
        %v1153 = vrot.slane %v1152, 2
        %v1154 = vrot.slane %v894, 7
        %v1155 = vrot.slane %v1154, 2
        %v1156 = vrot.slane %v895, 7
        %v1157 = vrot.slane %v1156, 2
        %v1158 = vrot.slane %v896, 7
        %v1159 = vrot.slane %v1158, 2
        %v1160 = vrot.slane %v897, 7
        %v1161 = vrot.slane %v1160, 2
        %v1162 = vrot.slane %v898, 7
        %v1163 = vrot.slane %v1162, 2
        %v1164 = vrot.slane %v899, 7
        %v1165 = vrot.slane %v1164, 2
        %v1166 = vrot.slane %v900, 7
        %v1167 = vrot.slane %v1166, 2
        %v1168 = vrot.slane %v901, 7
        %v1169 = vrot.slane %v1168, 2
        %v1170 = vrot.slane %v902, 7
        %v1171 = vrot.slane %v1170, 2
        %v1172 = vrot.slane %v903, 7
        %v1173 = vrot.slane %v1172, 2
        %v1174 = vrot.slane %v904, 7
        %v1175 = vrot.slane %v1174, 2
        %v1176 = vrot.slane %v905, 7
        %v1177 = vrot.slane %v1176, 2
        %v1178 = vrot.slane %v906, 7
        %v1179 = vrot.slane %v1178, 2
        %v1180 = vrot.slane %v907, 7
        %v1181 = vrot.slane %v1180, 2
        %v1182 = vrot.slane %v908, 7
        %v1183 = vrot.slane %v1182, 2
        %v1184 = vrot.slane %v909, 7
        %v1185 = vrot.slane %v1184, 2
        %v1186 = vrot.slane %v910, 7
        %v1187 = vrot.slane %v1186, 2
        %v1188 = vrot.slane %v911, 7
        %v1189 = vrot.slane %v1188, 2
        %v1190 = vrot.slane %v912, 7
        %v1191 = vrot.slane %v1190, 2
        %v1192 = vrot.slane %v913, 7
        %v1193 = vrot.slane %v1192, 2
        %v1194 = vrot.slane %v914, 7
        %v1195 = vrot.slane %v1194, 2
        %v1196 = vrot.slane %v915, 7
        %v1197 = vrot.slane %v1196, 2
        %v1198 = vrot.slane %v916, 7
        %v1199 = vrot.slane %v1198, 2
        %v1200 = vrot.slane %v917, 7
        %v1201 = vrot.slane %v1200, 2
        %v1202 = vrot.slane %v918, 7
        %v1203 = vrot.slane %v1202, 2
        %v1204 = vrot.slane %v919, 7
        %v1205 = vrot.slane %v1204, 2
        %v1206 = vrot.slane %v920, 7
        %v1207 = vrot.slane %v1206, 2
        %v1208 = vrot.slane %v921, 7
        %v1209 = vrot.slane %v1208, 2
        %v1210 = vrot.slane %v922, 7
        %v1211 = vrot.slane %v1210, 2
        %v1212 = vrot.slane %v923, 7
        %v1213 = vrot.slane %v1212, 2
        %v1214 = vrot.slane %v924, 7
        %v1215 = vrot.slane %v1214, 2
        %v1216 = vrot.slane %v925, 7
        %v1217 = vrot.slane %v1216, 2
        %v1218 = vrot.slane %v926, 7
        %v1219 = vrot.slane %v1218, 2
        %v1220 = vrot.slane %v927, 7
        %v1221 = vrot.slane %v1220, 2
        %v1222 = vrot.slane %v928, 7
        %v1223 = vrot.slane %v1222, 2
        %v1224 = vrot.slane %v929, 7
        %v1225 = vrot.slane %v1224, 2
        %v1226 = vrot.slane %v930, 7
        %v1227 = vrot.slane %v1226, 2
        %v1228 = vrot.slane %v931, 7
        %v1229 = vrot.slane %v1228, 2
        %v1230 = vrot.slane %v932, 7
        %v1231 = vrot.slane %v1230, 2
        %v1232 = vrot.slane %v933, 7
        %v1233 = vrot.slane %v1232, 2
        %v1234 = vrot.slane %v934, 7
        %v1235 = vrot.slane %v1234, 2
        %v1236 = vrot.slane %v935, 7
        %v1237 = vrot.slane %v1236, 2
        %v1238 = vrot.slane %v936, 7
        %v1239 = vrot.slane %v1238, 2
        %v1240 = vrot.slane %v937, 7
        %v1241 = vrot.slane %v1240, 2
        %v1242 = vrot.slane %v938, 7
        %v1243 = vrot.slane %v1242, 2
        %v1244 = vrot.slane %v939, 7
        %v1245 = vrot.slane %v1244, 2
        %v1246 = vrot.slane %v940, 7
        %v1247 = vrot.slane %v1246, 2
        %v1248 = vrot.slane %v941, 7
        %v1249 = vrot.slane %v1248, 2
        %v1250 = vrot.slane %v942, 7
        %v1251 = vrot.slane %v1250, 2
        %v1252 = vrot.slane %v943, 7
        %v1253 = vrot.slane %v1252, 2
        %v1254 = vrot.slane %v944, 7
        %v1255 = vrot.slane %v1254, 2
        %v1256 = vrot.slane %v945, 7
        %v1257 = vrot.slane %v1256, 2
        %v1258 = vrot.slane %v946, 7
        %v1259 = vrot.slane %v1258, 2
        %v1260 = vrot.slane %v947, 7
        %v1261 = vrot.slane %v1260, 2
        %v1262 = vrot.slane %v948, 7
        %v1263 = vrot.slane %v1262, 2
        %v1264 = vrot.slane %v949, 7
        %v1265 = vrot.slane %v1264, 2
        %v1266 = vrot.slane %v950, 7
        %v1267 = vrot.slane %v1266, 2
        %v1268 = vrot.slane %v951, 7
        %v1269 = vrot.slane %v1268, 2
        %v1270 = vrot.slane %v952, 7
        %v1271 = vrot.slane %v1270, 2
        %v1272 = vrot.slane %v953, 7
        %v1273 = vrot.slane %v1272, 2
        %v1274 = vrot.slane %v954, 7
        %v1275 = vrot.slane %v1274, 2
        %v1276 = vrot.slane %v955, 7
        %v1277 = vrot.slane %v1276, 2
        %v1278 = vrot.slane %v956, 7
        %v1279 = vrot.slane %v1278, 2
        %v1280 = vrot.slane %v957, 7
        %v1281 = vrot.slane %v1280, 2
        %v1282 = vrot.slane %v958, 7
        %v1283 = vrot.slane %v1282, 2
        %v1284 = vrot.slane %v959, 7
        %v1285 = vrot.slane %v1284, 2
        %v1286 = vrot.slane %v960, 7
        %v1287 = vrot.slane %v1286, 2
        %v1288 = vrot.slane %v961, 7
        %v1289 = vrot.slane %v1288, 2
        %v1290 = vrot.slane %v962, 7
        %v1291 = vrot.slane %v1290, 2
        %v1292 = vrot.slane %v963, 7
        %v1293 = vrot.slane %v1292, 2
        %v1294 = vrot.slane %v964, 7
        %v1295 = vrot.slane %v1294, 2
        %v1296 = vrot.slane %v965, 7
        %v1297 = vrot.slane %v1296, 2
        %v1298 = vrot.slane %v966, 7
        %v1299 = vrot.slane %v1298, 2
        %v1300 = vrot.slane %v967, 7
        %v1301 = vrot.slane %v1300, 2
        %v1302 = vrot.slane %v968, 7
        %v1303 = vrot.slane %v1302, 2
        %v1304 = vrot.slane %v969, 7
        %v1305 = vrot.slane %v1304, 2
        %v1306 = vrot.slane %v970, 7
        %v1307 = vrot.slane %v1306, 2
        %v1308 = vrot.slane %v971, 7
        %v1309 = vrot.slane %v1308, 2
        %v1310 = vrot.slane %v972, 7
        %v1311 = vrot.slane %v1310, 2
        %v1312 = vrot.slane %v973, 7
        %v1313 = vrot.slane %v1312, 2
        %v1314 = vrot.slane %v974, 7
        %v1315 = vrot.slane %v1314, 2
        %v1316 = vrot.slane %v975, 7
        %v1317 = vrot.slane %v1316, 2
        %v1318 = vrot.slane %v976, 7
        %v1319 = vrot.slane %v1318, 2
        %v1320 = vrot.slane %v977, 7
        %v1321 = vrot.slane %v1320, 2
        %v1322 = vrot.slane %v978, 7
        %v1323 = vrot.slane %v1322, 2
        %v1324 = vrot.slane %v979, 7
        %v1325 = vrot.slane %v1324, 2
        %v1326 = vrot.slane %v980, 7
        %v1327 = vrot.slane %v1326, 2
        %v1328 = vrot.slane %v981, 7
        %v1329 = vrot.slane %v1328, 2
        %v1330 = vrot.slane %v982, 7
        %v1331 = vrot.slane %v1330, 2
        %v1332 = vrot.slane %v983, 7
        %v1333 = vrot.slane %v1332, 2
        %v1334 = vrot.slane %v984, 7
        %v1335 = vrot.slane %v1334, 2
        %v1336 = vrot.slane %v985, 7
        %v1337 = vrot.slane %v1336, 2
        %v1338 = vrot.slane %v986, 7
        %v1339 = vrot.slane %v1338, 2
        %v1340 = vrot.slane %v987, 7
        %v1341 = vrot.slane %v1340, 2
        %v1342 = vrot.slane %v988, 7
        %v1343 = vrot.slane %v1342, 2
        %v1344 = vrot.slane %v989, 7
        %v1345 = vrot.slane %v1344, 2
        %v1346 = vrot.slane %v990, 7
        %v1347 = vrot.slane %v1346, 2
        %v1348 = vrot.slane %v991, 7
        %v1349 = vrot.slane %v1348, 2
        %v1350 = vrot.slane %v992, 7
        %v1351 = vrot.slane %v1350, 2
        %v1352 = vrot.slane %v993, 7
        %v1353 = vrot.slane %v1352, 2
        %v1354 = vrot.slane %v994, 7
        %v1355 = vrot.slane %v1354, 2
        %v1356 = vrot.slane %v995, 7
        %v1357 = vrot.slane %v1356, 2
        %v1358 = vrot.slane %v996, 7
        %v1359 = vrot.slane %v1358, 2
        %v1360 = vrot.slane %v997, 7
        %v1361 = vrot.slane %v1360, 2
        %v1362 = vrot.slane %v998, 7
        %v1363 = vrot.slane %v1362, 2
        %v1364 = vrot.slane %v999, 7
        %v1365 = vrot.slane %v1364, 2
        %v1366 = vrot.slane %v1000, 7
        %v1367 = vrot.slane %v1366, 2
        %v1368 = vrot.slane %v1001, 7
        %v1369 = vrot.slane %v1368, 2
        %v1370 = vrot.slane %v1002, 7
        %v1371 = vrot.slane %v1370, 2
        %v1372 = vrot.slane %v1003, 7
        %v1373 = vrot.slane %v1372, 2
        %v1374 = vrot.slane %v1004, 7
        %v1375 = vrot.slane %v1374, 2
        %v1376 = vrot.slane %v1005, 7
        %v1377 = vrot.slane %v1376, 2
        %v1378 = vrot.slane %v1006, 7
        %v1379 = vrot.slane %v1378, 2
        %v1380 = vrot.slane %v1007, 7
        %v1381 = vrot.slane %v1380, 2
        %v1382 = vrot.slane %v1008, 7
        %v1383 = vrot.slane %v1382, 2
        %v1384 = vrot.slane %v1009, 7
        %v1385 = vrot.slane %v1384, 2
        %v1386 = vrot.slane %v1010, 7
        %v1387 = vrot.slane %v1386, 2
        %v1388 = vrot.slane %v1011, 7
        %v1389 = vrot.slane %v1388, 2
        %v1390 = vrot.slane %v1012, 7
        %v1391 = vrot.slane %v1390, 2
        %v1392 = vrot.slane %v1013, 7
        %v1393 = vrot.slane %v1392, 2
        %v1394 = vrot.slane %v1014, 7
        %v1395 = vrot.slane %v1394, 2
        %v1396 = vrot.slane %v1015, 7
        %v1397 = vrot.slane %v1396, 2
        %v1398 = vrot.slane %v1016, 7
        %v1399 = vrot.slane %v1398, 2
        %v1400 = vrot.slane %v1017, 7
        %v1401 = vrot.slane %v1400, 2
        %v1530 = vadd.f32 %v890, %v1147
        %v1531 = vadd.f32 %v891, %v1149
        %v1532 = vadd.f32 %v892, %v1151
        %v1533 = vadd.f32 %v893, %v1153
        %v1534 = vadd.f32 %v894, %v1155
        %v1535 = vadd.f32 %v895, %v1157
        %v1536 = vadd.f32 %v896, %v1159
        %v1537 = vadd.f32 %v897, %v1161
        %v1538 = vadd.f32 %v898, %v1163
        %v1539 = vadd.f32 %v899, %v1165
        %v1540 = vadd.f32 %v900, %v1167
        %v1541 = vadd.f32 %v901, %v1169
        %v1542 = vadd.f32 %v902, %v1171
        %v1543 = vadd.f32 %v903, %v1173
        %v1544 = vadd.f32 %v904, %v1175
        %v1545 = vadd.f32 %v905, %v1177
        %v1546 = vadd.f32 %v906, %v1179
        %v1547 = vadd.f32 %v907, %v1181
        %v1548 = vadd.f32 %v908, %v1183
        %v1549 = vadd.f32 %v909, %v1185
        %v1550 = vadd.f32 %v910, %v1187
        %v1551 = vadd.f32 %v911, %v1189
        %v1552 = vadd.f32 %v912, %v1191
        %v1553 = vadd.f32 %v913, %v1193
        %v1554 = vadd.f32 %v914, %v1195
        %v1555 = vadd.f32 %v915, %v1197
        %v1556 = vadd.f32 %v916, %v1199
        %v1557 = vadd.f32 %v917, %v1201
        %v1558 = vadd.f32 %v918, %v1203
        %v1559 = vadd.f32 %v919, %v1205
        %v1560 = vadd.f32 %v920, %v1207
        %v1561 = vadd.f32 %v921, %v1209
        %v1562 = vadd.f32 %v922, %v1211
        %v1563 = vadd.f32 %v923, %v1213
        %v1564 = vadd.f32 %v924, %v1215
        %v1565 = vadd.f32 %v925, %v1217
        %v1566 = vadd.f32 %v926, %v1219
        %v1567 = vadd.f32 %v927, %v1221
        %v1568 = vadd.f32 %v928, %v1223
        %v1569 = vadd.f32 %v929, %v1225
        %v1570 = vadd.f32 %v930, %v1227
        %v1571 = vadd.f32 %v931, %v1229
        %v1572 = vadd.f32 %v932, %v1231
        %v1573 = vadd.f32 %v933, %v1233
        %v1574 = vadd.f32 %v934, %v1235
        %v1575 = vadd.f32 %v935, %v1237
        %v1576 = vadd.f32 %v936, %v1239
        %v1577 = vadd.f32 %v937, %v1241
        %v1578 = vadd.f32 %v938, %v1243
        %v1579 = vadd.f32 %v939, %v1245
        %v1580 = vadd.f32 %v940, %v1247
        %v1581 = vadd.f32 %v941, %v1249
        %v1582 = vadd.f32 %v942, %v1251
        %v1583 = vadd.f32 %v943, %v1253
        %v1584 = vadd.f32 %v944, %v1255
        %v1585 = vadd.f32 %v945, %v1257
        %v1586 = vadd.f32 %v946, %v1259
        %v1587 = vadd.f32 %v947, %v1261
        %v1588 = vadd.f32 %v948, %v1263
        %v1589 = vadd.f32 %v949, %v1265
        %v1590 = vadd.f32 %v950, %v1267
        %v1591 = vadd.f32 %v951, %v1269
        %v1592 = vadd.f32 %v952, %v1271
        %v1593 = vadd.f32 %v953, %v1273
        %v1594 = vadd.f32 %v954, %v1275
        %v1595 = vadd.f32 %v955, %v1277
        %v1596 = vadd.f32 %v956, %v1279
        %v1597 = vadd.f32 %v957, %v1281
        %v1598 = vadd.f32 %v958, %v1283
        %v1599 = vadd.f32 %v959, %v1285
        %v1600 = vadd.f32 %v960, %v1287
        %v1601 = vadd.f32 %v961, %v1289
        %v1602 = vadd.f32 %v962, %v1291
        %v1603 = vadd.f32 %v963, %v1293
        %v1604 = vadd.f32 %v964, %v1295
        %v1605 = vadd.f32 %v965, %v1297
        %v1606 = vadd.f32 %v966, %v1299
        %v1607 = vadd.f32 %v967, %v1301
        %v1608 = vadd.f32 %v968, %v1303
        %v1609 = vadd.f32 %v969, %v1305
        %v1610 = vadd.f32 %v970, %v1307
        %v1611 = vadd.f32 %v971, %v1309
        %v1612 = vadd.f32 %v972, %v1311
        %v1613 = vadd.f32 %v973, %v1313
        %v1614 = vadd.f32 %v974, %v1315
        %v1615 = vadd.f32 %v975, %v1317
        %v1616 = vadd.f32 %v976, %v1319
        %v1617 = vadd.f32 %v977, %v1321
        %v1618 = vadd.f32 %v978, %v1323
        %v1619 = vadd.f32 %v979, %v1325
        %v1620 = vadd.f32 %v980, %v1327
        %v1621 = vadd.f32 %v981, %v1329
        %v1622 = vadd.f32 %v982, %v1331
        %v1623 = vadd.f32 %v983, %v1333
        %v1624 = vadd.f32 %v984, %v1335
        %v1625 = vadd.f32 %v985, %v1337
        %v1626 = vadd.f32 %v986, %v1339
        %v1627 = vadd.f32 %v987, %v1341
        %v1628 = vadd.f32 %v988, %v1343
        %v1629 = vadd.f32 %v989, %v1345
        %v1630 = vadd.f32 %v990, %v1347
        %v1631 = vadd.f32 %v991, %v1349
        %v1632 = vadd.f32 %v992, %v1351
        %v1633 = vadd.f32 %v993, %v1353
        %v1634 = vadd.f32 %v994, %v1355
        %v1635 = vadd.f32 %v995, %v1357
        %v1636 = vadd.f32 %v996, %v1359
        %v1637 = vadd.f32 %v997, %v1361
        %v1638 = vadd.f32 %v998, %v1363
        %v1639 = vadd.f32 %v999, %v1365
        %v1640 = vadd.f32 %v1000, %v1367
        %v1641 = vadd.f32 %v1001, %v1369
        %v1642 = vadd.f32 %v1002, %v1371
        %v1643 = vadd.f32 %v1003, %v1373
        %v1644 = vadd.f32 %v1004, %v1375
        %v1645 = vadd.f32 %v1005, %v1377
        %v1646 = vadd.f32 %v1006, %v1379
        %v1647 = vadd.f32 %v1007, %v1381
        %v1648 = vadd.f32 %v1008, %v1383
        %v1649 = vadd.f32 %v1009, %v1385
        %v1650 = vadd.f32 %v1010, %v1387
        %v1651 = vadd.f32 %v1011, %v1389
        %v1652 = vadd.f32 %v1012, %v1391
        %v1653 = vadd.f32 %v1013, %v1393
        %v1654 = vadd.f32 %v1014, %v1395
        %v1655 = vadd.f32 %v1015, %v1397
        %v1656 = vadd.f32 %v1016, %v1399
        %v1657 = vadd.f32 %v1017, %v1401
        %v1658 = vadd.f32 %v1530, %v1538
        %v1659 = vadd.f32 %v1531, %v1539
        %v1660 = vadd.f32 %v1532, %v1540
        %v1661 = vadd.f32 %v1533, %v1541
        %v1662 = vadd.f32 %v1534, %v1542
        %v1663 = vadd.f32 %v1535, %v1543
        %v1664 = vadd.f32 %v1536, %v1544
        %v1665 = vadd.f32 %v1537, %v1545
        %v1666 = vadd.f32 %v1546, %v1554
        %v1667 = vadd.f32 %v1547, %v1555
        %v1668 = vadd.f32 %v1548, %v1556
        %v1669 = vadd.f32 %v1549, %v1557
        %v1670 = vadd.f32 %v1550, %v1558
        %v1671 = vadd.f32 %v1551, %v1559
        %v1672 = vadd.f32 %v1552, %v1560
        %v1673 = vadd.f32 %v1553, %v1561
        %v1674 = vadd.f32 %v1562, %v1570
        %v1675 = vadd.f32 %v1563, %v1571
        %v1676 = vadd.f32 %v1564, %v1572
        %v1677 = vadd.f32 %v1565, %v1573
        %v1678 = vadd.f32 %v1566, %v1574
        %v1679 = vadd.f32 %v1567, %v1575
        %v1680 = vadd.f32 %v1568, %v1576
        %v1681 = vadd.f32 %v1569, %v1577
        %v1682 = vadd.f32 %v1578, %v1586
        %v1683 = vadd.f32 %v1579, %v1587
        %v1684 = vadd.f32 %v1580, %v1588
        %v1685 = vadd.f32 %v1581, %v1589
        %v1686 = vadd.f32 %v1582, %v1590
        %v1687 = vadd.f32 %v1583, %v1591
        %v1688 = vadd.f32 %v1584, %v1592
        %v1689 = vadd.f32 %v1585, %v1593
        %v1690 = vadd.f32 %v1594, %v1602
        %v1691 = vadd.f32 %v1595, %v1603
        %v1692 = vadd.f32 %v1596, %v1604
        %v1693 = vadd.f32 %v1597, %v1605
        %v1694 = vadd.f32 %v1598, %v1606
        %v1695 = vadd.f32 %v1599, %v1607
        %v1696 = vadd.f32 %v1600, %v1608
        %v1697 = vadd.f32 %v1601, %v1609
        %v1698 = vadd.f32 %v1610, %v1618
        %v1699 = vadd.f32 %v1611, %v1619
        %v1700 = vadd.f32 %v1612, %v1620
        %v1701 = vadd.f32 %v1613, %v1621
        %v1702 = vadd.f32 %v1614, %v1622
        %v1703 = vadd.f32 %v1615, %v1623
        %v1704 = vadd.f32 %v1616, %v1624
        %v1705 = vadd.f32 %v1617, %v1625
        %v1706 = vadd.f32 %v1626, %v1634
        %v1707 = vadd.f32 %v1627, %v1635
        %v1708 = vadd.f32 %v1628, %v1636
        %v1709 = vadd.f32 %v1629, %v1637
        %v1710 = vadd.f32 %v1630, %v1638
        %v1711 = vadd.f32 %v1631, %v1639
        %v1712 = vadd.f32 %v1632, %v1640
        %v1713 = vadd.f32 %v1633, %v1641
        %v1714 = vadd.f32 %v1642, %v1650
        %v1715 = vadd.f32 %v1643, %v1651
        %v1716 = vadd.f32 %v1644, %v1652
        %v1717 = vadd.f32 %v1645, %v1653
        %v1718 = vadd.f32 %v1646, %v1654
        %v1719 = vadd.f32 %v1647, %v1655
        %v1720 = vadd.f32 %v1648, %v1656
        %v1721 = vadd.f32 %v1649, %v1657
        %v1722 = vmul.f32 %v1658, 0.25
        %v1723 = vmul.f32 %v1659, 0.25
        %v1724 = vmul.f32 %v1660, 0.25
        %v1725 = vmul.f32 %v1661, 0.25
        %v1726 = vmul.f32 %v1662, 0.25
        %v1727 = vmul.f32 %v1663, 0.25
        %v1728 = vmul.f32 %v1664, 0.25
        %v1729 = vmul.f32 %v1665, 0.25
        %v1730 = vmul.f32 %v1666, 0.25
        %v1731 = vmul.f32 %v1667, 0.25
        %v1732 = vmul.f32 %v1668, 0.25
        %v1733 = vmul.f32 %v1669, 0.25
        %v1734 = vmul.f32 %v1670, 0.25
        %v1735 = vmul.f32 %v1671, 0.25
        %v1736 = vmul.f32 %v1672, 0.25
        %v1737 = vmul.f32 %v1673, 0.25
        %v1738 = vmul.f32 %v1674, 0.25
        %v1739 = vmul.f32 %v1675, 0.25
        %v1740 = vmul.f32 %v1676, 0.25
        %v1741 = vmul.f32 %v1677, 0.25
        %v1742 = vmul.f32 %v1678, 0.25
        %v1743 = vmul.f32 %v1679, 0.25
        %v1744 = vmul.f32 %v1680, 0.25
        %v1745 = vmul.f32 %v1681, 0.25
        %v1746 = vmul.f32 %v1682, 0.25
        %v1747 = vmul.f32 %v1683, 0.25
        %v1748 = vmul.f32 %v1684, 0.25
        %v1749 = vmul.f32 %v1685, 0.25
        %v1750 = vmul.f32 %v1686, 0.25
        %v1751 = vmul.f32 %v1687, 0.25
        %v1752 = vmul.f32 %v1688, 0.25
        %v1753 = vmul.f32 %v1689, 0.25
        %v1754 = vmul.f32 %v1690, 0.25
        %v1755 = vmul.f32 %v1691, 0.25
        %v1756 = vmul.f32 %v1692, 0.25
        %v1757 = vmul.f32 %v1693, 0.25
        %v1758 = vmul.f32 %v1694, 0.25
        %v1759 = vmul.f32 %v1695, 0.25
        %v1760 = vmul.f32 %v1696, 0.25
        %v1761 = vmul.f32 %v1697, 0.25
        %v1762 = vmul.f32 %v1698, 0.25
        %v1763 = vmul.f32 %v1699, 0.25
        %v1764 = vmul.f32 %v1700, 0.25
        %v1765 = vmul.f32 %v1701, 0.25
        %v1766 = vmul.f32 %v1702, 0.25
        %v1767 = vmul.f32 %v1703, 0.25
        %v1768 = vmul.f32 %v1704, 0.25
        %v1769 = vmul.f32 %v1705, 0.25
        %v1770 = vmul.f32 %v1706, 0.25
        %v1771 = vmul.f32 %v1707, 0.25
        %v1772 = vmul.f32 %v1708, 0.25
        %v1773 = vmul.f32 %v1709, 0.25
        %v1774 = vmul.f32 %v1710, 0.25
        %v1775 = vmul.f32 %v1711, 0.25
        %v1776 = vmul.f32 %v1712, 0.25
        %v1777 = vmul.f32 %v1713, 0.25
        %v1778 = vmul.f32 %v1714, 0.25
        %v1779 = vmul.f32 %v1715, 0.25
        %v1780 = vmul.f32 %v1716, 0.25
        %v1781 = vmul.f32 %v1717, 0.25
        %v1782 = vmul.f32 %v1718, 0.25
        %v1783 = vmul.f32 %v1719, 0.25
        %v1784 = vmul.f32 %v1720, 0.25
        %v1785 = vmul.f32 %v1721, 0.25
        %v1786 = vpack.c.bf16 %v1722, %v1722
        %v1787 = vpack.c.bf16 %v1723, %v1723
        %v1788 = vpack.c.bf16 %v1724, %v1724
        %v1789 = vpack.c.bf16 %v1725, %v1725
        %v1790 = vpack.c.bf16 %v1726, %v1726
        %v1791 = vpack.c.bf16 %v1727, %v1727
        %v1792 = vpack.c.bf16 %v1728, %v1728
        %v1793 = vpack.c.bf16 %v1729, %v1729
        %v1794 = vpack.c.bf16 %v1730, %v1730
        %v1795 = vpack.c.bf16 %v1731, %v1731
        %v1796 = vpack.c.bf16 %v1732, %v1732
        %v1797 = vpack.c.bf16 %v1733, %v1733
        %v1798 = vpack.c.bf16 %v1734, %v1734
        %v1799 = vpack.c.bf16 %v1735, %v1735
        %v1800 = vpack.c.bf16 %v1736, %v1736
        %v1801 = vpack.c.bf16 %v1737, %v1737
        %v1802 = vpack.c.bf16 %v1738, %v1738
        %v1803 = vpack.c.bf16 %v1739, %v1739
        %v1804 = vpack.c.bf16 %v1740, %v1740
        %v1805 = vpack.c.bf16 %v1741, %v1741
        %v1806 = vpack.c.bf16 %v1742, %v1742
        %v1807 = vpack.c.bf16 %v1743, %v1743
        %v1808 = vpack.c.bf16 %v1744, %v1744
        %v1809 = vpack.c.bf16 %v1745, %v1745
        %v1810 = vpack.c.bf16 %v1746, %v1746
        %v1811 = vpack.c.bf16 %v1747, %v1747
        %v1812 = vpack.c.bf16 %v1748, %v1748
        %v1813 = vpack.c.bf16 %v1749, %v1749
        %v1814 = vpack.c.bf16 %v1750, %v1750
        %v1815 = vpack.c.bf16 %v1751, %v1751
        %v1816 = vpack.c.bf16 %v1752, %v1752
        %v1817 = vpack.c.bf16 %v1753, %v1753
        %v1818 = vpack.c.bf16 %v1754, %v1754
        %v1819 = vpack.c.bf16 %v1755, %v1755
        %v1820 = vpack.c.bf16 %v1756, %v1756
        %v1821 = vpack.c.bf16 %v1757, %v1757
        %v1822 = vpack.c.bf16 %v1758, %v1758
        %v1823 = vpack.c.bf16 %v1759, %v1759
        %v1824 = vpack.c.bf16 %v1760, %v1760
        %v1825 = vpack.c.bf16 %v1761, %v1761
        %v1826 = vpack.c.bf16 %v1762, %v1762
        %v1827 = vpack.c.bf16 %v1763, %v1763
        %v1828 = vpack.c.bf16 %v1764, %v1764
        %v1829 = vpack.c.bf16 %v1765, %v1765
        %v1830 = vpack.c.bf16 %v1766, %v1766
        %v1831 = vpack.c.bf16 %v1767, %v1767
        %v1832 = vpack.c.bf16 %v1768, %v1768
        %v1833 = vpack.c.bf16 %v1769, %v1769
        %v1834 = vpack.c.bf16 %v1770, %v1770
        %v1835 = vpack.c.bf16 %v1771, %v1771
        %v1836 = vpack.c.bf16 %v1772, %v1772
        %v1837 = vpack.c.bf16 %v1773, %v1773
        %v1838 = vpack.c.bf16 %v1774, %v1774
        %v1839 = vpack.c.bf16 %v1775, %v1775
        %v1840 = vpack.c.bf16 %v1776, %v1776
        %v1841 = vpack.c.bf16 %v1777, %v1777
        %v1842 = vpack.c.bf16 %v1778, %v1778
        %v1843 = vpack.c.bf16 %v1779, %v1779
        %v1844 = vpack.c.bf16 %v1780, %v1780
        %v1845 = vpack.c.bf16 %v1781, %v1781
        %v1846 = vpack.c.bf16 %v1782, %v1782
        %v1847 = vpack.c.bf16 %v1783, %v1783
        %v1848 = vpack.c.bf16 %v1784, %v1784
        %v1849 = vpack.c.bf16 %v1785, %v1785
        %v1850 = vld [vmem:[%s5] sm:$0x3]
        %v1851 = vld [vmem:[%s6] sm:$0x1]
        %v1853 = vperm.slane %v1851, 0
        %v1919 = vunpack.c.l.b16 %v1786
        %v1920 = vunpack.c.l.b16 %v1787
        %v1921 = vunpack.c.l.b16 %v1788
        %v1922 = vunpack.c.l.b16 %v1789
        %v1923 = vunpack.c.l.b16 %v1790
        %v1924 = vunpack.c.l.b16 %v1791
        %v1925 = vunpack.c.l.b16 %v1792
        %v1926 = vunpack.c.l.b16 %v1793
        %v1927 = vunpack.c.l.b16 %v1794
        %v1928 = vunpack.c.l.b16 %v1795
        %v1929 = vunpack.c.l.b16 %v1796
        %v1930 = vunpack.c.l.b16 %v1797
        %v1931 = vunpack.c.l.b16 %v1798
        %v1932 = vunpack.c.l.b16 %v1799
        %v1933 = vunpack.c.l.b16 %v1800
        %v1934 = vunpack.c.l.b16 %v1801
        %v1935 = vunpack.c.l.b16 %v1802
        %v1936 = vunpack.c.l.b16 %v1803
        %v1937 = vunpack.c.l.b16 %v1804
        %v1938 = vunpack.c.l.b16 %v1805
        %v1939 = vunpack.c.l.b16 %v1806
        %v1940 = vunpack.c.l.b16 %v1807
        %v1941 = vunpack.c.l.b16 %v1808
        %v1942 = vunpack.c.l.b16 %v1809
        %v1943 = vunpack.c.l.b16 %v1810
        %v1944 = vunpack.c.l.b16 %v1811
        %v1945 = vunpack.c.l.b16 %v1812
        %v1946 = vunpack.c.l.b16 %v1813
        %v1947 = vunpack.c.l.b16 %v1814
        %v1948 = vunpack.c.l.b16 %v1815
        %v1949 = vunpack.c.l.b16 %v1816
        %v1950 = vunpack.c.l.b16 %v1817
        %v1951 = vunpack.c.l.b16 %v1818
        %v1952 = vunpack.c.l.b16 %v1819
        %v1953 = vunpack.c.l.b16 %v1820
        %v1954 = vunpack.c.l.b16 %v1821
        %v1955 = vunpack.c.l.b16 %v1822
        %v1956 = vunpack.c.l.b16 %v1823
        %v1957 = vunpack.c.l.b16 %v1824
        %v1958 = vunpack.c.l.b16 %v1825
        %v1959 = vunpack.c.l.b16 %v1826
        %v1960 = vunpack.c.l.b16 %v1827
        %v1961 = vunpack.c.l.b16 %v1828
        %v1962 = vunpack.c.l.b16 %v1829
        %v1963 = vunpack.c.l.b16 %v1830
        %v1964 = vunpack.c.l.b16 %v1831
        %v1965 = vunpack.c.l.b16 %v1832
        %v1966 = vunpack.c.l.b16 %v1833
        %v1967 = vunpack.c.l.b16 %v1834
        %v1968 = vunpack.c.l.b16 %v1835
        %v1969 = vunpack.c.l.b16 %v1836
        %v1970 = vunpack.c.l.b16 %v1837
        %v1971 = vunpack.c.l.b16 %v1838
        %v1972 = vunpack.c.l.b16 %v1839
        %v1973 = vunpack.c.l.b16 %v1840
        %v1974 = vunpack.c.l.b16 %v1841
        %v1975 = vunpack.c.l.b16 %v1842
        %v1976 = vunpack.c.l.b16 %v1843
        %v1977 = vunpack.c.l.b16 %v1844
        %v1978 = vunpack.c.l.b16 %v1845
        %v1979 = vunpack.c.l.b16 %v1846
        %v1980 = vunpack.c.l.b16 %v1847
        %v1981 = vunpack.c.l.b16 %v1848
        %v1982 = vunpack.c.l.b16 %v1849
        %v1983 = vrot.slane %v1920, 7
        %v1984 = vsel %vm378, %v1983, %v1919
        %v1985 = vrot.slane %v1921, 6
        %v1986 = vsel %vm382, %v1985, %v1984
        %v1987 = vrot.slane %v1922, 5
        %v1988 = vsel %vm386, %v1987, %v1986
        %v1989 = vrot.slane %v1923, 4
        %vm1990 = vcmask 1044484
        %v1991 = vsel %vm1990, %v1989, %v1988
        %v1992 = vrot.slane %v1924, 3
        %vm1993 = vcmask 1045509
        %v1994 = vsel %vm1993, %v1992, %v1991
        %v1995 = vrot.slane %v1925, 2
        %vm1996 = vcmask 1046534
        %v1997 = vsel %vm1996, %v1995, %v1994
        %v1998 = vrot.slane %v1926, 1
        %vm1999 = vcmask 1047559
        %v2000 = vsel %vm1999, %v1998, %v1997
        %v2001 = vrot.slane %v1928, 7
        %v2002 = vsel %vm378, %v2001, %v1927
        %v2003 = vrot.slane %v1929, 6
        %v2004 = vsel %vm382, %v2003, %v2002
        %v2005 = vrot.slane %v1930, 5
        %v2006 = vsel %vm386, %v2005, %v2004
        %v2007 = vrot.slane %v1931, 4
        %v2008 = vsel %vm1990, %v2007, %v2006
        %v2009 = vrot.slane %v1932, 3
        %v2010 = vsel %vm1993, %v2009, %v2008
        %v2011 = vrot.slane %v1933, 2
        %v2012 = vsel %vm1996, %v2011, %v2010
        %v2013 = vrot.slane %v1934, 1
        %v2014 = vsel %vm1999, %v2013, %v2012
        %v2015 = vrot.slane %v1936, 7
        %v2016 = vsel %vm378, %v2015, %v1935
        %v2017 = vrot.slane %v1937, 6
        %v2018 = vsel %vm382, %v2017, %v2016
        %v2019 = vrot.slane %v1938, 5
        %v2020 = vsel %vm386, %v2019, %v2018
        %v2021 = vrot.slane %v1939, 4
        %v2022 = vsel %vm1990, %v2021, %v2020
        %v2023 = vrot.slane %v1940, 3
        %v2024 = vsel %vm1993, %v2023, %v2022
        %v2025 = vrot.slane %v1941, 2
        %v2026 = vsel %vm1996, %v2025, %v2024
        %v2027 = vrot.slane %v1942, 1
        %v2028 = vsel %vm1999, %v2027, %v2026
        %v2029 = vrot.slane %v1944, 7
        %v2030 = vsel %vm378, %v2029, %v1943
        %v2031 = vrot.slane %v1945, 6
        %v2032 = vsel %vm382, %v2031, %v2030
        %v2033 = vrot.slane %v1946, 5
        %v2034 = vsel %vm386, %v2033, %v2032
        %v2035 = vrot.slane %v1947, 4
        %v2036 = vsel %vm1990, %v2035, %v2034
        %v2037 = vrot.slane %v1948, 3
        %v2038 = vsel %vm1993, %v2037, %v2036
        %v2039 = vrot.slane %v1949, 2
        %v2040 = vsel %vm1996, %v2039, %v2038
        %v2041 = vrot.slane %v1950, 1
        %v2042 = vsel %vm1999, %v2041, %v2040
        %v2043 = vrot.slane %v1952, 7
        %v2044 = vsel %vm378, %v2043, %v1951
        %v2045 = vrot.slane %v1953, 6
        %v2046 = vsel %vm382, %v2045, %v2044
        %v2047 = vrot.slane %v1954, 5
        %v2048 = vsel %vm386, %v2047, %v2046
        %v2049 = vrot.slane %v1955, 4
        %v2050 = vsel %vm1990, %v2049, %v2048
        %v2051 = vrot.slane %v1956, 3
        %v2052 = vsel %vm1993, %v2051, %v2050
        %v2053 = vrot.slane %v1957, 2
        %v2054 = vsel %vm1996, %v2053, %v2052
        %v2055 = vrot.slane %v1958, 1
        %v2056 = vsel %vm1999, %v2055, %v2054
        %v2057 = vrot.slane %v1960, 7
        %v2058 = vsel %vm378, %v2057, %v1959
        %v2059 = vrot.slane %v1961, 6
        %v2060 = vsel %vm382, %v2059, %v2058
        %v2061 = vrot.slane %v1962, 5
        %v2062 = vsel %vm386, %v2061, %v2060
        %v2063 = vrot.slane %v1963, 4
        %v2064 = vsel %vm1990, %v2063, %v2062
        %v2065 = vrot.slane %v1964, 3
        %v2066 = vsel %vm1993, %v2065, %v2064
        %v2067 = vrot.slane %v1965, 2
        %v2068 = vsel %vm1996, %v2067, %v2066
        %v2069 = vrot.slane %v1966, 1
        %v2070 = vsel %vm1999, %v2069, %v2068
        %v2071 = vrot.slane %v1968, 7
        %v2072 = vsel %vm378, %v2071, %v1967
        %v2073 = vrot.slane %v1969, 6
        %v2074 = vsel %vm382, %v2073, %v2072
        %v2075 = vrot.slane %v1970, 5
        %v2076 = vsel %vm386, %v2075, %v2074
        %v2077 = vrot.slane %v1971, 4
        %v2078 = vsel %vm1990, %v2077, %v2076
        %v2079 = vrot.slane %v1972, 3
        %v2080 = vsel %vm1993, %v2079, %v2078
        %v2081 = vrot.slane %v1973, 2
        %v2082 = vsel %vm1996, %v2081, %v2080
        %v2083 = vrot.slane %v1974, 1
        %v2084 = vsel %vm1999, %v2083, %v2082
        %v2085 = vrot.slane %v1976, 7
        %v2086 = vsel %vm378, %v2085, %v1975
        %v2087 = vrot.slane %v1977, 6
        %v2088 = vsel %vm382, %v2087, %v2086
        %v2089 = vrot.slane %v1978, 5
        %v2090 = vsel %vm386, %v2089, %v2088
        %v2091 = vrot.slane %v1979, 4
        %v2092 = vsel %vm1990, %v2091, %v2090
        %v2093 = vrot.slane %v1980, 3
        %v2094 = vsel %vm1993, %v2093, %v2092
        %v2095 = vrot.slane %v1981, 2
        %v2096 = vsel %vm1996, %v2095, %v2094
        %v2097 = vrot.slane %v1982, 1
        %v2098 = vsel %vm1999, %v2097, %v2096
        %v2099 = vpack.c.b16 %v2014, %v2000
        %v2100 = vpack.c.b16 %v2042, %v2028
        %v2101 = vpack.c.b16 %v2070, %v2056
        %v2102 = vpack.c.b16 %v2098, %v2084
        %vm2103 = vcmask 31744
        %v2105 = vsel %vm2103, %v2099, 0
        %v2108 = vsel %vm2103, %v2100, 0
        %v2111 = vsel %vm2103, %v2101, 0
        %v2114 = vsel %vm2103, %v2102, 0
        %vm2116 = vcmask 1041408
        %v2118 = vsel %vm2116, %v1850, 0
        %2120 = vmatpush.bf16.msra.mxu0 0
        %2121 = vmatpush.bf16.msra.mxu0 0
        %2122 = vmatpush.bf16.msra.mxu0 0
        %2123 = vmatpush.bf16.msra.mxu0 0
        %2124 = vmatpush.bf16.msra.mxu0 0
        %2125 = vmatpush.bf16.msra.mxu0 0
        %2126 = vmatpush.bf16.msra.mxu0 0
        %2127 = vmatpush.bf16.msra.mxu0 %v2118
        %2128 = vmatmul.bf16.gmra.mxu0 %v2105
        %v2129 = vpop.f32.mrf.mxu0
        %v2130 = vadd.f32 %v1853, %v2129
        %v2131 = vpop.f32.mrf.mxu0
        %v2132 = vadd.f32 %v1853, %v2131
        %2133 = vmatmul.bf16.gmra.mxu0 %v2108
        %v2134 = vpop.f32.mrf.mxu0
        %v2135 = vadd.f32 %v1853, %v2134
        %v2136 = vpop.f32.mrf.mxu0
        %v2137 = vadd.f32 %v1853, %v2136
        %2138 = vmatmul.bf16.gmra.mxu0 %v2111
        %v2139 = vpop.f32.mrf.mxu0
        %v2140 = vadd.f32 %v1853, %v2139
        %v2141 = vpop.f32.mrf.mxu0
        %v2142 = vadd.f32 %v1853, %v2141
        %2143 = vmatmul.bf16.gmra.mxu0 %v2114
        %v2144 = vpop.f32.mrf.mxu0
        %v2145 = vadd.f32 %v1853, %v2144
        %v2146 = vpop.f32.mrf.mxu0
        %v2147 = vadd.f32 %v1853, %v2146
        %2148 = vdwg.mxu0
        %vm2149 = vcmask 64512
        %2150 = vst.msk [vmem:[%s271] sm:$0xff] %vm2149, %v2130
        %2151 = vst.msk [vmem:[%s271 + $0x8] sm:$0xff] %vm2149, %v2132
        %2152 = vst.msk [vmem:[%s271 + $0x10] sm:$0xff] %vm2149, %v2135
        %2153 = vst.msk [vmem:[%s271 + $0x18] sm:$0xff] %vm2149, %v2137
        %2154 = vst.msk [vmem:[%s271 + $0x20] sm:$0xff] %vm2149, %v2140
        %2155 = vst.msk [vmem:[%s271 + $0x28] sm:$0xff] %vm2149, %v2142
        %2156 = vst.msk [vmem:[%s271 + $0x30] sm:$0xff] %vm2149, %v2145
        %2157 = vst.msk [vmem:[%s271 + $0x38] sm:$0xff] %vm2149, %v2147
        %v2158 = vunpack.c.l.bf16 %v278
        %v2159 = vunpack.c.l.bf16 %v279
        %v2160 = vunpack.c.l.bf16 %v280
        %v2161 = vunpack.c.l.bf16 %v281
        %v2162 = vunpack.c.l.bf16 %v282
        %v2163 = vunpack.c.l.bf16 %v283
        %v2164 = vunpack.c.l.bf16 %v284
        %v2165 = vunpack.c.l.bf16 %v285
        %v2166 = vunpack.c.l.bf16 %v286
        %v2167 = vunpack.c.l.bf16 %v287
        %v2168 = vunpack.c.l.bf16 %v288
        %v2169 = vunpack.c.l.bf16 %v289
        %v2170 = vunpack.c.l.bf16 %v290
        %v2171 = vunpack.c.l.bf16 %v291
        %v2172 = vunpack.c.l.bf16 %v292
        %v2173 = vunpack.c.l.bf16 %v293
        %v2174 = vunpack.c.l.bf16 %v294
        %v2175 = vunpack.c.l.bf16 %v295
        %v2176 = vunpack.c.l.bf16 %v296
        %v2177 = vunpack.c.l.bf16 %v297
        %v2178 = vunpack.c.l.bf16 %v298
        %v2179 = vunpack.c.l.bf16 %v299
        %v2180 = vunpack.c.l.bf16 %v300
        %v2181 = vunpack.c.l.bf16 %v301
        %v2182 = vunpack.c.l.bf16 %v302
        %v2183 = vunpack.c.l.bf16 %v303
        %v2184 = vunpack.c.l.bf16 %v304
        %v2185 = vunpack.c.l.bf16 %v305
        %v2186 = vunpack.c.l.bf16 %v306
        %v2187 = vunpack.c.l.bf16 %v307
        %v2188 = vunpack.c.l.bf16 %v308
        %v2189 = vunpack.c.l.bf16 %v309
        %v2190 = vmax.f32 %v2158, 0.0
        %v2191 = vmax.f32 %v2159, 0.0
        %v2192 = vmax.f32 %v2160, 0.0
        %v2193 = vmax.f32 %v2161, 0.0
        %v2194 = vmax.f32 %v2162, 0.0
        %v2195 = vmax.f32 %v2163, 0.0
        %v2196 = vmax.f32 %v2164, 0.0
        %v2197 = vmax.f32 %v2165, 0.0
        %v2198 = vmax.f32 %v2166, 0.0
        %v2199 = vmax.f32 %v2167, 0.0
        %v2200 = vmax.f32 %v2168, 0.0
        %v2201 = vmax.f32 %v2169, 0.0
        %v2202 = vmax.f32 %v2170, 0.0
        %v2203 = vmax.f32 %v2171, 0.0
        %v2204 = vmax.f32 %v2172, 0.0
        %v2205 = vmax.f32 %v2173, 0.0
        %v2206 = vmax.f32 %v2174, 0.0
        %v2207 = vmax.f32 %v2175, 0.0
        %v2208 = vmax.f32 %v2176, 0.0
        %v2209 = vmax.f32 %v2177, 0.0
        %v2210 = vmax.f32 %v2178, 0.0
        %v2211 = vmax.f32 %v2179, 0.0
        %v2212 = vmax.f32 %v2180, 0.0
        %v2213 = vmax.f32 %v2181, 0.0
        %v2214 = vmax.f32 %v2182, 0.0
        %v2215 = vmax.f32 %v2183, 0.0
        %v2216 = vmax.f32 %v2184, 0.0
        %v2217 = vmax.f32 %v2185, 0.0
        %v2218 = vmax.f32 %v2186, 0.0
        %v2219 = vmax.f32 %v2187, 0.0
        %v2220 = vmax.f32 %v2188, 0.0
        %v2221 = vmax.f32 %v2189, 0.0
        %v2222 = vpack.c.bf16 %v2190, %v2190
        %v2223 = vpack.c.bf16 %v2191, %v2191
        %v2224 = vpack.c.bf16 %v2192, %v2192
        %v2225 = vpack.c.bf16 %v2193, %v2193
        %v2226 = vpack.c.bf16 %v2194, %v2194
        %v2227 = vpack.c.bf16 %v2195, %v2195
        %v2228 = vpack.c.bf16 %v2196, %v2196
        %v2229 = vpack.c.bf16 %v2197, %v2197
        %v2230 = vpack.c.bf16 %v2198, %v2198
        %v2231 = vpack.c.bf16 %v2199, %v2199
        %v2232 = vpack.c.bf16 %v2200, %v2200
        %v2233 = vpack.c.bf16 %v2201, %v2201
        %v2234 = vpack.c.bf16 %v2202, %v2202
        %v2235 = vpack.c.bf16 %v2203, %v2203
        %v2236 = vpack.c.bf16 %v2204, %v2204
        %v2237 = vpack.c.bf16 %v2205, %v2205
        %v2238 = vpack.c.bf16 %v2206, %v2206
        %v2239 = vpack.c.bf16 %v2207, %v2207
        %v2240 = vpack.c.bf16 %v2208, %v2208
        %v2241 = vpack.c.bf16 %v2209, %v2209
        %v2242 = vpack.c.bf16 %v2210, %v2210
        %v2243 = vpack.c.bf16 %v2211, %v2211
        %v2244 = vpack.c.bf16 %v2212, %v2212
        %v2245 = vpack.c.bf16 %v2213, %v2213
        %v2246 = vpack.c.bf16 %v2214, %v2214
        %v2247 = vpack.c.bf16 %v2215, %v2215
        %v2248 = vpack.c.bf16 %v2216, %v2216
        %v2249 = vpack.c.bf16 %v2217, %v2217
        %v2250 = vpack.c.bf16 %v2218, %v2218
        %v2251 = vpack.c.bf16 %v2219, %v2219
        %v2252 = vpack.c.bf16 %v2220, %v2220
        %v2253 = vpack.c.bf16 %v2221, %v2221
        %vm2254 = vcmask 27648
        %2255 = vst.msk [vmem:[#allocation2] sm:$0xf] %vm2254, 0
        %2256 = vst.msk [vmem:[#allocation2 + $0x4] sm:$0xf] %vm2254, 0
        %vm2257 = vcmask 24576
        %2258 = vst.msk [vmem:[#allocation2 + $0x8] sm:$0x1] %vm2257, 0
        %s2259 = scalar_lea.vmem [#allocation2], 204
        %2260 = vst.msk [vmem:[%s2259] sm:$0xf] %vm2254, 0
        %2261 = vst.msk [vmem:[%s2259 + $0x4] sm:$0xf] %vm2254, 0
        %2262 = vst.msk [vmem:[%s2259 + $0x8] sm:$0x1] %vm2257, 0
        %v2295 = vunpack.c.l.b16 %v2222
        %v2296 = vunpack.c.l.b16 %v2223
        %v2297 = vunpack.c.l.b16 %v2224
        %v2298 = vunpack.c.l.b16 %v2225
        %v2299 = vunpack.c.l.b16 %v2226
        %v2300 = vunpack.c.l.b16 %v2227
        %v2301 = vunpack.c.l.b16 %v2228
        %v2302 = vunpack.c.l.b16 %v2229
        %v2303 = vunpack.c.l.b16 %v2230
        %v2304 = vunpack.c.l.b16 %v2231
        %v2305 = vunpack.c.l.b16 %v2232
        %v2306 = vunpack.c.l.b16 %v2233
        %v2307 = vunpack.c.l.b16 %v2234
        %v2308 = vunpack.c.l.b16 %v2235
        %v2309 = vunpack.c.l.b16 %v2236
        %v2310 = vunpack.c.l.b16 %v2237
        %v2311 = vunpack.c.l.b16 %v2238
        %v2312 = vunpack.c.l.b16 %v2239
        %v2313 = vunpack.c.l.b16 %v2240
        %v2314 = vunpack.c.l.b16 %v2241
        %v2315 = vunpack.c.l.b16 %v2242
        %v2316 = vunpack.c.l.b16 %v2243
        %v2317 = vunpack.c.l.b16 %v2244
        %v2318 = vunpack.c.l.b16 %v2245
        %v2319 = vunpack.c.l.b16 %v2246
        %v2320 = vunpack.c.l.b16 %v2247
        %v2321 = vunpack.c.l.b16 %v2248
        %v2322 = vunpack.c.l.b16 %v2249
        %v2323 = vunpack.c.l.b16 %v2250
        %v2324 = vunpack.c.l.b16 %v2251
        %v2325 = vunpack.c.l.b16 %v2252
        %v2326 = vunpack.c.l.b16 %v2253
        %v2327 = vpack.c.b16 %v2296, %v2295
        %v2328 = vpack.c.b16 %v2298, %v2297
        %v2329 = vpack.c.b16 %v2300, %v2299
        %v2330 = vpack.c.b16 %v2302, %v2301
        %v2331 = vpack.c.b16 %v2304, %v2303
        %v2332 = vpack.c.b16 %v2306, %v2305
        %v2333 = vpack.c.b16 %v2308, %v2307
        %v2334 = vpack.c.b16 %v2310, %v2309
        %v2335 = vpack.c.b16 %v2312, %v2311
        %v2336 = vpack.c.b16 %v2314, %v2313
        %v2337 = vpack.c.b16 %v2316, %v2315
        %v2338 = vpack.c.b16 %v2318, %v2317
        %v2339 = vpack.c.b16 %v2320, %v2319
        %v2340 = vpack.c.b16 %v2322, %v2321
        %v2341 = vpack.c.b16 %v2324, %v2323
        %v2342 = vpack.c.b16 %v2326, %v2325
        %v2344 = vshrl.u32 %v2327, 16
        %v2346 = vrot.slane %v2344, 7
        %v2347 = vshll.u32 %v2327, 16
        %v2349 = vor.u32 %v2346, %v2347
        %v2351 = vshrl.u32 %v2328, 16
        %v2353 = vrot.slane %v2351, 7
        %v2354 = vshll.u32 %v2328, 16
        %v2356 = vor.u32 %v2353, %v2354
        %v2358 = vshrl.u32 %v2329, 16
        %v2360 = vrot.slane %v2358, 7
        %v2361 = vshll.u32 %v2329, 16
        %v2363 = vor.u32 %v2360, %v2361
        %v2365 = vshrl.u32 %v2330, 16
        %v2367 = vrot.slane %v2365, 7
        %v2368 = vshll.u32 %v2330, 16
        %v2370 = vor.u32 %v2367, %v2368
        %v2372 = vshrl.u32 %v2331, 16
        %v2374 = vrot.slane %v2372, 7
        %v2375 = vshll.u32 %v2331, 16
        %v2377 = vor.u32 %v2374, %v2375
        %v2379 = vshrl.u32 %v2332, 16
        %v2381 = vrot.slane %v2379, 7
        %v2382 = vshll.u32 %v2332, 16
        %v2384 = vor.u32 %v2381, %v2382
        %v2386 = vshrl.u32 %v2333, 16
        %v2388 = vrot.slane %v2386, 7
        %v2389 = vshll.u32 %v2333, 16
        %v2391 = vor.u32 %v2388, %v2389
        %v2393 = vshrl.u32 %v2334, 16
        %v2395 = vrot.slane %v2393, 7
        %v2396 = vshll.u32 %v2334, 16
        %v2398 = vor.u32 %v2395, %v2396
        %v2400 = vshrl.u32 %v2335, 16
        %v2402 = vrot.slane %v2400, 7
        %v2403 = vshll.u32 %v2335, 16
        %v2405 = vor.u32 %v2402, %v2403
        %v2407 = vshrl.u32 %v2336, 16
        %v2409 = vrot.slane %v2407, 7
        %v2410 = vshll.u32 %v2336, 16
        %v2412 = vor.u32 %v2409, %v2410
        %v2414 = vshrl.u32 %v2337, 16
        %v2416 = vrot.slane %v2414, 7
        %v2417 = vshll.u32 %v2337, 16
        %v2419 = vor.u32 %v2416, %v2417
        %v2421 = vshrl.u32 %v2338, 16
        %v2423 = vrot.slane %v2421, 7
        %v2424 = vshll.u32 %v2338, 16
        %v2426 = vor.u32 %v2423, %v2424
        %v2428 = vshrl.u32 %v2339, 16
        %v2430 = vrot.slane %v2428, 7
        %v2431 = vshll.u32 %v2339, 16
        %v2433 = vor.u32 %v2430, %v2431
        %v2435 = vshrl.u32 %v2340, 16
        %v2437 = vrot.slane %v2435, 7
        %v2438 = vshll.u32 %v2340, 16
        %v2440 = vor.u32 %v2437, %v2438
        %v2442 = vshrl.u32 %v2341, 16
        %v2444 = vrot.slane %v2442, 7
        %v2445 = vshll.u32 %v2341, 16
        %v2447 = vor.u32 %v2444, %v2445
        %v2449 = vshrl.u32 %v2342, 16
        %v2451 = vrot.slane %v2449, 7
        %v2452 = vshll.u32 %v2342, 16
        %v2454 = vor.u32 %v2451, %v2452
        %vm2487 = vcmask 1040384
        %vm2488 = vsmask.f32 256
        %vm2489 = vmand %vm2487, %vm2488
        %v2490 = vsel %vm2489, 0, %v2349
        %v2491 = vsel %vm2489, 0, %v2356
        %v2492 = vsel %vm2489, 0, %v2363
        %v2493 = vsel %vm2489, 0, %v2370
        %v2494 = vsel %vm2489, 0, %v2377
        %v2495 = vsel %vm2489, 0, %v2384
        %v2496 = vsel %vm2489, 0, %v2391
        %v2497 = vsel %vm2489, 0, %v2398
        %v2498 = vsel %vm2489, 0, %v2405
        %v2499 = vsel %vm2489, 0, %v2412
        %v2500 = vsel %vm2489, 0, %v2419
        %v2501 = vsel %vm2489, 0, %v2426
        %v2502 = vsel %vm2489, 0, %v2433
        %v2503 = vsel %vm2489, 0, %v2440
        %v2504 = vsel %vm2489, 0, %v2447
        %v2505 = vsel %vm2489, 0, %v2454
        %v2506 = vsel %vm2489, %v2346, 0
        %v2507 = vsel %vm2489, %v2353, 0
        %v2508 = vsel %vm2489, %v2360, 0
        %v2509 = vsel %vm2489, %v2367, 0
        %v2510 = vsel %vm2489, %v2374, 0
        %v2511 = vsel %vm2489, %v2381, 0
        %v2512 = vsel %vm2489, %v2388, 0
        %v2513 = vsel %vm2489, %v2395, 0
        %v2514 = vsel %vm2489, %v2402, 0
        %v2515 = vsel %vm2489, %v2409, 0
        %v2516 = vsel %vm2489, %v2416, 0
        %v2517 = vsel %vm2489, %v2423, 0
        %v2518 = vsel %vm2489, %v2430, 0
        %v2519 = vsel %vm2489, %v2437, 0
        %v2520 = vsel %vm2489, %v2444, 0
        %v2521 = vsel %vm2489, %v2451, 0
        %v2554 = vunpack.c.l.b16 %v2490
        %v2555 = vunpack.c.h.b16 %v2490
        %v2556 = vunpack.c.l.b16 %v2506
        %v2557 = vunpack.c.l.b16 %v2491
        %v2558 = vunpack.c.h.b16 %v2491
        %v2559 = vunpack.c.l.b16 %v2507
        %v2560 = vunpack.c.l.b16 %v2492
        %v2561 = vunpack.c.h.b16 %v2492
        %v2562 = vunpack.c.l.b16 %v2508
        %v2563 = vunpack.c.l.b16 %v2493
        %v2564 = vunpack.c.h.b16 %v2493
        %v2565 = vunpack.c.l.b16 %v2509
        %v2566 = vunpack.c.l.b16 %v2494
        %v2567 = vunpack.c.h.b16 %v2494
        %v2568 = vunpack.c.l.b16 %v2510
        %v2569 = vunpack.c.l.b16 %v2495
        %v2570 = vunpack.c.h.b16 %v2495
        %v2571 = vunpack.c.l.b16 %v2511
        %v2572 = vunpack.c.l.b16 %v2496
        %v2573 = vunpack.c.h.b16 %v2496
        %v2574 = vunpack.c.l.b16 %v2512
        %v2575 = vunpack.c.l.b16 %v2497
        %v2576 = vunpack.c.h.b16 %v2497
        %v2577 = vunpack.c.l.b16 %v2513
        %v2578 = vunpack.c.l.b16 %v2498
        %v2579 = vunpack.c.h.b16 %v2498
        %v2580 = vunpack.c.l.b16 %v2514
        %v2581 = vunpack.c.l.b16 %v2499
        %v2582 = vunpack.c.h.b16 %v2499
        %v2583 = vunpack.c.l.b16 %v2515
        %v2584 = vunpack.c.l.b16 %v2500
        %v2585 = vunpack.c.h.b16 %v2500
        %v2586 = vunpack.c.l.b16 %v2516
        %v2587 = vunpack.c.l.b16 %v2501
        %v2588 = vunpack.c.h.b16 %v2501
        %v2589 = vunpack.c.l.b16 %v2517
        %v2590 = vunpack.c.l.b16 %v2502
        %v2591 = vunpack.c.h.b16 %v2502
        %v2592 = vunpack.c.l.b16 %v2518
        %v2593 = vunpack.c.l.b16 %v2503
        %v2594 = vunpack.c.h.b16 %v2503
        %v2595 = vunpack.c.l.b16 %v2519
        %v2596 = vunpack.c.l.b16 %v2504
        %v2597 = vunpack.c.h.b16 %v2504
        %v2598 = vunpack.c.l.b16 %v2520
        %v2599 = vunpack.c.l.b16 %v2505
        %v2600 = vunpack.c.h.b16 %v2505
        %v2601 = vunpack.c.l.b16 %v2521
        %v2602 = vpack.c.b16 %v2554, %v2554
        %v2603 = vpack.c.b16 %v2555, %v2555
        %v2604 = vpack.c.b16 %v2556, %v2556
        %v2605 = vpack.c.b16 %v2557, %v2557
        %v2606 = vpack.c.b16 %v2558, %v2558
        %v2607 = vpack.c.b16 %v2559, %v2559
        %v2608 = vpack.c.b16 %v2560, %v2560
        %v2609 = vpack.c.b16 %v2561, %v2561
        %v2610 = vpack.c.b16 %v2562, %v2562
        %v2611 = vpack.c.b16 %v2563, %v2563
        %v2612 = vpack.c.b16 %v2564, %v2564
        %v2613 = vpack.c.b16 %v2565, %v2565
        %v2614 = vpack.c.b16 %v2566, %v2566
        %v2615 = vpack.c.b16 %v2567, %v2567
        %v2616 = vpack.c.b16 %v2568, %v2568
        %v2617 = vpack.c.b16 %v2569, %v2569
        %v2618 = vpack.c.b16 %v2570, %v2570
        %v2619 = vpack.c.b16 %v2571, %v2571
        %v2620 = vpack.c.b16 %v2572, %v2572
        %v2621 = vpack.c.b16 %v2573, %v2573
        %v2622 = vpack.c.b16 %v2574, %v2574
        %v2623 = vpack.c.b16 %v2575, %v2575
        %v2624 = vpack.c.b16 %v2576, %v2576
        %v2625 = vpack.c.b16 %v2577, %v2577
        %v2626 = vpack.c.b16 %v2578, %v2578
        %v2627 = vpack.c.b16 %v2579, %v2579
        %v2628 = vpack.c.b16 %v2580, %v2580
        %v2629 = vpack.c.b16 %v2581, %v2581
        %v2630 = vpack.c.b16 %v2582, %v2582
        %v2631 = vpack.c.b16 %v2583, %v2583
        %v2632 = vpack.c.b16 %v2584, %v2584
        %v2633 = vpack.c.b16 %v2585, %v2585
        %v2634 = vpack.c.b16 %v2586, %v2586
        %v2635 = vpack.c.b16 %v2587, %v2587
        %v2636 = vpack.c.b16 %v2588, %v2588
        %v2637 = vpack.c.b16 %v2589, %v2589
        %v2638 = vpack.c.b16 %v2590, %v2590
        %v2639 = vpack.c.b16 %v2591, %v2591
        %v2640 = vpack.c.b16 %v2592, %v2592
        %v2641 = vpack.c.b16 %v2593, %v2593
        %v2642 = vpack.c.b16 %v2594, %v2594
        %v2643 = vpack.c.b16 %v2595, %v2595
        %v2644 = vpack.c.b16 %v2596, %v2596
        %v2645 = vpack.c.b16 %v2597, %v2597
        %v2646 = vpack.c.b16 %v2598, %v2598
        %v2647 = vpack.c.b16 %v2599, %v2599
        %v2648 = vpack.c.b16 %v2600, %v2600
        %v2649 = vpack.c.b16 %v2601, %v2601
        %s2698 = scalar_lea.vmem [#allocation2], 12
        %2699 = vst.msk [vmem:[%s2698] sm:$0xf] %vm2254, %v2602
        %2700 = vst.msk [vmem:[%s2698 + $0x4] sm:$0xf] %vm2254, %v2603
        %2701 = vst.msk [vmem:[%s2698 + $0x8] sm:$0x1] %vm2257, %v2604
        %2702 = vst.msk [vmem:[%s2698 + $0xc] sm:$0xf] %vm2254, %v2605
        %2703 = vst.msk [vmem:[%s2698 + $0x10] sm:$0xf] %vm2254, %v2606
        %2704 = vst.msk [vmem:[%s2698 + $0x14] sm:$0x1] %vm2257, %v2607
        %2705 = vst.msk [vmem:[%s2698 + $0x18] sm:$0xf] %vm2254, %v2608
        %2706 = vst.msk [vmem:[%s2698 + $0x1c] sm:$0xf] %vm2254, %v2609
        %2707 = vst.msk [vmem:[%s2698 + $0x20] sm:$0x1] %vm2257, %v2610
        %2708 = vst.msk [vmem:[%s2698 + $0x24] sm:$0xf] %vm2254, %v2611
        %2709 = vst.msk [vmem:[%s2698 + $0x28] sm:$0xf] %vm2254, %v2612
        %2710 = vst.msk [vmem:[%s2698 + $0x2c] sm:$0x1] %vm2257, %v2613
        %2711 = vst.msk [vmem:[%s2698 + $0x30] sm:$0xf] %vm2254, %v2614
        %2712 = vst.msk [vmem:[%s2698 + $0x34] sm:$0xf] %vm2254, %v2615
        %2713 = vst.msk [vmem:[%s2698 + $0x38] sm:$0x1] %vm2257, %v2616
        %2714 = vst.msk [vmem:[%s2698 + $0x3c] sm:$0xf] %vm2254, %v2617
        %2715 = vst.msk [vmem:[%s2698 + $0x40] sm:$0xf] %vm2254, %v2618
        %2716 = vst.msk [vmem:[%s2698 + $0x44] sm:$0x1] %vm2257, %v2619
        %2717 = vst.msk [vmem:[%s2698 + $0x48] sm:$0xf] %vm2254, %v2620
        %2718 = vst.msk [vmem:[%s2698 + $0x4c] sm:$0xf] %vm2254, %v2621
        %2719 = vst.msk [vmem:[%s2698 + $0x50] sm:$0x1] %vm2257, %v2622
        %2720 = vst.msk [vmem:[%s2698 + $0x54] sm:$0xf] %vm2254, %v2623
        %2721 = vst.msk [vmem:[%s2698 + $0x58] sm:$0xf] %vm2254, %v2624
        %2722 = vst.msk [vmem:[%s2698 + $0x5c] sm:$0x1] %vm2257, %v2625
        %2723 = vst.msk [vmem:[%s2698 + $0x60] sm:$0xf] %vm2254, %v2626
        %2724 = vst.msk [vmem:[%s2698 + $0x64] sm:$0xf] %vm2254, %v2627
        %2725 = vst.msk [vmem:[%s2698 + $0x68] sm:$0x1] %vm2257, %v2628
        %2726 = vst.msk [vmem:[%s2698 + $0x6c] sm:$0xf] %vm2254, %v2629
        %2727 = vst.msk [vmem:[%s2698 + $0x70] sm:$0xf] %vm2254, %v2630
        %2728 = vst.msk [vmem:[%s2698 + $0x74] sm:$0x1] %vm2257, %v2631
        %2729 = vst.msk [vmem:[%s2698 + $0x78] sm:$0xf] %vm2254, %v2632
        %2730 = vst.msk [vmem:[%s2698 + $0x7c] sm:$0xf] %vm2254, %v2633
        %2731 = vst.msk [vmem:[%s2698 + $0x80] sm:$0x1] %vm2257, %v2634
        %2732 = vst.msk [vmem:[%s2698 + $0x84] sm:$0xf] %vm2254, %v2635
        %2733 = vst.msk [vmem:[%s2698 + $0x88] sm:$0xf] %vm2254, %v2636
        %2734 = vst.msk [vmem:[%s2698 + $0x8c] sm:$0x1] %vm2257, %v2637
        %2735 = vst.msk [vmem:[%s2698 + $0x90] sm:$0xf] %vm2254, %v2638
        %2736 = vst.msk [vmem:[%s2698 + $0x94] sm:$0xf] %vm2254, %v2639
        %2737 = vst.msk [vmem:[%s2698 + $0x98] sm:$0x1] %vm2257, %v2640
        %2738 = vst.msk [vmem:[%s2698 + $0x9c] sm:$0xf] %vm2254, %v2641
        %2739 = vst.msk [vmem:[%s2698 + $0xa0] sm:$0xf] %vm2254, %v2642
        %2740 = vst.msk [vmem:[%s2698 + $0xa4] sm:$0x1] %vm2257, %v2643
        %2741 = vst.msk [vmem:[%s2698 + $0xa8] sm:$0xf] %vm2254, %v2644
        %2742 = vst.msk [vmem:[%s2698 + $0xac] sm:$0xf] %vm2254, %v2645
        %2743 = vst.msk [vmem:[%s2698 + $0xb0] sm:$0x1] %vm2257, %v2646
        %2744 = vst.msk [vmem:[%s2698 + $0xb4] sm:$0xf] %vm2254, %v2647
        %2745 = vst.msk [vmem:[%s2698 + $0xb8] sm:$0xf] %vm2254, %v2648
        %2746 = vst.msk [vmem:[%s2698 + $0xbc] sm:$0x1] %vm2257, %v2649
        %v2747 = vld [vmem:[#allocation2] sm:$0xf]
        %v2748 = vld [vmem:[#allocation2 + $0x4] sm:$0xf]
        %v2749 = vld [vmem:[#allocation2 + $0xc] sm:$0xf]
        %v2750 = vld [vmem:[#allocation2 + $0x10] sm:$0xf]
        %v2751 = vld [vmem:[#allocation2 + $0x18] sm:$0xf]
        %v2752 = vld [vmem:[#allocation2 + $0x1c] sm:$0xf]
        %v2753 = vld [vmem:[#allocation2 + $0x24] sm:$0xf]
        %v2754 = vld [vmem:[#allocation2 + $0x28] sm:$0xf]
        %v2755 = vld [vmem:[#allocation2 + $0x30] sm:$0xf]
        %v2756 = vld [vmem:[#allocation2 + $0x34] sm:$0xf]
        %v2757 = vld [vmem:[#allocation2 + $0x3c] sm:$0xf]
        %v2758 = vld [vmem:[#allocation2 + $0x40] sm:$0xf]
        %v2759 = vld [vmem:[#allocation2 + $0x48] sm:$0xf]
        %v2760 = vld [vmem:[#allocation2 + $0x4c] sm:$0xf]
        %v2761 = vld [vmem:[#allocation2 + $0x54] sm:$0xf]
        %v2762 = vld [vmem:[#allocation2 + $0x58] sm:$0xf]
        %v2763 = vld [vmem:[#allocation2 + $0x60] sm:$0xf]
        %v2764 = vld [vmem:[#allocation2 + $0x64] sm:$0xf]
        %v2765 = vld [vmem:[#allocation2 + $0x6c] sm:$0xf]
        %v2766 = vld [vmem:[#allocation2 + $0x70] sm:$0xf]
        %v2767 = vld [vmem:[#allocation2 + $0x78] sm:$0xf]
        %v2768 = vld [vmem:[#allocation2 + $0x7c] sm:$0xf]
        %v2769 = vld [vmem:[#allocation2 + $0x84] sm:$0xf]
        %v2770 = vld [vmem:[#allocation2 + $0x88] sm:$0xf]
        %v2771 = vld [vmem:[#allocation2 + $0x90] sm:$0xf]
        %v2772 = vld [vmem:[#allocation2 + $0x94] sm:$0xf]
        %v2773 = vld [vmem:[#allocation2 + $0x9c] sm:$0xf]
        %v2774 = vld [vmem:[#allocation2 + $0xa0] sm:$0xf]
        %v2775 = vld [vmem:[#allocation2 + $0xa8] sm:$0xf]
        %v2776 = vld [vmem:[#allocation2 + $0xac] sm:$0xf]
        %v2777 = vld [vmem:[#allocation2 + $0xb4] sm:$0xf]
        %v2778 = vld [vmem:[#allocation2 + $0xb8] sm:$0xf]
        %v2779 = vld [vmem:[#allocation2 + $0x8] sm:$0x1]
        %v2780 = vld [vmem:[#allocation2 + $0x14] sm:$0x1]
        %v2781 = vld [vmem:[#allocation2 + $0x20] sm:$0x1]
        %v2782 = vld [vmem:[#allocation2 + $0x2c] sm:$0x1]
        %v2783 = vld [vmem:[#allocation2 + $0x38] sm:$0x1]
        %v2784 = vld [vmem:[#allocation2 + $0x44] sm:$0x1]
        %v2785 = vld [vmem:[#allocation2 + $0x50] sm:$0x1]
        %v2786 = vld [vmem:[#allocation2 + $0x5c] sm:$0x1]
        %v2787 = vld [vmem:[#allocation2 + $0x68] sm:$0x1]
        %v2788 = vld [vmem:[#allocation2 + $0x74] sm:$0x1]
        %v2789 = vld [vmem:[#allocation2 + $0x80] sm:$0x1]
        %v2790 = vld [vmem:[#allocation2 + $0x8c] sm:$0x1]
        %v2791 = vld [vmem:[#allocation2 + $0x98] sm:$0x1]
        %v2792 = vld [vmem:[#allocation2 + $0xa4] sm:$0x1]
        %v2793 = vld [vmem:[#allocation2 + $0xb0] sm:$0x1]
        %v2794 = vld [vmem:[#allocation2 + $0xbc] sm:$0x1]
        %v2795 = vld [vmem:[#allocation2] sm:$0xe]
        %v2796 = vld [vmem:[#allocation2 + $0xc] sm:$0xe]
        %v2797 = vld [vmem:[#allocation2 + $0x18] sm:$0xe]
        %v2798 = vld [vmem:[#allocation2 + $0x24] sm:$0xe]
        %v2799 = vld [vmem:[#allocation2 + $0x30] sm:$0xe]
        %v2800 = vld [vmem:[#allocation2 + $0x3c] sm:$0xe]
        %v2801 = vld [vmem:[#allocation2 + $0x48] sm:$0xe]
        %v2802 = vld [vmem:[#allocation2 + $0x54] sm:$0xe]
        %v2803 = vld [vmem:[#allocation2 + $0x60] sm:$0xe]
        %v2804 = vld [vmem:[#allocation2 + $0x6c] sm:$0xe]
        %v2805 = vld [vmem:[#allocation2 + $0x78] sm:$0xe]
        %v2806 = vld [vmem:[#allocation2 + $0x84] sm:$0xe]
        %v2807 = vld [vmem:[#allocation2 + $0x90] sm:$0xe]
        %v2808 = vld [vmem:[#allocation2 + $0x9c] sm:$0xe]
        %v2809 = vld [vmem:[#allocation2 + $0xa8] sm:$0xe]
        %v2810 = vld [vmem:[#allocation2 + $0xb4] sm:$0xe]
        %v2811 = vld [vmem:[%s2698] sm:$0xf]
        %v2812 = vld [vmem:[%s2698 + $0x4] sm:$0xf]
        %v2813 = vld [vmem:[%s2698 + $0xc] sm:$0xf]
        %v2814 = vld [vmem:[%s2698 + $0x10] sm:$0xf]
        %v2815 = vld [vmem:[%s2698 + $0x18] sm:$0xf]
        %v2816 = vld [vmem:[%s2698 + $0x1c] sm:$0xf]
        %v2817 = vld [vmem:[%s2698 + $0x24] sm:$0xf]
        %v2818 = vld [vmem:[%s2698 + $0x28] sm:$0xf]
        %v2819 = vld [vmem:[%s2698 + $0x30] sm:$0xf]
        %v2820 = vld [vmem:[%s2698 + $0x34] sm:$0xf]
        %v2821 = vld [vmem:[%s2698 + $0x3c] sm:$0xf]
        %v2822 = vld [vmem:[%s2698 + $0x40] sm:$0xf]
        %v2823 = vld [vmem:[%s2698 + $0x48] sm:$0xf]
        %v2824 = vld [vmem:[%s2698 + $0x4c] sm:$0xf]
        %v2825 = vld [vmem:[%s2698 + $0x54] sm:$0xf]
        %v2826 = vld [vmem:[%s2698 + $0x58] sm:$0xf]
        %v2827 = vld [vmem:[%s2698 + $0x60] sm:$0xf]
        %v2828 = vld [vmem:[%s2698 + $0x64] sm:$0xf]
        %v2829 = vld [vmem:[%s2698 + $0x6c] sm:$0xf]
        %v2830 = vld [vmem:[%s2698 + $0x70] sm:$0xf]
        %v2831 = vld [vmem:[%s2698 + $0x78] sm:$0xf]
        %v2832 = vld [vmem:[%s2698 + $0x7c] sm:$0xf]
        %v2833 = vld [vmem:[%s2698 + $0x84] sm:$0xf]
        %v2834 = vld [vmem:[%s2698 + $0x88] sm:$0xf]
        %v2835 = vld [vmem:[%s2698 + $0x90] sm:$0xf]
        %v2836 = vld [vmem:[%s2698 + $0x94] sm:$0xf]
        %v2837 = vld [vmem:[%s2698 + $0x9c] sm:$0xf]
        %v2838 = vld [vmem:[%s2698 + $0xa0] sm:$0xf]
        %v2839 = vld [vmem:[%s2698 + $0xa8] sm:$0xf]
        %v2840 = vld [vmem:[%s2698 + $0xac] sm:$0xf]
        %v2841 = vld [vmem:[%s2698 + $0xb4] sm:$0xf]
        %v2842 = vld [vmem:[%s2698 + $0xb8] sm:$0xf]
        %v2843 = vld [vmem:[%s2698 + $0x8] sm:$0x1]
        %v2844 = vld [vmem:[%s2698 + $0x14] sm:$0x1]
        %v2845 = vld [vmem:[%s2698 + $0x20] sm:$0x1]
        %v2846 = vld [vmem:[%s2698 + $0x2c] sm:$0x1]
        %v2847 = vld [vmem:[%s2698 + $0x38] sm:$0x1]
        %v2848 = vld [vmem:[%s2698 + $0x44] sm:$0x1]
        %v2849 = vld [vmem:[%s2698 + $0x50] sm:$0x1]
        %v2850 = vld [vmem:[%s2698 + $0x5c] sm:$0x1]
        %v2851 = vld [vmem:[%s2698 + $0x68] sm:$0x1]
        %v2852 = vld [vmem:[%s2698 + $0x74] sm:$0x1]
        %v2853 = vld [vmem:[%s2698 + $0x80] sm:$0x1]
        %v2854 = vld [vmem:[%s2698 + $0x8c] sm:$0x1]
        %v2855 = vld [vmem:[%s2698 + $0x98] sm:$0x1]
        %v2856 = vld [vmem:[%s2698 + $0xa4] sm:$0x1]
        %v2857 = vld [vmem:[%s2698 + $0xb0] sm:$0x1]
        %v2858 = vld [vmem:[%s2698 + $0xbc] sm:$0x1]
        %v2859 = vld [vmem:[%s2698] sm:$0xe]
        %v2860 = vld [vmem:[%s2698 + $0xc] sm:$0xe]
        %v2861 = vld [vmem:[%s2698 + $0x18] sm:$0xe]
        %v2862 = vld [vmem:[%s2698 + $0x24] sm:$0xe]
        %v2863 = vld [vmem:[%s2698 + $0x30] sm:$0xe]
        %v2864 = vld [vmem:[%s2698 + $0x3c] sm:$0xe]
        %v2865 = vld [vmem:[%s2698 + $0x48] sm:$0xe]
        %v2866 = vld [vmem:[%s2698 + $0x54] sm:$0xe]
        %v2867 = vld [vmem:[%s2698 + $0x60] sm:$0xe]
        %v2868 = vld [vmem:[%s2698 + $0x6c] sm:$0xe]
        %v2869 = vld [vmem:[%s2698 + $0x78] sm:$0xe]
        %v2870 = vld [vmem:[%s2698 + $0x84] sm:$0xe]
        %v2871 = vld [vmem:[%s2698 + $0x90] sm:$0xe]
        %v2872 = vld [vmem:[%s2698 + $0x9c] sm:$0xe]
        %v2873 = vld [vmem:[%s2698 + $0xa8] sm:$0xe]
        %v2874 = vld [vmem:[%s2698 + $0xb4] sm:$0xe]
        %s2875 = scalar_lea.vmem [#allocation2], 24
        %v2876 = vld [vmem:[%s2875] sm:$0xf]
        %v2877 = vld [vmem:[%s2875 + $0x4] sm:$0xf]
        %v2878 = vld [vmem:[%s2875 + $0xc] sm:$0xf]
        %v2879 = vld [vmem:[%s2875 + $0x10] sm:$0xf]
        %v2880 = vld [vmem:[%s2875 + $0x18] sm:$0xf]
        %v2881 = vld [vmem:[%s2875 + $0x1c] sm:$0xf]
        %v2882 = vld [vmem:[%s2875 + $0x24] sm:$0xf]
        %v2883 = vld [vmem:[%s2875 + $0x28] sm:$0xf]
        %v2884 = vld [vmem:[%s2875 + $0x30] sm:$0xf]
        %v2885 = vld [vmem:[%s2875 + $0x34] sm:$0xf]
        %v2886 = vld [vmem:[%s2875 + $0x3c] sm:$0xf]
        %v2887 = vld [vmem:[%s2875 + $0x40] sm:$0xf]
        %v2888 = vld [vmem:[%s2875 + $0x48] sm:$0xf]
        %v2889 = vld [vmem:[%s2875 + $0x4c] sm:$0xf]
        %v2890 = vld [vmem:[%s2875 + $0x54] sm:$0xf]
        %v2891 = vld [vmem:[%s2875 + $0x58] sm:$0xf]
        %v2892 = vld [vmem:[%s2875 + $0x60] sm:$0xf]
        %v2893 = vld [vmem:[%s2875 + $0x64] sm:$0xf]
        %v2894 = vld [vmem:[%s2875 + $0x6c] sm:$0xf]
        %v2895 = vld [vmem:[%s2875 + $0x70] sm:$0xf]
        %v2896 = vld [vmem:[%s2875 + $0x78] sm:$0xf]
        %v2897 = vld [vmem:[%s2875 + $0x7c] sm:$0xf]
        %v2898 = vld [vmem:[%s2875 + $0x84] sm:$0xf]
        %v2899 = vld [vmem:[%s2875 + $0x88] sm:$0xf]
        %v2900 = vld [vmem:[%s2875 + $0x90] sm:$0xf]
        %v2901 = vld [vmem:[%s2875 + $0x94] sm:$0xf]
        %v2902 = vld [vmem:[%s2875 + $0x9c] sm:$0xf]
        %v2903 = vld [vmem:[%s2875 + $0xa0] sm:$0xf]
        %v2904 = vld [vmem:[%s2875 + $0xa8] sm:$0xf]
        %v2905 = vld [vmem:[%s2875 + $0xac] sm:$0xf]
        %v2906 = vld [vmem:[%s2875 + $0xb4] sm:$0xf]
        %v2907 = vld [vmem:[%s2875 + $0xb8] sm:$0xf]
        %v2908 = vld [vmem:[%s2875 + $0x8] sm:$0x1]
        %v2909 = vld [vmem:[%s2875 + $0x14] sm:$0x1]
        %v2910 = vld [vmem:[%s2875 + $0x20] sm:$0x1]
        %v2911 = vld [vmem:[%s2875 + $0x2c] sm:$0x1]
        %v2912 = vld [vmem:[%s2875 + $0x38] sm:$0x1]
        %v2913 = vld [vmem:[%s2875 + $0x44] sm:$0x1]
        %v2914 = vld [vmem:[%s2875 + $0x50] sm:$0x1]
        %v2915 = vld [vmem:[%s2875 + $0x5c] sm:$0x1]
        %v2916 = vld [vmem:[%s2875 + $0x68] sm:$0x1]
        %v2917 = vld [vmem:[%s2875 + $0x74] sm:$0x1]
        %v2918 = vld [vmem:[%s2875 + $0x80] sm:$0x1]
        %v2919 = vld [vmem:[%s2875 + $0x8c] sm:$0x1]
        %v2920 = vld [vmem:[%s2875 + $0x98] sm:$0x1]
        %v2921 = vld [vmem:[%s2875 + $0xa4] sm:$0x1]
        %v2922 = vld [vmem:[%s2875 + $0xb0] sm:$0x1]
        %v2923 = vld [vmem:[%s2875 + $0xbc] sm:$0x1]
        %v2924 = vld [vmem:[%s2875] sm:$0xe]
        %v2925 = vld [vmem:[%s2875 + $0xc] sm:$0xe]
        %v2926 = vld [vmem:[%s2875 + $0x18] sm:$0xe]
        %v2927 = vld [vmem:[%s2875 + $0x24] sm:$0xe]
        %v2928 = vld [vmem:[%s2875 + $0x30] sm:$0xe]
        %v2929 = vld [vmem:[%s2875 + $0x3c] sm:$0xe]
        %v2930 = vld [vmem:[%s2875 + $0x48] sm:$0xe]
        %v2931 = vld [vmem:[%s2875 + $0x54] sm:$0xe]
        %v2932 = vld [vmem:[%s2875 + $0x60] sm:$0xe]
        %v2933 = vld [vmem:[%s2875 + $0x6c] sm:$0xe]
        %v2934 = vld [vmem:[%s2875 + $0x78] sm:$0xe]
        %v2935 = vld [vmem:[%s2875 + $0x84] sm:$0xe]
        %v2936 = vld [vmem:[%s2875 + $0x90] sm:$0xe]
        %v2937 = vld [vmem:[%s2875 + $0x9c] sm:$0xe]
        %v2938 = vld [vmem:[%s2875 + $0xa8] sm:$0xe]
        %v2939 = vld [vmem:[%s2875 + $0xb4] sm:$0xe]
        %v2972 = vunpack.c.l.b16 %v2747
        %v2973 = vunpack.c.l.b16 %v2748
        %v2974 = vunpack.c.l.b16 %v2749
        %v2975 = vunpack.c.l.b16 %v2750
        %v2976 = vunpack.c.l.b16 %v2751
        %v2977 = vunpack.c.l.b16 %v2752
        %v2978 = vunpack.c.l.b16 %v2753
        %v2979 = vunpack.c.l.b16 %v2754
        %v2980 = vunpack.c.l.b16 %v2755
        %v2981 = vunpack.c.l.b16 %v2756
        %v2982 = vunpack.c.l.b16 %v2757
        %v2983 = vunpack.c.l.b16 %v2758
        %v2984 = vunpack.c.l.b16 %v2759
        %v2985 = vunpack.c.l.b16 %v2760
        %v2986 = vunpack.c.l.b16 %v2761
        %v2987 = vunpack.c.l.b16 %v2762
        %v2988 = vunpack.c.l.b16 %v2763
        %v2989 = vunpack.c.l.b16 %v2764
        %v2990 = vunpack.c.l.b16 %v2765
        %v2991 = vunpack.c.l.b16 %v2766
        %v2992 = vunpack.c.l.b16 %v2767
        %v2993 = vunpack.c.l.b16 %v2768
        %v2994 = vunpack.c.l.b16 %v2769
        %v2995 = vunpack.c.l.b16 %v2770
        %v2996 = vunpack.c.l.b16 %v2771
        %v2997 = vunpack.c.l.b16 %v2772
        %v2998 = vunpack.c.l.b16 %v2773
        %v2999 = vunpack.c.l.b16 %v2774
        %v3000 = vunpack.c.l.b16 %v2775
        %v3001 = vunpack.c.l.b16 %v2776
        %v3002 = vunpack.c.l.b16 %v2777
        %v3003 = vunpack.c.l.b16 %v2778
        %v3004 = vpack.c.b16 %v2973, %v2972
        %v3005 = vpack.c.b16 %v2975, %v2974
        %v3006 = vpack.c.b16 %v2977, %v2976
        %v3007 = vpack.c.b16 %v2979, %v2978
        %v3008 = vpack.c.b16 %v2981, %v2980
        %v3009 = vpack.c.b16 %v2983, %v2982
        %v3010 = vpack.c.b16 %v2985, %v2984
        %v3011 = vpack.c.b16 %v2987, %v2986
        %v3012 = vpack.c.b16 %v2989, %v2988
        %v3013 = vpack.c.b16 %v2991, %v2990
        %v3014 = vpack.c.b16 %v2993, %v2992
        %v3015 = vpack.c.b16 %v2995, %v2994
        %v3016 = vpack.c.b16 %v2997, %v2996
        %v3017 = vpack.c.b16 %v2999, %v2998
        %v3018 = vpack.c.b16 %v3001, %v3000
        %v3019 = vpack.c.b16 %v3003, %v3002
        %v3036 = vunpack.c.l.b16 %v2779
        %v3037 = vunpack.c.l.b16 %v2780
        %v3038 = vunpack.c.l.b16 %v2781
        %v3039 = vunpack.c.l.b16 %v2782
        %v3040 = vunpack.c.l.b16 %v2783
        %v3041 = vunpack.c.l.b16 %v2784
        %v3042 = vunpack.c.l.b16 %v2785
        %v3043 = vunpack.c.l.b16 %v2786
        %v3044 = vunpack.c.l.b16 %v2787
        %v3045 = vunpack.c.l.b16 %v2788
        %v3046 = vunpack.c.l.b16 %v2789
        %v3047 = vunpack.c.l.b16 %v2790
        %v3048 = vunpack.c.l.b16 %v2791
        %v3049 = vunpack.c.l.b16 %v2792
        %v3050 = vunpack.c.l.b16 %v2793
        %v3051 = vunpack.c.l.b16 %v2794
        %v3052 = vpack.c.b16 %v3036, %v3036
        %v3053 = vpack.c.b16 %v3037, %v3037
        %v3054 = vpack.c.b16 %v3038, %v3038
        %v3055 = vpack.c.b16 %v3039, %v3039
        %v3056 = vpack.c.b16 %v3040, %v3040
        %v3057 = vpack.c.b16 %v3041, %v3041
        %v3058 = vpack.c.b16 %v3042, %v3042
        %v3059 = vpack.c.b16 %v3043, %v3043
        %v3060 = vpack.c.b16 %v3044, %v3044
        %v3061 = vpack.c.b16 %v3045, %v3045
        %v3062 = vpack.c.b16 %v3046, %v3046
        %v3063 = vpack.c.b16 %v3047, %v3047
        %v3064 = vpack.c.b16 %v3048, %v3048
        %v3065 = vpack.c.b16 %v3049, %v3049
        %v3066 = vpack.c.b16 %v3050, %v3050
        %v3067 = vpack.c.b16 %v3051, %v3051
        %vm3068 = vsmask.f32 7424
        %v3070 = vshrl.u32 %v3004, 16
        %v3072 = vshll.u32 %v3004, 16
        %v3074 = vrot.slane %v3072, 1
        %v3075 = vor.u32 %v3070, %v3074
        %v3077 = vshll.u32 %v3052, 16
        %v3079 = vrot.slane %v3077, 1
        %v3080 = vsel %vm3068, %v3075, %v3079
        %v3082 = vshrl.u32 %v3005, 16
        %v3084 = vshll.u32 %v3005, 16
        %v3086 = vrot.slane %v3084, 1
        %v3087 = vor.u32 %v3082, %v3086
        %v3089 = vshll.u32 %v3053, 16
        %v3091 = vrot.slane %v3089, 1
        %v3092 = vsel %vm3068, %v3087, %v3091
        %v3094 = vshrl.u32 %v3006, 16
        %v3096 = vshll.u32 %v3006, 16
        %v3098 = vrot.slane %v3096, 1
        %v3099 = vor.u32 %v3094, %v3098
        %v3101 = vshll.u32 %v3054, 16
        %v3103 = vrot.slane %v3101, 1
        %v3104 = vsel %vm3068, %v3099, %v3103
        %v3106 = vshrl.u32 %v3007, 16
        %v3108 = vshll.u32 %v3007, 16
        %v3110 = vrot.slane %v3108, 1
        %v3111 = vor.u32 %v3106, %v3110
        %v3113 = vshll.u32 %v3055, 16
        %v3115 = vrot.slane %v3113, 1
        %v3116 = vsel %vm3068, %v3111, %v3115
        %v3118 = vshrl.u32 %v3008, 16
        %v3120 = vshll.u32 %v3008, 16
        %v3122 = vrot.slane %v3120, 1
        %v3123 = vor.u32 %v3118, %v3122
        %v3125 = vshll.u32 %v3056, 16
        %v3127 = vrot.slane %v3125, 1
        %v3128 = vsel %vm3068, %v3123, %v3127
        %v3130 = vshrl.u32 %v3009, 16
        %v3132 = vshll.u32 %v3009, 16
        %v3134 = vrot.slane %v3132, 1
        %v3135 = vor.u32 %v3130, %v3134
        %v3137 = vshll.u32 %v3057, 16
        %v3139 = vrot.slane %v3137, 1
        %v3140 = vsel %vm3068, %v3135, %v3139
        %v3142 = vshrl.u32 %v3010, 16
        %v3144 = vshll.u32 %v3010, 16
        %v3146 = vrot.slane %v3144, 1
        %v3147 = vor.u32 %v3142, %v3146
        %v3149 = vshll.u32 %v3058, 16
        %v3151 = vrot.slane %v3149, 1
        %v3152 = vsel %vm3068, %v3147, %v3151
        %v3154 = vshrl.u32 %v3011, 16
        %v3156 = vshll.u32 %v3011, 16
        %v3158 = vrot.slane %v3156, 1
        %v3159 = vor.u32 %v3154, %v3158
        %v3161 = vshll.u32 %v3059, 16
        %v3163 = vrot.slane %v3161, 1
        %v3164 = vsel %vm3068, %v3159, %v3163
        %v3166 = vshrl.u32 %v3012, 16
        %v3168 = vshll.u32 %v3012, 16
        %v3170 = vrot.slane %v3168, 1
        %v3171 = vor.u32 %v3166, %v3170
        %v3173 = vshll.u32 %v3060, 16
        %v3175 = vrot.slane %v3173, 1
        %v3176 = vsel %vm3068, %v3171, %v3175
        %v3178 = vshrl.u32 %v3013, 16
        %v3180 = vshll.u32 %v3013, 16
        %v3182 = vrot.slane %v3180, 1
        %v3183 = vor.u32 %v3178, %v3182
        %v3185 = vshll.u32 %v3061, 16
        %v3187 = vrot.slane %v3185, 1
        %v3188 = vsel %vm3068, %v3183, %v3187
        %v3190 = vshrl.u32 %v3014, 16
        %v3192 = vshll.u32 %v3014, 16
        %v3194 = vrot.slane %v3192, 1
        %v3195 = vor.u32 %v3190, %v3194
        %v3197 = vshll.u32 %v3062, 16
        %v3199 = vrot.slane %v3197, 1
        %v3200 = vsel %vm3068, %v3195, %v3199
        %v3202 = vshrl.u32 %v3015, 16
        %v3204 = vshll.u32 %v3015, 16
        %v3206 = vrot.slane %v3204, 1
        %v3207 = vor.u32 %v3202, %v3206
        %v3209 = vshll.u32 %v3063, 16
        %v3211 = vrot.slane %v3209, 1
        %v3212 = vsel %vm3068, %v3207, %v3211
        %v3214 = vshrl.u32 %v3016, 16
        %v3216 = vshll.u32 %v3016, 16
        %v3218 = vrot.slane %v3216, 1
        %v3219 = vor.u32 %v3214, %v3218
        %v3221 = vshll.u32 %v3064, 16
        %v3223 = vrot.slane %v3221, 1
        %v3224 = vsel %vm3068, %v3219, %v3223
        %v3226 = vshrl.u32 %v3017, 16
        %v3228 = vshll.u32 %v3017, 16
        %v3230 = vrot.slane %v3228, 1
        %v3231 = vor.u32 %v3226, %v3230
        %v3233 = vshll.u32 %v3065, 16
        %v3235 = vrot.slane %v3233, 1
        %v3236 = vsel %vm3068, %v3231, %v3235
        %v3238 = vshrl.u32 %v3018, 16
        %v3240 = vshll.u32 %v3018, 16
        %v3242 = vrot.slane %v3240, 1
        %v3243 = vor.u32 %v3238, %v3242
        %v3245 = vshll.u32 %v3066, 16
        %v3247 = vrot.slane %v3245, 1
        %v3248 = vsel %vm3068, %v3243, %v3247
        %v3250 = vshrl.u32 %v3019, 16
        %v3252 = vshll.u32 %v3019, 16
        %v3254 = vrot.slane %v3252, 1
        %v3255 = vor.u32 %v3250, %v3254
        %v3257 = vshll.u32 %v3067, 16
        %v3259 = vrot.slane %v3257, 1
        %v3260 = vsel %vm3068, %v3255, %v3259
        %3261 = vrot.lane.b32.xlu0 %v3080, 4
        %v3262 = vpop.permute.xlu0 %3261
        %3263 = vrot.lane.b32.xlu0 %v3092, 4
        %v3264 = vpop.permute.xlu0 %3263
        %3265 = vrot.lane.b32.xlu0 %v3104, 4
        %v3266 = vpop.permute.xlu0 %3265
        %3267 = vrot.lane.b32.xlu0 %v3116, 4
        %v3268 = vpop.permute.xlu0 %3267
        %3269 = vrot.lane.b32.xlu0 %v3128, 4
        %v3270 = vpop.permute.xlu0 %3269
        %3271 = vrot.lane.b32.xlu0 %v3140, 4
        %v3272 = vpop.permute.xlu0 %3271
        %3273 = vrot.lane.b32.xlu0 %v3152, 4
        %v3274 = vpop.permute.xlu0 %3273
        %3275 = vrot.lane.b32.xlu0 %v3164, 4
        %v3276 = vpop.permute.xlu0 %3275
        %3277 = vrot.lane.b32.xlu0 %v3176, 4
        %v3278 = vpop.permute.xlu0 %3277
        %3279 = vrot.lane.b32.xlu0 %v3188, 4
        %v3280 = vpop.permute.xlu0 %3279
        %3281 = vrot.lane.b32.xlu0 %v3200, 4
        %v3282 = vpop.permute.xlu0 %3281
        %3283 = vrot.lane.b32.xlu0 %v3212, 4
        %v3284 = vpop.permute.xlu0 %3283
        %3285 = vrot.lane.b32.xlu0 %v3224, 4
        %v3286 = vpop.permute.xlu0 %3285
        %3287 = vrot.lane.b32.xlu0 %v3236, 4
        %v3288 = vpop.permute.xlu0 %3287
        %3289 = vrot.lane.b32.xlu0 %v3248, 4
        %v3290 = vpop.permute.xlu0 %3289
        %3291 = vrot.lane.b32.xlu0 %v3260, 4
        %v3292 = vpop.permute.xlu0 %3291
        %v3309 = vunpack.c.l.b16 %v2795
        %v3310 = vunpack.c.l.b16 %v2796
        %v3311 = vunpack.c.l.b16 %v2797
        %v3312 = vunpack.c.l.b16 %v2798
        %v3313 = vunpack.c.l.b16 %v2799
        %v3314 = vunpack.c.l.b16 %v2800
        %v3315 = vunpack.c.l.b16 %v2801
        %v3316 = vunpack.c.l.b16 %v2802
        %v3317 = vunpack.c.l.b16 %v2803
        %v3318 = vunpack.c.l.b16 %v2804
        %v3319 = vunpack.c.l.b16 %v2805
        %v3320 = vunpack.c.l.b16 %v2806
        %v3321 = vunpack.c.l.b16 %v2807
        %v3322 = vunpack.c.l.b16 %v2808
        %v3323 = vunpack.c.l.b16 %v2809
        %v3324 = vunpack.c.l.b16 %v2810
        %v3325 = vpack.c.b16 %v2973, %v3309
        %v3326 = vpack.c.b16 %v2975, %v3310
        %v3327 = vpack.c.b16 %v2977, %v3311
        %v3328 = vpack.c.b16 %v2979, %v3312
        %v3329 = vpack.c.b16 %v2981, %v3313
        %v3330 = vpack.c.b16 %v2983, %v3314
        %v3331 = vpack.c.b16 %v2985, %v3315
        %v3332 = vpack.c.b16 %v2987, %v3316
        %v3333 = vpack.c.b16 %v2989, %v3317
        %v3334 = vpack.c.b16 %v2991, %v3318
        %v3335 = vpack.c.b16 %v2993, %v3319
        %v3336 = vpack.c.b16 %v2995, %v3320
        %v3337 = vpack.c.b16 %v2997, %v3321
        %v3338 = vpack.c.b16 %v2999, %v3322
        %v3339 = vpack.c.b16 %v3001, %v3323
        %v3340 = vpack.c.b16 %v3003, %v3324
        %vm3341 = vcmask 1046528
        %v3342 = vrot.slane %v3325, 1
        %v3343 = vrot.slane %v3052, 1
        %v3344 = vsel %vm3341, %v3342, %v3343
        %v3345 = vrot.slane %v3326, 1
        %v3346 = vrot.slane %v3053, 1
        %v3347 = vsel %vm3341, %v3345, %v3346
        %v3348 = vrot.slane %v3327, 1
        %v3349 = vrot.slane %v3054, 1
        %v3350 = vsel %vm3341, %v3348, %v3349
        %v3351 = vrot.slane %v3328, 1
        %v3352 = vrot.slane %v3055, 1
        %v3353 = vsel %vm3341, %v3351, %v3352
        %v3354 = vrot.slane %v3329, 1
        %v3355 = vrot.slane %v3056, 1
        %v3356 = vsel %vm3341, %v3354, %v3355
        %v3357 = vrot.slane %v3330, 1
        %v3358 = vrot.slane %v3057, 1
        %v3359 = vsel %vm3341, %v3357, %v3358
        %v3360 = vrot.slane %v3331, 1
        %v3361 = vrot.slane %v3058, 1
        %v3362 = vsel %vm3341, %v3360, %v3361
        %v3363 = vrot.slane %v3332, 1
        %v3364 = vrot.slane %v3059, 1
        %v3365 = vsel %vm3341, %v3363, %v3364
        %v3366 = vrot.slane %v3333, 1
        %v3367 = vrot.slane %v3060, 1
        %v3368 = vsel %vm3341, %v3366, %v3367
        %v3369 = vrot.slane %v3334, 1
        %v3370 = vrot.slane %v3061, 1
        %v3371 = vsel %vm3341, %v3369, %v3370
        %v3372 = vrot.slane %v3335, 1
        %v3373 = vrot.slane %v3062, 1
        %v3374 = vsel %vm3341, %v3372, %v3373
        %v3375 = vrot.slane %v3336, 1
        %v3376 = vrot.slane %v3063, 1
        %v3377 = vsel %vm3341, %v3375, %v3376
        %v3378 = vrot.slane %v3337, 1
        %v3379 = vrot.slane %v3064, 1
        %v3380 = vsel %vm3341, %v3378, %v3379
        %v3381 = vrot.slane %v3338, 1
        %v3382 = vrot.slane %v3065, 1
        %v3383 = vsel %vm3341, %v3381, %v3382
        %v3384 = vrot.slane %v3339, 1
        %v3385 = vrot.slane %v3066, 1
        %v3386 = vsel %vm3341, %v3384, %v3385
        %v3387 = vrot.slane %v3340, 1
        %v3388 = vrot.slane %v3067, 1
        %v3389 = vsel %vm3341, %v3387, %v3388
        %3390 = vrot.lane.b32.xlu0 %v3344, 8
        %v3391 = vpop.permute.xlu0 %3390
        %3392 = vrot.lane.b32.xlu0 %v3347, 8
        %v3393 = vpop.permute.xlu0 %3392
        %3394 = vrot.lane.b32.xlu0 %v3350, 8
        %v3395 = vpop.permute.xlu0 %3394
        %3396 = vrot.lane.b32.xlu0 %v3353, 8
        %v3397 = vpop.permute.xlu0 %3396
        %3398 = vrot.lane.b32.xlu0 %v3356, 8
        %v3399 = vpop.permute.xlu0 %3398
        %3400 = vrot.lane.b32.xlu0 %v3359, 8
        %v3401 = vpop.permute.xlu0 %3400
        %3402 = vrot.lane.b32.xlu0 %v3362, 8
        %v3403 = vpop.permute.xlu0 %3402
        %3404 = vrot.lane.b32.xlu0 %v3365, 8
        %v3405 = vpop.permute.xlu0 %3404
        %3406 = vrot.lane.b32.xlu0 %v3368, 8
        %v3407 = vpop.permute.xlu0 %3406
        %3408 = vrot.lane.b32.xlu0 %v3371, 8
        %v3409 = vpop.permute.xlu0 %3408
        %3410 = vrot.lane.b32.xlu0 %v3374, 8
        %v3411 = vpop.permute.xlu0 %3410
        %3412 = vrot.lane.b32.xlu0 %v3377, 8
        %v3413 = vpop.permute.xlu0 %3412
        %3414 = vrot.lane.b32.xlu0 %v3380, 8
        %v3415 = vpop.permute.xlu0 %3414
        %3416 = vrot.lane.b32.xlu0 %v3383, 8
        %v3417 = vpop.permute.xlu0 %3416
        %3418 = vrot.lane.b32.xlu0 %v3386, 8
        %v3419 = vpop.permute.xlu0 %3418
        %3420 = vrot.lane.b32.xlu0 %v3389, 8
        %v3421 = vpop.permute.xlu0 %3420
        %v3454 = vunpack.c.l.b16 %v2811
        %v3455 = vunpack.c.l.b16 %v2812
        %v3456 = vunpack.c.l.b16 %v2813
        %v3457 = vunpack.c.l.b16 %v2814
        %v3458 = vunpack.c.l.b16 %v2815
        %v3459 = vunpack.c.l.b16 %v2816
        %v3460 = vunpack.c.l.b16 %v2817
        %v3461 = vunpack.c.l.b16 %v2818
        %v3462 = vunpack.c.l.b16 %v2819
        %v3463 = vunpack.c.l.b16 %v2820
        %v3464 = vunpack.c.l.b16 %v2821
        %v3465 = vunpack.c.l.b16 %v2822
        %v3466 = vunpack.c.l.b16 %v2823
        %v3467 = vunpack.c.l.b16 %v2824
        %v3468 = vunpack.c.l.b16 %v2825
        %v3469 = vunpack.c.l.b16 %v2826
        %v3470 = vunpack.c.l.b16 %v2827
        %v3471 = vunpack.c.l.b16 %v2828
        %v3472 = vunpack.c.l.b16 %v2829
        %v3473 = vunpack.c.l.b16 %v2830
        %v3474 = vunpack.c.l.b16 %v2831
        %v3475 = vunpack.c.l.b16 %v2832
        %v3476 = vunpack.c.l.b16 %v2833
        %v3477 = vunpack.c.l.b16 %v2834
        %v3478 = vunpack.c.l.b16 %v2835
        %v3479 = vunpack.c.l.b16 %v2836
        %v3480 = vunpack.c.l.b16 %v2837
        %v3481 = vunpack.c.l.b16 %v2838
        %v3482 = vunpack.c.l.b16 %v2839
        %v3483 = vunpack.c.l.b16 %v2840
        %v3484 = vunpack.c.l.b16 %v2841
        %v3485 = vunpack.c.l.b16 %v2842
        %v3486 = vpack.c.b16 %v3455, %v3454
        %v3487 = vpack.c.b16 %v3457, %v3456
        %v3488 = vpack.c.b16 %v3459, %v3458
        %v3489 = vpack.c.b16 %v3461, %v3460
        %v3490 = vpack.c.b16 %v3463, %v3462
        %v3491 = vpack.c.b16 %v3465, %v3464
        %v3492 = vpack.c.b16 %v3467, %v3466
        %v3493 = vpack.c.b16 %v3469, %v3468
        %v3494 = vpack.c.b16 %v3471, %v3470
        %v3495 = vpack.c.b16 %v3473, %v3472
        %v3496 = vpack.c.b16 %v3475, %v3474
        %v3497 = vpack.c.b16 %v3477, %v3476
        %v3498 = vpack.c.b16 %v3479, %v3478
        %v3499 = vpack.c.b16 %v3481, %v3480
        %v3500 = vpack.c.b16 %v3483, %v3482
        %v3501 = vpack.c.b16 %v3485, %v3484
        %3502 = vrot.lane.b32.xlu0 %v3486, 12
        %v3503 = vpop.permute.xlu0 %3502
        %3504 = vrot.lane.b32.xlu0 %v3487, 12
        %v3505 = vpop.permute.xlu0 %3504
        %3506 = vrot.lane.b32.xlu0 %v3488, 12
        %v3507 = vpop.permute.xlu0 %3506
        %3508 = vrot.lane.b32.xlu0 %v3489, 12
        %v3509 = vpop.permute.xlu0 %3508
        %3510 = vrot.lane.b32.xlu0 %v3490, 12
        %v3511 = vpop.permute.xlu0 %3510
        %3512 = vrot.lane.b32.xlu0 %v3491, 12
        %v3513 = vpop.permute.xlu0 %3512
        %3514 = vrot.lane.b32.xlu0 %v3492, 12
        %v3515 = vpop.permute.xlu0 %3514
        %3516 = vrot.lane.b32.xlu0 %v3493, 12
        %v3517 = vpop.permute.xlu0 %3516
        %3518 = vrot.lane.b32.xlu0 %v3494, 12
        %v3519 = vpop.permute.xlu0 %3518
        %3520 = vrot.lane.b32.xlu0 %v3495, 12
        %v3521 = vpop.permute.xlu0 %3520
        %3522 = vrot.lane.b32.xlu0 %v3496, 12
        %v3523 = vpop.permute.xlu0 %3522
        %3524 = vrot.lane.b32.xlu0 %v3497, 12
        %v3525 = vpop.permute.xlu0 %3524
        %3526 = vrot.lane.b32.xlu0 %v3498, 12
        %v3527 = vpop.permute.xlu0 %3526
        %3528 = vrot.lane.b32.xlu0 %v3499, 12
        %v3529 = vpop.permute.xlu0 %3528
        %3530 = vrot.lane.b32.xlu0 %v3500, 12
        %v3531 = vpop.permute.xlu0 %3530
        %3532 = vrot.lane.b32.xlu0 %v3501, 12
        %v3533 = vpop.permute.xlu0 %3532
        %v3550 = vunpack.c.l.b16 %v2843
        %v3551 = vunpack.c.l.b16 %v2844
        %v3552 = vunpack.c.l.b16 %v2845
        %v3553 = vunpack.c.l.b16 %v2846
        %v3554 = vunpack.c.l.b16 %v2847
        %v3555 = vunpack.c.l.b16 %v2848
        %v3556 = vunpack.c.l.b16 %v2849
        %v3557 = vunpack.c.l.b16 %v2850
        %v3558 = vunpack.c.l.b16 %v2851
        %v3559 = vunpack.c.l.b16 %v2852
        %v3560 = vunpack.c.l.b16 %v2853
        %v3561 = vunpack.c.l.b16 %v2854
        %v3562 = vunpack.c.l.b16 %v2855
        %v3563 = vunpack.c.l.b16 %v2856
        %v3564 = vunpack.c.l.b16 %v2857
        %v3565 = vunpack.c.l.b16 %v2858
        %v3566 = vpack.c.b16 %v3550, %v3550
        %v3567 = vpack.c.b16 %v3551, %v3551
        %v3568 = vpack.c.b16 %v3552, %v3552
        %v3569 = vpack.c.b16 %v3553, %v3553
        %v3570 = vpack.c.b16 %v3554, %v3554
        %v3571 = vpack.c.b16 %v3555, %v3555
        %v3572 = vpack.c.b16 %v3556, %v3556
        %v3573 = vpack.c.b16 %v3557, %v3557
        %v3574 = vpack.c.b16 %v3558, %v3558
        %v3575 = vpack.c.b16 %v3559, %v3559
        %v3576 = vpack.c.b16 %v3560, %v3560
        %v3577 = vpack.c.b16 %v3561, %v3561
        %v3578 = vpack.c.b16 %v3562, %v3562
        %v3579 = vpack.c.b16 %v3563, %v3563
        %v3580 = vpack.c.b16 %v3564, %v3564
        %v3581 = vpack.c.b16 %v3565, %v3565
        %v3583 = vshrl.u32 %v3486, 16
        %v3585 = vshll.u32 %v3486, 16
        %v3587 = vrot.slane %v3585, 1
        %v3588 = vor.u32 %v3583, %v3587
        %v3590 = vshll.u32 %v3566, 16
        %v3592 = vrot.slane %v3590, 1
        %v3593 = vsel %vm3068, %v3588, %v3592
        %v3595 = vshrl.u32 %v3487, 16
        %v3597 = vshll.u32 %v3487, 16
        %v3599 = vrot.slane %v3597, 1
        %v3600 = vor.u32 %v3595, %v3599
        %v3602 = vshll.u32 %v3567, 16
        %v3604 = vrot.slane %v3602, 1
        %v3605 = vsel %vm3068, %v3600, %v3604
        %v3607 = vshrl.u32 %v3488, 16
        %v3609 = vshll.u32 %v3488, 16
        %v3611 = vrot.slane %v3609, 1
        %v3612 = vor.u32 %v3607, %v3611
        %v3614 = vshll.u32 %v3568, 16
        %v3616 = vrot.slane %v3614, 1
        %v3617 = vsel %vm3068, %v3612, %v3616
        %v3619 = vshrl.u32 %v3489, 16
        %v3621 = vshll.u32 %v3489, 16
        %v3623 = vrot.slane %v3621, 1
        %v3624 = vor.u32 %v3619, %v3623
        %v3626 = vshll.u32 %v3569, 16
        %v3628 = vrot.slane %v3626, 1
        %v3629 = vsel %vm3068, %v3624, %v3628
        %v3631 = vshrl.u32 %v3490, 16
        %v3633 = vshll.u32 %v3490, 16
        %v3635 = vrot.slane %v3633, 1
        %v3636 = vor.u32 %v3631, %v3635
        %v3638 = vshll.u32 %v3570, 16
        %v3640 = vrot.slane %v3638, 1
        %v3641 = vsel %vm3068, %v3636, %v3640
        %v3643 = vshrl.u32 %v3491, 16
        %v3645 = vshll.u32 %v3491, 16
        %v3647 = vrot.slane %v3645, 1
        %v3648 = vor.u32 %v3643, %v3647
        %v3650 = vshll.u32 %v3571, 16
        %v3652 = vrot.slane %v3650, 1
        %v3653 = vsel %vm3068, %v3648, %v3652
        %v3655 = vshrl.u32 %v3492, 16
        %v3657 = vshll.u32 %v3492, 16
        %v3659 = vrot.slane %v3657, 1
        %v3660 = vor.u32 %v3655, %v3659
        %v3662 = vshll.u32 %v3572, 16
        %v3664 = vrot.slane %v3662, 1
        %v3665 = vsel %vm3068, %v3660, %v3664
        %v3667 = vshrl.u32 %v3493, 16
        %v3669 = vshll.u32 %v3493, 16
        %v3671 = vrot.slane %v3669, 1
        %v3672 = vor.u32 %v3667, %v3671
        %v3674 = vshll.u32 %v3573, 16
        %v3676 = vrot.slane %v3674, 1
        %v3677 = vsel %vm3068, %v3672, %v3676
        %v3679 = vshrl.u32 %v3494, 16
        %v3681 = vshll.u32 %v3494, 16
        %v3683 = vrot.slane %v3681, 1
        %v3684 = vor.u32 %v3679, %v3683
        %v3686 = vshll.u32 %v3574, 16
        %v3688 = vrot.slane %v3686, 1
        %v3689 = vsel %vm3068, %v3684, %v3688
        %v3691 = vshrl.u32 %v3495, 16
        %v3693 = vshll.u32 %v3495, 16
        %v3695 = vrot.slane %v3693, 1
        %v3696 = vor.u32 %v3691, %v3695
        %v3698 = vshll.u32 %v3575, 16
        %v3700 = vrot.slane %v3698, 1
        %v3701 = vsel %vm3068, %v3696, %v3700
        %v3703 = vshrl.u32 %v3496, 16
        %v3705 = vshll.u32 %v3496, 16
        %v3707 = vrot.slane %v3705, 1
        %v3708 = vor.u32 %v3703, %v3707
        %v3710 = vshll.u32 %v3576, 16
        %v3712 = vrot.slane %v3710, 1
        %v3713 = vsel %vm3068, %v3708, %v3712
        %v3715 = vshrl.u32 %v3497, 16
        %v3717 = vshll.u32 %v3497, 16
        %v3719 = vrot.slane %v3717, 1
        %v3720 = vor.u32 %v3715, %v3719
        %v3722 = vshll.u32 %v3577, 16
        %v3724 = vrot.slane %v3722, 1
        %v3725 = vsel %vm3068, %v3720, %v3724
        %v3727 = vshrl.u32 %v3498, 16
        %v3729 = vshll.u32 %v3498, 16
        %v3731 = vrot.slane %v3729, 1
        %v3732 = vor.u32 %v3727, %v3731
        %v3734 = vshll.u32 %v3578, 16
        %v3736 = vrot.slane %v3734, 1
        %v3737 = vsel %vm3068, %v3732, %v3736
        %v3739 = vshrl.u32 %v3499, 16
        %v3741 = vshll.u32 %v3499, 16
        %v3743 = vrot.slane %v3741, 1
        %v3744 = vor.u32 %v3739, %v3743
        %v3746 = vshll.u32 %v3579, 16
        %v3748 = vrot.slane %v3746, 1
        %v3749 = vsel %vm3068, %v3744, %v3748
        %v3751 = vshrl.u32 %v3500, 16
        %v3753 = vshll.u32 %v3500, 16
        %v3755 = vrot.slane %v3753, 1
        %v3756 = vor.u32 %v3751, %v3755
        %v3758 = vshll.u32 %v3580, 16
        %v3760 = vrot.slane %v3758, 1
        %v3761 = vsel %vm3068, %v3756, %v3760
        %v3763 = vshrl.u32 %v3501, 16
        %v3765 = vshll.u32 %v3501, 16
        %v3767 = vrot.slane %v3765, 1
        %v3768 = vor.u32 %v3763, %v3767
        %v3770 = vshll.u32 %v3581, 16
        %v3772 = vrot.slane %v3770, 1
        %v3773 = vsel %vm3068, %v3768, %v3772
        %3774 = vrot.lane.b32.xlu0 %v3593, 16
        %v3775 = vpop.permute.xlu0 %3774
        %3776 = vrot.lane.b32.xlu0 %v3605, 16
        %v3777 = vpop.permute.xlu0 %3776
        %3778 = vrot.lane.b32.xlu0 %v3617, 16
        %v3779 = vpop.permute.xlu0 %3778
        %3780 = vrot.lane.b32.xlu0 %v3629, 16
        %v3781 = vpop.permute.xlu0 %3780
        %3782 = vrot.lane.b32.xlu0 %v3641, 16
        %v3783 = vpop.permute.xlu0 %3782
        %3784 = vrot.lane.b32.xlu0 %v3653, 16
        %v3785 = vpop.permute.xlu0 %3784
        %3786 = vrot.lane.b32.xlu0 %v3665, 16
        %v3787 = vpop.permute.xlu0 %3786
        %3788 = vrot.lane.b32.xlu0 %v3677, 16
        %v3789 = vpop.permute.xlu0 %3788
        %3790 = vrot.lane.b32.xlu0 %v3689, 16
        %v3791 = vpop.permute.xlu0 %3790
        %3792 = vrot.lane.b32.xlu0 %v3701, 16
        %v3793 = vpop.permute.xlu0 %3792
        %3794 = vrot.lane.b32.xlu0 %v3713, 16
        %v3795 = vpop.permute.xlu0 %3794
        %3796 = vrot.lane.b32.xlu0 %v3725, 16
        %v3797 = vpop.permute.xlu0 %3796
        %3798 = vrot.lane.b32.xlu0 %v3737, 16
        %v3799 = vpop.permute.xlu0 %3798
        %3800 = vrot.lane.b32.xlu0 %v3749, 16
        %v3801 = vpop.permute.xlu0 %3800
        %3802 = vrot.lane.b32.xlu0 %v3761, 16
        %v3803 = vpop.permute.xlu0 %3802
        %3804 = vrot.lane.b32.xlu0 %v3773, 16
        %v3805 = vpop.permute.xlu0 %3804
        %v3822 = vunpack.c.l.b16 %v2859
        %v3823 = vunpack.c.l.b16 %v2860
        %v3824 = vunpack.c.l.b16 %v2861
        %v3825 = vunpack.c.l.b16 %v2862
        %v3826 = vunpack.c.l.b16 %v2863
        %v3827 = vunpack.c.l.b16 %v2864
        %v3828 = vunpack.c.l.b16 %v2865
        %v3829 = vunpack.c.l.b16 %v2866
        %v3830 = vunpack.c.l.b16 %v2867
        %v3831 = vunpack.c.l.b16 %v2868
        %v3832 = vunpack.c.l.b16 %v2869
        %v3833 = vunpack.c.l.b16 %v2870
        %v3834 = vunpack.c.l.b16 %v2871
        %v3835 = vunpack.c.l.b16 %v2872
        %v3836 = vunpack.c.l.b16 %v2873
        %v3837 = vunpack.c.l.b16 %v2874
        %v3838 = vpack.c.b16 %v3455, %v3822
        %v3839 = vpack.c.b16 %v3457, %v3823
        %v3840 = vpack.c.b16 %v3459, %v3824
        %v3841 = vpack.c.b16 %v3461, %v3825
        %v3842 = vpack.c.b16 %v3463, %v3826
        %v3843 = vpack.c.b16 %v3465, %v3827
        %v3844 = vpack.c.b16 %v3467, %v3828
        %v3845 = vpack.c.b16 %v3469, %v3829
        %v3846 = vpack.c.b16 %v3471, %v3830
        %v3847 = vpack.c.b16 %v3473, %v3831
        %v3848 = vpack.c.b16 %v3475, %v3832
        %v3849 = vpack.c.b16 %v3477, %v3833
        %v3850 = vpack.c.b16 %v3479, %v3834
        %v3851 = vpack.c.b16 %v3481, %v3835
        %v3852 = vpack.c.b16 %v3483, %v3836
        %v3853 = vpack.c.b16 %v3485, %v3837
        %v3854 = vrot.slane %v3838, 1
        %v3855 = vrot.slane %v3566, 1
        %v3856 = vsel %vm3341, %v3854, %v3855
        %v3857 = vrot.slane %v3839, 1
        %v3858 = vrot.slane %v3567, 1
        %v3859 = vsel %vm3341, %v3857, %v3858
        %v3860 = vrot.slane %v3840, 1
        %v3861 = vrot.slane %v3568, 1
        %v3862 = vsel %vm3341, %v3860, %v3861
        %v3863 = vrot.slane %v3841, 1
        %v3864 = vrot.slane %v3569, 1
        %v3865 = vsel %vm3341, %v3863, %v3864
        %v3866 = vrot.slane %v3842, 1
        %v3867 = vrot.slane %v3570, 1
        %v3868 = vsel %vm3341, %v3866, %v3867
        %v3869 = vrot.slane %v3843, 1
        %v3870 = vrot.slane %v3571, 1
        %v3871 = vsel %vm3341, %v3869, %v3870
        %v3872 = vrot.slane %v3844, 1
        %v3873 = vrot.slane %v3572, 1
        %v3874 = vsel %vm3341, %v3872, %v3873
        %v3875 = vrot.slane %v3845, 1
        %v3876 = vrot.slane %v3573, 1
        %v3877 = vsel %vm3341, %v3875, %v3876
        %v3878 = vrot.slane %v3846, 1
        %v3879 = vrot.slane %v3574, 1
        %v3880 = vsel %vm3341, %v3878, %v3879
        %v3881 = vrot.slane %v3847, 1
        %v3882 = vrot.slane %v3575, 1
        %v3883 = vsel %vm3341, %v3881, %v3882
        %v3884 = vrot.slane %v3848, 1
        %v3885 = vrot.slane %v3576, 1
        %v3886 = vsel %vm3341, %v3884, %v3885
        %v3887 = vrot.slane %v3849, 1
        %v3888 = vrot.slane %v3577, 1
        %v3889 = vsel %vm3341, %v3887, %v3888
        %v3890 = vrot.slane %v3850, 1
        %v3891 = vrot.slane %v3578, 1
        %v3892 = vsel %vm3341, %v3890, %v3891
        %v3893 = vrot.slane %v3851, 1
        %v3894 = vrot.slane %v3579, 1
        %v3895 = vsel %vm3341, %v3893, %v3894
        %v3896 = vrot.slane %v3852, 1
        %v3897 = vrot.slane %v3580, 1
        %v3898 = vsel %vm3341, %v3896, %v3897
        %v3899 = vrot.slane %v3853, 1
        %v3900 = vrot.slane %v3581, 1
        %v3901 = vsel %vm3341, %v3899, %v3900
        %3902 = vrot.lane.b32.xlu0 %v3856, 20
        %v3903 = vpop.permute.xlu0 %3902
        %3904 = vrot.lane.b32.xlu0 %v3859, 20
        %v3905 = vpop.permute.xlu0 %3904
        %3906 = vrot.lane.b32.xlu0 %v3862, 20
        %v3907 = vpop.permute.xlu0 %3906
        %3908 = vrot.lane.b32.xlu0 %v3865, 20
        %v3909 = vpop.permute.xlu0 %3908
        %3910 = vrot.lane.b32.xlu0 %v3868, 20
        %v3911 = vpop.permute.xlu0 %3910
        %3912 = vrot.lane.b32.xlu0 %v3871, 20
        %v3913 = vpop.permute.xlu0 %3912
        %3914 = vrot.lane.b32.xlu0 %v3874, 20
        %v3915 = vpop.permute.xlu0 %3914
        %3916 = vrot.lane.b32.xlu0 %v3877, 20
        %v3917 = vpop.permute.xlu0 %3916
        %3918 = vrot.lane.b32.xlu0 %v3880, 20
        %v3919 = vpop.permute.xlu0 %3918
        %3920 = vrot.lane.b32.xlu0 %v3883, 20
        %v3921 = vpop.permute.xlu0 %3920
        %3922 = vrot.lane.b32.xlu0 %v3886, 20
        %v3923 = vpop.permute.xlu0 %3922
        %3924 = vrot.lane.b32.xlu0 %v3889, 20
        %v3925 = vpop.permute.xlu0 %3924
        %3926 = vrot.lane.b32.xlu0 %v3892, 20
        %v3927 = vpop.permute.xlu0 %3926
        %3928 = vrot.lane.b32.xlu0 %v3895, 20
        %v3929 = vpop.permute.xlu0 %3928
        %3930 = vrot.lane.b32.xlu0 %v3898, 20
        %v3931 = vpop.permute.xlu0 %3930
        %3932 = vrot.lane.b32.xlu0 %v3901, 20
        %v3933 = vpop.permute.xlu0 %3932
        %v3966 = vunpack.c.l.b16 %v2876
        %v3967 = vunpack.c.l.b16 %v2877
        %v3968 = vunpack.c.l.b16 %v2878
        %v3969 = vunpack.c.l.b16 %v2879
        %v3970 = vunpack.c.l.b16 %v2880
        %v3971 = vunpack.c.l.b16 %v2881
        %v3972 = vunpack.c.l.b16 %v2882
        %v3973 = vunpack.c.l.b16 %v2883
        %v3974 = vunpack.c.l.b16 %v2884
        %v3975 = vunpack.c.l.b16 %v2885
        %v3976 = vunpack.c.l.b16 %v2886
        %v3977 = vunpack.c.l.b16 %v2887
        %v3978 = vunpack.c.l.b16 %v2888
        %v3979 = vunpack.c.l.b16 %v2889
        %v3980 = vunpack.c.l.b16 %v2890
        %v3981 = vunpack.c.l.b16 %v2891
        %v3982 = vunpack.c.l.b16 %v2892
        %v3983 = vunpack.c.l.b16 %v2893
        %v3984 = vunpack.c.l.b16 %v2894
        %v3985 = vunpack.c.l.b16 %v2895
        %v3986 = vunpack.c.l.b16 %v2896
        %v3987 = vunpack.c.l.b16 %v2897
        %v3988 = vunpack.c.l.b16 %v2898
        %v3989 = vunpack.c.l.b16 %v2899
        %v3990 = vunpack.c.l.b16 %v2900
        %v3991 = vunpack.c.l.b16 %v2901
        %v3992 = vunpack.c.l.b16 %v2902
        %v3993 = vunpack.c.l.b16 %v2903
        %v3994 = vunpack.c.l.b16 %v2904
        %v3995 = vunpack.c.l.b16 %v2905
        %v3996 = vunpack.c.l.b16 %v2906
        %v3997 = vunpack.c.l.b16 %v2907
        %v3998 = vpack.c.b16 %v3967, %v3966
        %v3999 = vpack.c.b16 %v3969, %v3968
        %v4000 = vpack.c.b16 %v3971, %v3970
        %v4001 = vpack.c.b16 %v3973, %v3972
        %v4002 = vpack.c.b16 %v3975, %v3974
        %v4003 = vpack.c.b16 %v3977, %v3976
        %v4004 = vpack.c.b16 %v3979, %v3978
        %v4005 = vpack.c.b16 %v3981, %v3980
        %v4006 = vpack.c.b16 %v3983, %v3982
        %v4007 = vpack.c.b16 %v3985, %v3984
        %v4008 = vpack.c.b16 %v3987, %v3986
        %v4009 = vpack.c.b16 %v3989, %v3988
        %v4010 = vpack.c.b16 %v3991, %v3990
        %v4011 = vpack.c.b16 %v3993, %v3992
        %v4012 = vpack.c.b16 %v3995, %v3994
        %v4013 = vpack.c.b16 %v3997, %v3996
        %4014 = vrot.lane.b32.xlu0 %v3998, 24
        %v4015 = vpop.permute.xlu0 %4014
        %4016 = vrot.lane.b32.xlu0 %v3999, 24
        %v4017 = vpop.permute.xlu0 %4016
        %4018 = vrot.lane.b32.xlu0 %v4000, 24
        %v4019 = vpop.permute.xlu0 %4018
        %4020 = vrot.lane.b32.xlu0 %v4001, 24
        %v4021 = vpop.permute.xlu0 %4020
        %4022 = vrot.lane.b32.xlu0 %v4002, 24
        %v4023 = vpop.permute.xlu0 %4022
        %4024 = vrot.lane.b32.xlu0 %v4003, 24
        %v4025 = vpop.permute.xlu0 %4024
        %4026 = vrot.lane.b32.xlu0 %v4004, 24
        %v4027 = vpop.permute.xlu0 %4026
        %4028 = vrot.lane.b32.xlu0 %v4005, 24
        %v4029 = vpop.permute.xlu0 %4028
        %4030 = vrot.lane.b32.xlu0 %v4006, 24
        %v4031 = vpop.permute.xlu0 %4030
        %4032 = vrot.lane.b32.xlu0 %v4007, 24
        %v4033 = vpop.permute.xlu0 %4032
        %4034 = vrot.lane.b32.xlu0 %v4008, 24
        %v4035 = vpop.permute.xlu0 %4034
        %4036 = vrot.lane.b32.xlu0 %v4009, 24
        %v4037 = vpop.permute.xlu0 %4036
        %4038 = vrot.lane.b32.xlu0 %v4010, 24
        %v4039 = vpop.permute.xlu0 %4038
        %4040 = vrot.lane.b32.xlu0 %v4011, 24
        %v4041 = vpop.permute.xlu0 %4040
        %4042 = vrot.lane.b32.xlu0 %v4012, 24
        %v4043 = vpop.permute.xlu0 %4042
        %4044 = vrot.lane.b32.xlu0 %v4013, 24
        %v4045 = vpop.permute.xlu0 %4044
        %v4062 = vunpack.c.l.b16 %v2908
        %v4063 = vunpack.c.l.b16 %v2909
        %v4064 = vunpack.c.l.b16 %v2910
        %v4065 = vunpack.c.l.b16 %v2911
        %v4066 = vunpack.c.l.b16 %v2912
        %v4067 = vunpack.c.l.b16 %v2913
        %v4068 = vunpack.c.l.b16 %v2914
        %v4069 = vunpack.c.l.b16 %v2915
        %v4070 = vunpack.c.l.b16 %v2916
        %v4071 = vunpack.c.l.b16 %v2917
        %v4072 = vunpack.c.l.b16 %v2918
        %v4073 = vunpack.c.l.b16 %v2919
        %v4074 = vunpack.c.l.b16 %v2920
        %v4075 = vunpack.c.l.b16 %v2921
        %v4076 = vunpack.c.l.b16 %v2922
        %v4077 = vunpack.c.l.b16 %v2923
        %v4078 = vpack.c.b16 %v4062, %v4062
        %v4079 = vpack.c.b16 %v4063, %v4063
        %v4080 = vpack.c.b16 %v4064, %v4064
        %v4081 = vpack.c.b16 %v4065, %v4065
        %v4082 = vpack.c.b16 %v4066, %v4066
        %v4083 = vpack.c.b16 %v4067, %v4067
        %v4084 = vpack.c.b16 %v4068, %v4068
        %v4085 = vpack.c.b16 %v4069, %v4069
        %v4086 = vpack.c.b16 %v4070, %v4070
        %v4087 = vpack.c.b16 %v4071, %v4071
        %v4088 = vpack.c.b16 %v4072, %v4072
        %v4089 = vpack.c.b16 %v4073, %v4073
        %v4090 = vpack.c.b16 %v4074, %v4074
        %v4091 = vpack.c.b16 %v4075, %v4075
        %v4092 = vpack.c.b16 %v4076, %v4076
        %v4093 = vpack.c.b16 %v4077, %v4077
        %v4095 = vshrl.u32 %v3998, 16
        %v4097 = vshll.u32 %v3998, 16
        %v4099 = vrot.slane %v4097, 1
        %v4100 = vor.u32 %v4095, %v4099
        %v4102 = vshll.u32 %v4078, 16
        %v4104 = vrot.slane %v4102, 1
        %v4105 = vsel %vm3068, %v4100, %v4104
        %v4107 = vshrl.u32 %v3999, 16
        %v4109 = vshll.u32 %v3999, 16
        %v4111 = vrot.slane %v4109, 1
        %v4112 = vor.u32 %v4107, %v4111
        %v4114 = vshll.u32 %v4079, 16
        %v4116 = vrot.slane %v4114, 1
        %v4117 = vsel %vm3068, %v4112, %v4116
        %v4119 = vshrl.u32 %v4000, 16
        %v4121 = vshll.u32 %v4000, 16
        %v4123 = vrot.slane %v4121, 1
        %v4124 = vor.u32 %v4119, %v4123
        %v4126 = vshll.u32 %v4080, 16
        %v4128 = vrot.slane %v4126, 1
        %v4129 = vsel %vm3068, %v4124, %v4128
        %v4131 = vshrl.u32 %v4001, 16
        %v4133 = vshll.u32 %v4001, 16
        %v4135 = vrot.slane %v4133, 1
        %v4136 = vor.u32 %v4131, %v4135
        %v4138 = vshll.u32 %v4081, 16
        %v4140 = vrot.slane %v4138, 1
        %v4141 = vsel %vm3068, %v4136, %v4140
        %v4143 = vshrl.u32 %v4002, 16
        %v4145 = vshll.u32 %v4002, 16
        %v4147 = vrot.slane %v4145, 1
        %v4148 = vor.u32 %v4143, %v4147
        %v4150 = vshll.u32 %v4082, 16
        %v4152 = vrot.slane %v4150, 1
        %v4153 = vsel %vm3068, %v4148, %v4152
        %v4155 = vshrl.u32 %v4003, 16
        %v4157 = vshll.u32 %v4003, 16
        %v4159 = vrot.slane %v4157, 1
        %v4160 = vor.u32 %v4155, %v4159
        %v4162 = vshll.u32 %v4083, 16
        %v4164 = vrot.slane %v4162, 1
        %v4165 = vsel %vm3068, %v4160, %v4164
        %v4167 = vshrl.u32 %v4004, 16
        %v4169 = vshll.u32 %v4004, 16
        %v4171 = vrot.slane %v4169, 1
        %v4172 = vor.u32 %v4167, %v4171
        %v4174 = vshll.u32 %v4084, 16
        %v4176 = vrot.slane %v4174, 1
        %v4177 = vsel %vm3068, %v4172, %v4176
        %v4179 = vshrl.u32 %v4005, 16
        %v4181 = vshll.u32 %v4005, 16
        %v4183 = vrot.slane %v4181, 1
        %v4184 = vor.u32 %v4179, %v4183
        %v4186 = vshll.u32 %v4085, 16
        %v4188 = vrot.slane %v4186, 1
        %v4189 = vsel %vm3068, %v4184, %v4188
        %v4191 = vshrl.u32 %v4006, 16
        %v4193 = vshll.u32 %v4006, 16
        %v4195 = vrot.slane %v4193, 1
        %v4196 = vor.u32 %v4191, %v4195
        %v4198 = vshll.u32 %v4086, 16
        %v4200 = vrot.slane %v4198, 1
        %v4201 = vsel %vm3068, %v4196, %v4200
        %v4203 = vshrl.u32 %v4007, 16
        %v4205 = vshll.u32 %v4007, 16
        %v4207 = vrot.slane %v4205, 1
        %v4208 = vor.u32 %v4203, %v4207
        %v4210 = vshll.u32 %v4087, 16
        %v4212 = vrot.slane %v4210, 1
        %v4213 = vsel %vm3068, %v4208, %v4212
        %v4215 = vshrl.u32 %v4008, 16
        %v4217 = vshll.u32 %v4008, 16
        %v4219 = vrot.slane %v4217, 1
        %v4220 = vor.u32 %v4215, %v4219
        %v4222 = vshll.u32 %v4088, 16
        %v4224 = vrot.slane %v4222, 1
        %v4225 = vsel %vm3068, %v4220, %v4224
        %v4227 = vshrl.u32 %v4009, 16
        %v4229 = vshll.u32 %v4009, 16
        %v4231 = vrot.slane %v4229, 1
        %v4232 = vor.u32 %v4227, %v4231
        %v4234 = vshll.u32 %v4089, 16
        %v4236 = vrot.slane %v4234, 1
        %v4237 = vsel %vm3068, %v4232, %v4236
        %v4239 = vshrl.u32 %v4010, 16
        %v4241 = vshll.u32 %v4010, 16
        %v4243 = vrot.slane %v4241, 1
        %v4244 = vor.u32 %v4239, %v4243
        %v4246 = vshll.u32 %v4090, 16
        %v4248 = vrot.slane %v4246, 1
        %v4249 = vsel %vm3068, %v4244, %v4248
        %v4251 = vshrl.u32 %v4011, 16
        %v4253 = vshll.u32 %v4011, 16
        %v4255 = vrot.slane %v4253, 1
        %v4256 = vor.u32 %v4251, %v4255
        %v4258 = vshll.u32 %v4091, 16
        %v4260 = vrot.slane %v4258, 1
        %v4261 = vsel %vm3068, %v4256, %v4260
        %v4263 = vshrl.u32 %v4012, 16
        %v4265 = vshll.u32 %v4012, 16
        %v4267 = vrot.slane %v4265, 1
        %v4268 = vor.u32 %v4263, %v4267
        %v4270 = vshll.u32 %v4092, 16
        %v4272 = vrot.slane %v4270, 1
        %v4273 = vsel %vm3068, %v4268, %v4272
        %v4275 = vshrl.u32 %v4013, 16
        %v4277 = vshll.u32 %v4013, 16
        %v4279 = vrot.slane %v4277, 1
        %v4280 = vor.u32 %v4275, %v4279
        %v4282 = vshll.u32 %v4093, 16
        %v4284 = vrot.slane %v4282, 1
        %v4285 = vsel %vm3068, %v4280, %v4284
        %4286 = vrot.lane.b32.xlu0 %v4105, 28
        %v4287 = vpop.permute.xlu0 %4286
        %4288 = vrot.lane.b32.xlu0 %v4117, 28
        %v4289 = vpop.permute.xlu0 %4288
        %4290 = vrot.lane.b32.xlu0 %v4129, 28
        %v4291 = vpop.permute.xlu0 %4290
        %4292 = vrot.lane.b32.xlu0 %v4141, 28
        %v4293 = vpop.permute.xlu0 %4292
        %4294 = vrot.lane.b32.xlu0 %v4153, 28
        %v4295 = vpop.permute.xlu0 %4294
        %4296 = vrot.lane.b32.xlu0 %v4165, 28
        %v4297 = vpop.permute.xlu0 %4296
        %4298 = vrot.lane.b32.xlu0 %v4177, 28
        %v4299 = vpop.permute.xlu0 %4298
        %4300 = vrot.lane.b32.xlu0 %v4189, 28
        %v4301 = vpop.permute.xlu0 %4300
        %4302 = vrot.lane.b32.xlu0 %v4201, 28
        %v4303 = vpop.permute.xlu0 %4302
        %4304 = vrot.lane.b32.xlu0 %v4213, 28
        %v4305 = vpop.permute.xlu0 %4304
        %4306 = vrot.lane.b32.xlu0 %v4225, 28
        %v4307 = vpop.permute.xlu0 %4306
        %4308 = vrot.lane.b32.xlu0 %v4237, 28
        %v4309 = vpop.permute.xlu0 %4308
        %4310 = vrot.lane.b32.xlu0 %v4249, 28
        %v4311 = vpop.permute.xlu0 %4310
        %4312 = vrot.lane.b32.xlu0 %v4261, 28
        %v4313 = vpop.permute.xlu0 %4312
        %4314 = vrot.lane.b32.xlu0 %v4273, 28
        %v4315 = vpop.permute.xlu0 %4314
        %4316 = vrot.lane.b32.xlu0 %v4285, 28
        %v4317 = vpop.permute.xlu0 %4316
        %v4334 = vunpack.c.l.b16 %v2924
        %v4335 = vunpack.c.l.b16 %v2925
        %v4336 = vunpack.c.l.b16 %v2926
        %v4337 = vunpack.c.l.b16 %v2927
        %v4338 = vunpack.c.l.b16 %v2928
        %v4339 = vunpack.c.l.b16 %v2929
        %v4340 = vunpack.c.l.b16 %v2930
        %v4341 = vunpack.c.l.b16 %v2931
        %v4342 = vunpack.c.l.b16 %v2932
        %v4343 = vunpack.c.l.b16 %v2933
        %v4344 = vunpack.c.l.b16 %v2934
        %v4345 = vunpack.c.l.b16 %v2935
        %v4346 = vunpack.c.l.b16 %v2936
        %v4347 = vunpack.c.l.b16 %v2937
        %v4348 = vunpack.c.l.b16 %v2938
        %v4349 = vunpack.c.l.b16 %v2939
        %v4350 = vpack.c.b16 %v3967, %v4334
        %v4351 = vpack.c.b16 %v3969, %v4335
        %v4352 = vpack.c.b16 %v3971, %v4336
        %v4353 = vpack.c.b16 %v3973, %v4337
        %v4354 = vpack.c.b16 %v3975, %v4338
        %v4355 = vpack.c.b16 %v3977, %v4339
        %v4356 = vpack.c.b16 %v3979, %v4340
        %v4357 = vpack.c.b16 %v3981, %v4341
        %v4358 = vpack.c.b16 %v3983, %v4342
        %v4359 = vpack.c.b16 %v3985, %v4343
        %v4360 = vpack.c.b16 %v3987, %v4344
        %v4361 = vpack.c.b16 %v3989, %v4345
        %v4362 = vpack.c.b16 %v3991, %v4346
        %v4363 = vpack.c.b16 %v3993, %v4347
        %v4364 = vpack.c.b16 %v3995, %v4348
        %v4365 = vpack.c.b16 %v3997, %v4349
        %v4366 = vrot.slane %v4350, 1
        %v4367 = vrot.slane %v4078, 1
        %v4368 = vsel %vm3341, %v4366, %v4367
        %v4369 = vrot.slane %v4351, 1
        %v4370 = vrot.slane %v4079, 1
        %v4371 = vsel %vm3341, %v4369, %v4370
        %v4372 = vrot.slane %v4352, 1
        %v4373 = vrot.slane %v4080, 1
        %v4374 = vsel %vm3341, %v4372, %v4373
        %v4375 = vrot.slane %v4353, 1
        %v4376 = vrot.slane %v4081, 1
        %v4377 = vsel %vm3341, %v4375, %v4376
        %v4378 = vrot.slane %v4354, 1
        %v4379 = vrot.slane %v4082, 1
        %v4380 = vsel %vm3341, %v4378, %v4379
        %v4381 = vrot.slane %v4355, 1
        %v4382 = vrot.slane %v4083, 1
        %v4383 = vsel %vm3341, %v4381, %v4382
        %v4384 = vrot.slane %v4356, 1
        %v4385 = vrot.slane %v4084, 1
        %v4386 = vsel %vm3341, %v4384, %v4385
        %v4387 = vrot.slane %v4357, 1
        %v4388 = vrot.slane %v4085, 1
        %v4389 = vsel %vm3341, %v4387, %v4388
        %v4390 = vrot.slane %v4358, 1
        %v4391 = vrot.slane %v4086, 1
        %v4392 = vsel %vm3341, %v4390, %v4391
        %v4393 = vrot.slane %v4359, 1
        %v4394 = vrot.slane %v4087, 1
        %v4395 = vsel %vm3341, %v4393, %v4394
        %v4396 = vrot.slane %v4360, 1
        %v4397 = vrot.slane %v4088, 1
        %v4398 = vsel %vm3341, %v4396, %v4397
        %v4399 = vrot.slane %v4361, 1
        %v4400 = vrot.slane %v4089, 1
        %v4401 = vsel %vm3341, %v4399, %v4400
        %v4402 = vrot.slane %v4362, 1
        %v4403 = vrot.slane %v4090, 1
        %v4404 = vsel %vm3341, %v4402, %v4403
        %v4405 = vrot.slane %v4363, 1
        %v4406 = vrot.slane %v4091, 1
        %v4407 = vsel %vm3341, %v4405, %v4406
        %v4408 = vrot.slane %v4364, 1
        %v4409 = vrot.slane %v4092, 1
        %v4410 = vsel %vm3341, %v4408, %v4409
        %v4411 = vrot.slane %v4365, 1
        %v4412 = vrot.slane %v4093, 1
        %v4413 = vsel %vm3341, %v4411, %v4412
        %4414 = vrot.lane.b32.xlu0 %v4368, 32
        %v4415 = vpop.permute.xlu0 %4414
        %4416 = vrot.lane.b32.xlu0 %v4371, 32
        %v4417 = vpop.permute.xlu0 %4416
        %4418 = vrot.lane.b32.xlu0 %v4374, 32
        %v4419 = vpop.permute.xlu0 %4418
        %4420 = vrot.lane.b32.xlu0 %v4377, 32
        %v4421 = vpop.permute.xlu0 %4420
        %4422 = vrot.lane.b32.xlu0 %v4380, 32
        %v4423 = vpop.permute.xlu0 %4422
        %4424 = vrot.lane.b32.xlu0 %v4383, 32
        %v4425 = vpop.permute.xlu0 %4424
        %4426 = vrot.lane.b32.xlu0 %v4386, 32
        %v4427 = vpop.permute.xlu0 %4426
        %4428 = vrot.lane.b32.xlu0 %v4389, 32
        %v4429 = vpop.permute.xlu0 %4428
        %4430 = vrot.lane.b32.xlu0 %v4392, 32
        %v4431 = vpop.permute.xlu0 %4430
        %4432 = vrot.lane.b32.xlu0 %v4395, 32
        %v4433 = vpop.permute.xlu0 %4432
        %4434 = vrot.lane.b32.xlu0 %v4398, 32
        %v4435 = vpop.permute.xlu0 %4434
        %4436 = vrot.lane.b32.xlu0 %v4401, 32
        %v4437 = vpop.permute.xlu0 %4436
        %4438 = vrot.lane.b32.xlu0 %v4404, 32
        %v4439 = vpop.permute.xlu0 %4438
        %4440 = vrot.lane.b32.xlu0 %v4407, 32
        %v4441 = vpop.permute.xlu0 %4440
        %4442 = vrot.lane.b32.xlu0 %v4410, 32
        %v4443 = vpop.permute.xlu0 %4442
        %4444 = vrot.lane.b32.xlu0 %v4413, 32
        %v4445 = vpop.permute.xlu0 %4444
        %v4447 = vsel %vm2103, %v3004, %v3262
        %v4449 = vsel %vm2103, %v3005, %v3264
        %v4451 = vsel %vm2103, %v3006, %v3266
        %v4453 = vsel %vm2103, %v3007, %v3268
        %v4455 = vsel %vm2103, %v3008, %v3270
        %v4457 = vsel %vm2103, %v3009, %v3272
        %v4459 = vsel %vm2103, %v3010, %v3274
        %v4461 = vsel %vm2103, %v3011, %v3276
        %v4463 = vsel %vm2103, %v3012, %v3278
        %v4465 = vsel %vm2103, %v3013, %v3280
        %v4467 = vsel %vm2103, %v3014, %v3282
        %v4469 = vsel %vm2103, %v3015, %v3284
        %v4471 = vsel %vm2103, %v3016, %v3286
        %v4473 = vsel %vm2103, %v3017, %v3288
        %v4475 = vsel %vm2103, %v3018, %v3290
        %v4477 = vsel %vm2103, %v3019, %v3292
        %v4479 = vsel %vm2149, %v4447, %v3391
        %v4481 = vsel %vm2149, %v4449, %v3393
        %v4483 = vsel %vm2149, %v4451, %v3395
        %v4485 = vsel %vm2149, %v4453, %v3397
        %v4487 = vsel %vm2149, %v4455, %v3399
        %v4489 = vsel %vm2149, %v4457, %v3401
        %v4491 = vsel %vm2149, %v4459, %v3403
        %v4493 = vsel %vm2149, %v4461, %v3405
        %v4495 = vsel %vm2149, %v4463, %v3407
        %v4497 = vsel %vm2149, %v4465, %v3409
        %v4499 = vsel %vm2149, %v4467, %v3411
        %v4501 = vsel %vm2149, %v4469, %v3413
        %v4503 = vsel %vm2149, %v4471, %v3415
        %v4505 = vsel %vm2149, %v4473, %v3417
        %v4507 = vsel %vm2149, %v4475, %v3419
        %v4509 = vsel %vm2149, %v4477, %v3421
        %vm4510 = vcmask 97280
        %v4512 = vsel %vm4510, %v4479, %v3503
        %v4514 = vsel %vm4510, %v4481, %v3505
        %v4516 = vsel %vm4510, %v4483, %v3507
        %v4518 = vsel %vm4510, %v4485, %v3509
        %v4520 = vsel %vm4510, %v4487, %v3511
        %v4522 = vsel %vm4510, %v4489, %v3513
        %v4524 = vsel %vm4510, %v4491, %v3515
        %v4526 = vsel %vm4510, %v4493, %v3517
        %v4528 = vsel %vm4510, %v4495, %v3519
        %v4530 = vsel %vm4510, %v4497, %v3521
        %v4532 = vsel %vm4510, %v4499, %v3523
        %v4534 = vsel %vm4510, %v4501, %v3525
        %v4536 = vsel %vm4510, %v4503, %v3527
        %v4538 = vsel %vm4510, %v4505, %v3529
        %v4540 = vsel %vm4510, %v4507, %v3531
        %v4542 = vsel %vm4510, %v4509, %v3533
        %vm4543 = vcmask 130048
        %v4545 = vsel %vm4543, %v4512, %v3775
        %v4547 = vsel %vm4543, %v4514, %v3777
        %v4549 = vsel %vm4543, %v4516, %v3779
        %v4551 = vsel %vm4543, %v4518, %v3781
        %v4553 = vsel %vm4543, %v4520, %v3783
        %v4555 = vsel %vm4543, %v4522, %v3785
        %v4557 = vsel %vm4543, %v4524, %v3787
        %v4559 = vsel %vm4543, %v4526, %v3789
        %v4561 = vsel %vm4543, %v4528, %v3791
        %v4563 = vsel %vm4543, %v4530, %v3793
        %v4565 = vsel %vm4543, %v4532, %v3795
        %v4567 = vsel %vm4543, %v4534, %v3797
        %v4569 = vsel %vm4543, %v4536, %v3799
        %v4571 = vsel %vm4543, %v4538, %v3801
        %v4573 = vsel %vm4543, %v4540, %v3803
        %v4575 = vsel %vm4543, %v4542, %v3805
        %vm4576 = vcmask 162816
        %v4578 = vsel %vm4576, %v4545, %v3903
        %v4580 = vsel %vm4576, %v4547, %v3905
        %v4582 = vsel %vm4576, %v4549, %v3907
        %v4584 = vsel %vm4576, %v4551, %v3909
        %v4586 = vsel %vm4576, %v4553, %v3911
        %v4588 = vsel %vm4576, %v4555, %v3913
        %v4590 = vsel %vm4576, %v4557, %v3915
        %v4592 = vsel %vm4576, %v4559, %v3917
        %v4594 = vsel %vm4576, %v4561, %v3919
        %v4596 = vsel %vm4576, %v4563, %v3921
        %v4598 = vsel %vm4576, %v4565, %v3923
        %v4600 = vsel %vm4576, %v4567, %v3925
        %v4602 = vsel %vm4576, %v4569, %v3927
        %v4604 = vsel %vm4576, %v4571, %v3929
        %v4606 = vsel %vm4576, %v4573, %v3931
        %v4608 = vsel %vm4576, %v4575, %v3933
        %vm4609 = vcmask 195584
        %v4611 = vsel %vm4609, %v4578, %v4015
        %v4613 = vsel %vm4609, %v4580, %v4017
        %v4615 = vsel %vm4609, %v4582, %v4019
        %v4617 = vsel %vm4609, %v4584, %v4021
        %v4619 = vsel %vm4609, %v4586, %v4023
        %v4621 = vsel %vm4609, %v4588, %v4025
        %v4623 = vsel %vm4609, %v4590, %v4027
        %v4625 = vsel %vm4609, %v4592, %v4029
        %v4627 = vsel %vm4609, %v4594, %v4031
        %v4629 = vsel %vm4609, %v4596, %v4033
        %v4631 = vsel %vm4609, %v4598, %v4035
        %v4633 = vsel %vm4609, %v4600, %v4037
        %v4635 = vsel %vm4609, %v4602, %v4039
        %v4637 = vsel %vm4609, %v4604, %v4041
        %v4639 = vsel %vm4609, %v4606, %v4043
        %v4641 = vsel %vm4609, %v4608, %v4045
        %vm4642 = vcmask 228352
        %v4644 = vsel %vm4642, %v4611, %v4287
        %v4646 = vsel %vm4642, %v4613, %v4289
        %v4648 = vsel %vm4642, %v4615, %v4291
        %v4650 = vsel %vm4642, %v4617, %v4293
        %v4652 = vsel %vm4642, %v4619, %v4295
        %v4654 = vsel %vm4642, %v4621, %v4297
        %v4656 = vsel %vm4642, %v4623, %v4299
        %v4658 = vsel %vm4642, %v4625, %v4301
        %v4660 = vsel %vm4642, %v4627, %v4303
        %v4662 = vsel %vm4642, %v4629, %v4305
        %v4664 = vsel %vm4642, %v4631, %v4307
        %v4666 = vsel %vm4642, %v4633, %v4309
        %v4668 = vsel %vm4642, %v4635, %v4311
        %v4670 = vsel %vm4642, %v4637, %v4313
        %v4672 = vsel %vm4642, %v4639, %v4315
        %v4674 = vsel %vm4642, %v4641, %v4317
        %vm4675 = vcmask 261120
        %v4677 = vsel %vm4675, %v4644, %v4415
        %v4679 = vsel %vm4675, %v4646, %v4417
        %v4681 = vsel %vm4675, %v4648, %v4419
        %v4683 = vsel %vm4675, %v4650, %v4421
        %v4685 = vsel %vm4675, %v4652, %v4423
        %v4687 = vsel %vm4675, %v4654, %v4425
        %v4689 = vsel %vm4675, %v4656, %v4427
        %v4691 = vsel %vm4675, %v4658, %v4429
        %v4693 = vsel %vm4675, %v4660, %v4431
        %v4695 = vsel %vm4675, %v4662, %v4433
        %v4697 = vsel %vm4675, %v4664, %v4435
        %v4699 = vsel %vm4675, %v4666, %v4437
        %v4701 = vsel %vm4675, %v4668, %v4439
        %v4703 = vsel %vm4675, %v4670, %v4441
        %v4705 = vsel %vm4675, %v4672, %v4443
        %v4707 = vsel %vm4675, %v4674, %v4445
        %v4708 = vld [vmem:[%s1] sm:$0xf]
        %v4709 = vld [vmem:[%s1 + $0x4] sm:$0xf]
        %v4710 = vld [vmem:[%s1 + $0x8] sm:$0xf]
        %v4711 = vld [vmem:[%s1 + $0xc] sm:$0xf]
        %v4712 = vld [vmem:[%s1 + $0x10] sm:$0x3]
        %v4713 = vld [vmem:[%s2] sm:$0x1]
        %v4715 = vperm.slane %v4713, 0
        %v4722 = vunpack.c.l.b16 %v4708
        %v4723 = vunpack.c.l.b16 %v4709
        %v4724 = vunpack.c.l.b16 %v4710
        %v4725 = vunpack.c.l.b16 %v4711
        %v4726 = vunpack.c.l.b16 %v4712
        %v4727 = vpack.c.b16 %v4723, %v4722
        %v4728 = vpack.c.b16 %v4725, %v4724
        %v4729 = vpack.c.b16 %v4726, %v4726
        %vm4732 = vcmask 293888
        %v4733 = vsel %vm4732, %v4677, 0
        %v4735 = vsel %vm4732, %v4679, 0
        %v4737 = vsel %vm4732, %v4681, 0
        %v4739 = vsel %vm4732, %v4683, 0
        %v4741 = vsel %vm4732, %v4685, 0
        %v4743 = vsel %vm4732, %v4687, 0
        %v4745 = vsel %vm4732, %v4689, 0
        %v4747 = vsel %vm4732, %v4691, 0
        %v4749 = vsel %vm4732, %v4693, 0
        %v4751 = vsel %vm4732, %v4695, 0
        %v4753 = vsel %vm4732, %v4697, 0
        %v4755 = vsel %vm4732, %v4699, 0
        %v4757 = vsel %vm4732, %v4701, 0
        %v4759 = vsel %vm4732, %v4703, 0
        %v4761 = vsel %vm4732, %v4705, 0
        %v4763 = vsel %vm4732, %v4707, 0
        %v4766 = vsel %vm2116, %v4729, 0
        %4768 = vmatpush.bf16.msra.mxu0 0
        %4769 = vmatpush.bf16.msra.mxu0 0
        %4770 = vmatpush.bf16.msra.mxu0 0
        %4771 = vmatpush.bf16.msra.mxu0 0
        %4772 = vmatpush.bf16.msra.mxu0 0
        %4773 = vmatpush.bf16.msra.mxu0 %v4766
        %4774 = vmatpush.bf16.msra.mxu0 %v4728
        %4775 = vmatpush.bf16.msra.mxu0 %v4727
        %4776 = vmatmul.bf16.gmra.mxu0 %v4733
        %v4777 = vpop.f32.mrf.mxu0
        %v4778 = vadd.f32 %v4715, %v4777
        %v4779 = vpop.f32.mrf.mxu0
        %v4780 = vadd.f32 %v4715, %v4779
        %4781 = vmatmul.bf16.gmra.mxu0 %v4735
        %v4782 = vpop.f32.mrf.mxu0
        %v4783 = vadd.f32 %v4715, %v4782
        %v4784 = vpop.f32.mrf.mxu0
        %v4785 = vadd.f32 %v4715, %v4784
        %4786 = vmatmul.bf16.gmra.mxu0 %v4737
        %v4787 = vpop.f32.mrf.mxu0
        %v4788 = vadd.f32 %v4715, %v4787
        %v4789 = vpop.f32.mrf.mxu0
        %v4790 = vadd.f32 %v4715, %v4789
        %4791 = vmatmul.bf16.gmra.mxu0 %v4739
        %v4792 = vpop.f32.mrf.mxu0
        %v4793 = vadd.f32 %v4715, %v4792
        %v4794 = vpop.f32.mrf.mxu0
        %v4795 = vadd.f32 %v4715, %v4794
        %4796 = vmatmul.bf16.gmra.mxu0 %v4741
        %v4797 = vpop.f32.mrf.mxu0
        %v4798 = vadd.f32 %v4715, %v4797
        %v4799 = vpop.f32.mrf.mxu0
        %v4800 = vadd.f32 %v4715, %v4799
        %4801 = vmatmul.bf16.gmra.mxu0 %v4743
        %v4802 = vpop.f32.mrf.mxu0
        %v4803 = vadd.f32 %v4715, %v4802
        %v4804 = vpop.f32.mrf.mxu0
        %v4805 = vadd.f32 %v4715, %v4804
        %4806 = vmatmul.bf16.gmra.mxu0 %v4745
        %v4807 = vpop.f32.mrf.mxu0
        %v4808 = vadd.f32 %v4715, %v4807
        %v4809 = vpop.f32.mrf.mxu0
        %v4810 = vadd.f32 %v4715, %v4809
        %4811 = vmatmul.bf16.gmra.mxu0 %v4747
        %v4812 = vpop.f32.mrf.mxu0
        %v4813 = vadd.f32 %v4715, %v4812
        %v4814 = vpop.f32.mrf.mxu0
        %v4815 = vadd.f32 %v4715, %v4814
        %4816 = vmatmul.bf16.gmra.mxu0 %v4749
        %v4817 = vpop.f32.mrf.mxu0
        %v4818 = vadd.f32 %v4715, %v4817
        %v4819 = vpop.f32.mrf.mxu0
        %v4820 = vadd.f32 %v4715, %v4819
        %4821 = vmatmul.bf16.gmra.mxu0 %v4751
        %v4822 = vpop.f32.mrf.mxu0
        %v4823 = vadd.f32 %v4715, %v4822
        %v4824 = vpop.f32.mrf.mxu0
        %v4825 = vadd.f32 %v4715, %v4824
        %4826 = vmatmul.bf16.gmra.mxu0 %v4753
        %v4827 = vpop.f32.mrf.mxu0
        %v4828 = vadd.f32 %v4715, %v4827
        %v4829 = vpop.f32.mrf.mxu0
        %v4830 = vadd.f32 %v4715, %v4829
        %4831 = vmatmul.bf16.gmra.mxu0 %v4755
        %v4832 = vpop.f32.mrf.mxu0
        %v4833 = vadd.f32 %v4715, %v4832
        %v4834 = vpop.f32.mrf.mxu0
        %v4835 = vadd.f32 %v4715, %v4834
        %4836 = vmatmul.bf16.gmra.mxu0 %v4757
        %v4837 = vpop.f32.mrf.mxu0
        %v4838 = vadd.f32 %v4715, %v4837
        %v4839 = vpop.f32.mrf.mxu0
        %v4840 = vadd.f32 %v4715, %v4839
        %4841 = vmatmul.bf16.gmra.mxu0 %v4759
        %v4842 = vpop.f32.mrf.mxu0
        %v4843 = vadd.f32 %v4715, %v4842
        %v4844 = vpop.f32.mrf.mxu0
        %v4845 = vadd.f32 %v4715, %v4844
        %4846 = vmatmul.bf16.gmra.mxu0 %v4761
        %v4847 = vpop.f32.mrf.mxu0
        %v4848 = vadd.f32 %v4715, %v4847
        %v4849 = vpop.f32.mrf.mxu0
        %v4850 = vadd.f32 %v4715, %v4849
        %4851 = vmatmul.bf16.gmra.mxu0 %v4763
        %v4852 = vpop.f32.mrf.mxu0
        %v4853 = vadd.f32 %v4715, %v4852
        %v4854 = vpop.f32.mrf.mxu0
        %v4855 = vadd.f32 %v4715, %v4854
        %4856 = vdwg.mxu0
        %v4857 = vmax.f32 %v4778, 0.0
        %v4858 = vmax.f32 %v4780, 0.0
        %v4859 = vmax.f32 %v4783, 0.0
        %v4860 = vmax.f32 %v4785, 0.0
        %v4861 = vmax.f32 %v4788, 0.0
        %v4862 = vmax.f32 %v4790, 0.0
        %v4863 = vmax.f32 %v4793, 0.0
        %v4864 = vmax.f32 %v4795, 0.0
        %v4865 = vmax.f32 %v4798, 0.0
        %v4866 = vmax.f32 %v4800, 0.0
        %v4867 = vmax.f32 %v4803, 0.0
        %v4868 = vmax.f32 %v4805, 0.0
        %v4869 = vmax.f32 %v4808, 0.0
        %v4870 = vmax.f32 %v4810, 0.0
        %v4871 = vmax.f32 %v4813, 0.0
        %v4872 = vmax.f32 %v4815, 0.0
        %v4873 = vmax.f32 %v4818, 0.0
        %v4874 = vmax.f32 %v4820, 0.0
        %v4875 = vmax.f32 %v4823, 0.0
        %v4876 = vmax.f32 %v4825, 0.0
        %v4877 = vmax.f32 %v4828, 0.0
        %v4878 = vmax.f32 %v4830, 0.0
        %v4879 = vmax.f32 %v4833, 0.0
        %v4880 = vmax.f32 %v4835, 0.0
        %v4881 = vmax.f32 %v4838, 0.0
        %v4882 = vmax.f32 %v4840, 0.0
        %v4883 = vmax.f32 %v4843, 0.0
        %v4884 = vmax.f32 %v4845, 0.0
        %v4885 = vmax.f32 %v4848, 0.0
        %v4886 = vmax.f32 %v4850, 0.0
        %v4887 = vmax.f32 %v4853, 0.0
        %v4888 = vmax.f32 %v4855, 0.0
        %vm4889 = vcmask 60416
        %4890 = vst.msk [vmem:[#allocation3] sm:$0xf] %vm4889, 0
        %4891 = vst.msk [vmem:[#allocation3 + $0x4] sm:$0xf] %vm4889, 0
        %vm4892 = vcmask 57344
        %4893 = vst.msk [vmem:[#allocation3 + $0x8] sm:$0x1] %vm4892, 0
        %s4894 = scalar_lea.vmem [#allocation3], 204
        %4895 = vst.msk [vmem:[%s4894] sm:$0xf] %vm4889, 0
        %4896 = vst.msk [vmem:[%s4894 + $0x4] sm:$0xf] %vm4889, 0
        %4897 = vst.msk [vmem:[%s4894 + $0x8] sm:$0x1] %vm4892, 0
        %v4898 = vpack.c.bf16 %v4857, %v4857
        %v4899 = vpack.c.bf16 %v4858, %v4858
        %v4900 = vpack.c.bf16 %v4859, %v4859
        %v4901 = vpack.c.bf16 %v4860, %v4860
        %v4902 = vpack.c.bf16 %v4861, %v4861
        %v4903 = vpack.c.bf16 %v4862, %v4862
        %v4904 = vpack.c.bf16 %v4863, %v4863
        %v4905 = vpack.c.bf16 %v4864, %v4864
        %v4906 = vpack.c.bf16 %v4865, %v4865
        %v4907 = vpack.c.bf16 %v4866, %v4866
        %v4908 = vpack.c.bf16 %v4867, %v4867
        %v4909 = vpack.c.bf16 %v4868, %v4868
        %v4910 = vpack.c.bf16 %v4869, %v4869
        %v4911 = vpack.c.bf16 %v4870, %v4870
        %v4912 = vpack.c.bf16 %v4871, %v4871
        %v4913 = vpack.c.bf16 %v4872, %v4872
        %v4914 = vpack.c.bf16 %v4873, %v4873
        %v4915 = vpack.c.bf16 %v4874, %v4874
        %v4916 = vpack.c.bf16 %v4875, %v4875
        %v4917 = vpack.c.bf16 %v4876, %v4876
        %v4918 = vpack.c.bf16 %v4877, %v4877
        %v4919 = vpack.c.bf16 %v4878, %v4878
        %v4920 = vpack.c.bf16 %v4879, %v4879
        %v4921 = vpack.c.bf16 %v4880, %v4880
        %v4922 = vpack.c.bf16 %v4881, %v4881
        %v4923 = vpack.c.bf16 %v4882, %v4882
        %v4924 = vpack.c.bf16 %v4883, %v4883
        %v4925 = vpack.c.bf16 %v4884, %v4884
        %v4926 = vpack.c.bf16 %v4885, %v4885
        %v4927 = vpack.c.bf16 %v4886, %v4886
        %v4928 = vpack.c.bf16 %v4887, %v4887
        %v4929 = vpack.c.bf16 %v4888, %v4888
        %v4962 = vunpack.c.l.b16 %v4898
        %v4963 = vunpack.c.l.b16 %v4899
        %v4964 = vunpack.c.l.b16 %v4900
        %v4965 = vunpack.c.l.b16 %v4901
        %v4966 = vunpack.c.l.b16 %v4902
        %v4967 = vunpack.c.l.b16 %v4903
        %v4968 = vunpack.c.l.b16 %v4904
        %v4969 = vunpack.c.l.b16 %v4905
        %v4970 = vunpack.c.l.b16 %v4906
        %v4971 = vunpack.c.l.b16 %v4907
        %v4972 = vunpack.c.l.b16 %v4908
        %v4973 = vunpack.c.l.b16 %v4909
        %v4974 = vunpack.c.l.b16 %v4910
        %v4975 = vunpack.c.l.b16 %v4911
        %v4976 = vunpack.c.l.b16 %v4912
        %v4977 = vunpack.c.l.b16 %v4913
        %v4978 = vunpack.c.l.b16 %v4914
        %v4979 = vunpack.c.l.b16 %v4915
        %v4980 = vunpack.c.l.b16 %v4916
        %v4981 = vunpack.c.l.b16 %v4917
        %v4982 = vunpack.c.l.b16 %v4918
        %v4983 = vunpack.c.l.b16 %v4919
        %v4984 = vunpack.c.l.b16 %v4920
        %v4985 = vunpack.c.l.b16 %v4921
        %v4986 = vunpack.c.l.b16 %v4922
        %v4987 = vunpack.c.l.b16 %v4923
        %v4988 = vunpack.c.l.b16 %v4924
        %v4989 = vunpack.c.l.b16 %v4925
        %v4990 = vunpack.c.l.b16 %v4926
        %v4991 = vunpack.c.l.b16 %v4927
        %v4992 = vunpack.c.l.b16 %v4928
        %v4993 = vunpack.c.l.b16 %v4929
        %v4994 = vpack.c.b16 %v4963, %v4962
        %v4995 = vpack.c.b16 %v4965, %v4964
        %v4996 = vpack.c.b16 %v4967, %v4966
        %v4997 = vpack.c.b16 %v4969, %v4968
        %v4998 = vpack.c.b16 %v4971, %v4970
        %v4999 = vpack.c.b16 %v4973, %v4972
        %v5000 = vpack.c.b16 %v4975, %v4974
        %v5001 = vpack.c.b16 %v4977, %v4976
        %v5002 = vpack.c.b16 %v4979, %v4978
        %v5003 = vpack.c.b16 %v4981, %v4980
        %v5004 = vpack.c.b16 %v4983, %v4982
        %v5005 = vpack.c.b16 %v4985, %v4984
        %v5006 = vpack.c.b16 %v4987, %v4986
        %v5007 = vpack.c.b16 %v4989, %v4988
        %v5008 = vpack.c.b16 %v4991, %v4990
        %v5009 = vpack.c.b16 %v4993, %v4992
        %v5011 = vshrl.u32 %v4994, 16
        %v5013 = vrot.slane %v5011, 7
        %v5014 = vshll.u32 %v4994, 16
        %v5016 = vor.u32 %v5013, %v5014
        %v5018 = vshrl.u32 %v4995, 16
        %v5020 = vrot.slane %v5018, 7
        %v5021 = vshll.u32 %v4995, 16
        %v5023 = vor.u32 %v5020, %v5021
        %v5025 = vshrl.u32 %v4996, 16
        %v5027 = vrot.slane %v5025, 7
        %v5028 = vshll.u32 %v4996, 16
        %v5030 = vor.u32 %v5027, %v5028
        %v5032 = vshrl.u32 %v4997, 16
        %v5034 = vrot.slane %v5032, 7
        %v5035 = vshll.u32 %v4997, 16
        %v5037 = vor.u32 %v5034, %v5035
        %v5039 = vshrl.u32 %v4998, 16
        %v5041 = vrot.slane %v5039, 7
        %v5042 = vshll.u32 %v4998, 16
        %v5044 = vor.u32 %v5041, %v5042
        %v5046 = vshrl.u32 %v4999, 16
        %v5048 = vrot.slane %v5046, 7
        %v5049 = vshll.u32 %v4999, 16
        %v5051 = vor.u32 %v5048, %v5049
        %v5053 = vshrl.u32 %v5000, 16
        %v5055 = vrot.slane %v5053, 7
        %v5056 = vshll.u32 %v5000, 16
        %v5058 = vor.u32 %v5055, %v5056
        %v5060 = vshrl.u32 %v5001, 16
        %v5062 = vrot.slane %v5060, 7
        %v5063 = vshll.u32 %v5001, 16
        %v5065 = vor.u32 %v5062, %v5063
        %v5067 = vshrl.u32 %v5002, 16
        %v5069 = vrot.slane %v5067, 7
        %v5070 = vshll.u32 %v5002, 16
        %v5072 = vor.u32 %v5069, %v5070
        %v5074 = vshrl.u32 %v5003, 16
        %v5076 = vrot.slane %v5074, 7
        %v5077 = vshll.u32 %v5003, 16
        %v5079 = vor.u32 %v5076, %v5077
        %v5081 = vshrl.u32 %v5004, 16
        %v5083 = vrot.slane %v5081, 7
        %v5084 = vshll.u32 %v5004, 16
        %v5086 = vor.u32 %v5083, %v5084
        %v5088 = vshrl.u32 %v5005, 16
        %v5090 = vrot.slane %v5088, 7
        %v5091 = vshll.u32 %v5005, 16
        %v5093 = vor.u32 %v5090, %v5091
        %v5095 = vshrl.u32 %v5006, 16
        %v5097 = vrot.slane %v5095, 7
        %v5098 = vshll.u32 %v5006, 16
        %v5100 = vor.u32 %v5097, %v5098
        %v5102 = vshrl.u32 %v5007, 16
        %v5104 = vrot.slane %v5102, 7
        %v5105 = vshll.u32 %v5007, 16
        %v5107 = vor.u32 %v5104, %v5105
        %v5109 = vshrl.u32 %v5008, 16
        %v5111 = vrot.slane %v5109, 7
        %v5112 = vshll.u32 %v5008, 16
        %v5114 = vor.u32 %v5111, %v5112
        %v5116 = vshrl.u32 %v5009, 16
        %v5118 = vrot.slane %v5116, 7
        %v5119 = vshll.u32 %v5009, 16
        %v5121 = vor.u32 %v5118, %v5119
        %v5154 = vsel %vm2489, 0, %v5016
        %v5155 = vsel %vm2489, 0, %v5023
        %v5156 = vsel %vm2489, 0, %v5030
        %v5157 = vsel %vm2489, 0, %v5037
        %v5158 = vsel %vm2489, 0, %v5044
        %v5159 = vsel %vm2489, 0, %v5051
        %v5160 = vsel %vm2489, 0, %v5058
        %v5161 = vsel %vm2489, 0, %v5065
        %v5162 = vsel %vm2489, 0, %v5072
        %v5163 = vsel %vm2489, 0, %v5079
        %v5164 = vsel %vm2489, 0, %v5086
        %v5165 = vsel %vm2489, 0, %v5093
        %v5166 = vsel %vm2489, 0, %v5100
        %v5167 = vsel %vm2489, 0, %v5107
        %v5168 = vsel %vm2489, 0, %v5114
        %v5169 = vsel %vm2489, 0, %v5121
        %v5170 = vsel %vm2489, %v5013, 0
        %v5171 = vsel %vm2489, %v5020, 0
        %v5172 = vsel %vm2489, %v5027, 0
        %v5173 = vsel %vm2489, %v5034, 0
        %v5174 = vsel %vm2489, %v5041, 0
        %v5175 = vsel %vm2489, %v5048, 0
        %v5176 = vsel %vm2489, %v5055, 0
        %v5177 = vsel %vm2489, %v5062, 0
        %v5178 = vsel %vm2489, %v5069, 0
        %v5179 = vsel %vm2489, %v5076, 0
        %v5180 = vsel %vm2489, %v5083, 0
        %v5181 = vsel %vm2489, %v5090, 0
        %v5182 = vsel %vm2489, %v5097, 0
        %v5183 = vsel %vm2489, %v5104, 0
        %v5184 = vsel %vm2489, %v5111, 0
        %v5185 = vsel %vm2489, %v5118, 0
        %v5218 = vunpack.c.l.b16 %v5154
        %v5219 = vunpack.c.h.b16 %v5154
        %v5220 = vunpack.c.l.b16 %v5170
        %v5221 = vunpack.c.l.b16 %v5155
        %v5222 = vunpack.c.h.b16 %v5155
        %v5223 = vunpack.c.l.b16 %v5171
        %v5224 = vunpack.c.l.b16 %v5156
        %v5225 = vunpack.c.h.b16 %v5156
        %v5226 = vunpack.c.l.b16 %v5172
        %v5227 = vunpack.c.l.b16 %v5157
        %v5228 = vunpack.c.h.b16 %v5157
        %v5229 = vunpack.c.l.b16 %v5173
        %v5230 = vunpack.c.l.b16 %v5158
        %v5231 = vunpack.c.h.b16 %v5158
        %v5232 = vunpack.c.l.b16 %v5174
        %v5233 = vunpack.c.l.b16 %v5159
        %v5234 = vunpack.c.h.b16 %v5159
        %v5235 = vunpack.c.l.b16 %v5175
        %v5236 = vunpack.c.l.b16 %v5160
        %v5237 = vunpack.c.h.b16 %v5160
        %v5238 = vunpack.c.l.b16 %v5176
        %v5239 = vunpack.c.l.b16 %v5161
        %v5240 = vunpack.c.h.b16 %v5161
        %v5241 = vunpack.c.l.b16 %v5177
        %v5242 = vunpack.c.l.b16 %v5162
        %v5243 = vunpack.c.h.b16 %v5162
        %v5244 = vunpack.c.l.b16 %v5178
        %v5245 = vunpack.c.l.b16 %v5163
        %v5246 = vunpack.c.h.b16 %v5163
        %v5247 = vunpack.c.l.b16 %v5179
        %v5248 = vunpack.c.l.b16 %v5164
        %v5249 = vunpack.c.h.b16 %v5164
        %v5250 = vunpack.c.l.b16 %v5180
        %v5251 = vunpack.c.l.b16 %v5165
        %v5252 = vunpack.c.h.b16 %v5165
        %v5253 = vunpack.c.l.b16 %v5181
        %v5254 = vunpack.c.l.b16 %v5166
        %v5255 = vunpack.c.h.b16 %v5166
        %v5256 = vunpack.c.l.b16 %v5182
        %v5257 = vunpack.c.l.b16 %v5167
        %v5258 = vunpack.c.h.b16 %v5167
        %v5259 = vunpack.c.l.b16 %v5183
        %v5260 = vunpack.c.l.b16 %v5168
        %v5261 = vunpack.c.h.b16 %v5168
        %v5262 = vunpack.c.l.b16 %v5184
        %v5263 = vunpack.c.l.b16 %v5169
        %v5264 = vunpack.c.h.b16 %v5169
        %v5265 = vunpack.c.l.b16 %v5185
        %v5266 = vpack.c.b16 %v5218, %v5218
        %v5267 = vpack.c.b16 %v5219, %v5219
        %v5268 = vpack.c.b16 %v5220, %v5220
        %v5269 = vpack.c.b16 %v5221, %v5221
        %v5270 = vpack.c.b16 %v5222, %v5222
        %v5271 = vpack.c.b16 %v5223, %v5223
        %v5272 = vpack.c.b16 %v5224, %v5224
        %v5273 = vpack.c.b16 %v5225, %v5225
        %v5274 = vpack.c.b16 %v5226, %v5226
        %v5275 = vpack.c.b16 %v5227, %v5227
        %v5276 = vpack.c.b16 %v5228, %v5228
        %v5277 = vpack.c.b16 %v5229, %v5229
        %v5278 = vpack.c.b16 %v5230, %v5230
        %v5279 = vpack.c.b16 %v5231, %v5231
        %v5280 = vpack.c.b16 %v5232, %v5232
        %v5281 = vpack.c.b16 %v5233, %v5233
        %v5282 = vpack.c.b16 %v5234, %v5234
        %v5283 = vpack.c.b16 %v5235, %v5235
        %v5284 = vpack.c.b16 %v5236, %v5236
        %v5285 = vpack.c.b16 %v5237, %v5237
        %v5286 = vpack.c.b16 %v5238, %v5238
        %v5287 = vpack.c.b16 %v5239, %v5239
        %v5288 = vpack.c.b16 %v5240, %v5240
        %v5289 = vpack.c.b16 %v5241, %v5241
        %v5290 = vpack.c.b16 %v5242, %v5242
        %v5291 = vpack.c.b16 %v5243, %v5243
        %v5292 = vpack.c.b16 %v5244, %v5244
        %v5293 = vpack.c.b16 %v5245, %v5245
        %v5294 = vpack.c.b16 %v5246, %v5246
        %v5295 = vpack.c.b16 %v5247, %v5247
        %v5296 = vpack.c.b16 %v5248, %v5248
        %v5297 = vpack.c.b16 %v5249, %v5249
        %v5298 = vpack.c.b16 %v5250, %v5250
        %v5299 = vpack.c.b16 %v5251, %v5251
        %v5300 = vpack.c.b16 %v5252, %v5252
        %v5301 = vpack.c.b16 %v5253, %v5253
        %v5302 = vpack.c.b16 %v5254, %v5254
        %v5303 = vpack.c.b16 %v5255, %v5255
        %v5304 = vpack.c.b16 %v5256, %v5256
        %v5305 = vpack.c.b16 %v5257, %v5257
        %v5306 = vpack.c.b16 %v5258, %v5258
        %v5307 = vpack.c.b16 %v5259, %v5259
        %v5308 = vpack.c.b16 %v5260, %v5260
        %v5309 = vpack.c.b16 %v5261, %v5261
        %v5310 = vpack.c.b16 %v5262, %v5262
        %v5311 = vpack.c.b16 %v5263, %v5263
        %v5312 = vpack.c.b16 %v5264, %v5264
        %v5313 = vpack.c.b16 %v5265, %v5265
        %s5362 = scalar_lea.vmem [#allocation3], 12
        %5363 = vst.msk [vmem:[%s5362] sm:$0xf] %vm4889, %v5266
        %5364 = vst.msk [vmem:[%s5362 + $0x4] sm:$0xf] %vm4889, %v5267
        %5365 = vst.msk [vmem:[%s5362 + $0x8] sm:$0x1] %vm4892, %v5268
        %5366 = vst.msk [vmem:[%s5362 + $0xc] sm:$0xf] %vm4889, %v5269
        %5367 = vst.msk [vmem:[%s5362 + $0x10] sm:$0xf] %vm4889, %v5270
        %5368 = vst.msk [vmem:[%s5362 + $0x14] sm:$0x1] %vm4892, %v5271
        %5369 = vst.msk [vmem:[%s5362 + $0x18] sm:$0xf] %vm4889, %v5272
        %5370 = vst.msk [vmem:[%s5362 + $0x1c] sm:$0xf] %vm4889, %v5273
        %5371 = vst.msk [vmem:[%s5362 + $0x20] sm:$0x1] %vm4892, %v5274
        %5372 = vst.msk [vmem:[%s5362 + $0x24] sm:$0xf] %vm4889, %v5275
        %5373 = vst.msk [vmem:[%s5362 + $0x28] sm:$0xf] %vm4889, %v5276
        %5374 = vst.msk [vmem:[%s5362 + $0x2c] sm:$0x1] %vm4892, %v5277
        %5375 = vst.msk [vmem:[%s5362 + $0x30] sm:$0xf] %vm4889, %v5278
        %5376 = vst.msk [vmem:[%s5362 + $0x34] sm:$0xf] %vm4889, %v5279
        %5377 = vst.msk [vmem:[%s5362 + $0x38] sm:$0x1] %vm4892, %v5280
        %5378 = vst.msk [vmem:[%s5362 + $0x3c] sm:$0xf] %vm4889, %v5281
        %5379 = vst.msk [vmem:[%s5362 + $0x40] sm:$0xf] %vm4889, %v5282
        %5380 = vst.msk [vmem:[%s5362 + $0x44] sm:$0x1] %vm4892, %v5283
        %5381 = vst.msk [vmem:[%s5362 + $0x48] sm:$0xf] %vm4889, %v5284
        %5382 = vst.msk [vmem:[%s5362 + $0x4c] sm:$0xf] %vm4889, %v5285
        %5383 = vst.msk [vmem:[%s5362 + $0x50] sm:$0x1] %vm4892, %v5286
        %5384 = vst.msk [vmem:[%s5362 + $0x54] sm:$0xf] %vm4889, %v5287
        %5385 = vst.msk [vmem:[%s5362 + $0x58] sm:$0xf] %vm4889, %v5288
        %5386 = vst.msk [vmem:[%s5362 + $0x5c] sm:$0x1] %vm4892, %v5289
        %5387 = vst.msk [vmem:[%s5362 + $0x60] sm:$0xf] %vm4889, %v5290
        %5388 = vst.msk [vmem:[%s5362 + $0x64] sm:$0xf] %vm4889, %v5291
        %5389 = vst.msk [vmem:[%s5362 + $0x68] sm:$0x1] %vm4892, %v5292
        %5390 = vst.msk [vmem:[%s5362 + $0x6c] sm:$0xf] %vm4889, %v5293
        %5391 = vst.msk [vmem:[%s5362 + $0x70] sm:$0xf] %vm4889, %v5294
        %5392 = vst.msk [vmem:[%s5362 + $0x74] sm:$0x1] %vm4892, %v5295
        %5393 = vst.msk [vmem:[%s5362 + $0x78] sm:$0xf] %vm4889, %v5296
        %5394 = vst.msk [vmem:[%s5362 + $0x7c] sm:$0xf] %vm4889, %v5297
        %5395 = vst.msk [vmem:[%s5362 + $0x80] sm:$0x1] %vm4892, %v5298
        %5396 = vst.msk [vmem:[%s5362 + $0x84] sm:$0xf] %vm4889, %v5299
        %5397 = vst.msk [vmem:[%s5362 + $0x88] sm:$0xf] %vm4889, %v5300
        %5398 = vst.msk [vmem:[%s5362 + $0x8c] sm:$0x1] %vm4892, %v5301
        %5399 = vst.msk [vmem:[%s5362 + $0x90] sm:$0xf] %vm4889, %v5302
        %5400 = vst.msk [vmem:[%s5362 + $0x94] sm:$0xf] %vm4889, %v5303
        %5401 = vst.msk [vmem:[%s5362 + $0x98] sm:$0x1] %vm4892, %v5304
        %5402 = vst.msk [vmem:[%s5362 + $0x9c] sm:$0xf] %vm4889, %v5305
        %5403 = vst.msk [vmem:[%s5362 + $0xa0] sm:$0xf] %vm4889, %v5306
        %5404 = vst.msk [vmem:[%s5362 + $0xa4] sm:$0x1] %vm4892, %v5307
        %5405 = vst.msk [vmem:[%s5362 + $0xa8] sm:$0xf] %vm4889, %v5308
        %5406 = vst.msk [vmem:[%s5362 + $0xac] sm:$0xf] %vm4889, %v5309
        %5407 = vst.msk [vmem:[%s5362 + $0xb0] sm:$0x1] %vm4892, %v5310
        %5408 = vst.msk [vmem:[%s5362 + $0xb4] sm:$0xf] %vm4889, %v5311
        %5409 = vst.msk [vmem:[%s5362 + $0xb8] sm:$0xf] %vm4889, %v5312
        %5410 = vst.msk [vmem:[%s5362 + $0xbc] sm:$0x1] %vm4892, %v5313
        %v5411 = vld [vmem:[#allocation3] sm:$0xf]
        %v5412 = vld [vmem:[#allocation3 + $0x4] sm:$0xf]
        %v5413 = vld [vmem:[#allocation3 + $0xc] sm:$0xf]
        %v5414 = vld [vmem:[#allocation3 + $0x10] sm:$0xf]
        %v5415 = vld [vmem:[#allocation3 + $0x18] sm:$0xf]
        %v5416 = vld [vmem:[#allocation3 + $0x1c] sm:$0xf]
        %v5417 = vld [vmem:[#allocation3 + $0x24] sm:$0xf]
        %v5418 = vld [vmem:[#allocation3 + $0x28] sm:$0xf]
        %v5419 = vld [vmem:[#allocation3 + $0x30] sm:$0xf]
        %v5420 = vld [vmem:[#allocation3 + $0x34] sm:$0xf]
        %v5421 = vld [vmem:[#allocation3 + $0x3c] sm:$0xf]
        %v5422 = vld [vmem:[#allocation3 + $0x40] sm:$0xf]
        %v5423 = vld [vmem:[#allocation3 + $0x48] sm:$0xf]
        %v5424 = vld [vmem:[#allocation3 + $0x4c] sm:$0xf]
        %v5425 = vld [vmem:[#allocation3 + $0x54] sm:$0xf]
        %v5426 = vld [vmem:[#allocation3 + $0x58] sm:$0xf]
        %v5427 = vld [vmem:[#allocation3 + $0x60] sm:$0xf]
        %v5428 = vld [vmem:[#allocation3 + $0x64] sm:$0xf]
        %v5429 = vld [vmem:[#allocation3 + $0x6c] sm:$0xf]
        %v5430 = vld [vmem:[#allocation3 + $0x70] sm:$0xf]
        %v5431 = vld [vmem:[#allocation3 + $0x78] sm:$0xf]
        %v5432 = vld [vmem:[#allocation3 + $0x7c] sm:$0xf]
        %v5433 = vld [vmem:[#allocation3 + $0x84] sm:$0xf]
        %v5434 = vld [vmem:[#allocation3 + $0x88] sm:$0xf]
        %v5435 = vld [vmem:[#allocation3 + $0x90] sm:$0xf]
        %v5436 = vld [vmem:[#allocation3 + $0x94] sm:$0xf]
        %v5437 = vld [vmem:[#allocation3 + $0x9c] sm:$0xf]
        %v5438 = vld [vmem:[#allocation3 + $0xa0] sm:$0xf]
        %v5439 = vld [vmem:[#allocation3 + $0xa8] sm:$0xf]
        %v5440 = vld [vmem:[#allocation3 + $0xac] sm:$0xf]
        %v5441 = vld [vmem:[#allocation3 + $0xb4] sm:$0xf]
        %v5442 = vld [vmem:[#allocation3 + $0xb8] sm:$0xf]
        %v5443 = vld [vmem:[#allocation3 + $0x8] sm:$0x1]
        %v5444 = vld [vmem:[#allocation3 + $0x14] sm:$0x1]
        %v5445 = vld [vmem:[#allocation3 + $0x20] sm:$0x1]
        %v5446 = vld [vmem:[#allocation3 + $0x2c] sm:$0x1]
        %v5447 = vld [vmem:[#allocation3 + $0x38] sm:$0x1]
        %v5448 = vld [vmem:[#allocation3 + $0x44] sm:$0x1]
        %v5449 = vld [vmem:[#allocation3 + $0x50] sm:$0x1]
        %v5450 = vld [vmem:[#allocation3 + $0x5c] sm:$0x1]
        %v5451 = vld [vmem:[#allocation3 + $0x68] sm:$0x1]
        %v5452 = vld [vmem:[#allocation3 + $0x74] sm:$0x1]
        %v5453 = vld [vmem:[#allocation3 + $0x80] sm:$0x1]
        %v5454 = vld [vmem:[#allocation3 + $0x8c] sm:$0x1]
        %v5455 = vld [vmem:[#allocation3 + $0x98] sm:$0x1]
        %v5456 = vld [vmem:[#allocation3 + $0xa4] sm:$0x1]
        %v5457 = vld [vmem:[#allocation3 + $0xb0] sm:$0x1]
        %v5458 = vld [vmem:[#allocation3 + $0xbc] sm:$0x1]
        %v5459 = vld [vmem:[#allocation3] sm:$0xe]
        %v5460 = vld [vmem:[#allocation3 + $0xc] sm:$0xe]
        %v5461 = vld [vmem:[#allocation3 + $0x18] sm:$0xe]
        %v5462 = vld [vmem:[#allocation3 + $0x24] sm:$0xe]
        %v5463 = vld [vmem:[#allocation3 + $0x30] sm:$0xe]
        %v5464 = vld [vmem:[#allocation3 + $0x3c] sm:$0xe]
        %v5465 = vld [vmem:[#allocation3 + $0x48] sm:$0xe]
        %v5466 = vld [vmem:[#allocation3 + $0x54] sm:$0xe]
        %v5467 = vld [vmem:[#allocation3 + $0x60] sm:$0xe]
        %v5468 = vld [vmem:[#allocation3 + $0x6c] sm:$0xe]
        %v5469 = vld [vmem:[#allocation3 + $0x78] sm:$0xe]
        %v5470 = vld [vmem:[#allocation3 + $0x84] sm:$0xe]
        %v5471 = vld [vmem:[#allocation3 + $0x90] sm:$0xe]
        %v5472 = vld [vmem:[#allocation3 + $0x9c] sm:$0xe]
        %v5473 = vld [vmem:[#allocation3 + $0xa8] sm:$0xe]
        %v5474 = vld [vmem:[#allocation3 + $0xb4] sm:$0xe]
        %v5475 = vld [vmem:[%s5362] sm:$0xf]
        %v5476 = vld [vmem:[%s5362 + $0x4] sm:$0xf]
        %v5477 = vld [vmem:[%s5362 + $0xc] sm:$0xf]
        %v5478 = vld [vmem:[%s5362 + $0x10] sm:$0xf]
        %v5479 = vld [vmem:[%s5362 + $0x18] sm:$0xf]
        %v5480 = vld [vmem:[%s5362 + $0x1c] sm:$0xf]
        %v5481 = vld [vmem:[%s5362 + $0x24] sm:$0xf]
        %v5482 = vld [vmem:[%s5362 + $0x28] sm:$0xf]
        %v5483 = vld [vmem:[%s5362 + $0x30] sm:$0xf]
        %v5484 = vld [vmem:[%s5362 + $0x34] sm:$0xf]
        %v5485 = vld [vmem:[%s5362 + $0x3c] sm:$0xf]
        %v5486 = vld [vmem:[%s5362 + $0x40] sm:$0xf]
        %v5487 = vld [vmem:[%s5362 + $0x48] sm:$0xf]
        %v5488 = vld [vmem:[%s5362 + $0x4c] sm:$0xf]
        %v5489 = vld [vmem:[%s5362 + $0x54] sm:$0xf]
        %v5490 = vld [vmem:[%s5362 + $0x58] sm:$0xf]
        %v5491 = vld [vmem:[%s5362 + $0x60] sm:$0xf]
        %v5492 = vld [vmem:[%s5362 + $0x64] sm:$0xf]
        %v5493 = vld [vmem:[%s5362 + $0x6c] sm:$0xf]
        %v5494 = vld [vmem:[%s5362 + $0x70] sm:$0xf]
        %v5495 = vld [vmem:[%s5362 + $0x78] sm:$0xf]
        %v5496 = vld [vmem:[%s5362 + $0x7c] sm:$0xf]
        %v5497 = vld [vmem:[%s5362 + $0x84] sm:$0xf]
        %v5498 = vld [vmem:[%s5362 + $0x88] sm:$0xf]
        %v5499 = vld [vmem:[%s5362 + $0x90] sm:$0xf]
        %v5500 = vld [vmem:[%s5362 + $0x94] sm:$0xf]
        %v5501 = vld [vmem:[%s5362 + $0x9c] sm:$0xf]
        %v5502 = vld [vmem:[%s5362 + $0xa0] sm:$0xf]
        %v5503 = vld [vmem:[%s5362 + $0xa8] sm:$0xf]
        %v5504 = vld [vmem:[%s5362 + $0xac] sm:$0xf]
        %v5505 = vld [vmem:[%s5362 + $0xb4] sm:$0xf]
        %v5506 = vld [vmem:[%s5362 + $0xb8] sm:$0xf]
        %v5507 = vld [vmem:[%s5362 + $0x8] sm:$0x1]
        %v5508 = vld [vmem:[%s5362 + $0x14] sm:$0x1]
        %v5509 = vld [vmem:[%s5362 + $0x20] sm:$0x1]
        %v5510 = vld [vmem:[%s5362 + $0x2c] sm:$0x1]
        %v5511 = vld [vmem:[%s5362 + $0x38] sm:$0x1]
        %v5512 = vld [vmem:[%s5362 + $0x44] sm:$0x1]
        %v5513 = vld [vmem:[%s5362 + $0x50] sm:$0x1]
        %v5514 = vld [vmem:[%s5362 + $0x5c] sm:$0x1]
        %v5515 = vld [vmem:[%s5362 + $0x68] sm:$0x1]
        %v5516 = vld [vmem:[%s5362 + $0x74] sm:$0x1]
        %v5517 = vld [vmem:[%s5362 + $0x80] sm:$0x1]
        %v5518 = vld [vmem:[%s5362 + $0x8c] sm:$0x1]
        %v5519 = vld [vmem:[%s5362 + $0x98] sm:$0x1]
        %v5520 = vld [vmem:[%s5362 + $0xa4] sm:$0x1]
        %v5521 = vld [vmem:[%s5362 + $0xb0] sm:$0x1]
        %v5522 = vld [vmem:[%s5362 + $0xbc] sm:$0x1]
        %v5523 = vld [vmem:[%s5362] sm:$0xe]
        %v5524 = vld [vmem:[%s5362 + $0xc] sm:$0xe]
        %v5525 = vld [vmem:[%s5362 + $0x18] sm:$0xe]
        %v5526 = vld [vmem:[%s5362 + $0x24] sm:$0xe]
        %v5527 = vld [vmem:[%s5362 + $0x30] sm:$0xe]
        %v5528 = vld [vmem:[%s5362 + $0x3c] sm:$0xe]
        %v5529 = vld [vmem:[%s5362 + $0x48] sm:$0xe]
        %v5530 = vld [vmem:[%s5362 + $0x54] sm:$0xe]
        %v5531 = vld [vmem:[%s5362 + $0x60] sm:$0xe]
        %v5532 = vld [vmem:[%s5362 + $0x6c] sm:$0xe]
        %v5533 = vld [vmem:[%s5362 + $0x78] sm:$0xe]
        %v5534 = vld [vmem:[%s5362 + $0x84] sm:$0xe]
        %v5535 = vld [vmem:[%s5362 + $0x90] sm:$0xe]
        %v5536 = vld [vmem:[%s5362 + $0x9c] sm:$0xe]
        %v5537 = vld [vmem:[%s5362 + $0xa8] sm:$0xe]
        %v5538 = vld [vmem:[%s5362 + $0xb4] sm:$0xe]
        %s5539 = scalar_lea.vmem [#allocation3], 24
        %v5540 = vld [vmem:[%s5539] sm:$0xf]
        %v5541 = vld [vmem:[%s5539 + $0x4] sm:$0xf]
        %v5542 = vld [vmem:[%s5539 + $0xc] sm:$0xf]
        %v5543 = vld [vmem:[%s5539 + $0x10] sm:$0xf]
        %v5544 = vld [vmem:[%s5539 + $0x18] sm:$0xf]
        %v5545 = vld [vmem:[%s5539 + $0x1c] sm:$0xf]
        %v5546 = vld [vmem:[%s5539 + $0x24] sm:$0xf]
        %v5547 = vld [vmem:[%s5539 + $0x28] sm:$0xf]
        %v5548 = vld [vmem:[%s5539 + $0x30] sm:$0xf]
        %v5549 = vld [vmem:[%s5539 + $0x34] sm:$0xf]
        %v5550 = vld [vmem:[%s5539 + $0x3c] sm:$0xf]
        %v5551 = vld [vmem:[%s5539 + $0x40] sm:$0xf]
        %v5552 = vld [vmem:[%s5539 + $0x48] sm:$0xf]
        %v5553 = vld [vmem:[%s5539 + $0x4c] sm:$0xf]
        %v5554 = vld [vmem:[%s5539 + $0x54] sm:$0xf]
        %v5555 = vld [vmem:[%s5539 + $0x58] sm:$0xf]
        %v5556 = vld [vmem:[%s5539 + $0x60] sm:$0xf]
        %v5557 = vld [vmem:[%s5539 + $0x64] sm:$0xf]
        %v5558 = vld [vmem:[%s5539 + $0x6c] sm:$0xf]
        %v5559 = vld [vmem:[%s5539 + $0x70] sm:$0xf]
        %v5560 = vld [vmem:[%s5539 + $0x78] sm:$0xf]
        %v5561 = vld [vmem:[%s5539 + $0x7c] sm:$0xf]
        %v5562 = vld [vmem:[%s5539 + $0x84] sm:$0xf]
        %v5563 = vld [vmem:[%s5539 + $0x88] sm:$0xf]
        %v5564 = vld [vmem:[%s5539 + $0x90] sm:$0xf]
        %v5565 = vld [vmem:[%s5539 + $0x94] sm:$0xf]
        %v5566 = vld [vmem:[%s5539 + $0x9c] sm:$0xf]
        %v5567 = vld [vmem:[%s5539 + $0xa0] sm:$0xf]
        %v5568 = vld [vmem:[%s5539 + $0xa8] sm:$0xf]
        %v5569 = vld [vmem:[%s5539 + $0xac] sm:$0xf]
        %v5570 = vld [vmem:[%s5539 + $0xb4] sm:$0xf]
        %v5571 = vld [vmem:[%s5539 + $0xb8] sm:$0xf]
        %v5572 = vld [vmem:[%s5539 + $0x8] sm:$0x1]
        %v5573 = vld [vmem:[%s5539 + $0x14] sm:$0x1]
        %v5574 = vld [vmem:[%s5539 + $0x20] sm:$0x1]
        %v5575 = vld [vmem:[%s5539 + $0x2c] sm:$0x1]
        %v5576 = vld [vmem:[%s5539 + $0x38] sm:$0x1]
        %v5577 = vld [vmem:[%s5539 + $0x44] sm:$0x1]
        %v5578 = vld [vmem:[%s5539 + $0x50] sm:$0x1]
        %v5579 = vld [vmem:[%s5539 + $0x5c] sm:$0x1]
        %v5580 = vld [vmem:[%s5539 + $0x68] sm:$0x1]
        %v5581 = vld [vmem:[%s5539 + $0x74] sm:$0x1]
        %v5582 = vld [vmem:[%s5539 + $0x80] sm:$0x1]
        %v5583 = vld [vmem:[%s5539 + $0x8c] sm:$0x1]
        %v5584 = vld [vmem:[%s5539 + $0x98] sm:$0x1]
        %v5585 = vld [vmem:[%s5539 + $0xa4] sm:$0x1]
        %v5586 = vld [vmem:[%s5539 + $0xb0] sm:$0x1]
        %v5587 = vld [vmem:[%s5539 + $0xbc] sm:$0x1]
        %v5588 = vld [vmem:[%s5539] sm:$0xe]
        %v5589 = vld [vmem:[%s5539 + $0xc] sm:$0xe]
        %v5590 = vld [vmem:[%s5539 + $0x18] sm:$0xe]
        %v5591 = vld [vmem:[%s5539 + $0x24] sm:$0xe]
        %v5592 = vld [vmem:[%s5539 + $0x30] sm:$0xe]
        %v5593 = vld [vmem:[%s5539 + $0x3c] sm:$0xe]
        %v5594 = vld [vmem:[%s5539 + $0x48] sm:$0xe]
        %v5595 = vld [vmem:[%s5539 + $0x54] sm:$0xe]
        %v5596 = vld [vmem:[%s5539 + $0x60] sm:$0xe]
        %v5597 = vld [vmem:[%s5539 + $0x6c] sm:$0xe]
        %v5598 = vld [vmem:[%s5539 + $0x78] sm:$0xe]
        %v5599 = vld [vmem:[%s5539 + $0x84] sm:$0xe]
        %v5600 = vld [vmem:[%s5539 + $0x90] sm:$0xe]
        %v5601 = vld [vmem:[%s5539 + $0x9c] sm:$0xe]
        %v5602 = vld [vmem:[%s5539 + $0xa8] sm:$0xe]
        %v5603 = vld [vmem:[%s5539 + $0xb4] sm:$0xe]
        %v5636 = vunpack.c.l.b16 %v5411
        %v5637 = vunpack.c.l.b16 %v5412
        %v5638 = vunpack.c.l.b16 %v5413
        %v5639 = vunpack.c.l.b16 %v5414
        %v5640 = vunpack.c.l.b16 %v5415
        %v5641 = vunpack.c.l.b16 %v5416
        %v5642 = vunpack.c.l.b16 %v5417
        %v5643 = vunpack.c.l.b16 %v5418
        %v5644 = vunpack.c.l.b16 %v5419
        %v5645 = vunpack.c.l.b16 %v5420
        %v5646 = vunpack.c.l.b16 %v5421
        %v5647 = vunpack.c.l.b16 %v5422
        %v5648 = vunpack.c.l.b16 %v5423
        %v5649 = vunpack.c.l.b16 %v5424
        %v5650 = vunpack.c.l.b16 %v5425
        %v5651 = vunpack.c.l.b16 %v5426
        %v5652 = vunpack.c.l.b16 %v5427
        %v5653 = vunpack.c.l.b16 %v5428
        %v5654 = vunpack.c.l.b16 %v5429
        %v5655 = vunpack.c.l.b16 %v5430
        %v5656 = vunpack.c.l.b16 %v5431
        %v5657 = vunpack.c.l.b16 %v5432
        %v5658 = vunpack.c.l.b16 %v5433
        %v5659 = vunpack.c.l.b16 %v5434
        %v5660 = vunpack.c.l.b16 %v5435
        %v5661 = vunpack.c.l.b16 %v5436
        %v5662 = vunpack.c.l.b16 %v5437
        %v5663 = vunpack.c.l.b16 %v5438
        %v5664 = vunpack.c.l.b16 %v5439
        %v5665 = vunpack.c.l.b16 %v5440
        %v5666 = vunpack.c.l.b16 %v5441
        %v5667 = vunpack.c.l.b16 %v5442
        %v5668 = vpack.c.b16 %v5637, %v5636
        %v5669 = vpack.c.b16 %v5639, %v5638
        %v5670 = vpack.c.b16 %v5641, %v5640
        %v5671 = vpack.c.b16 %v5643, %v5642
        %v5672 = vpack.c.b16 %v5645, %v5644
        %v5673 = vpack.c.b16 %v5647, %v5646
        %v5674 = vpack.c.b16 %v5649, %v5648
        %v5675 = vpack.c.b16 %v5651, %v5650
        %v5676 = vpack.c.b16 %v5653, %v5652
        %v5677 = vpack.c.b16 %v5655, %v5654
        %v5678 = vpack.c.b16 %v5657, %v5656
        %v5679 = vpack.c.b16 %v5659, %v5658
        %v5680 = vpack.c.b16 %v5661, %v5660
        %v5681 = vpack.c.b16 %v5663, %v5662
        %v5682 = vpack.c.b16 %v5665, %v5664
        %v5683 = vpack.c.b16 %v5667, %v5666
        %v5700 = vunpack.c.l.b16 %v5443
        %v5701 = vunpack.c.l.b16 %v5444
        %v5702 = vunpack.c.l.b16 %v5445
        %v5703 = vunpack.c.l.b16 %v5446
        %v5704 = vunpack.c.l.b16 %v5447
        %v5705 = vunpack.c.l.b16 %v5448
        %v5706 = vunpack.c.l.b16 %v5449
        %v5707 = vunpack.c.l.b16 %v5450
        %v5708 = vunpack.c.l.b16 %v5451
        %v5709 = vunpack.c.l.b16 %v5452
        %v5710 = vunpack.c.l.b16 %v5453
        %v5711 = vunpack.c.l.b16 %v5454
        %v5712 = vunpack.c.l.b16 %v5455
        %v5713 = vunpack.c.l.b16 %v5456
        %v5714 = vunpack.c.l.b16 %v5457
        %v5715 = vunpack.c.l.b16 %v5458
        %v5716 = vpack.c.b16 %v5700, %v5700
        %v5717 = vpack.c.b16 %v5701, %v5701
        %v5718 = vpack.c.b16 %v5702, %v5702
        %v5719 = vpack.c.b16 %v5703, %v5703
        %v5720 = vpack.c.b16 %v5704, %v5704
        %v5721 = vpack.c.b16 %v5705, %v5705
        %v5722 = vpack.c.b16 %v5706, %v5706
        %v5723 = vpack.c.b16 %v5707, %v5707
        %v5724 = vpack.c.b16 %v5708, %v5708
        %v5725 = vpack.c.b16 %v5709, %v5709
        %v5726 = vpack.c.b16 %v5710, %v5710
        %v5727 = vpack.c.b16 %v5711, %v5711
        %v5728 = vpack.c.b16 %v5712, %v5712
        %v5729 = vpack.c.b16 %v5713, %v5713
        %v5730 = vpack.c.b16 %v5714, %v5714
        %v5731 = vpack.c.b16 %v5715, %v5715
        %v5733 = vshrl.u32 %v5668, 16
        %v5735 = vshll.u32 %v5668, 16
        %v5737 = vrot.slane %v5735, 1
        %v5738 = vor.u32 %v5733, %v5737
        %v5740 = vshll.u32 %v5716, 16
        %v5742 = vrot.slane %v5740, 1
        %v5743 = vsel %vm3068, %v5738, %v5742
        %v5745 = vshrl.u32 %v5669, 16
        %v5747 = vshll.u32 %v5669, 16
        %v5749 = vrot.slane %v5747, 1
        %v5750 = vor.u32 %v5745, %v5749
        %v5752 = vshll.u32 %v5717, 16
        %v5754 = vrot.slane %v5752, 1
        %v5755 = vsel %vm3068, %v5750, %v5754
        %v5757 = vshrl.u32 %v5670, 16
        %v5759 = vshll.u32 %v5670, 16
        %v5761 = vrot.slane %v5759, 1
        %v5762 = vor.u32 %v5757, %v5761
        %v5764 = vshll.u32 %v5718, 16
        %v5766 = vrot.slane %v5764, 1
        %v5767 = vsel %vm3068, %v5762, %v5766
        %v5769 = vshrl.u32 %v5671, 16
        %v5771 = vshll.u32 %v5671, 16
        %v5773 = vrot.slane %v5771, 1
        %v5774 = vor.u32 %v5769, %v5773
        %v5776 = vshll.u32 %v5719, 16
        %v5778 = vrot.slane %v5776, 1
        %v5779 = vsel %vm3068, %v5774, %v5778
        %v5781 = vshrl.u32 %v5672, 16
        %v5783 = vshll.u32 %v5672, 16
        %v5785 = vrot.slane %v5783, 1
        %v5786 = vor.u32 %v5781, %v5785
        %v5788 = vshll.u32 %v5720, 16
        %v5790 = vrot.slane %v5788, 1
        %v5791 = vsel %vm3068, %v5786, %v5790
        %v5793 = vshrl.u32 %v5673, 16
        %v5795 = vshll.u32 %v5673, 16
        %v5797 = vrot.slane %v5795, 1
        %v5798 = vor.u32 %v5793, %v5797
        %v5800 = vshll.u32 %v5721, 16
        %v5802 = vrot.slane %v5800, 1
        %v5803 = vsel %vm3068, %v5798, %v5802
        %v5805 = vshrl.u32 %v5674, 16
        %v5807 = vshll.u32 %v5674, 16
        %v5809 = vrot.slane %v5807, 1
        %v5810 = vor.u32 %v5805, %v5809
        %v5812 = vshll.u32 %v5722, 16
        %v5814 = vrot.slane %v5812, 1
        %v5815 = vsel %vm3068, %v5810, %v5814
        %v5817 = vshrl.u32 %v5675, 16
        %v5819 = vshll.u32 %v5675, 16
        %v5821 = vrot.slane %v5819, 1
        %v5822 = vor.u32 %v5817, %v5821
        %v5824 = vshll.u32 %v5723, 16
        %v5826 = vrot.slane %v5824, 1
        %v5827 = vsel %vm3068, %v5822, %v5826
        %v5829 = vshrl.u32 %v5676, 16
        %v5831 = vshll.u32 %v5676, 16
        %v5833 = vrot.slane %v5831, 1
        %v5834 = vor.u32 %v5829, %v5833
        %v5836 = vshll.u32 %v5724, 16
        %v5838 = vrot.slane %v5836, 1
        %v5839 = vsel %vm3068, %v5834, %v5838
        %v5841 = vshrl.u32 %v5677, 16
        %v5843 = vshll.u32 %v5677, 16
        %v5845 = vrot.slane %v5843, 1
        %v5846 = vor.u32 %v5841, %v5845
        %v5848 = vshll.u32 %v5725, 16
        %v5850 = vrot.slane %v5848, 1
        %v5851 = vsel %vm3068, %v5846, %v5850
        %v5853 = vshrl.u32 %v5678, 16
        %v5855 = vshll.u32 %v5678, 16
        %v5857 = vrot.slane %v5855, 1
        %v5858 = vor.u32 %v5853, %v5857
        %v5860 = vshll.u32 %v5726, 16
        %v5862 = vrot.slane %v5860, 1
        %v5863 = vsel %vm3068, %v5858, %v5862
        %v5865 = vshrl.u32 %v5679, 16
        %v5867 = vshll.u32 %v5679, 16
        %v5869 = vrot.slane %v5867, 1
        %v5870 = vor.u32 %v5865, %v5869
        %v5872 = vshll.u32 %v5727, 16
        %v5874 = vrot.slane %v5872, 1
        %v5875 = vsel %vm3068, %v5870, %v5874
        %v5877 = vshrl.u32 %v5680, 16
        %v5879 = vshll.u32 %v5680, 16
        %v5881 = vrot.slane %v5879, 1
        %v5882 = vor.u32 %v5877, %v5881
        %v5884 = vshll.u32 %v5728, 16
        %v5886 = vrot.slane %v5884, 1
        %v5887 = vsel %vm3068, %v5882, %v5886
        %v5889 = vshrl.u32 %v5681, 16
        %v5891 = vshll.u32 %v5681, 16
        %v5893 = vrot.slane %v5891, 1
        %v5894 = vor.u32 %v5889, %v5893
        %v5896 = vshll.u32 %v5729, 16
        %v5898 = vrot.slane %v5896, 1
        %v5899 = vsel %vm3068, %v5894, %v5898
        %v5901 = vshrl.u32 %v5682, 16
        %v5903 = vshll.u32 %v5682, 16
        %v5905 = vrot.slane %v5903, 1
        %v5906 = vor.u32 %v5901, %v5905
        %v5908 = vshll.u32 %v5730, 16
        %v5910 = vrot.slane %v5908, 1
        %v5911 = vsel %vm3068, %v5906, %v5910
        %v5913 = vshrl.u32 %v5683, 16
        %v5915 = vshll.u32 %v5683, 16
        %v5917 = vrot.slane %v5915, 1
        %v5918 = vor.u32 %v5913, %v5917
        %v5920 = vshll.u32 %v5731, 16
        %v5922 = vrot.slane %v5920, 1
        %v5923 = vsel %vm3068, %v5918, %v5922
        %5924 = vrot.lane.b32.xlu0 %v5743, 8
        %v5925 = vpop.permute.xlu0 %5924
        %5926 = vrot.lane.b32.xlu0 %v5755, 8
        %v5927 = vpop.permute.xlu0 %5926
        %5928 = vrot.lane.b32.xlu0 %v5767, 8
        %v5929 = vpop.permute.xlu0 %5928
        %5930 = vrot.lane.b32.xlu0 %v5779, 8
        %v5931 = vpop.permute.xlu0 %5930
        %5932 = vrot.lane.b32.xlu0 %v5791, 8
        %v5933 = vpop.permute.xlu0 %5932
        %5934 = vrot.lane.b32.xlu0 %v5803, 8
        %v5935 = vpop.permute.xlu0 %5934
        %5936 = vrot.lane.b32.xlu0 %v5815, 8
        %v5937 = vpop.permute.xlu0 %5936
        %5938 = vrot.lane.b32.xlu0 %v5827, 8
        %v5939 = vpop.permute.xlu0 %5938
        %5940 = vrot.lane.b32.xlu0 %v5839, 8
        %v5941 = vpop.permute.xlu0 %5940
        %5942 = vrot.lane.b32.xlu0 %v5851, 8
        %v5943 = vpop.permute.xlu0 %5942
        %5944 = vrot.lane.b32.xlu0 %v5863, 8
        %v5945 = vpop.permute.xlu0 %5944
        %5946 = vrot.lane.b32.xlu0 %v5875, 8
        %v5947 = vpop.permute.xlu0 %5946
        %5948 = vrot.lane.b32.xlu0 %v5887, 8
        %v5949 = vpop.permute.xlu0 %5948
        %5950 = vrot.lane.b32.xlu0 %v5899, 8
        %v5951 = vpop.permute.xlu0 %5950
        %5952 = vrot.lane.b32.xlu0 %v5911, 8
        %v5953 = vpop.permute.xlu0 %5952
        %5954 = vrot.lane.b32.xlu0 %v5923, 8
        %v5955 = vpop.permute.xlu0 %5954
        %v5972 = vunpack.c.l.b16 %v5459
        %v5973 = vunpack.c.l.b16 %v5460
        %v5974 = vunpack.c.l.b16 %v5461
        %v5975 = vunpack.c.l.b16 %v5462
        %v5976 = vunpack.c.l.b16 %v5463
        %v5977 = vunpack.c.l.b16 %v5464
        %v5978 = vunpack.c.l.b16 %v5465
        %v5979 = vunpack.c.l.b16 %v5466
        %v5980 = vunpack.c.l.b16 %v5467
        %v5981 = vunpack.c.l.b16 %v5468
        %v5982 = vunpack.c.l.b16 %v5469
        %v5983 = vunpack.c.l.b16 %v5470
        %v5984 = vunpack.c.l.b16 %v5471
        %v5985 = vunpack.c.l.b16 %v5472
        %v5986 = vunpack.c.l.b16 %v5473
        %v5987 = vunpack.c.l.b16 %v5474
        %v5988 = vpack.c.b16 %v5637, %v5972
        %v5989 = vpack.c.b16 %v5639, %v5973
        %v5990 = vpack.c.b16 %v5641, %v5974
        %v5991 = vpack.c.b16 %v5643, %v5975
        %v5992 = vpack.c.b16 %v5645, %v5976
        %v5993 = vpack.c.b16 %v5647, %v5977
        %v5994 = vpack.c.b16 %v5649, %v5978
        %v5995 = vpack.c.b16 %v5651, %v5979
        %v5996 = vpack.c.b16 %v5653, %v5980
        %v5997 = vpack.c.b16 %v5655, %v5981
        %v5998 = vpack.c.b16 %v5657, %v5982
        %v5999 = vpack.c.b16 %v5659, %v5983
        %v6000 = vpack.c.b16 %v5661, %v5984
        %v6001 = vpack.c.b16 %v5663, %v5985
        %v6002 = vpack.c.b16 %v5665, %v5986
        %v6003 = vpack.c.b16 %v5667, %v5987
        %v6004 = vrot.slane %v5988, 1
        %v6005 = vrot.slane %v5716, 1
        %v6006 = vsel %vm3341, %v6004, %v6005
        %v6007 = vrot.slane %v5989, 1
        %v6008 = vrot.slane %v5717, 1
        %v6009 = vsel %vm3341, %v6007, %v6008
        %v6010 = vrot.slane %v5990, 1
        %v6011 = vrot.slane %v5718, 1
        %v6012 = vsel %vm3341, %v6010, %v6011
        %v6013 = vrot.slane %v5991, 1
        %v6014 = vrot.slane %v5719, 1
        %v6015 = vsel %vm3341, %v6013, %v6014
        %v6016 = vrot.slane %v5992, 1
        %v6017 = vrot.slane %v5720, 1
        %v6018 = vsel %vm3341, %v6016, %v6017
        %v6019 = vrot.slane %v5993, 1
        %v6020 = vrot.slane %v5721, 1
        %v6021 = vsel %vm3341, %v6019, %v6020
        %v6022 = vrot.slane %v5994, 1
        %v6023 = vrot.slane %v5722, 1
        %v6024 = vsel %vm3341, %v6022, %v6023
        %v6025 = vrot.slane %v5995, 1
        %v6026 = vrot.slane %v5723, 1
        %v6027 = vsel %vm3341, %v6025, %v6026
        %v6028 = vrot.slane %v5996, 1
        %v6029 = vrot.slane %v5724, 1
        %v6030 = vsel %vm3341, %v6028, %v6029
        %v6031 = vrot.slane %v5997, 1
        %v6032 = vrot.slane %v5725, 1
        %v6033 = vsel %vm3341, %v6031, %v6032
        %v6034 = vrot.slane %v5998, 1
        %v6035 = vrot.slane %v5726, 1
        %v6036 = vsel %vm3341, %v6034, %v6035
        %v6037 = vrot.slane %v5999, 1
        %v6038 = vrot.slane %v5727, 1
        %v6039 = vsel %vm3341, %v6037, %v6038
        %v6040 = vrot.slane %v6000, 1
        %v6041 = vrot.slane %v5728, 1
        %v6042 = vsel %vm3341, %v6040, %v6041
        %v6043 = vrot.slane %v6001, 1
        %v6044 = vrot.slane %v5729, 1
        %v6045 = vsel %vm3341, %v6043, %v6044
        %v6046 = vrot.slane %v6002, 1
        %v6047 = vrot.slane %v5730, 1
        %v6048 = vsel %vm3341, %v6046, %v6047
        %v6049 = vrot.slane %v6003, 1
        %v6050 = vrot.slane %v5731, 1
        %v6051 = vsel %vm3341, %v6049, %v6050
        %6052 = vrot.lane.b32.xlu0 %v6006, 16
        %v6053 = vpop.permute.xlu0 %6052
        %6054 = vrot.lane.b32.xlu0 %v6009, 16
        %v6055 = vpop.permute.xlu0 %6054
        %6056 = vrot.lane.b32.xlu0 %v6012, 16
        %v6057 = vpop.permute.xlu0 %6056
        %6058 = vrot.lane.b32.xlu0 %v6015, 16
        %v6059 = vpop.permute.xlu0 %6058
        %6060 = vrot.lane.b32.xlu0 %v6018, 16
        %v6061 = vpop.permute.xlu0 %6060
        %6062 = vrot.lane.b32.xlu0 %v6021, 16
        %v6063 = vpop.permute.xlu0 %6062
        %6064 = vrot.lane.b32.xlu0 %v6024, 16
        %v6065 = vpop.permute.xlu0 %6064
        %6066 = vrot.lane.b32.xlu0 %v6027, 16
        %v6067 = vpop.permute.xlu0 %6066
        %6068 = vrot.lane.b32.xlu0 %v6030, 16
        %v6069 = vpop.permute.xlu0 %6068
        %6070 = vrot.lane.b32.xlu0 %v6033, 16
        %v6071 = vpop.permute.xlu0 %6070
        %6072 = vrot.lane.b32.xlu0 %v6036, 16
        %v6073 = vpop.permute.xlu0 %6072
        %6074 = vrot.lane.b32.xlu0 %v6039, 16
        %v6075 = vpop.permute.xlu0 %6074
        %6076 = vrot.lane.b32.xlu0 %v6042, 16
        %v6077 = vpop.permute.xlu0 %6076
        %6078 = vrot.lane.b32.xlu0 %v6045, 16
        %v6079 = vpop.permute.xlu0 %6078
        %6080 = vrot.lane.b32.xlu0 %v6048, 16
        %v6081 = vpop.permute.xlu0 %6080
        %6082 = vrot.lane.b32.xlu0 %v6051, 16
        %v6083 = vpop.permute.xlu0 %6082
        %v6116 = vunpack.c.l.b16 %v5475
        %v6117 = vunpack.c.l.b16 %v5476
        %v6118 = vunpack.c.l.b16 %v5477
        %v6119 = vunpack.c.l.b16 %v5478
        %v6120 = vunpack.c.l.b16 %v5479
        %v6121 = vunpack.c.l.b16 %v5480
        %v6122 = vunpack.c.l.b16 %v5481
        %v6123 = vunpack.c.l.b16 %v5482
        %v6124 = vunpack.c.l.b16 %v5483
        %v6125 = vunpack.c.l.b16 %v5484
        %v6126 = vunpack.c.l.b16 %v5485
        %v6127 = vunpack.c.l.b16 %v5486
        %v6128 = vunpack.c.l.b16 %v5487
        %v6129 = vunpack.c.l.b16 %v5488
        %v6130 = vunpack.c.l.b16 %v5489
        %v6131 = vunpack.c.l.b16 %v5490
        %v6132 = vunpack.c.l.b16 %v5491
        %v6133 = vunpack.c.l.b16 %v5492
        %v6134 = vunpack.c.l.b16 %v5493
        %v6135 = vunpack.c.l.b16 %v5494
        %v6136 = vunpack.c.l.b16 %v5495
        %v6137 = vunpack.c.l.b16 %v5496
        %v6138 = vunpack.c.l.b16 %v5497
        %v6139 = vunpack.c.l.b16 %v5498
        %v6140 = vunpack.c.l.b16 %v5499
        %v6141 = vunpack.c.l.b16 %v5500
        %v6142 = vunpack.c.l.b16 %v5501
        %v6143 = vunpack.c.l.b16 %v5502
        %v6144 = vunpack.c.l.b16 %v5503
        %v6145 = vunpack.c.l.b16 %v5504
        %v6146 = vunpack.c.l.b16 %v5505
        %v6147 = vunpack.c.l.b16 %v5506
        %v6148 = vpack.c.b16 %v6117, %v6116
        %v6149 = vpack.c.b16 %v6119, %v6118
        %v6150 = vpack.c.b16 %v6121, %v6120
        %v6151 = vpack.c.b16 %v6123, %v6122
        %v6152 = vpack.c.b16 %v6125, %v6124
        %v6153 = vpack.c.b16 %v6127, %v6126
        %v6154 = vpack.c.b16 %v6129, %v6128
        %v6155 = vpack.c.b16 %v6131, %v6130
        %v6156 = vpack.c.b16 %v6133, %v6132
        %v6157 = vpack.c.b16 %v6135, %v6134
        %v6158 = vpack.c.b16 %v6137, %v6136
        %v6159 = vpack.c.b16 %v6139, %v6138
        %v6160 = vpack.c.b16 %v6141, %v6140
        %v6161 = vpack.c.b16 %v6143, %v6142
        %v6162 = vpack.c.b16 %v6145, %v6144
        %v6163 = vpack.c.b16 %v6147, %v6146
        %6164 = vrot.lane.b32.xlu0 %v6148, 24
        %v6165 = vpop.permute.xlu0 %6164
        %6166 = vrot.lane.b32.xlu0 %v6149, 24
        %v6167 = vpop.permute.xlu0 %6166
        %6168 = vrot.lane.b32.xlu0 %v6150, 24
        %v6169 = vpop.permute.xlu0 %6168
        %6170 = vrot.lane.b32.xlu0 %v6151, 24
        %v6171 = vpop.permute.xlu0 %6170
        %6172 = vrot.lane.b32.xlu0 %v6152, 24
        %v6173 = vpop.permute.xlu0 %6172
        %6174 = vrot.lane.b32.xlu0 %v6153, 24
        %v6175 = vpop.permute.xlu0 %6174
        %6176 = vrot.lane.b32.xlu0 %v6154, 24
        %v6177 = vpop.permute.xlu0 %6176
        %6178 = vrot.lane.b32.xlu0 %v6155, 24
        %v6179 = vpop.permute.xlu0 %6178
        %6180 = vrot.lane.b32.xlu0 %v6156, 24
        %v6181 = vpop.permute.xlu0 %6180
        %6182 = vrot.lane.b32.xlu0 %v6157, 24
        %v6183 = vpop.permute.xlu0 %6182
        %6184 = vrot.lane.b32.xlu0 %v6158, 24
        %v6185 = vpop.permute.xlu0 %6184
        %6186 = vrot.lane.b32.xlu0 %v6159, 24
        %v6187 = vpop.permute.xlu0 %6186
        %6188 = vrot.lane.b32.xlu0 %v6160, 24
        %v6189 = vpop.permute.xlu0 %6188
        %6190 = vrot.lane.b32.xlu0 %v6161, 24
        %v6191 = vpop.permute.xlu0 %6190
        %6192 = vrot.lane.b32.xlu0 %v6162, 24
        %v6193 = vpop.permute.xlu0 %6192
        %6194 = vrot.lane.b32.xlu0 %v6163, 24
        %v6195 = vpop.permute.xlu0 %6194
        %v6212 = vunpack.c.l.b16 %v5507
        %v6213 = vunpack.c.l.b16 %v5508
        %v6214 = vunpack.c.l.b16 %v5509
        %v6215 = vunpack.c.l.b16 %v5510
        %v6216 = vunpack.c.l.b16 %v5511
        %v6217 = vunpack.c.l.b16 %v5512
        %v6218 = vunpack.c.l.b16 %v5513
        %v6219 = vunpack.c.l.b16 %v5514
        %v6220 = vunpack.c.l.b16 %v5515
        %v6221 = vunpack.c.l.b16 %v5516
        %v6222 = vunpack.c.l.b16 %v5517
        %v6223 = vunpack.c.l.b16 %v5518
        %v6224 = vunpack.c.l.b16 %v5519
        %v6225 = vunpack.c.l.b16 %v5520
        %v6226 = vunpack.c.l.b16 %v5521
        %v6227 = vunpack.c.l.b16 %v5522
        %v6228 = vpack.c.b16 %v6212, %v6212
        %v6229 = vpack.c.b16 %v6213, %v6213
        %v6230 = vpack.c.b16 %v6214, %v6214
        %v6231 = vpack.c.b16 %v6215, %v6215
        %v6232 = vpack.c.b16 %v6216, %v6216
        %v6233 = vpack.c.b16 %v6217, %v6217
        %v6234 = vpack.c.b16 %v6218, %v6218
        %v6235 = vpack.c.b16 %v6219, %v6219
        %v6236 = vpack.c.b16 %v6220, %v6220
        %v6237 = vpack.c.b16 %v6221, %v6221
        %v6238 = vpack.c.b16 %v6222, %v6222
        %v6239 = vpack.c.b16 %v6223, %v6223
        %v6240 = vpack.c.b16 %v6224, %v6224
        %v6241 = vpack.c.b16 %v6225, %v6225
        %v6242 = vpack.c.b16 %v6226, %v6226
        %v6243 = vpack.c.b16 %v6227, %v6227
        %v6245 = vshrl.u32 %v6148, 16
        %v6247 = vshll.u32 %v6148, 16
        %v6249 = vrot.slane %v6247, 1
        %v6250 = vor.u32 %v6245, %v6249
        %v6252 = vshll.u32 %v6228, 16
        %v6254 = vrot.slane %v6252, 1
        %v6255 = vsel %vm3068, %v6250, %v6254
        %v6257 = vshrl.u32 %v6149, 16
        %v6259 = vshll.u32 %v6149, 16
        %v6261 = vrot.slane %v6259, 1
        %v6262 = vor.u32 %v6257, %v6261
        %v6264 = vshll.u32 %v6229, 16
        %v6266 = vrot.slane %v6264, 1
        %v6267 = vsel %vm3068, %v6262, %v6266
        %v6269 = vshrl.u32 %v6150, 16
        %v6271 = vshll.u32 %v6150, 16
        %v6273 = vrot.slane %v6271, 1
        %v6274 = vor.u32 %v6269, %v6273
        %v6276 = vshll.u32 %v6230, 16
        %v6278 = vrot.slane %v6276, 1
        %v6279 = vsel %vm3068, %v6274, %v6278
        %v6281 = vshrl.u32 %v6151, 16
        %v6283 = vshll.u32 %v6151, 16
        %v6285 = vrot.slane %v6283, 1
        %v6286 = vor.u32 %v6281, %v6285
        %v6288 = vshll.u32 %v6231, 16
        %v6290 = vrot.slane %v6288, 1
        %v6291 = vsel %vm3068, %v6286, %v6290
        %v6293 = vshrl.u32 %v6152, 16
        %v6295 = vshll.u32 %v6152, 16
        %v6297 = vrot.slane %v6295, 1
        %v6298 = vor.u32 %v6293, %v6297
        %v6300 = vshll.u32 %v6232, 16
        %v6302 = vrot.slane %v6300, 1
        %v6303 = vsel %vm3068, %v6298, %v6302
        %v6305 = vshrl.u32 %v6153, 16
        %v6307 = vshll.u32 %v6153, 16
        %v6309 = vrot.slane %v6307, 1
        %v6310 = vor.u32 %v6305, %v6309
        %v6312 = vshll.u32 %v6233, 16
        %v6314 = vrot.slane %v6312, 1
        %v6315 = vsel %vm3068, %v6310, %v6314
        %v6317 = vshrl.u32 %v6154, 16
        %v6319 = vshll.u32 %v6154, 16
        %v6321 = vrot.slane %v6319, 1
        %v6322 = vor.u32 %v6317, %v6321
        %v6324 = vshll.u32 %v6234, 16
        %v6326 = vrot.slane %v6324, 1
        %v6327 = vsel %vm3068, %v6322, %v6326
        %v6329 = vshrl.u32 %v6155, 16
        %v6331 = vshll.u32 %v6155, 16
        %v6333 = vrot.slane %v6331, 1
        %v6334 = vor.u32 %v6329, %v6333
        %v6336 = vshll.u32 %v6235, 16
        %v6338 = vrot.slane %v6336, 1
        %v6339 = vsel %vm3068, %v6334, %v6338
        %v6341 = vshrl.u32 %v6156, 16
        %v6343 = vshll.u32 %v6156, 16
        %v6345 = vrot.slane %v6343, 1
        %v6346 = vor.u32 %v6341, %v6345
        %v6348 = vshll.u32 %v6236, 16
        %v6350 = vrot.slane %v6348, 1
        %v6351 = vsel %vm3068, %v6346, %v6350
        %v6353 = vshrl.u32 %v6157, 16
        %v6355 = vshll.u32 %v6157, 16
        %v6357 = vrot.slane %v6355, 1
        %v6358 = vor.u32 %v6353, %v6357
        %v6360 = vshll.u32 %v6237, 16
        %v6362 = vrot.slane %v6360, 1
        %v6363 = vsel %vm3068, %v6358, %v6362
        %v6365 = vshrl.u32 %v6158, 16
        %v6367 = vshll.u32 %v6158, 16
        %v6369 = vrot.slane %v6367, 1
        %v6370 = vor.u32 %v6365, %v6369
        %v6372 = vshll.u32 %v6238, 16
        %v6374 = vrot.slane %v6372, 1
        %v6375 = vsel %vm3068, %v6370, %v6374
        %v6377 = vshrl.u32 %v6159, 16
        %v6379 = vshll.u32 %v6159, 16
        %v6381 = vrot.slane %v6379, 1
        %v6382 = vor.u32 %v6377, %v6381
        %v6384 = vshll.u32 %v6239, 16
        %v6386 = vrot.slane %v6384, 1
        %v6387 = vsel %vm3068, %v6382, %v6386
        %v6389 = vshrl.u32 %v6160, 16
        %v6391 = vshll.u32 %v6160, 16
        %v6393 = vrot.slane %v6391, 1
        %v6394 = vor.u32 %v6389, %v6393
        %v6396 = vshll.u32 %v6240, 16
        %v6398 = vrot.slane %v6396, 1
        %v6399 = vsel %vm3068, %v6394, %v6398
        %v6401 = vshrl.u32 %v6161, 16
        %v6403 = vshll.u32 %v6161, 16
        %v6405 = vrot.slane %v6403, 1
        %v6406 = vor.u32 %v6401, %v6405
        %v6408 = vshll.u32 %v6241, 16
        %v6410 = vrot.slane %v6408, 1
        %v6411 = vsel %vm3068, %v6406, %v6410
        %v6413 = vshrl.u32 %v6162, 16
        %v6415 = vshll.u32 %v6162, 16
        %v6417 = vrot.slane %v6415, 1
        %v6418 = vor.u32 %v6413, %v6417
        %v6420 = vshll.u32 %v6242, 16
        %v6422 = vrot.slane %v6420, 1
        %v6423 = vsel %vm3068, %v6418, %v6422
        %v6425 = vshrl.u32 %v6163, 16
        %v6427 = vshll.u32 %v6163, 16
        %v6429 = vrot.slane %v6427, 1
        %v6430 = vor.u32 %v6425, %v6429
        %v6432 = vshll.u32 %v6243, 16
        %v6434 = vrot.slane %v6432, 1
        %v6435 = vsel %vm3068, %v6430, %v6434
        %6436 = vrot.lane.b32.xlu0 %v6255, 32
        %v6437 = vpop.permute.xlu0 %6436
        %6438 = vrot.lane.b32.xlu0 %v6267, 32
        %v6439 = vpop.permute.xlu0 %6438
        %6440 = vrot.lane.b32.xlu0 %v6279, 32
        %v6441 = vpop.permute.xlu0 %6440
        %6442 = vrot.lane.b32.xlu0 %v6291, 32
        %v6443 = vpop.permute.xlu0 %6442
        %6444 = vrot.lane.b32.xlu0 %v6303, 32
        %v6445 = vpop.permute.xlu0 %6444
        %6446 = vrot.lane.b32.xlu0 %v6315, 32
        %v6447 = vpop.permute.xlu0 %6446
        %6448 = vrot.lane.b32.xlu0 %v6327, 32
        %v6449 = vpop.permute.xlu0 %6448
        %6450 = vrot.lane.b32.xlu0 %v6339, 32
        %v6451 = vpop.permute.xlu0 %6450
        %6452 = vrot.lane.b32.xlu0 %v6351, 32
        %v6453 = vpop.permute.xlu0 %6452
        %6454 = vrot.lane.b32.xlu0 %v6363, 32
        %v6455 = vpop.permute.xlu0 %6454
        %6456 = vrot.lane.b32.xlu0 %v6375, 32
        %v6457 = vpop.permute.xlu0 %6456
        %6458 = vrot.lane.b32.xlu0 %v6387, 32
        %v6459 = vpop.permute.xlu0 %6458
        %6460 = vrot.lane.b32.xlu0 %v6399, 32
        %v6461 = vpop.permute.xlu0 %6460
        %6462 = vrot.lane.b32.xlu0 %v6411, 32
        %v6463 = vpop.permute.xlu0 %6462
        %6464 = vrot.lane.b32.xlu0 %v6423, 32
        %v6465 = vpop.permute.xlu0 %6464
        %6466 = vrot.lane.b32.xlu0 %v6435, 32
        %v6467 = vpop.permute.xlu0 %6466
        %v6484 = vunpack.c.l.b16 %v5523
        %v6485 = vunpack.c.l.b16 %v5524
        %v6486 = vunpack.c.l.b16 %v5525
        %v6487 = vunpack.c.l.b16 %v5526
        %v6488 = vunpack.c.l.b16 %v5527
        %v6489 = vunpack.c.l.b16 %v5528
        %v6490 = vunpack.c.l.b16 %v5529
        %v6491 = vunpack.c.l.b16 %v5530
        %v6492 = vunpack.c.l.b16 %v5531
        %v6493 = vunpack.c.l.b16 %v5532
        %v6494 = vunpack.c.l.b16 %v5533
        %v6495 = vunpack.c.l.b16 %v5534
        %v6496 = vunpack.c.l.b16 %v5535
        %v6497 = vunpack.c.l.b16 %v5536
        %v6498 = vunpack.c.l.b16 %v5537
        %v6499 = vunpack.c.l.b16 %v5538
        %v6500 = vpack.c.b16 %v6117, %v6484
        %v6501 = vpack.c.b16 %v6119, %v6485
        %v6502 = vpack.c.b16 %v6121, %v6486
        %v6503 = vpack.c.b16 %v6123, %v6487
        %v6504 = vpack.c.b16 %v6125, %v6488
        %v6505 = vpack.c.b16 %v6127, %v6489
        %v6506 = vpack.c.b16 %v6129, %v6490
        %v6507 = vpack.c.b16 %v6131, %v6491
        %v6508 = vpack.c.b16 %v6133, %v6492
        %v6509 = vpack.c.b16 %v6135, %v6493
        %v6510 = vpack.c.b16 %v6137, %v6494
        %v6511 = vpack.c.b16 %v6139, %v6495
        %v6512 = vpack.c.b16 %v6141, %v6496
        %v6513 = vpack.c.b16 %v6143, %v6497
        %v6514 = vpack.c.b16 %v6145, %v6498
        %v6515 = vpack.c.b16 %v6147, %v6499
        %v6516 = vrot.slane %v6500, 1
        %v6517 = vrot.slane %v6228, 1
        %v6518 = vsel %vm3341, %v6516, %v6517
        %v6519 = vrot.slane %v6501, 1
        %v6520 = vrot.slane %v6229, 1
        %v6521 = vsel %vm3341, %v6519, %v6520
        %v6522 = vrot.slane %v6502, 1
        %v6523 = vrot.slane %v6230, 1
        %v6524 = vsel %vm3341, %v6522, %v6523
        %v6525 = vrot.slane %v6503, 1
        %v6526 = vrot.slane %v6231, 1
        %v6527 = vsel %vm3341, %v6525, %v6526
        %v6528 = vrot.slane %v6504, 1
        %v6529 = vrot.slane %v6232, 1
        %v6530 = vsel %vm3341, %v6528, %v6529
        %v6531 = vrot.slane %v6505, 1
        %v6532 = vrot.slane %v6233, 1
        %v6533 = vsel %vm3341, %v6531, %v6532
        %v6534 = vrot.slane %v6506, 1
        %v6535 = vrot.slane %v6234, 1
        %v6536 = vsel %vm3341, %v6534, %v6535
        %v6537 = vrot.slane %v6507, 1
        %v6538 = vrot.slane %v6235, 1
        %v6539 = vsel %vm3341, %v6537, %v6538
        %v6540 = vrot.slane %v6508, 1
        %v6541 = vrot.slane %v6236, 1
        %v6542 = vsel %vm3341, %v6540, %v6541
        %v6543 = vrot.slane %v6509, 1
        %v6544 = vrot.slane %v6237, 1
        %v6545 = vsel %vm3341, %v6543, %v6544
        %v6546 = vrot.slane %v6510, 1
        %v6547 = vrot.slane %v6238, 1
        %v6548 = vsel %vm3341, %v6546, %v6547
        %v6549 = vrot.slane %v6511, 1
        %v6550 = vrot.slane %v6239, 1
        %v6551 = vsel %vm3341, %v6549, %v6550
        %v6552 = vrot.slane %v6512, 1
        %v6553 = vrot.slane %v6240, 1
        %v6554 = vsel %vm3341, %v6552, %v6553
        %v6555 = vrot.slane %v6513, 1
        %v6556 = vrot.slane %v6241, 1
        %v6557 = vsel %vm3341, %v6555, %v6556
        %v6558 = vrot.slane %v6514, 1
        %v6559 = vrot.slane %v6242, 1
        %v6560 = vsel %vm3341, %v6558, %v6559
        %v6561 = vrot.slane %v6515, 1
        %v6562 = vrot.slane %v6243, 1
        %v6563 = vsel %vm3341, %v6561, %v6562
        %6564 = vrot.lane.b32.xlu0 %v6518, 40
        %v6565 = vpop.permute.xlu0 %6564
        %6566 = vrot.lane.b32.xlu0 %v6521, 40
        %v6567 = vpop.permute.xlu0 %6566
        %6568 = vrot.lane.b32.xlu0 %v6524, 40
        %v6569 = vpop.permute.xlu0 %6568
        %6570 = vrot.lane.b32.xlu0 %v6527, 40
        %v6571 = vpop.permute.xlu0 %6570
        %6572 = vrot.lane.b32.xlu0 %v6530, 40
        %v6573 = vpop.permute.xlu0 %6572
        %6574 = vrot.lane.b32.xlu0 %v6533, 40
        %v6575 = vpop.permute.xlu0 %6574
        %6576 = vrot.lane.b32.xlu0 %v6536, 40
        %v6577 = vpop.permute.xlu0 %6576
        %6578 = vrot.lane.b32.xlu0 %v6539, 40
        %v6579 = vpop.permute.xlu0 %6578
        %6580 = vrot.lane.b32.xlu0 %v6542, 40
        %v6581 = vpop.permute.xlu0 %6580
        %6582 = vrot.lane.b32.xlu0 %v6545, 40
        %v6583 = vpop.permute.xlu0 %6582
        %6584 = vrot.lane.b32.xlu0 %v6548, 40
        %v6585 = vpop.permute.xlu0 %6584
        %6586 = vrot.lane.b32.xlu0 %v6551, 40
        %v6587 = vpop.permute.xlu0 %6586
        %6588 = vrot.lane.b32.xlu0 %v6554, 40
        %v6589 = vpop.permute.xlu0 %6588
        %6590 = vrot.lane.b32.xlu0 %v6557, 40
        %v6591 = vpop.permute.xlu0 %6590
        %6592 = vrot.lane.b32.xlu0 %v6560, 40
        %v6593 = vpop.permute.xlu0 %6592
        %6594 = vrot.lane.b32.xlu0 %v6563, 40
        %v6595 = vpop.permute.xlu0 %6594
        %v6628 = vunpack.c.l.b16 %v5540
        %v6629 = vunpack.c.l.b16 %v5541
        %v6630 = vunpack.c.l.b16 %v5542
        %v6631 = vunpack.c.l.b16 %v5543
        %v6632 = vunpack.c.l.b16 %v5544
        %v6633 = vunpack.c.l.b16 %v5545
        %v6634 = vunpack.c.l.b16 %v5546
        %v6635 = vunpack.c.l.b16 %v5547
        %v6636 = vunpack.c.l.b16 %v5548
        %v6637 = vunpack.c.l.b16 %v5549
        %v6638 = vunpack.c.l.b16 %v5550
        %v6639 = vunpack.c.l.b16 %v5551
        %v6640 = vunpack.c.l.b16 %v5552
        %v6641 = vunpack.c.l.b16 %v5553
        %v6642 = vunpack.c.l.b16 %v5554
        %v6643 = vunpack.c.l.b16 %v5555
        %v6644 = vunpack.c.l.b16 %v5556
        %v6645 = vunpack.c.l.b16 %v5557
        %v6646 = vunpack.c.l.b16 %v5558
        %v6647 = vunpack.c.l.b16 %v5559
        %v6648 = vunpack.c.l.b16 %v5560
        %v6649 = vunpack.c.l.b16 %v5561
        %v6650 = vunpack.c.l.b16 %v5562
        %v6651 = vunpack.c.l.b16 %v5563
        %v6652 = vunpack.c.l.b16 %v5564
        %v6653 = vunpack.c.l.b16 %v5565
        %v6654 = vunpack.c.l.b16 %v5566
        %v6655 = vunpack.c.l.b16 %v5567
        %v6656 = vunpack.c.l.b16 %v5568
        %v6657 = vunpack.c.l.b16 %v5569
        %v6658 = vunpack.c.l.b16 %v5570
        %v6659 = vunpack.c.l.b16 %v5571
        %v6660 = vpack.c.b16 %v6629, %v6628
        %v6661 = vpack.c.b16 %v6631, %v6630
        %v6662 = vpack.c.b16 %v6633, %v6632
        %v6663 = vpack.c.b16 %v6635, %v6634
        %v6664 = vpack.c.b16 %v6637, %v6636
        %v6665 = vpack.c.b16 %v6639, %v6638
        %v6666 = vpack.c.b16 %v6641, %v6640
        %v6667 = vpack.c.b16 %v6643, %v6642
        %v6668 = vpack.c.b16 %v6645, %v6644
        %v6669 = vpack.c.b16 %v6647, %v6646
        %v6670 = vpack.c.b16 %v6649, %v6648
        %v6671 = vpack.c.b16 %v6651, %v6650
        %v6672 = vpack.c.b16 %v6653, %v6652
        %v6673 = vpack.c.b16 %v6655, %v6654
        %v6674 = vpack.c.b16 %v6657, %v6656
        %v6675 = vpack.c.b16 %v6659, %v6658
        %6676 = vrot.lane.b32.xlu0 %v6660, 48
        %v6677 = vpop.permute.xlu0 %6676
        %6678 = vrot.lane.b32.xlu0 %v6661, 48
        %v6679 = vpop.permute.xlu0 %6678
        %6680 = vrot.lane.b32.xlu0 %v6662, 48
        %v6681 = vpop.permute.xlu0 %6680
        %6682 = vrot.lane.b32.xlu0 %v6663, 48
        %v6683 = vpop.permute.xlu0 %6682
        %6684 = vrot.lane.b32.xlu0 %v6664, 48
        %v6685 = vpop.permute.xlu0 %6684
        %6686 = vrot.lane.b32.xlu0 %v6665, 48
        %v6687 = vpop.permute.xlu0 %6686
        %6688 = vrot.lane.b32.xlu0 %v6666, 48
        %v6689 = vpop.permute.xlu0 %6688
        %6690 = vrot.lane.b32.xlu0 %v6667, 48
        %v6691 = vpop.permute.xlu0 %6690
        %6692 = vrot.lane.b32.xlu0 %v6668, 48
        %v6693 = vpop.permute.xlu0 %6692
        %6694 = vrot.lane.b32.xlu0 %v6669, 48
        %v6695 = vpop.permute.xlu0 %6694
        %6696 = vrot.lane.b32.xlu0 %v6670, 48
        %v6697 = vpop.permute.xlu0 %6696
        %6698 = vrot.lane.b32.xlu0 %v6671, 48
        %v6699 = vpop.permute.xlu0 %6698
        %6700 = vrot.lane.b32.xlu0 %v6672, 48
        %v6701 = vpop.permute.xlu0 %6700
        %6702 = vrot.lane.b32.xlu0 %v6673, 48
        %v6703 = vpop.permute.xlu0 %6702
        %6704 = vrot.lane.b32.xlu0 %v6674, 48
        %v6705 = vpop.permute.xlu0 %6704
        %6706 = vrot.lane.b32.xlu0 %v6675, 48
        %v6707 = vpop.permute.xlu0 %6706
        %v6724 = vunpack.c.l.b16 %v5572
        %v6725 = vunpack.c.l.b16 %v5573
        %v6726 = vunpack.c.l.b16 %v5574
        %v6727 = vunpack.c.l.b16 %v5575
        %v6728 = vunpack.c.l.b16 %v5576
        %v6729 = vunpack.c.l.b16 %v5577
        %v6730 = vunpack.c.l.b16 %v5578
        %v6731 = vunpack.c.l.b16 %v5579
        %v6732 = vunpack.c.l.b16 %v5580
        %v6733 = vunpack.c.l.b16 %v5581
        %v6734 = vunpack.c.l.b16 %v5582
        %v6735 = vunpack.c.l.b16 %v5583
        %v6736 = vunpack.c.l.b16 %v5584
        %v6737 = vunpack.c.l.b16 %v5585
        %v6738 = vunpack.c.l.b16 %v5586
        %v6739 = vunpack.c.l.b16 %v5587
        %v6740 = vpack.c.b16 %v6724, %v6724
        %v6741 = vpack.c.b16 %v6725, %v6725
        %v6742 = vpack.c.b16 %v6726, %v6726
        %v6743 = vpack.c.b16 %v6727, %v6727
        %v6744 = vpack.c.b16 %v6728, %v6728
        %v6745 = vpack.c.b16 %v6729, %v6729
        %v6746 = vpack.c.b16 %v6730, %v6730
        %v6747 = vpack.c.b16 %v6731, %v6731
        %v6748 = vpack.c.b16 %v6732, %v6732
        %v6749 = vpack.c.b16 %v6733, %v6733
        %v6750 = vpack.c.b16 %v6734, %v6734
        %v6751 = vpack.c.b16 %v6735, %v6735
        %v6752 = vpack.c.b16 %v6736, %v6736
        %v6753 = vpack.c.b16 %v6737, %v6737
        %v6754 = vpack.c.b16 %v6738, %v6738
        %v6755 = vpack.c.b16 %v6739, %v6739
        %v6757 = vshrl.u32 %v6660, 16
        %v6759 = vshll.u32 %v6660, 16
        %v6761 = vrot.slane %v6759, 1
        %v6762 = vor.u32 %v6757, %v6761
        %v6764 = vshll.u32 %v6740, 16
        %v6766 = vrot.slane %v6764, 1
        %v6767 = vsel %vm3068, %v6762, %v6766
        %v6769 = vshrl.u32 %v6661, 16
        %v6771 = vshll.u32 %v6661, 16
        %v6773 = vrot.slane %v6771, 1
        %v6774 = vor.u32 %v6769, %v6773
        %v6776 = vshll.u32 %v6741, 16
        %v6778 = vrot.slane %v6776, 1
        %v6779 = vsel %vm3068, %v6774, %v6778
        %v6781 = vshrl.u32 %v6662, 16
        %v6783 = vshll.u32 %v6662, 16
        %v6785 = vrot.slane %v6783, 1
        %v6786 = vor.u32 %v6781, %v6785
        %v6788 = vshll.u32 %v6742, 16
        %v6790 = vrot.slane %v6788, 1
        %v6791 = vsel %vm3068, %v6786, %v6790
        %v6793 = vshrl.u32 %v6663, 16
        %v6795 = vshll.u32 %v6663, 16
        %v6797 = vrot.slane %v6795, 1
        %v6798 = vor.u32 %v6793, %v6797
        %v6800 = vshll.u32 %v6743, 16
        %v6802 = vrot.slane %v6800, 1
        %v6803 = vsel %vm3068, %v6798, %v6802
        %v6805 = vshrl.u32 %v6664, 16
        %v6807 = vshll.u32 %v6664, 16
        %v6809 = vrot.slane %v6807, 1
        %v6810 = vor.u32 %v6805, %v6809
        %v6812 = vshll.u32 %v6744, 16
        %v6814 = vrot.slane %v6812, 1
        %v6815 = vsel %vm3068, %v6810, %v6814
        %v6817 = vshrl.u32 %v6665, 16
        %v6819 = vshll.u32 %v6665, 16
        %v6821 = vrot.slane %v6819, 1
        %v6822 = vor.u32 %v6817, %v6821
        %v6824 = vshll.u32 %v6745, 16
        %v6826 = vrot.slane %v6824, 1
        %v6827 = vsel %vm3068, %v6822, %v6826
        %v6829 = vshrl.u32 %v6666, 16
        %v6831 = vshll.u32 %v6666, 16
        %v6833 = vrot.slane %v6831, 1
        %v6834 = vor.u32 %v6829, %v6833
        %v6836 = vshll.u32 %v6746, 16
        %v6838 = vrot.slane %v6836, 1
        %v6839 = vsel %vm3068, %v6834, %v6838
        %v6841 = vshrl.u32 %v6667, 16
        %v6843 = vshll.u32 %v6667, 16
        %v6845 = vrot.slane %v6843, 1
        %v6846 = vor.u32 %v6841, %v6845
        %v6848 = vshll.u32 %v6747, 16
        %v6850 = vrot.slane %v6848, 1
        %v6851 = vsel %vm3068, %v6846, %v6850
        %v6853 = vshrl.u32 %v6668, 16
        %v6855 = vshll.u32 %v6668, 16
        %v6857 = vrot.slane %v6855, 1
        %v6858 = vor.u32 %v6853, %v6857
        %v6860 = vshll.u32 %v6748, 16
        %v6862 = vrot.slane %v6860, 1
        %v6863 = vsel %vm3068, %v6858, %v6862
        %v6865 = vshrl.u32 %v6669, 16
        %v6867 = vshll.u32 %v6669, 16
        %v6869 = vrot.slane %v6867, 1
        %v6870 = vor.u32 %v6865, %v6869
        %v6872 = vshll.u32 %v6749, 16
        %v6874 = vrot.slane %v6872, 1
        %v6875 = vsel %vm3068, %v6870, %v6874
        %v6877 = vshrl.u32 %v6670, 16
        %v6879 = vshll.u32 %v6670, 16
        %v6881 = vrot.slane %v6879, 1
        %v6882 = vor.u32 %v6877, %v6881
        %v6884 = vshll.u32 %v6750, 16
        %v6886 = vrot.slane %v6884, 1
        %v6887 = vsel %vm3068, %v6882, %v6886
        %v6889 = vshrl.u32 %v6671, 16
        %v6891 = vshll.u32 %v6671, 16
        %v6893 = vrot.slane %v6891, 1
        %v6894 = vor.u32 %v6889, %v6893
        %v6896 = vshll.u32 %v6751, 16
        %v6898 = vrot.slane %v6896, 1
        %v6899 = vsel %vm3068, %v6894, %v6898
        %v6901 = vshrl.u32 %v6672, 16
        %v6903 = vshll.u32 %v6672, 16
        %v6905 = vrot.slane %v6903, 1
        %v6906 = vor.u32 %v6901, %v6905
        %v6908 = vshll.u32 %v6752, 16
        %v6910 = vrot.slane %v6908, 1
        %v6911 = vsel %vm3068, %v6906, %v6910
        %v6913 = vshrl.u32 %v6673, 16
        %v6915 = vshll.u32 %v6673, 16
        %v6917 = vrot.slane %v6915, 1
        %v6918 = vor.u32 %v6913, %v6917
        %v6920 = vshll.u32 %v6753, 16
        %v6922 = vrot.slane %v6920, 1
        %v6923 = vsel %vm3068, %v6918, %v6922
        %v6925 = vshrl.u32 %v6674, 16
        %v6927 = vshll.u32 %v6674, 16
        %v6929 = vrot.slane %v6927, 1
        %v6930 = vor.u32 %v6925, %v6929
        %v6932 = vshll.u32 %v6754, 16
        %v6934 = vrot.slane %v6932, 1
        %v6935 = vsel %vm3068, %v6930, %v6934
        %v6937 = vshrl.u32 %v6675, 16
        %v6939 = vshll.u32 %v6675, 16
        %v6941 = vrot.slane %v6939, 1
        %v6942 = vor.u32 %v6937, %v6941
        %v6944 = vshll.u32 %v6755, 16
        %v6946 = vrot.slane %v6944, 1
        %v6947 = vsel %vm3068, %v6942, %v6946
        %6948 = vrot.lane.b32.xlu0 %v6767, 56
        %v6949 = vpop.permute.xlu0 %6948
        %6950 = vrot.lane.b32.xlu0 %v6779, 56
        %v6951 = vpop.permute.xlu0 %6950
        %6952 = vrot.lane.b32.xlu0 %v6791, 56
        %v6953 = vpop.permute.xlu0 %6952
        %6954 = vrot.lane.b32.xlu0 %v6803, 56
        %v6955 = vpop.permute.xlu0 %6954
        %6956 = vrot.lane.b32.xlu0 %v6815, 56
        %v6957 = vpop.permute.xlu0 %6956
        %6958 = vrot.lane.b32.xlu0 %v6827, 56
        %v6959 = vpop.permute.xlu0 %6958
        %6960 = vrot.lane.b32.xlu0 %v6839, 56
        %v6961 = vpop.permute.xlu0 %6960
        %6962 = vrot.lane.b32.xlu0 %v6851, 56
        %v6963 = vpop.permute.xlu0 %6962
        %6964 = vrot.lane.b32.xlu0 %v6863, 56
        %v6965 = vpop.permute.xlu0 %6964
        %6966 = vrot.lane.b32.xlu0 %v6875, 56
        %v6967 = vpop.permute.xlu0 %6966
        %6968 = vrot.lane.b32.xlu0 %v6887, 56
        %v6969 = vpop.permute.xlu0 %6968
        %6970 = vrot.lane.b32.xlu0 %v6899, 56
        %v6971 = vpop.permute.xlu0 %6970
        %6972 = vrot.lane.b32.xlu0 %v6911, 56
        %v6973 = vpop.permute.xlu0 %6972
        %6974 = vrot.lane.b32.xlu0 %v6923, 56
        %v6975 = vpop.permute.xlu0 %6974
        %6976 = vrot.lane.b32.xlu0 %v6935, 56
        %v6977 = vpop.permute.xlu0 %6976
        %6978 = vrot.lane.b32.xlu0 %v6947, 56
        %v6979 = vpop.permute.xlu0 %6978
        %v6996 = vunpack.c.l.b16 %v5588
        %v6997 = vunpack.c.l.b16 %v5589
        %v6998 = vunpack.c.l.b16 %v5590
        %v6999 = vunpack.c.l.b16 %v5591
        %v7000 = vunpack.c.l.b16 %v5592
        %v7001 = vunpack.c.l.b16 %v5593
        %v7002 = vunpack.c.l.b16 %v5594
        %v7003 = vunpack.c.l.b16 %v5595
        %v7004 = vunpack.c.l.b16 %v5596
        %v7005 = vunpack.c.l.b16 %v5597
        %v7006 = vunpack.c.l.b16 %v5598
        %v7007 = vunpack.c.l.b16 %v5599
        %v7008 = vunpack.c.l.b16 %v5600
        %v7009 = vunpack.c.l.b16 %v5601
        %v7010 = vunpack.c.l.b16 %v5602
        %v7011 = vunpack.c.l.b16 %v5603
        %v7012 = vpack.c.b16 %v6629, %v6996
        %v7013 = vpack.c.b16 %v6631, %v6997
        %v7014 = vpack.c.b16 %v6633, %v6998
        %v7015 = vpack.c.b16 %v6635, %v6999
        %v7016 = vpack.c.b16 %v6637, %v7000
        %v7017 = vpack.c.b16 %v6639, %v7001
        %v7018 = vpack.c.b16 %v6641, %v7002
        %v7019 = vpack.c.b16 %v6643, %v7003
        %v7020 = vpack.c.b16 %v6645, %v7004
        %v7021 = vpack.c.b16 %v6647, %v7005
        %v7022 = vpack.c.b16 %v6649, %v7006
        %v7023 = vpack.c.b16 %v6651, %v7007
        %v7024 = vpack.c.b16 %v6653, %v7008
        %v7025 = vpack.c.b16 %v6655, %v7009
        %v7026 = vpack.c.b16 %v6657, %v7010
        %v7027 = vpack.c.b16 %v6659, %v7011
        %v7028 = vrot.slane %v7012, 1
        %v7029 = vrot.slane %v6740, 1
        %v7030 = vsel %vm3341, %v7028, %v7029
        %v7031 = vrot.slane %v7013, 1
        %v7032 = vrot.slane %v6741, 1
        %v7033 = vsel %vm3341, %v7031, %v7032
        %v7034 = vrot.slane %v7014, 1
        %v7035 = vrot.slane %v6742, 1
        %v7036 = vsel %vm3341, %v7034, %v7035
        %v7037 = vrot.slane %v7015, 1
        %v7038 = vrot.slane %v6743, 1
        %v7039 = vsel %vm3341, %v7037, %v7038
        %v7040 = vrot.slane %v7016, 1
        %v7041 = vrot.slane %v6744, 1
        %v7042 = vsel %vm3341, %v7040, %v7041
        %v7043 = vrot.slane %v7017, 1
        %v7044 = vrot.slane %v6745, 1
        %v7045 = vsel %vm3341, %v7043, %v7044
        %v7046 = vrot.slane %v7018, 1
        %v7047 = vrot.slane %v6746, 1
        %v7048 = vsel %vm3341, %v7046, %v7047
        %v7049 = vrot.slane %v7019, 1
        %v7050 = vrot.slane %v6747, 1
        %v7051 = vsel %vm3341, %v7049, %v7050
        %v7052 = vrot.slane %v7020, 1
        %v7053 = vrot.slane %v6748, 1
        %v7054 = vsel %vm3341, %v7052, %v7053
        %v7055 = vrot.slane %v7021, 1
        %v7056 = vrot.slane %v6749, 1
        %v7057 = vsel %vm3341, %v7055, %v7056
        %v7058 = vrot.slane %v7022, 1
        %v7059 = vrot.slane %v6750, 1
        %v7060 = vsel %vm3341, %v7058, %v7059
        %v7061 = vrot.slane %v7023, 1
        %v7062 = vrot.slane %v6751, 1
        %v7063 = vsel %vm3341, %v7061, %v7062
        %v7064 = vrot.slane %v7024, 1
        %v7065 = vrot.slane %v6752, 1
        %v7066 = vsel %vm3341, %v7064, %v7065
        %v7067 = vrot.slane %v7025, 1
        %v7068 = vrot.slane %v6753, 1
        %v7069 = vsel %vm3341, %v7067, %v7068
        %v7070 = vrot.slane %v7026, 1
        %v7071 = vrot.slane %v6754, 1
        %v7072 = vsel %vm3341, %v7070, %v7071
        %v7073 = vrot.slane %v7027, 1
        %v7074 = vrot.slane %v6755, 1
        %v7075 = vsel %vm3341, %v7073, %v7074
        %7076 = vrot.lane.b32.xlu0 %v7030, 64
        %v7077 = vpop.permute.xlu0 %7076
        %7078 = vrot.lane.b32.xlu0 %v7033, 64
        %v7079 = vpop.permute.xlu0 %7078
        %7080 = vrot.lane.b32.xlu0 %v7036, 64
        %v7081 = vpop.permute.xlu0 %7080
        %7082 = vrot.lane.b32.xlu0 %v7039, 64
        %v7083 = vpop.permute.xlu0 %7082
        %7084 = vrot.lane.b32.xlu0 %v7042, 64
        %v7085 = vpop.permute.xlu0 %7084
        %7086 = vrot.lane.b32.xlu0 %v7045, 64
        %v7087 = vpop.permute.xlu0 %7086
        %7088 = vrot.lane.b32.xlu0 %v7048, 64
        %v7089 = vpop.permute.xlu0 %7088
        %7090 = vrot.lane.b32.xlu0 %v7051, 64
        %v7091 = vpop.permute.xlu0 %7090
        %7092 = vrot.lane.b32.xlu0 %v7054, 64
        %v7093 = vpop.permute.xlu0 %7092
        %7094 = vrot.lane.b32.xlu0 %v7057, 64
        %v7095 = vpop.permute.xlu0 %7094
        %7096 = vrot.lane.b32.xlu0 %v7060, 64
        %v7097 = vpop.permute.xlu0 %7096
        %7098 = vrot.lane.b32.xlu0 %v7063, 64
        %v7099 = vpop.permute.xlu0 %7098
        %7100 = vrot.lane.b32.xlu0 %v7066, 64
        %v7101 = vpop.permute.xlu0 %7100
        %7102 = vrot.lane.b32.xlu0 %v7069, 64
        %v7103 = vpop.permute.xlu0 %7102
        %7104 = vrot.lane.b32.xlu0 %v7072, 64
        %v7105 = vpop.permute.xlu0 %7104
        %7106 = vrot.lane.b32.xlu0 %v7075, 64
        %v7107 = vpop.permute.xlu0 %7106
        %v7109 = vsel %vm2149, %v5668, %v5925
        %v7111 = vsel %vm2149, %v5669, %v5927
        %v7113 = vsel %vm2149, %v5670, %v5929
        %v7115 = vsel %vm2149, %v5671, %v5931
        %v7117 = vsel %vm2149, %v5672, %v5933
        %v7119 = vsel %vm2149, %v5673, %v5935
        %v7121 = vsel %vm2149, %v5674, %v5937
        %v7123 = vsel %vm2149, %v5675, %v5939
        %v7125 = vsel %vm2149, %v5676, %v5941
        %v7127 = vsel %vm2149, %v5677, %v5943
        %v7129 = vsel %vm2149, %v5678, %v5945
        %v7131 = vsel %vm2149, %v5679, %v5947
        %v7133 = vsel %vm2149, %v5680, %v5949
        %v7135 = vsel %vm2149, %v5681, %v5951
        %v7137 = vsel %vm2149, %v5682, %v5953
        %v7139 = vsel %vm2149, %v5683, %v5955
        %v7141 = vsel %vm4543, %v7109, %v6053
        %v7143 = vsel %vm4543, %v7111, %v6055
        %v7145 = vsel %vm4543, %v7113, %v6057
        %v7147 = vsel %vm4543, %v7115, %v6059
        %v7149 = vsel %vm4543, %v7117, %v6061
        %v7151 = vsel %vm4543, %v7119, %v6063
        %v7153 = vsel %vm4543, %v7121, %v6065
        %v7155 = vsel %vm4543, %v7123, %v6067
        %v7157 = vsel %vm4543, %v7125, %v6069
        %v7159 = vsel %vm4543, %v7127, %v6071
        %v7161 = vsel %vm4543, %v7129, %v6073
        %v7163 = vsel %vm4543, %v7131, %v6075
        %v7165 = vsel %vm4543, %v7133, %v6077
        %v7167 = vsel %vm4543, %v7135, %v6079
        %v7169 = vsel %vm4543, %v7137, %v6081
        %v7171 = vsel %vm4543, %v7139, %v6083
        %v7173 = vsel %vm4609, %v7141, %v6165
        %v7175 = vsel %vm4609, %v7143, %v6167
        %v7177 = vsel %vm4609, %v7145, %v6169
        %v7179 = vsel %vm4609, %v7147, %v6171
        %v7181 = vsel %vm4609, %v7149, %v6173
        %v7183 = vsel %vm4609, %v7151, %v6175
        %v7185 = vsel %vm4609, %v7153, %v6177
        %v7187 = vsel %vm4609, %v7155, %v6179
        %v7189 = vsel %vm4609, %v7157, %v6181
        %v7191 = vsel %vm4609, %v7159, %v6183
        %v7193 = vsel %vm4609, %v7161, %v6185
        %v7195 = vsel %vm4609, %v7163, %v6187
        %v7197 = vsel %vm4609, %v7165, %v6189
        %v7199 = vsel %vm4609, %v7167, %v6191
        %v7201 = vsel %vm4609, %v7169, %v6193
        %v7203 = vsel %vm4609, %v7171, %v6195
        %v7205 = vsel %vm4675, %v7173, %v6437
        %v7207 = vsel %vm4675, %v7175, %v6439
        %v7209 = vsel %vm4675, %v7177, %v6441
        %v7211 = vsel %vm4675, %v7179, %v6443
        %v7213 = vsel %vm4675, %v7181, %v6445
        %v7215 = vsel %vm4675, %v7183, %v6447
        %v7217 = vsel %vm4675, %v7185, %v6449
        %v7219 = vsel %vm4675, %v7187, %v6451
        %v7221 = vsel %vm4675, %v7189, %v6453
        %v7223 = vsel %vm4675, %v7191, %v6455
        %v7225 = vsel %vm4675, %v7193, %v6457
        %v7227 = vsel %vm4675, %v7195, %v6459
        %v7229 = vsel %vm4675, %v7197, %v6461
        %v7231 = vsel %vm4675, %v7199, %v6463
        %v7233 = vsel %vm4675, %v7201, %v6465
        %v7235 = vsel %vm4675, %v7203, %v6467
        %vm7236 = vcmask 326656
        %v7238 = vsel %vm7236, %v7205, %v6565
        %v7240 = vsel %vm7236, %v7207, %v6567
        %v7242 = vsel %vm7236, %v7209, %v6569
        %v7244 = vsel %vm7236, %v7211, %v6571
        %v7246 = vsel %vm7236, %v7213, %v6573
        %v7248 = vsel %vm7236, %v7215, %v6575
        %v7250 = vsel %vm7236, %v7217, %v6577
        %v7252 = vsel %vm7236, %v7219, %v6579
        %v7254 = vsel %vm7236, %v7221, %v6581
        %v7256 = vsel %vm7236, %v7223, %v6583
        %v7258 = vsel %vm7236, %v7225, %v6585
        %v7260 = vsel %vm7236, %v7227, %v6587
        %v7262 = vsel %vm7236, %v7229, %v6589
        %v7264 = vsel %vm7236, %v7231, %v6591
        %v7266 = vsel %vm7236, %v7233, %v6593
        %v7268 = vsel %vm7236, %v7235, %v6595
        %vm7269 = vcmask 392192
        %v7271 = vsel %vm7269, %v7238, %v6677
        %v7273 = vsel %vm7269, %v7240, %v6679
        %v7275 = vsel %vm7269, %v7242, %v6681
        %v7277 = vsel %vm7269, %v7244, %v6683
        %v7279 = vsel %vm7269, %v7246, %v6685
        %v7281 = vsel %vm7269, %v7248, %v6687
        %v7283 = vsel %vm7269, %v7250, %v6689
        %v7285 = vsel %vm7269, %v7252, %v6691
        %v7287 = vsel %vm7269, %v7254, %v6693
        %v7289 = vsel %vm7269, %v7256, %v6695
        %v7291 = vsel %vm7269, %v7258, %v6697
        %v7293 = vsel %vm7269, %v7260, %v6699
        %v7295 = vsel %vm7269, %v7262, %v6701
        %v7297 = vsel %vm7269, %v7264, %v6703
        %v7299 = vsel %vm7269, %v7266, %v6705
        %v7301 = vsel %vm7269, %v7268, %v6707
        %vm7302 = vcmask 457728
        %v7304 = vsel %vm7302, %v7271, %v6949
        %v7306 = vsel %vm7302, %v7273, %v6951
        %v7308 = vsel %vm7302, %v7275, %v6953
        %v7310 = vsel %vm7302, %v7277, %v6955
        %v7312 = vsel %vm7302, %v7279, %v6957
        %v7314 = vsel %vm7302, %v7281, %v6959
        %v7316 = vsel %vm7302, %v7283, %v6961
        %v7318 = vsel %vm7302, %v7285, %v6963
        %v7320 = vsel %vm7302, %v7287, %v6965
        %v7322 = vsel %vm7302, %v7289, %v6967
        %v7324 = vsel %vm7302, %v7291, %v6969
        %v7326 = vsel %vm7302, %v7293, %v6971
        %v7328 = vsel %vm7302, %v7295, %v6973
        %v7330 = vsel %vm7302, %v7297, %v6975
        %v7332 = vsel %vm7302, %v7299, %v6977
        %v7334 = vsel %vm7302, %v7301, %v6979
        %vm7335 = vcmask 523264
        %v7337 = vsel %vm7335, %v7304, %v7077
        %v7339 = vsel %vm7335, %v7306, %v7079
        %v7341 = vsel %vm7335, %v7308, %v7081
        %v7343 = vsel %vm7335, %v7310, %v7083
        %v7345 = vsel %vm7335, %v7312, %v7085
        %v7347 = vsel %vm7335, %v7314, %v7087
        %v7349 = vsel %vm7335, %v7316, %v7089
        %v7351 = vsel %vm7335, %v7318, %v7091
        %v7353 = vsel %vm7335, %v7320, %v7093
        %v7355 = vsel %vm7335, %v7322, %v7095
        %v7357 = vsel %vm7335, %v7324, %v7097
        %v7359 = vsel %vm7335, %v7326, %v7099
        %v7361 = vsel %vm7335, %v7328, %v7101
        %v7363 = vsel %vm7335, %v7330, %v7103
        %v7365 = vsel %vm7335, %v7332, %v7105
        %v7367 = vsel %vm7335, %v7334, %v7107
        %v7368 = vld [vmem:[%s3] sm:$0xf]
        %v7369 = vld [vmem:[%s3 + $0x4] sm:$0xf]
        %v7370 = vld [vmem:[%s3 + $0x8] sm:$0xf]
        %v7371 = vld [vmem:[%s3 + $0xc] sm:$0xf]
        %v7372 = vld [vmem:[%s3 + $0x10] sm:$0xf]
        %v7373 = vld [vmem:[%s3 + $0x14] sm:$0xf]
        %v7374 = vld [vmem:[%s3 + $0x18] sm:$0xf]
        %v7375 = vld [vmem:[%s3 + $0x1c] sm:$0xf]
        %v7376 = vld [vmem:[%s3 + $0x20] sm:$0xf]
        %v7377 = vld [vmem:[%s4] sm:$0x1]
        %v7379 = vperm.slane %v7377, 0
        %v7390 = vunpack.c.l.b16 %v7368
        %v7391 = vunpack.c.l.b16 %v7369
        %v7392 = vunpack.c.l.b16 %v7370
        %v7393 = vunpack.c.l.b16 %v7371
        %v7394 = vunpack.c.l.b16 %v7372
        %v7395 = vunpack.c.l.b16 %v7373
        %v7396 = vunpack.c.l.b16 %v7374
        %v7397 = vunpack.c.l.b16 %v7375
        %v7398 = vunpack.c.l.b16 %v7376
        %v7399 = vpack.c.b16 %v7391, %v7390
        %v7400 = vpack.c.b16 %v7393, %v7392
        %v7401 = vpack.c.b16 %v7395, %v7394
        %v7402 = vpack.c.b16 %v7397, %v7396
        %v7403 = vpack.c.b16 %v7398, %v7398
        %vm7408 = vcmask 588800
        %v7409 = vsel %vm7408, %v7337, 0
        %v7411 = vsel %vm7408, %v7339, 0
        %v7413 = vsel %vm7408, %v7341, 0
        %v7415 = vsel %vm7408, %v7343, 0
        %v7417 = vsel %vm7408, %v7345, 0
        %v7419 = vsel %vm7408, %v7347, 0
        %v7421 = vsel %vm7408, %v7349, 0
        %v7423 = vsel %vm7408, %v7351, 0
        %v7425 = vsel %vm7408, %v7353, 0
        %v7427 = vsel %vm7408, %v7355, 0
        %v7429 = vsel %vm7408, %v7357, 0
        %v7431 = vsel %vm7408, %v7359, 0
        %v7433 = vsel %vm7408, %v7361, 0
        %v7435 = vsel %vm7408, %v7363, 0
        %v7437 = vsel %vm7408, %v7365, 0
        %v7439 = vsel %vm7408, %v7367, 0
        %vm7441 = vcmask 1043456
        %v7443 = vsel %vm7441, %v7403, 0
        %7445 = vmatpush.bf16.msra.mxu0 0
        %7446 = vmatpush.bf16.msra.mxu0 0
        %7447 = vmatpush.bf16.msra.mxu0 0
        %7448 = vmatpush.bf16.msra.mxu0 %v7443
        %7449 = vmatpush.bf16.msra.mxu0 %v7402
        %7450 = vmatpush.bf16.msra.mxu0 %v7401
        %7451 = vmatpush.bf16.msra.mxu0 %v7400
        %7452 = vmatpush.bf16.msra.mxu0 %v7399
        %7453 = vmatmul.bf16.gmra.mxu0 %v7409
        %v7454 = vpop.f32.mrf.mxu0
        %v7455 = vadd.f32 %v7379, %v7454
        %v7456 = vpop.f32.mrf.mxu0
        %v7457 = vadd.f32 %v7379, %v7456
        %7458 = vmatmul.bf16.gmra.mxu0 %v7411
        %v7459 = vpop.f32.mrf.mxu0
        %v7460 = vadd.f32 %v7379, %v7459
        %v7461 = vpop.f32.mrf.mxu0
        %v7462 = vadd.f32 %v7379, %v7461
        %7463 = vmatmul.bf16.gmra.mxu0 %v7413
        %v7464 = vpop.f32.mrf.mxu0
        %v7465 = vadd.f32 %v7379, %v7464
        %v7466 = vpop.f32.mrf.mxu0
        %v7467 = vadd.f32 %v7379, %v7466
        %7468 = vmatmul.bf16.gmra.mxu0 %v7415
        %v7469 = vpop.f32.mrf.mxu0
        %v7470 = vadd.f32 %v7379, %v7469
        %v7471 = vpop.f32.mrf.mxu0
        %v7472 = vadd.f32 %v7379, %v7471
        %7473 = vmatmul.bf16.gmra.mxu0 %v7417
        %v7474 = vpop.f32.mrf.mxu0
        %v7475 = vadd.f32 %v7379, %v7474
        %v7476 = vpop.f32.mrf.mxu0
        %v7477 = vadd.f32 %v7379, %v7476
        %7478 = vmatmul.bf16.gmra.mxu0 %v7419
        %v7479 = vpop.f32.mrf.mxu0
        %v7480 = vadd.f32 %v7379, %v7479
        %v7481 = vpop.f32.mrf.mxu0
        %v7482 = vadd.f32 %v7379, %v7481
        %7483 = vmatmul.bf16.gmra.mxu0 %v7421
        %v7484 = vpop.f32.mrf.mxu0
        %v7485 = vadd.f32 %v7379, %v7484
        %v7486 = vpop.f32.mrf.mxu0
        %v7487 = vadd.f32 %v7379, %v7486
        %7488 = vmatmul.bf16.gmra.mxu0 %v7423
        %v7489 = vpop.f32.mrf.mxu0
        %v7490 = vadd.f32 %v7379, %v7489
        %v7491 = vpop.f32.mrf.mxu0
        %v7492 = vadd.f32 %v7379, %v7491
        %7493 = vmatmul.bf16.gmra.mxu0 %v7425
        %v7494 = vpop.f32.mrf.mxu0
        %v7495 = vadd.f32 %v7379, %v7494
        %v7496 = vpop.f32.mrf.mxu0
        %v7497 = vadd.f32 %v7379, %v7496
        %7498 = vmatmul.bf16.gmra.mxu0 %v7427
        %v7499 = vpop.f32.mrf.mxu0
        %v7500 = vadd.f32 %v7379, %v7499
        %v7501 = vpop.f32.mrf.mxu0
        %v7502 = vadd.f32 %v7379, %v7501
        %7503 = vmatmul.bf16.gmra.mxu0 %v7429
        %v7504 = vpop.f32.mrf.mxu0
        %v7505 = vadd.f32 %v7379, %v7504
        %v7506 = vpop.f32.mrf.mxu0
        %v7507 = vadd.f32 %v7379, %v7506
        %7508 = vmatmul.bf16.gmra.mxu0 %v7431
        %v7509 = vpop.f32.mrf.mxu0
        %v7510 = vadd.f32 %v7379, %v7509
        %v7511 = vpop.f32.mrf.mxu0
        %v7512 = vadd.f32 %v7379, %v7511
        %7513 = vmatmul.bf16.gmra.mxu0 %v7433
        %v7514 = vpop.f32.mrf.mxu0
        %v7515 = vadd.f32 %v7379, %v7514
        %v7516 = vpop.f32.mrf.mxu0
        %v7517 = vadd.f32 %v7379, %v7516
        %7518 = vmatmul.bf16.gmra.mxu0 %v7435
        %v7519 = vpop.f32.mrf.mxu0
        %v7520 = vadd.f32 %v7379, %v7519
        %v7521 = vpop.f32.mrf.mxu0
        %v7522 = vadd.f32 %v7379, %v7521
        %7523 = vmatmul.bf16.gmra.mxu0 %v7437
        %v7524 = vpop.f32.mrf.mxu0
        %v7525 = vadd.f32 %v7379, %v7524
        %v7526 = vpop.f32.mrf.mxu0
        %v7527 = vadd.f32 %v7379, %v7526
        %7528 = vmatmul.bf16.gmra.mxu0 %v7439
        %v7529 = vpop.f32.mrf.mxu0
        %v7530 = vadd.f32 %v7379, %v7529
        %v7531 = vpop.f32.mrf.mxu0
        %v7532 = vadd.f32 %v7379, %v7531
        %7533 = vdwg.mxu0
        %v7566 = vrot.slane %v7455, 2
        %v7567 = vrot.slane %v7455, 4
        %v7568 = vrot.slane %v7455, 6
        %v7569 = vrot.slane %v7457, 2
        %v7570 = vrot.slane %v7457, 4
        %v7571 = vrot.slane %v7457, 6
        %v7572 = vrot.slane %v7460, 2
        %v7573 = vrot.slane %v7460, 4
        %v7574 = vrot.slane %v7460, 6
        %v7575 = vrot.slane %v7462, 2
        %v7576 = vrot.slane %v7462, 4
        %v7577 = vrot.slane %v7462, 6
        %v7578 = vrot.slane %v7465, 2
        %v7579 = vrot.slane %v7465, 4
        %v7580 = vrot.slane %v7465, 6
        %v7581 = vrot.slane %v7467, 2
        %v7582 = vrot.slane %v7467, 4
        %v7583 = vrot.slane %v7467, 6
        %v7584 = vrot.slane %v7470, 2
        %v7585 = vrot.slane %v7470, 4
        %v7586 = vrot.slane %v7470, 6
        %v7587 = vrot.slane %v7472, 2
        %v7588 = vrot.slane %v7472, 4
        %v7589 = vrot.slane %v7472, 6
        %v7590 = vrot.slane %v7475, 2
        %v7591 = vrot.slane %v7475, 4
        %v7592 = vrot.slane %v7475, 6
        %v7593 = vrot.slane %v7477, 2
        %v7594 = vrot.slane %v7477, 4
        %v7595 = vrot.slane %v7477, 6
        %v7596 = vrot.slane %v7480, 2
        %v7597 = vrot.slane %v7480, 4
        %v7598 = vrot.slane %v7480, 6
        %v7599 = vrot.slane %v7482, 2
        %v7600 = vrot.slane %v7482, 4
        %v7601 = vrot.slane %v7482, 6
        %v7602 = vrot.slane %v7485, 2
        %v7603 = vrot.slane %v7485, 4
        %v7604 = vrot.slane %v7485, 6
        %v7605 = vrot.slane %v7487, 2
        %v7606 = vrot.slane %v7487, 4
        %v7607 = vrot.slane %v7487, 6
        %v7608 = vrot.slane %v7490, 2
        %v7609 = vrot.slane %v7490, 4
        %v7610 = vrot.slane %v7490, 6
        %v7611 = vrot.slane %v7492, 2
        %v7612 = vrot.slane %v7492, 4
        %v7613 = vrot.slane %v7492, 6
        %v7614 = vrot.slane %v7495, 2
        %v7615 = vrot.slane %v7495, 4
        %v7616 = vrot.slane %v7495, 6
        %v7617 = vrot.slane %v7497, 2
        %v7618 = vrot.slane %v7497, 4
        %v7619 = vrot.slane %v7497, 6
        %v7620 = vrot.slane %v7500, 2
        %v7621 = vrot.slane %v7500, 4
        %v7622 = vrot.slane %v7500, 6
        %v7623 = vrot.slane %v7502, 2
        %v7624 = vrot.slane %v7502, 4
        %v7625 = vrot.slane %v7502, 6
        %v7626 = vrot.slane %v7505, 2
        %v7627 = vrot.slane %v7505, 4
        %v7628 = vrot.slane %v7505, 6
        %v7629 = vrot.slane %v7507, 2
        %v7630 = vrot.slane %v7507, 4
        %v7631 = vrot.slane %v7507, 6
        %v7632 = vrot.slane %v7510, 2
        %v7633 = vrot.slane %v7510, 4
        %v7634 = vrot.slane %v7510, 6
        %v7635 = vrot.slane %v7512, 2
        %v7636 = vrot.slane %v7512, 4
        %v7637 = vrot.slane %v7512, 6
        %v7638 = vrot.slane %v7515, 2
        %v7639 = vrot.slane %v7515, 4
        %v7640 = vrot.slane %v7515, 6
        %v7641 = vrot.slane %v7517, 2
        %v7642 = vrot.slane %v7517, 4
        %v7643 = vrot.slane %v7517, 6
        %v7644 = vrot.slane %v7520, 2
        %v7645 = vrot.slane %v7520, 4
        %v7646 = vrot.slane %v7520, 6
        %v7647 = vrot.slane %v7522, 2
        %v7648 = vrot.slane %v7522, 4
        %v7649 = vrot.slane %v7522, 6
        %v7650 = vrot.slane %v7525, 2
        %v7651 = vrot.slane %v7525, 4
        %v7652 = vrot.slane %v7525, 6
        %v7653 = vrot.slane %v7527, 2
        %v7654 = vrot.slane %v7527, 4
        %v7655 = vrot.slane %v7527, 6
        %v7656 = vrot.slane %v7530, 2
        %v7657 = vrot.slane %v7530, 4
        %v7658 = vrot.slane %v7530, 6
        %v7659 = vrot.slane %v7532, 2
        %v7660 = vrot.slane %v7532, 4
        %v7661 = vrot.slane %v7532, 6
        %v7758 = vrot.slane %v7455, 7
        %v7759 = vrot.slane %v7758, 2
        %v7760 = vrot.slane %v7566, 7
        %v7761 = vrot.slane %v7760, 2
        %v7762 = vrot.slane %v7567, 7
        %v7763 = vrot.slane %v7762, 2
        %v7764 = vrot.slane %v7568, 7
        %v7765 = vrot.slane %v7764, 2
        %v7766 = vrot.slane %v7457, 7
        %v7767 = vrot.slane %v7766, 2
        %v7768 = vrot.slane %v7569, 7
        %v7769 = vrot.slane %v7768, 2
        %v7770 = vrot.slane %v7570, 7
        %v7771 = vrot.slane %v7770, 2
        %v7772 = vrot.slane %v7571, 7
        %v7773 = vrot.slane %v7772, 2
        %v7774 = vrot.slane %v7460, 7
        %v7775 = vrot.slane %v7774, 2
        %v7776 = vrot.slane %v7572, 7
        %v7777 = vrot.slane %v7776, 2
        %v7778 = vrot.slane %v7573, 7
        %v7779 = vrot.slane %v7778, 2
        %v7780 = vrot.slane %v7574, 7
        %v7781 = vrot.slane %v7780, 2
        %v7782 = vrot.slane %v7462, 7
        %v7783 = vrot.slane %v7782, 2
        %v7784 = vrot.slane %v7575, 7
        %v7785 = vrot.slane %v7784, 2
        %v7786 = vrot.slane %v7576, 7
        %v7787 = vrot.slane %v7786, 2
        %v7788 = vrot.slane %v7577, 7
        %v7789 = vrot.slane %v7788, 2
        %v7790 = vrot.slane %v7465, 7
        %v7791 = vrot.slane %v7790, 2
        %v7792 = vrot.slane %v7578, 7
        %v7793 = vrot.slane %v7792, 2
        %v7794 = vrot.slane %v7579, 7
        %v7795 = vrot.slane %v7794, 2
        %v7796 = vrot.slane %v7580, 7
        %v7797 = vrot.slane %v7796, 2
        %v7798 = vrot.slane %v7467, 7
        %v7799 = vrot.slane %v7798, 2
        %v7800 = vrot.slane %v7581, 7
        %v7801 = vrot.slane %v7800, 2
        %v7802 = vrot.slane %v7582, 7
        %v7803 = vrot.slane %v7802, 2
        %v7804 = vrot.slane %v7583, 7
        %v7805 = vrot.slane %v7804, 2
        %v7806 = vrot.slane %v7470, 7
        %v7807 = vrot.slane %v7806, 2
        %v7808 = vrot.slane %v7584, 7
        %v7809 = vrot.slane %v7808, 2
        %v7810 = vrot.slane %v7585, 7
        %v7811 = vrot.slane %v7810, 2
        %v7812 = vrot.slane %v7586, 7
        %v7813 = vrot.slane %v7812, 2
        %v7814 = vrot.slane %v7472, 7
        %v7815 = vrot.slane %v7814, 2
        %v7816 = vrot.slane %v7587, 7
        %v7817 = vrot.slane %v7816, 2
        %v7818 = vrot.slane %v7588, 7
        %v7819 = vrot.slane %v7818, 2
        %v7820 = vrot.slane %v7589, 7
        %v7821 = vrot.slane %v7820, 2
        %v7822 = vrot.slane %v7475, 7
        %v7823 = vrot.slane %v7822, 2
        %v7824 = vrot.slane %v7590, 7
        %v7825 = vrot.slane %v7824, 2
        %v7826 = vrot.slane %v7591, 7
        %v7827 = vrot.slane %v7826, 2
        %v7828 = vrot.slane %v7592, 7
        %v7829 = vrot.slane %v7828, 2
        %v7830 = vrot.slane %v7477, 7
        %v7831 = vrot.slane %v7830, 2
        %v7832 = vrot.slane %v7593, 7
        %v7833 = vrot.slane %v7832, 2
        %v7834 = vrot.slane %v7594, 7
        %v7835 = vrot.slane %v7834, 2
        %v7836 = vrot.slane %v7595, 7
        %v7837 = vrot.slane %v7836, 2
        %v7838 = vrot.slane %v7480, 7
        %v7839 = vrot.slane %v7838, 2
        %v7840 = vrot.slane %v7596, 7
        %v7841 = vrot.slane %v7840, 2
        %v7842 = vrot.slane %v7597, 7
        %v7843 = vrot.slane %v7842, 2
        %v7844 = vrot.slane %v7598, 7
        %v7845 = vrot.slane %v7844, 2
        %v7846 = vrot.slane %v7482, 7
        %v7847 = vrot.slane %v7846, 2
        %v7848 = vrot.slane %v7599, 7
        %v7849 = vrot.slane %v7848, 2
        %v7850 = vrot.slane %v7600, 7
        %v7851 = vrot.slane %v7850, 2
        %v7852 = vrot.slane %v7601, 7
        %v7853 = vrot.slane %v7852, 2
        %v7854 = vrot.slane %v7485, 7
        %v7855 = vrot.slane %v7854, 2
        %v7856 = vrot.slane %v7602, 7
        %v7857 = vrot.slane %v7856, 2
        %v7858 = vrot.slane %v7603, 7
        %v7859 = vrot.slane %v7858, 2
        %v7860 = vrot.slane %v7604, 7
        %v7861 = vrot.slane %v7860, 2
        %v7862 = vrot.slane %v7487, 7
        %v7863 = vrot.slane %v7862, 2
        %v7864 = vrot.slane %v7605, 7
        %v7865 = vrot.slane %v7864, 2
        %v7866 = vrot.slane %v7606, 7
        %v7867 = vrot.slane %v7866, 2
        %v7868 = vrot.slane %v7607, 7
        %v7869 = vrot.slane %v7868, 2
        %v7870 = vrot.slane %v7490, 7
        %v7871 = vrot.slane %v7870, 2
        %v7872 = vrot.slane %v7608, 7
        %v7873 = vrot.slane %v7872, 2
        %v7874 = vrot.slane %v7609, 7
        %v7875 = vrot.slane %v7874, 2
        %v7876 = vrot.slane %v7610, 7
        %v7877 = vrot.slane %v7876, 2
        %v7878 = vrot.slane %v7492, 7
        %v7879 = vrot.slane %v7878, 2
        %v7880 = vrot.slane %v7611, 7
        %v7881 = vrot.slane %v7880, 2
        %v7882 = vrot.slane %v7612, 7
        %v7883 = vrot.slane %v7882, 2
        %v7884 = vrot.slane %v7613, 7
        %v7885 = vrot.slane %v7884, 2
        %v7886 = vrot.slane %v7495, 7
        %v7887 = vrot.slane %v7886, 2
        %v7888 = vrot.slane %v7614, 7
        %v7889 = vrot.slane %v7888, 2
        %v7890 = vrot.slane %v7615, 7
        %v7891 = vrot.slane %v7890, 2
        %v7892 = vrot.slane %v7616, 7
        %v7893 = vrot.slane %v7892, 2
        %v7894 = vrot.slane %v7497, 7
        %v7895 = vrot.slane %v7894, 2
        %v7896 = vrot.slane %v7617, 7
        %v7897 = vrot.slane %v7896, 2
        %v7898 = vrot.slane %v7618, 7
        %v7899 = vrot.slane %v7898, 2
        %v7900 = vrot.slane %v7619, 7
        %v7901 = vrot.slane %v7900, 2
        %v7902 = vrot.slane %v7500, 7
        %v7903 = vrot.slane %v7902, 2
        %v7904 = vrot.slane %v7620, 7
        %v7905 = vrot.slane %v7904, 2
        %v7906 = vrot.slane %v7621, 7
        %v7907 = vrot.slane %v7906, 2
        %v7908 = vrot.slane %v7622, 7
        %v7909 = vrot.slane %v7908, 2
        %v7910 = vrot.slane %v7502, 7
        %v7911 = vrot.slane %v7910, 2
        %v7912 = vrot.slane %v7623, 7
        %v7913 = vrot.slane %v7912, 2
        %v7914 = vrot.slane %v7624, 7
        %v7915 = vrot.slane %v7914, 2
        %v7916 = vrot.slane %v7625, 7
        %v7917 = vrot.slane %v7916, 2
        %v7918 = vrot.slane %v7505, 7
        %v7919 = vrot.slane %v7918, 2
        %v7920 = vrot.slane %v7626, 7
        %v7921 = vrot.slane %v7920, 2
        %v7922 = vrot.slane %v7627, 7
        %v7923 = vrot.slane %v7922, 2
        %v7924 = vrot.slane %v7628, 7
        %v7925 = vrot.slane %v7924, 2
        %v7926 = vrot.slane %v7507, 7
        %v7927 = vrot.slane %v7926, 2
        %v7928 = vrot.slane %v7629, 7
        %v7929 = vrot.slane %v7928, 2
        %v7930 = vrot.slane %v7630, 7
        %v7931 = vrot.slane %v7930, 2
        %v7932 = vrot.slane %v7631, 7
        %v7933 = vrot.slane %v7932, 2
        %v7934 = vrot.slane %v7510, 7
        %v7935 = vrot.slane %v7934, 2
        %v7936 = vrot.slane %v7632, 7
        %v7937 = vrot.slane %v7936, 2
        %v7938 = vrot.slane %v7633, 7
        %v7939 = vrot.slane %v7938, 2
        %v7940 = vrot.slane %v7634, 7
        %v7941 = vrot.slane %v7940, 2
        %v7942 = vrot.slane %v7512, 7
        %v7943 = vrot.slane %v7942, 2
        %v7944 = vrot.slane %v7635, 7
        %v7945 = vrot.slane %v7944, 2
        %v7946 = vrot.slane %v7636, 7
        %v7947 = vrot.slane %v7946, 2
        %v7948 = vrot.slane %v7637, 7
        %v7949 = vrot.slane %v7948, 2
        %v7950 = vrot.slane %v7515, 7
        %v7951 = vrot.slane %v7950, 2
        %v7952 = vrot.slane %v7638, 7
        %v7953 = vrot.slane %v7952, 2
        %v7954 = vrot.slane %v7639, 7
        %v7955 = vrot.slane %v7954, 2
        %v7956 = vrot.slane %v7640, 7
        %v7957 = vrot.slane %v7956, 2
        %v7958 = vrot.slane %v7517, 7
        %v7959 = vrot.slane %v7958, 2
        %v7960 = vrot.slane %v7641, 7
        %v7961 = vrot.slane %v7960, 2
        %v7962 = vrot.slane %v7642, 7
        %v7963 = vrot.slane %v7962, 2
        %v7964 = vrot.slane %v7643, 7
        %v7965 = vrot.slane %v7964, 2
        %v7966 = vrot.slane %v7520, 7
        %v7967 = vrot.slane %v7966, 2
        %v7968 = vrot.slane %v7644, 7
        %v7969 = vrot.slane %v7968, 2
        %v7970 = vrot.slane %v7645, 7
        %v7971 = vrot.slane %v7970, 2
        %v7972 = vrot.slane %v7646, 7
        %v7973 = vrot.slane %v7972, 2
        %v7974 = vrot.slane %v7522, 7
        %v7975 = vrot.slane %v7974, 2
        %v7976 = vrot.slane %v7647, 7
        %v7977 = vrot.slane %v7976, 2
        %v7978 = vrot.slane %v7648, 7
        %v7979 = vrot.slane %v7978, 2
        %v7980 = vrot.slane %v7649, 7
        %v7981 = vrot.slane %v7980, 2
        %v7982 = vrot.slane %v7525, 7
        %v7983 = vrot.slane %v7982, 2
        %v7984 = vrot.slane %v7650, 7
        %v7985 = vrot.slane %v7984, 2
        %v7986 = vrot.slane %v7651, 7
        %v7987 = vrot.slane %v7986, 2
        %v7988 = vrot.slane %v7652, 7
        %v7989 = vrot.slane %v7988, 2
        %v7990 = vrot.slane %v7527, 7
        %v7991 = vrot.slane %v7990, 2
        %v7992 = vrot.slane %v7653, 7
        %v7993 = vrot.slane %v7992, 2
        %v7994 = vrot.slane %v7654, 7
        %v7995 = vrot.slane %v7994, 2
        %v7996 = vrot.slane %v7655, 7
        %v7997 = vrot.slane %v7996, 2
        %v7998 = vrot.slane %v7530, 7
        %v7999 = vrot.slane %v7998, 2
        %v8000 = vrot.slane %v7656, 7
        %v8001 = vrot.slane %v8000, 2
        %v8002 = vrot.slane %v7657, 7
        %v8003 = vrot.slane %v8002, 2
        %v8004 = vrot.slane %v7658, 7
        %v8005 = vrot.slane %v8004, 2
        %v8006 = vrot.slane %v7532, 7
        %v8007 = vrot.slane %v8006, 2
        %v8008 = vrot.slane %v7659, 7
        %v8009 = vrot.slane %v8008, 2
        %v8010 = vrot.slane %v7660, 7
        %v8011 = vrot.slane %v8010, 2
        %v8012 = vrot.slane %v7661, 7
        %v8013 = vrot.slane %v8012, 2
        %v8142 = vadd.f32 %v7455, %v7759
        %v8143 = vadd.f32 %v7566, %v7761
        %v8144 = vadd.f32 %v7567, %v7763
        %v8145 = vadd.f32 %v7568, %v7765
        %v8146 = vadd.f32 %v7457, %v7767
        %v8147 = vadd.f32 %v7569, %v7769
        %v8148 = vadd.f32 %v7570, %v7771
        %v8149 = vadd.f32 %v7571, %v7773
        %v8150 = vadd.f32 %v7460, %v7775
        %v8151 = vadd.f32 %v7572, %v7777
        %v8152 = vadd.f32 %v7573, %v7779
        %v8153 = vadd.f32 %v7574, %v7781
        %v8154 = vadd.f32 %v7462, %v7783
        %v8155 = vadd.f32 %v7575, %v7785
        %v8156 = vadd.f32 %v7576, %v7787
        %v8157 = vadd.f32 %v7577, %v7789
        %v8158 = vadd.f32 %v7465, %v7791
        %v8159 = vadd.f32 %v7578, %v7793
        %v8160 = vadd.f32 %v7579, %v7795
        %v8161 = vadd.f32 %v7580, %v7797
        %v8162 = vadd.f32 %v7467, %v7799
        %v8163 = vadd.f32 %v7581, %v7801
        %v8164 = vadd.f32 %v7582, %v7803
        %v8165 = vadd.f32 %v7583, %v7805
        %v8166 = vadd.f32 %v7470, %v7807
        %v8167 = vadd.f32 %v7584, %v7809
        %v8168 = vadd.f32 %v7585, %v7811
        %v8169 = vadd.f32 %v7586, %v7813
        %v8170 = vadd.f32 %v7472, %v7815
        %v8171 = vadd.f32 %v7587, %v7817
        %v8172 = vadd.f32 %v7588, %v7819
        %v8173 = vadd.f32 %v7589, %v7821
        %v8174 = vadd.f32 %v7475, %v7823
        %v8175 = vadd.f32 %v7590, %v7825
        %v8176 = vadd.f32 %v7591, %v7827
        %v8177 = vadd.f32 %v7592, %v7829
        %v8178 = vadd.f32 %v7477, %v7831
        %v8179 = vadd.f32 %v7593, %v7833
        %v8180 = vadd.f32 %v7594, %v7835
        %v8181 = vadd.f32 %v7595, %v7837
        %v8182 = vadd.f32 %v7480, %v7839
        %v8183 = vadd.f32 %v7596, %v7841
        %v8184 = vadd.f32 %v7597, %v7843
        %v8185 = vadd.f32 %v7598, %v7845
        %v8186 = vadd.f32 %v7482, %v7847
        %v8187 = vadd.f32 %v7599, %v7849
        %v8188 = vadd.f32 %v7600, %v7851
        %v8189 = vadd.f32 %v7601, %v7853
        %v8190 = vadd.f32 %v7485, %v7855
        %v8191 = vadd.f32 %v7602, %v7857
        %v8192 = vadd.f32 %v7603, %v7859
        %v8193 = vadd.f32 %v7604, %v7861
        %v8194 = vadd.f32 %v7487, %v7863
        %v8195 = vadd.f32 %v7605, %v7865
        %v8196 = vadd.f32 %v7606, %v7867
        %v8197 = vadd.f32 %v7607, %v7869
        %v8198 = vadd.f32 %v7490, %v7871
        %v8199 = vadd.f32 %v7608, %v7873
        %v8200 = vadd.f32 %v7609, %v7875
        %v8201 = vadd.f32 %v7610, %v7877
        %v8202 = vadd.f32 %v7492, %v7879
        %v8203 = vadd.f32 %v7611, %v7881
        %v8204 = vadd.f32 %v7612, %v7883
        %v8205 = vadd.f32 %v7613, %v7885
        %v8206 = vadd.f32 %v7495, %v7887
        %v8207 = vadd.f32 %v7614, %v7889
        %v8208 = vadd.f32 %v7615, %v7891
        %v8209 = vadd.f32 %v7616, %v7893
        %v8210 = vadd.f32 %v7497, %v7895
        %v8211 = vadd.f32 %v7617, %v7897
        %v8212 = vadd.f32 %v7618, %v7899
        %v8213 = vadd.f32 %v7619, %v7901
        %v8214 = vadd.f32 %v7500, %v7903
        %v8215 = vadd.f32 %v7620, %v7905
        %v8216 = vadd.f32 %v7621, %v7907
        %v8217 = vadd.f32 %v7622, %v7909
        %v8218 = vadd.f32 %v7502, %v7911
        %v8219 = vadd.f32 %v7623, %v7913
        %v8220 = vadd.f32 %v7624, %v7915
        %v8221 = vadd.f32 %v7625, %v7917
        %v8222 = vadd.f32 %v7505, %v7919
        %v8223 = vadd.f32 %v7626, %v7921
        %v8224 = vadd.f32 %v7627, %v7923
        %v8225 = vadd.f32 %v7628, %v7925
        %v8226 = vadd.f32 %v7507, %v7927
        %v8227 = vadd.f32 %v7629, %v7929
        %v8228 = vadd.f32 %v7630, %v7931
        %v8229 = vadd.f32 %v7631, %v7933
        %v8230 = vadd.f32 %v7510, %v7935
        %v8231 = vadd.f32 %v7632, %v7937
        %v8232 = vadd.f32 %v7633, %v7939
        %v8233 = vadd.f32 %v7634, %v7941
        %v8234 = vadd.f32 %v7512, %v7943
        %v8235 = vadd.f32 %v7635, %v7945
        %v8236 = vadd.f32 %v7636, %v7947
        %v8237 = vadd.f32 %v7637, %v7949
        %v8238 = vadd.f32 %v7515, %v7951
        %v8239 = vadd.f32 %v7638, %v7953
        %v8240 = vadd.f32 %v7639, %v7955
        %v8241 = vadd.f32 %v7640, %v7957
        %v8242 = vadd.f32 %v7517, %v7959
        %v8243 = vadd.f32 %v7641, %v7961
        %v8244 = vadd.f32 %v7642, %v7963
        %v8245 = vadd.f32 %v7643, %v7965
        %v8246 = vadd.f32 %v7520, %v7967
        %v8247 = vadd.f32 %v7644, %v7969
        %v8248 = vadd.f32 %v7645, %v7971
        %v8249 = vadd.f32 %v7646, %v7973
        %v8250 = vadd.f32 %v7522, %v7975
        %v8251 = vadd.f32 %v7647, %v7977
        %v8252 = vadd.f32 %v7648, %v7979
        %v8253 = vadd.f32 %v7649, %v7981
        %v8254 = vadd.f32 %v7525, %v7983
        %v8255 = vadd.f32 %v7650, %v7985
        %v8256 = vadd.f32 %v7651, %v7987
        %v8257 = vadd.f32 %v7652, %v7989
        %v8258 = vadd.f32 %v7527, %v7991
        %v8259 = vadd.f32 %v7653, %v7993
        %v8260 = vadd.f32 %v7654, %v7995
        %v8261 = vadd.f32 %v7655, %v7997
        %v8262 = vadd.f32 %v7530, %v7999
        %v8263 = vadd.f32 %v7656, %v8001
        %v8264 = vadd.f32 %v7657, %v8003
        %v8265 = vadd.f32 %v7658, %v8005
        %v8266 = vadd.f32 %v7532, %v8007
        %v8267 = vadd.f32 %v7659, %v8009
        %v8268 = vadd.f32 %v7660, %v8011
        %v8269 = vadd.f32 %v7661, %v8013
        %v8270 = vadd.f32 %v8142, %v8150
        %v8271 = vadd.f32 %v8143, %v8151
        %v8272 = vadd.f32 %v8144, %v8152
        %v8273 = vadd.f32 %v8145, %v8153
        %v8274 = vadd.f32 %v8146, %v8154
        %v8275 = vadd.f32 %v8147, %v8155
        %v8276 = vadd.f32 %v8148, %v8156
        %v8277 = vadd.f32 %v8149, %v8157
        %v8278 = vadd.f32 %v8158, %v8166
        %v8279 = vadd.f32 %v8159, %v8167
        %v8280 = vadd.f32 %v8160, %v8168
        %v8281 = vadd.f32 %v8161, %v8169
        %v8282 = vadd.f32 %v8162, %v8170
        %v8283 = vadd.f32 %v8163, %v8171
        %v8284 = vadd.f32 %v8164, %v8172
        %v8285 = vadd.f32 %v8165, %v8173
        %v8286 = vadd.f32 %v8174, %v8182
        %v8287 = vadd.f32 %v8175, %v8183
        %v8288 = vadd.f32 %v8176, %v8184
        %v8289 = vadd.f32 %v8177, %v8185
        %v8290 = vadd.f32 %v8178, %v8186
        %v8291 = vadd.f32 %v8179, %v8187
        %v8292 = vadd.f32 %v8180, %v8188
        %v8293 = vadd.f32 %v8181, %v8189
        %v8294 = vadd.f32 %v8190, %v8198
        %v8295 = vadd.f32 %v8191, %v8199
        %v8296 = vadd.f32 %v8192, %v8200
        %v8297 = vadd.f32 %v8193, %v8201
        %v8298 = vadd.f32 %v8194, %v8202
        %v8299 = vadd.f32 %v8195, %v8203
        %v8300 = vadd.f32 %v8196, %v8204
        %v8301 = vadd.f32 %v8197, %v8205
        %v8302 = vadd.f32 %v8206, %v8214
        %v8303 = vadd.f32 %v8207, %v8215
        %v8304 = vadd.f32 %v8208, %v8216
        %v8305 = vadd.f32 %v8209, %v8217
        %v8306 = vadd.f32 %v8210, %v8218
        %v8307 = vadd.f32 %v8211, %v8219
        %v8308 = vadd.f32 %v8212, %v8220
        %v8309 = vadd.f32 %v8213, %v8221
        %v8310 = vadd.f32 %v8222, %v8230
        %v8311 = vadd.f32 %v8223, %v8231
        %v8312 = vadd.f32 %v8224, %v8232
        %v8313 = vadd.f32 %v8225, %v8233
        %v8314 = vadd.f32 %v8226, %v8234
        %v8315 = vadd.f32 %v8227, %v8235
        %v8316 = vadd.f32 %v8228, %v8236
        %v8317 = vadd.f32 %v8229, %v8237
        %v8318 = vadd.f32 %v8238, %v8246
        %v8319 = vadd.f32 %v8239, %v8247
        %v8320 = vadd.f32 %v8240, %v8248
        %v8321 = vadd.f32 %v8241, %v8249
        %v8322 = vadd.f32 %v8242, %v8250
        %v8323 = vadd.f32 %v8243, %v8251
        %v8324 = vadd.f32 %v8244, %v8252
        %v8325 = vadd.f32 %v8245, %v8253
        %v8326 = vadd.f32 %v8254, %v8262
        %v8327 = vadd.f32 %v8255, %v8263
        %v8328 = vadd.f32 %v8256, %v8264
        %v8329 = vadd.f32 %v8257, %v8265
        %v8330 = vadd.f32 %v8258, %v8266
        %v8331 = vadd.f32 %v8259, %v8267
        %v8332 = vadd.f32 %v8260, %v8268
        %v8333 = vadd.f32 %v8261, %v8269
        %v8334 = vmul.f32 %v8270, 0.25
        %v8335 = vmul.f32 %v8271, 0.25
        %v8336 = vmul.f32 %v8272, 0.25
        %v8337 = vmul.f32 %v8273, 0.25
        %v8338 = vmul.f32 %v8274, 0.25
        %v8339 = vmul.f32 %v8275, 0.25
        %v8340 = vmul.f32 %v8276, 0.25
        %v8341 = vmul.f32 %v8277, 0.25
        %v8342 = vmul.f32 %v8278, 0.25
        %v8343 = vmul.f32 %v8279, 0.25
        %v8344 = vmul.f32 %v8280, 0.25
        %v8345 = vmul.f32 %v8281, 0.25
        %v8346 = vmul.f32 %v8282, 0.25
        %v8347 = vmul.f32 %v8283, 0.25
        %v8348 = vmul.f32 %v8284, 0.25
        %v8349 = vmul.f32 %v8285, 0.25
        %v8350 = vmul.f32 %v8286, 0.25
        %v8351 = vmul.f32 %v8287, 0.25
        %v8352 = vmul.f32 %v8288, 0.25
        %v8353 = vmul.f32 %v8289, 0.25
        %v8354 = vmul.f32 %v8290, 0.25
        %v8355 = vmul.f32 %v8291, 0.25
        %v8356 = vmul.f32 %v8292, 0.25
        %v8357 = vmul.f32 %v8293, 0.25
        %v8358 = vmul.f32 %v8294, 0.25
        %v8359 = vmul.f32 %v8295, 0.25
        %v8360 = vmul.f32 %v8296, 0.25
        %v8361 = vmul.f32 %v8297, 0.25
        %v8362 = vmul.f32 %v8298, 0.25
        %v8363 = vmul.f32 %v8299, 0.25
        %v8364 = vmul.f32 %v8300, 0.25
        %v8365 = vmul.f32 %v8301, 0.25
        %v8366 = vmul.f32 %v8302, 0.25
        %v8367 = vmul.f32 %v8303, 0.25
        %v8368 = vmul.f32 %v8304, 0.25
        %v8369 = vmul.f32 %v8305, 0.25
        %v8370 = vmul.f32 %v8306, 0.25
        %v8371 = vmul.f32 %v8307, 0.25
        %v8372 = vmul.f32 %v8308, 0.25
        %v8373 = vmul.f32 %v8309, 0.25
        %v8374 = vmul.f32 %v8310, 0.25
        %v8375 = vmul.f32 %v8311, 0.25
        %v8376 = vmul.f32 %v8312, 0.25
        %v8377 = vmul.f32 %v8313, 0.25
        %v8378 = vmul.f32 %v8314, 0.25
        %v8379 = vmul.f32 %v8315, 0.25
        %v8380 = vmul.f32 %v8316, 0.25
        %v8381 = vmul.f32 %v8317, 0.25
        %v8382 = vmul.f32 %v8318, 0.25
        %v8383 = vmul.f32 %v8319, 0.25
        %v8384 = vmul.f32 %v8320, 0.25
        %v8385 = vmul.f32 %v8321, 0.25
        %v8386 = vmul.f32 %v8322, 0.25
        %v8387 = vmul.f32 %v8323, 0.25
        %v8388 = vmul.f32 %v8324, 0.25
        %v8389 = vmul.f32 %v8325, 0.25
        %v8390 = vmul.f32 %v8326, 0.25
        %v8391 = vmul.f32 %v8327, 0.25
        %v8392 = vmul.f32 %v8328, 0.25
        %v8393 = vmul.f32 %v8329, 0.25
        %v8394 = vmul.f32 %v8330, 0.25
        %v8395 = vmul.f32 %v8331, 0.25
        %v8396 = vmul.f32 %v8332, 0.25
        %v8397 = vmul.f32 %v8333, 0.25
        %v8398 = vld [vmem:[%s271] sm:$0xff]
        %v8399 = vld [vmem:[%s271 + $0x8] sm:$0xff]
        %v8400 = vld [vmem:[%s271 + $0x10] sm:$0xff]
        %v8401 = vld [vmem:[%s271 + $0x18] sm:$0xff]
        %v8402 = vld [vmem:[%s271 + $0x20] sm:$0xff]
        %v8403 = vld [vmem:[%s271 + $0x28] sm:$0xff]
        %v8404 = vld [vmem:[%s271 + $0x30] sm:$0xff]
        %v8405 = vld [vmem:[%s271 + $0x38] sm:$0xff]
        %v8470 = vperm.slane %v8334, 0
        %v8471 = vperm.slane %v8335, 0
        %v8472 = vperm.slane %v8336, 0
        %v8473 = vperm.slane %v8337, 0
        %v8474 = vperm.slane %v8338, 0
        %v8475 = vperm.slane %v8339, 0
        %v8476 = vperm.slane %v8340, 0
        %v8477 = vperm.slane %v8341, 0
        %v8478 = vperm.slane %v8342, 0
        %v8479 = vperm.slane %v8343, 0
        %v8480 = vperm.slane %v8344, 0
        %v8481 = vperm.slane %v8345, 0
        %v8482 = vperm.slane %v8346, 0
        %v8483 = vperm.slane %v8347, 0
        %v8484 = vperm.slane %v8348, 0
        %v8485 = vperm.slane %v8349, 0
        %v8486 = vperm.slane %v8350, 0
        %v8487 = vperm.slane %v8351, 0
        %v8488 = vperm.slane %v8352, 0
        %v8489 = vperm.slane %v8353, 0
        %v8490 = vperm.slane %v8354, 0
        %v8491 = vperm.slane %v8355, 0
        %v8492 = vperm.slane %v8356, 0
        %v8493 = vperm.slane %v8357, 0
        %v8494 = vperm.slane %v8358, 0
        %v8495 = vperm.slane %v8359, 0
        %v8496 = vperm.slane %v8360, 0
        %v8497 = vperm.slane %v8361, 0
        %v8498 = vperm.slane %v8362, 0
        %v8499 = vperm.slane %v8363, 0
        %v8500 = vperm.slane %v8364, 0
        %v8501 = vperm.slane %v8365, 0
        %v8502 = vperm.slane %v8366, 0
        %v8503 = vperm.slane %v8367, 0
        %v8504 = vperm.slane %v8368, 0
        %v8505 = vperm.slane %v8369, 0
        %v8506 = vperm.slane %v8370, 0
        %v8507 = vperm.slane %v8371, 0
        %v8508 = vperm.slane %v8372, 0
        %v8509 = vperm.slane %v8373, 0
        %v8510 = vperm.slane %v8374, 0
        %v8511 = vperm.slane %v8375, 0
        %v8512 = vperm.slane %v8376, 0
        %v8513 = vperm.slane %v8377, 0
        %v8514 = vperm.slane %v8378, 0
        %v8515 = vperm.slane %v8379, 0
        %v8516 = vperm.slane %v8380, 0
        %v8517 = vperm.slane %v8381, 0
        %v8518 = vperm.slane %v8382, 0
        %v8519 = vperm.slane %v8383, 0
        %v8520 = vperm.slane %v8384, 0
        %v8521 = vperm.slane %v8385, 0
        %v8522 = vperm.slane %v8386, 0
        %v8523 = vperm.slane %v8387, 0
        %v8524 = vperm.slane %v8388, 0
        %v8525 = vperm.slane %v8389, 0
        %v8526 = vperm.slane %v8390, 0
        %v8527 = vperm.slane %v8391, 0
        %v8528 = vperm.slane %v8392, 0
        %v8529 = vperm.slane %v8393, 0
        %v8530 = vperm.slane %v8394, 0
        %v8531 = vperm.slane %v8395, 0
        %v8532 = vperm.slane %v8396, 0
        %v8533 = vperm.slane %v8397, 0
        %v8534 = vsel %vm378, %v8471, %v8470
        %v8535 = vsel %vm382, %v8472, %v8534
        %v8536 = vsel %vm386, %v8473, %v8535
        %v8537 = vsel %vm1990, %v8474, %v8536
        %v8538 = vsel %vm1993, %v8475, %v8537
        %v8539 = vsel %vm1996, %v8476, %v8538
        %v8540 = vsel %vm1999, %v8477, %v8539
        %v8541 = vsel %vm378, %v8479, %v8478
        %v8542 = vsel %vm382, %v8480, %v8541
        %v8543 = vsel %vm386, %v8481, %v8542
        %v8544 = vsel %vm1990, %v8482, %v8543
        %v8545 = vsel %vm1993, %v8483, %v8544
        %v8546 = vsel %vm1996, %v8484, %v8545
        %v8547 = vsel %vm1999, %v8485, %v8546
        %v8548 = vsel %vm378, %v8487, %v8486
        %v8549 = vsel %vm382, %v8488, %v8548
        %v8550 = vsel %vm386, %v8489, %v8549
        %v8551 = vsel %vm1990, %v8490, %v8550
        %v8552 = vsel %vm1993, %v8491, %v8551
        %v8553 = vsel %vm1996, %v8492, %v8552
        %v8554 = vsel %vm1999, %v8493, %v8553
        %v8555 = vsel %vm378, %v8495, %v8494
        %v8556 = vsel %vm382, %v8496, %v8555
        %v8557 = vsel %vm386, %v8497, %v8556
        %v8558 = vsel %vm1990, %v8498, %v8557
        %v8559 = vsel %vm1993, %v8499, %v8558
        %v8560 = vsel %vm1996, %v8500, %v8559
        %v8561 = vsel %vm1999, %v8501, %v8560
        %v8562 = vsel %vm378, %v8503, %v8502
        %v8563 = vsel %vm382, %v8504, %v8562
        %v8564 = vsel %vm386, %v8505, %v8563
        %v8565 = vsel %vm1990, %v8506, %v8564
        %v8566 = vsel %vm1993, %v8507, %v8565
        %v8567 = vsel %vm1996, %v8508, %v8566
        %v8568 = vsel %vm1999, %v8509, %v8567
        %v8569 = vsel %vm378, %v8511, %v8510
        %v8570 = vsel %vm382, %v8512, %v8569
        %v8571 = vsel %vm386, %v8513, %v8570
        %v8572 = vsel %vm1990, %v8514, %v8571
        %v8573 = vsel %vm1993, %v8515, %v8572
        %v8574 = vsel %vm1996, %v8516, %v8573
        %v8575 = vsel %vm1999, %v8517, %v8574
        %v8576 = vsel %vm378, %v8519, %v8518
        %v8577 = vsel %vm382, %v8520, %v8576
        %v8578 = vsel %vm386, %v8521, %v8577
        %v8579 = vsel %vm1990, %v8522, %v8578
        %v8580 = vsel %vm1993, %v8523, %v8579
        %v8581 = vsel %vm1996, %v8524, %v8580
        %v8582 = vsel %vm1999, %v8525, %v8581
        %v8583 = vsel %vm378, %v8527, %v8526
        %v8584 = vsel %vm382, %v8528, %v8583
        %v8585 = vsel %vm386, %v8529, %v8584
        %v8586 = vsel %vm1990, %v8530, %v8585
        %v8587 = vsel %vm1993, %v8531, %v8586
        %v8588 = vsel %vm1996, %v8532, %v8587
        %v8589 = vsel %vm1999, %v8533, %v8588
        %v8598 = vadd.f32 %v8398, %v8540
        %v8599 = vadd.f32 %v8399, %v8547
        %v8600 = vadd.f32 %v8400, %v8554
        %v8601 = vadd.f32 %v8401, %v8561
        %v8602 = vadd.f32 %v8402, %v8568
        %v8603 = vadd.f32 %v8403, %v8575
        %v8604 = vadd.f32 %v8404, %v8582
        %v8605 = vadd.f32 %v8405, %v8589
        %8606 = vst.msk [vmem:[%s271] sm:$0xff] %vm2149, %v8598
        %8607 = vst.msk [vmem:[%s271 + $0x8] sm:$0xff] %vm2149, %v8599
        %8608 = vst.msk [vmem:[%s271 + $0x10] sm:$0xff] %vm2149, %v8600
        %8609 = vst.msk [vmem:[%s271 + $0x18] sm:$0xff] %vm2149, %v8601
        %8610 = vst.msk [vmem:[%s271 + $0x20] sm:$0xff] %vm2149, %v8602
        %8611 = vst.msk [vmem:[%s271 + $0x28] sm:$0xff] %vm2149, %v8603
        %8612 = vst.msk [vmem:[%s271 + $0x30] sm:$0xff] %vm2149, %v8604
        %8613 = vst.msk [vmem:[%s271 + $0x38] sm:$0xff] %vm2149, %v8605
        %s8614 = sand.u32 %s181, 1
        %s8615 = scalar_lea.sflag [#allocation5], %s8614
        %s8616 = sand.u32 %s181, 1
        %s8617 = smul.addr %s8616, 64
        %s8618 = scalar_lea.vmem [#allocation4], %s8617
        // Predicated region
        $region49: #{tpu_custom_call.1} parent=47 // pred_check
          %p8619 = pneg %p191
        $region50: #{tpu_custom_call.1} parent=47 // pred_check_branch
          %8621 = sbr.rel (%p8619) target = $region52
        $region51: #{tpu_custom_call.1} parent=47 // pred_region
          %8623 = vsyncadd %s8615, 0
          %s8624 = smul.addr %s21, 8
          %s8625 = smul.addr %s8624, 8
          %s8626 = scalar_lea.hbm %s7, %s8625
          %s8627 = sshll.u32 %s8618, 4
          %s8628 = int_to_ptr.vmem [resolvable:$true] %s8627
          %s8629 = sshll.u32 %s8626, 4
          %s8630 = int_to_ptr.hbm [resolvable:$true] %s8629
          %8635 = dma.vmem_to_hbm [thread:$0]  %s8628, 1024, %s8630, %s8615, 128, 128, 8
        $region52: #{tpu_custom_call.1} parent=47 // pred_fallthru
          _
      $region48: #{tpu_custom_call.1} parent=5 // pred_fallthru
        _
      %p8636 = scmp.le.s32.totalorder 2, %s16
      // Predicated region
      $region53: #{tpu_custom_call.1} parent=5 // pred_check
        %p8637 = pneg %p8636
      $region54: #{tpu_custom_call.1} parent=5 // pred_check_branch
        %8639 = sbr.rel (%p8637) target = $region56
      $region55: #{tpu_custom_call.1} parent=5 // pred_region
        %s8640 = ssub.s32 %s16, 2
        // Predicated region
        $region57: #{tpu_custom_call.1} parent=55 // pred_check
          %p8641 = pneg %p197
        $region58: #{tpu_custom_call.1} parent=55 // pred_check_branch
          %8643 = sbr.rel (%p8641) target = $region60
        $region59: #{tpu_custom_call.1} parent=55 // pred_region
          %s8644 = sand.u32 %s182, 1
          %s8645 = scalar_lea.sflag [#allocation5], %s8644
          %s8646 = sand.u32 %s182, 1
          %s8647 = smul.addr %s8646, 64
          %s8648 = scalar_lea.vmem [#allocation4], %s8647
          %8650 = dma.done %s8645, 1024
        $region60: #{tpu_custom_call.1} parent=55 // pred_fallthru
          _
      $region56: #{tpu_custom_call.1} parent=5 // pred_fallthru
        _
    $region6: #{tpu_custom_call.1} parent=1 // loop_footer
      %s20 = sadd.s32 1, %s16
    $region7: #{tpu_custom_call.1} parent=1 // loop_footer_branch
      %15 = sbr.rel target = $region3
    $region8: #{tpu_custom_call.1} parent=1 // loop_exit
      _
    %8651 = vsyncpa [#allocation5], 1
    %s8652 = scalar_lea.sflag [#allocation5], 1
    %8653 = vsyncpa %s8652, 1

</llo_original>
